<compile_context>
chip_gen: v6e
topology: v6e:2x2x1
jax: 0.10.0
libtpu: 0.0.40
codegen_flags: <defaults>
</compile_context>

<pallas_src>
import math
import numpy as np
import jax
import jax.numpy as jnp
from jax.experimental import pallas as pl
from jax.experimental.pallas import tpu as pltpu

# ---------------- configuration ----------------
D = 8              # number of Linear layers in feature_out
W = 128            # MLP width
E = 128            # cfg.model.nsg.embedding_feats_shape
DW = W + E         # deform_W = 256
GF = 32            # HexPlaneField feat_dim (stand-in)
GRID_PE = 2        # grid_pe > 1 -> poc_fre applied to grid feature
HEAD_OUT = (3, 3, 4, 1, 12)    # pos, scales, rotations, opacity, shs heads
HEAD_OFF = (0, 3, 6, 10, 11)   # primary column of each head inside the packed slab
NUM_HEADS = len(HEAD_OUT)
MID = NUM_HEADS * DW + E       # 1408: concatenated head hiddens + pos_lifespan hidden
MAX_TN = 1024                  # VMEM-safe on v7x (64 MiB/TC): f32 pre @ TN=1024 is ~5.8 MiB

# packed output-slab column layout (lane-dense 128-wide, 44 real columns)
OUT_SLAB = 128
COL_PTS, COL_SCALES, COL_ROT, COL_OPAC, COL_SHS = 0, 3, 6, 10, 11
COL_DX, COL_DSHS, COL_DR, COL_MU, COL_SIGMA = 23, 26, 38, 42, 43
OUT_COLS = 44
BASE_COLS = 23                 # xyz(3) sc(3) rot(4) op(1) shs(12) share cols 0:23 with output

# packed input-slab ("hin") column layout: base 0:23, zeros 23:31, time @31, poc_fre 32:128
T_COL = 31
POC_OFF = 32                   # [gf (32), sin(2gf) (32), cos(2gf) (32)] at cols 32:128


def _pick_tn(n):
    """Tile size: prefer >=4 grid steps (>=2 per TensorCore on v7x), TN <= MAX_TN."""
    for tn in (MAX_TN, 512, 256, 128, 64, 32, 16, 8):
        if n % tn == 0 and n // tn >= 4:
            return tn
    for tn in (512, 256, 128, 64, 32, 16, 8):
        if n % tn == 0:
            return tn
    return n   # tiny / odd N: single full block


# ---------------- Pallas kernel ----------------
def _deformation_kernel(hin_ref, ef_ref,
                        fw0_ref, fb0_ref, fwh_ref, fbh_ref,
                        Ahe_ref, aall_ref, Bc_ref, bout_ref,
                        out_ref, hcat_ref):
    f32, bf16 = jnp.float32, jnp.bfloat16
    dot = lambda a, b: jnp.dot(a, b, preferred_element_type=f32)

    # --- feature_out trunk -----------------------------------------------------------
    # hin cols 32:128 hold the host-computed poc_fre feature [gf, sin(2gf), cos(2gf)];
    # fw0 is zero-padded so the base/time/padding columns are inert -> one K=128 matmul.
    hin = hin_ref[...]                                     # (TN, 128) f32
    h = dot(hin.astype(bf16), fw0_ref[...]) + fb0_ref[...]
    for i in range(D - 1):                                 # (D-1) x [ReLU, Linear(W, W)]
        h = jnp.maximum(h, 0.0)
        h = dot(h.astype(bf16), fwh_ref[i]) + fbh_ref[i]

    # --- 5 deform heads + pos_lifespan as 2 wide matmuls -------------------------------
    # hidden = concat([feature_out(h), embedding_feats]); every head starts with ReLU.
    # relu(h) / relu(ef) are placed at lane-tile-aligned columns of a (TN, 256) bf16
    # scratch so ONE K=256 matmul against A_he = [A_h; A_e] replaces two K=128 matmuls.
    hcat_ref[:, 0:W] = jnp.maximum(h, 0.0).astype(bf16)
    hcat_ref[:, W:W + E] = jnp.maximum(ef_ref[...], 0.0).astype(bf16)
    pre = dot(hcat_ref[...], Ahe_ref[...]) + aall_ref[...]                # (TN, MID) f32
    mid = jnp.maximum(pre, 0.0).astype(bf16)
    # block-structured, lane-dense B: result already sits in the packed output layout
    raw = dot(mid, Bc_ref[...]) + bout_ref[...]                           # (TN, 128) f32

    # --- lane-dense epilogue (all f32 VPU/EUP work) -------------------------------------
    t1 = hin[:, T_COL:T_COL + 1]
    mu_t = raw[:, COL_MU:COL_MU + 1]
    sigma_t = jnp.exp(raw[:, COL_SIGMA:COL_SIGMA + 1])     # raw holds log_sigma there
    life = jnp.exp(-((t1 - mu_t) ** 2) / (2.0 * sigma_t * sigma_t))

    # mask == 1 (static_mlp / empty_voxel disabled); hin cols 0:23 are the *_emb inputs
    # in the same layout as the head deltas, so "emb * mask + delta" is one add.
    col = jax.lax.broadcasted_iota(jnp.int32, (1, OUT_SLAB), 1)
    base = jnp.where(col < BASE_COLS, hin, 0.0)
    summed = raw + base
    out = summed * jnp.where(col == COL_OPAC, life, 1.0)   # opacity *= life_score
    out = jnp.where(col == COL_SIGMA, sigma_t, out)        # sigma_t output column
    out_ref[...] = out


# ---------------- parameters (deterministic, torch-style Linear init) ----------------
def _linear(key, fan_in, fan_out):
    kw, kb = jax.random.split(key)
    bound = 1.0 / math.sqrt(fan_in)
    w = jax.random.uniform(kw, (fan_in, fan_out), jnp.float32, -bound, bound)
    b = jax.random.uniform(kb, (fan_out,), jnp.float32, -bound, bound)
    return w, b


def init_params(key):
    keys = jax.random.split(key, 32)
    ki = iter(keys)
    p = {}
    w0, b0 = _linear(next(ki), 3 * GF, W)            # grid_out_dim = feat_dim*3 (grid_pe>1)
    p["feat_w0"] = w0
    p["feat_b0"] = b0[None, :]
    p["feat_wh"], p["feat_bh"] = [], []
    for _ in range(D - 1):
        w, b = _linear(next(ki), W, W)
        p["feat_wh"].append(w)
        p["feat_bh"].append(b[None, :])
    p["head_A"], p["head_a"], p["head_B"], p["head_b"] = [], [], [], []
    for out in HEAD_OUT:
        wa, ba = _linear(next(ki), DW, DW)
        wb, bb = _linear(next(ki), DW, out)
        p["head_A"].append(wa); p["head_a"].append(ba[None, :])
        p["head_B"].append(wb); p["head_b"].append(bb[None, :])
    lw1, lb1 = _linear(next(ki), E, E)
    lw2, lb2 = _linear(next(ki), E, 2)
    p["life_w1"] = lw1; p["life_b1"] = lb1[None, :]
    p["life_w2"] = lw2; p["life_b2"] = lb2[None, :]
    # HexPlane stand-in projection (plain-JAX glue)
    p["grid_proj"] = jax.random.normal(next(ki), (4, GF), jnp.float32)
    p["grid_phase"] = jax.random.normal(next(ki), (1, GF), jnp.float32)
    return p


def pack_params(p):
    """Host-side weight packing: wide, MXU-friendly bf16 matmuls."""
    bf16 = jnp.bfloat16
    kp = {}
    # First trunk layer padded to K=128: rows POC_OFF:POC_OFF+3*GF carry the real weights,
    # rows 0:32 (base/time/zero-pad columns of the input slab) are zero.
    fw0_pad = jnp.zeros((OUT_SLAB, W), jnp.float32)
    fw0_pad = fw0_pad.at[POC_OFF:POC_OFF + 3 * GF, :].set(p["feat_w0"])
    kp["fw0"] = fw0_pad.astype(bf16)                                # (128, W)
    kp["fb0"] = p["feat_b0"]                                        # (1, W)   f32
    kp["fwh"] = jnp.stack(p["feat_wh"]).astype(bf16)                # (D-1, W, W)
    kp["fbh"] = jnp.stack(p["feat_bh"])                             # (D-1, 1, W) f32

    # Stacked head A (heads 0..4 then pos_lifespan layer-1 as the last 128 columns).
    # Rows 0:W act on relu(feature_out(h)), rows W:DW on relu(embedding_feats);
    # pos_lifespan only sees embedding_feats so its h-block is zero.
    Ah = jnp.concatenate([p["head_A"][k][:W, :] for k in range(NUM_HEADS)]
                         + [jnp.zeros((W, E), jnp.float32)], axis=1)      # (W, MID)
    Ae = jnp.concatenate([p["head_A"][k][W:DW, :] for k in range(NUM_HEADS)]
                         + [p["life_w1"]], axis=1)                        # (E, MID)
    a_all = jnp.concatenate([p["head_a"][k] for k in range(NUM_HEADS)]
                            + [p["life_b1"]], axis=1)                     # (1, MID)
    kp["A_he"] = jnp.concatenate([Ah, Ae], axis=0).astype(bf16)           # (DW, MID)
    kp["a_all"] = a_all                                                   # f32

    # Block-structured, lane-dense B (MID, 128): head k lands at its packed-output column;
    # dx / dr / dshs are additionally duplicated at their raw-output columns (zero blocks
    # are free on the MXU); pos_lifespan layer-2 lands at (mu, log_sigma) = cols 42:44.
    dup_off = {0: COL_DX, 2: COL_DR, 4: COL_DSHS}
    blocks = []
    bias = jnp.zeros((1, OUT_SLAB), jnp.float32)
    for k, width in enumerate(HEAD_OUT):
        blk = jnp.zeros((DW, OUT_SLAB), jnp.float32)
        blk = blk.at[:, HEAD_OFF[k]:HEAD_OFF[k] + width].set(p["head_B"][k])
        bias = bias.at[:, HEAD_OFF[k]:HEAD_OFF[k] + width].set(p["head_b"][k])
        if k in dup_off:
            off = dup_off[k]
            blk = blk.at[:, off:off + width].set(p["head_B"][k])
            bias = bias.at[:, off:off + width].set(p["head_b"][k])
        blocks.append(blk)
    life_blk = jnp.zeros((E, OUT_SLAB), jnp.float32)
    life_blk = life_blk.at[:, COL_MU:COL_MU + 2].set(p["life_w2"])
    bias = bias.at[:, COL_MU:COL_MU + 2].set(p["life_b2"])
    blocks.append(life_blk)
    kp["B_comb"] = jnp.concatenate(blocks, axis=0).astype(bf16)           # (MID, 128)
    kp["b_out"] = bias                                                    # (1, 128) f32
    return kp


# ---------------- wrapper ----------------
def deformation_forward(params, packed, rays_pts_emb, scales_emb, rotations_emb,
                        opacity_emb, shs_emb, time_emb, embedding_feats):
    N = rays_pts_emb.shape[0]
    tn = _pick_tn(N)
    xyz = rays_pts_emb[:, :3]
    t1 = time_emb[:, :1]

    # TODO(synk): HexPlaneField (multi-resolution grid_sample interpolation) has no clean
    # Pallas equivalent; replaced with a deterministic random-Fourier feature of (xyz, t)
    # computed in plain JAX as glue.
    grid_feature = jnp.sin(
        jnp.concatenate([xyz, t1], axis=-1) @ params["grid_proj"] + params["grid_phase"])
    emb = grid_feature * float(GRID_PE)                    # poc_fre (host-side)

    # One lane-dense (N, 128) input slab:
    #   cols 0:23  -> {xyz, scales, rot, opacity, shs}  (same layout as the output slab)
    #   cols 23:31 -> zeros, col 31 -> time
    #   cols 32:128-> [gf, sin(2gf), cos(2gf)]  (poc_fre, consumed by the padded fw0)
    pp23 = jnp.concatenate([xyz, scales_emb[:, :3], rotations_emb[:, :4],
                            opacity_emb[:, :1], shs_emb.reshape(N, 12)], axis=-1)
    hin = jnp.concatenate(
        [pp23, jnp.zeros((N, T_COL - BASE_COLS), jnp.float32), t1,
         grid_feature, jnp.sin(emb), jnp.cos(emb)], axis=-1)           # (N, 128)

    def pt_spec(c):
        return pl.BlockSpec((tn, c), lambda i: (i, 0))

    def w_spec(a):
        nd = a.ndim
        return pl.BlockSpec(a.shape, lambda i, _nd=nd: (0,) * _nd)

    weight_names = ("fw0", "fb0", "fwh", "fbh", "A_he", "a_all", "B_comb", "b_out")
    weights = [packed[k] for k in weight_names]
    in_specs = [pt_spec(OUT_SLAB), pt_spec(E)] + [w_spec(w) for w in weights]

    flops_pp = 2 * (OUT_SLAB * W + (D - 1) * W * W + DW * MID + MID * OUT_SLAB)
    weight_bytes = sum(int(np.prod(w.shape)) * w.dtype.itemsize for w in weights)
    cost = pl.CostEstimate(
        flops=int(N) * flops_pp,
        transcendentals=int(N) * 2,                        # exp(log_sigma), exp(life)
        bytes_accessed=int(N) * 4 * (OUT_SLAB + E + OUT_SLAB) + weight_bytes)

    out = pl.pallas_call(
        _deformation_kernel,
        out_shape=jax.ShapeDtypeStruct((N, OUT_SLAB), jnp.float32),
        grid_spec=pltpu.PrefetchScalarGridSpec(
            num_scalar_prefetch=0,
            grid=(N // tn,),
            in_specs=in_specs,
            out_specs=pt_spec(OUT_SLAB),
            scratch_shapes=[pltpu.VMEM((tn, DW), jnp.bfloat16)]),   # relu(h)|relu(ef) concat
        compiler_params=pltpu.CompilerParams(
            dimension_semantics=("parallel",),
            vmem_limit_bytes=48 * 1024 * 1024),            # v5e scoped default is only 16 MiB
        cost_estimate=cost,
    )(hin, embedding_feats, *weights)

    pts = out[:, COL_PTS:COL_PTS + 3]
    scales = out[:, COL_SCALES:COL_SCALES + 3]
    rotations = out[:, COL_ROT:COL_ROT + 4]
    opacity = out[:, COL_OPAC:COL_OPAC + 1]
    shs = out[:, COL_SHS:COL_SHS + 12].reshape(N, 4, 3)
    dx = out[:, COL_DX:COL_DX + 3]
    dshs = out[:, COL_DSHS:COL_DSHS + 12].reshape(N, 4, 3)
    dr = out[:, COL_DR:COL_DR + 4]
    mu_t = out[:, COL_MU:COL_MU + 1]
    sigma_t = out[:, COL_SIGMA:COL_SIGMA + 1]
    feat = None  # cfg.model.deformable.feat_head = False
    return pts, scales, rotations, opacity, shs, dx, feat, dshs, dr, mu_t, sigma_t


# ---------------- pure-JAX reference (for correctness check) ----------------
def reference_forward(params, rays_pts_emb, scales_emb, rotations_emb,
                      opacity_emb, shs_emb, time_emb, embedding_feats):
    hp = jax.lax.Precision.HIGHEST
    dot = lambda a, b: jnp.dot(a, b, precision=hp)
    N = rays_pts_emb.shape[0]
    xyz = rays_pts_emb[:, :3]
    t1 = time_emb[:, :1]
    gf = jnp.sin(jnp.concatenate([xyz, t1], -1) @ params["grid_proj"] + params["grid_phase"])
    emb = gf * GRID_PE                               # poc_fre
    h = jnp.concatenate([gf, jnp.sin(emb), jnp.cos(emb)], -1)
    h = dot(h, params["feat_w0"]) + params["feat_b0"]
    for i in range(D - 1):
        h = jnp.maximum(h, 0.0)
        h = dot(h, params["feat_wh"][i]) + params["feat_bh"][i]
    hidden = jnp.concatenate([h, embedding_feats], -1)
    hr = jnp.maximum(hidden, 0.0)
    head = []
    for k in range(NUM_HEADS):
        mid = jnp.maximum(dot(hr, params["head_A"][k]) + params["head_a"][k], 0.0)
        head.append(dot(mid, params["head_B"][k]) + params["head_b"][k])
    dx = head[0]; ds = head[1]; dr = head[2]; do = head[3]
    dshs = head[4].reshape(N, 4, 3)
    efr = jnp.maximum(embedding_feats, 0.0)
    mid = jnp.maximum(dot(efr, params["life_w1"]) + params["life_b1"], 0.0)
    life = dot(mid, params["life_w2"]) + params["life_b2"]
    mu_t = life[:, :1]; sigma_t = jnp.exp(life[:, 1:2])
    life_score = jnp.exp(-((t1 - mu_t) ** 2) / (2.0 * sigma_t ** 2))
    mask = jnp.ones_like(opacity_emb[:, :1])
    pts = xyz * mask + dx
    scales = scales_emb[:, :3] * mask + ds
    rotations = rotations_emb[:, :4] + dr
    opacity = (opacity_emb[:, :1] * mask + do) * life_score
    shs = shs_emb * mask[:, :, None] + dshs
    return pts, scales, rotations, opacity, shs, dx, None, dshs, dr, mu_t, sigma_t


if __name__ == "__main__":
    key = jax.random.PRNGKey(0)
    kp, kx = jax.random.split(key)
    params = init_params(kp)
    packed = pack_params(params)

    N = 1024            # -> TN=256, 4 grid steps (>=2 per TensorCore on v7x)
    ks = jax.random.split(kx, 8)
    rays_pts_emb = jax.random.normal(ks[0], (N, 27), jnp.float32)   # only [:, :3] used
    scales_emb = jax.random.normal(ks[1], (N, 3), jnp.float32)
    rotations_emb = jax.random.normal(ks[2], (N, 4), jnp.float32)
    opacity_emb = jax.random.normal(ks[3], (N, 1), jnp.float32)
    shs_emb = jax.random.normal(ks[4], (N, 4, 3), jnp.float32)
    time_emb = jax.random.uniform(ks[5], (N, 1), jnp.float32)
    embedding_feats = jax.random.normal(ks[6], (N, E), jnp.float32)

    outs = deformation_forward(params, packed, rays_pts_emb, scales_emb, rotations_emb,
                               opacity_emb, shs_emb, time_emb, embedding_feats)
    outs = jax.block_until_ready(outs)

    ref = reference_forward(params, rays_pts_emb, scales_emb, rotations_emb,
                            opacity_emb, shs_emb, time_emb, embedding_feats)
    # Tolerance tuned to bf16 MXU operands (f32 accumulation) vs f32 HIGHEST reference.
    for got, want in zip(outs, ref):
        if got is None:
            continue
        np.testing.assert_allclose(np.asarray(got), np.asarray(want), rtol=2e-2, atol=2e-2)

    print("KERNEL_OK")
</pallas_src>

<mosaic_0001>
module attributes {stable_mosaic.version = 11 : i64} {
  func.func @_deformation_kernel(%arg0: i32, %arg1: memref<256x128xf32, #tpu.memory_space<vmem>>, %arg2: memref<256x128xf32, #tpu.memory_space<vmem>>, %arg3: memref<128x128xbf16, #tpu.memory_space<vmem>>, %arg4: memref<1x128xf32, #tpu.memory_space<vmem>>, %arg5: memref<7x128x128xbf16, #tpu.memory_space<vmem>>, %arg6: memref<7x1x128xf32, #tpu.memory_space<vmem>>, %arg7: memref<256x1408xbf16, #tpu.memory_space<vmem>>, %arg8: memref<1x1408xf32, #tpu.memory_space<vmem>>, %arg9: memref<1408x128xbf16, #tpu.memory_space<vmem>>, %arg10: memref<1x128xf32, #tpu.memory_space<vmem>>, %arg11: memref<256x128xf32, #tpu.memory_space<vmem>>, %arg12: memref<256x256xbf16, #tpu.memory_space<vmem>>) attributes {dimension_semantics = [#tpu.dimension_semantics<parallel>], iteration_bounds = array<i64: 4>, scalar_prefetch = 0 : i64, scratch_operands = 1 : i64, tpu.core_type = #tpu.core_type<tc>, window_params = [{transform_indices = @transform_0, window_bounds = array<i64: 256, 128>}, {transform_indices = @transform_1, window_bounds = array<i64: 256, 128>}, {pipeline_mode = #tpu.pipeline_mode<synchronous>, transform_indices = @transform_2, window_bounds = array<i64: 128, 128>}, {pipeline_mode = #tpu.pipeline_mode<synchronous>, transform_indices = @transform_3, window_bounds = array<i64: 1, 128>}, {pipeline_mode = #tpu.pipeline_mode<synchronous>, transform_indices = @transform_4, window_bounds = array<i64: 7, 128, 128>}, {pipeline_mode = #tpu.pipeline_mode<synchronous>, transform_indices = @transform_5, window_bounds = array<i64: 7, 1, 128>}, {pipeline_mode = #tpu.pipeline_mode<synchronous>, transform_indices = @transform_6, window_bounds = array<i64: 256, 1408>}, {pipeline_mode = #tpu.pipeline_mode<synchronous>, transform_indices = @transform_7, window_bounds = array<i64: 1, 1408>}, {pipeline_mode = #tpu.pipeline_mode<synchronous>, transform_indices = @transform_8, window_bounds = array<i64: 1408, 128>}, {pipeline_mode = #tpu.pipeline_mode<synchronous>, transform_indices = @transform_9, window_bounds = array<i64: 1, 128>}, {transform_indices = @transform_10, window_bounds = array<i64: 256, 128>}]} {
    %c0 = arith.constant 0 : index
    %c0_0 = arith.constant 0 : index
    %0 = vector.load %arg1[%c0, %c0_0] : memref<256x128xf32, #tpu.memory_space<vmem>>, vector<256x128xf32>
    %1 = arith.truncf %0 : vector<256x128xf32> to vector<256x128xbf16>
    %c0_1 = arith.constant 0 : index
    %c0_2 = arith.constant 0 : index
    %2 = vector.load %arg3[%c0_1, %c0_2] : memref<128x128xbf16, #tpu.memory_space<vmem>>, vector<128x128xbf16>
    %cst = arith.constant dense<0.000000e+00> : vector<256x128xf32>
    %3 = tpu.matmul %1, %2, %cst {dimension_numbers = #tpu.dot_dimension_numbers<[1], [0], [0], [1], [0, 0, 1, 1], [], []>} : vector<256x128xbf16>, vector<128x128xbf16>, vector<256x128xf32> -> vector<256x128xf32>
    %c0_3 = arith.constant 0 : index
    %c0_4 = arith.constant 0 : index
    %4 = vector.load %arg4[%c0_3, %c0_4] : memref<1x128xf32, #tpu.memory_space<vmem>>, vector<1x128xf32>
    %5 = vector.broadcast %4 : vector<1x128xf32> to vector<256x128xf32>
    %6 = arith.addf %3, %5 : vector<256x128xf32>
    %cst_5 = arith.constant 0.000000e+00 : f32
    %7 = vector.broadcast %cst_5 : f32 to vector<256x128xf32>
    %8 = arith.maximumf %6, %7 : vector<256x128xf32>
    %9 = arith.truncf %8 : vector<256x128xf32> to vector<256x128xbf16>
    %c0_6 = arith.constant 0 : index
    %c0_7 = arith.constant 0 : index
    %c0_8 = arith.constant 0 : index
    %10 = vector.load %arg5[%c0_6, %c0_7, %c0_8] : memref<7x128x128xbf16, #tpu.memory_space<vmem>>, vector<1x128x128xbf16>
    %11 = vector.shape_cast %10 : vector<1x128x128xbf16> to vector<128x128xbf16>
    %cst_9 = arith.constant dense<0.000000e+00> : vector<256x128xf32>
    %12 = tpu.matmul %9, %11, %cst_9 {dimension_numbers = #tpu.dot_dimension_numbers<[1], [0], [0], [1], [0, 0, 1, 1], [], []>} : vector<256x128xbf16>, vector<128x128xbf16>, vector<256x128xf32> -> vector<256x128xf32>
    %c0_10 = arith.constant 0 : index
    %c0_11 = arith.constant 0 : index
    %c0_12 = arith.constant 0 : index
    %13 = vector.load %arg6[%c0_10, %c0_11, %c0_12] : memref<7x1x128xf32, #tpu.memory_space<vmem>>, vector<1x1x128xf32>
    %14 = vector.shape_cast %13 : vector<1x1x128xf32> to vector<1x128xf32>
    %15 = vector.broadcast %14 : vector<1x128xf32> to vector<256x128xf32>
    %16 = arith.addf %12, %15 : vector<256x128xf32>
    %cst_13 = arith.constant 0.000000e+00 : f32
    %17 = vector.broadcast %cst_13 : f32 to vector<256x128xf32>
    %18 = arith.maximumf %16, %17 : vector<256x128xf32>
    %19 = arith.truncf %18 : vector<256x128xf32> to vector<256x128xbf16>
    %c1 = arith.constant 1 : index
    %c0_14 = arith.constant 0 : index
    %c0_15 = arith.constant 0 : index
    %20 = vector.load %arg5[%c1, %c0_14, %c0_15] : memref<7x128x128xbf16, #tpu.memory_space<vmem>>, vector<1x128x128xbf16>
    %21 = vector.shape_cast %20 : vector<1x128x128xbf16> to vector<128x128xbf16>
    %cst_16 = arith.constant dense<0.000000e+00> : vector<256x128xf32>
    %22 = tpu.matmul %19, %21, %cst_16 {dimension_numbers = #tpu.dot_dimension_numbers<[1], [0], [0], [1], [0, 0, 1, 1], [], []>} : vector<256x128xbf16>, vector<128x128xbf16>, vector<256x128xf32> -> vector<256x128xf32>
    %c1_17 = arith.constant 1 : index
    %c0_18 = arith.constant 0 : index
    %c0_19 = arith.constant 0 : index
    %23 = vector.load %arg6[%c1_17, %c0_18, %c0_19] : memref<7x1x128xf32, #tpu.memory_space<vmem>>, vector<1x1x128xf32>
    %24 = vector.shape_cast %23 : vector<1x1x128xf32> to vector<1x128xf32>
    %25 = vector.broadcast %24 : vector<1x128xf32> to vector<256x128xf32>
    %26 = arith.addf %22, %25 : vector<256x128xf32>
    %cst_20 = arith.constant 0.000000e+00 : f32
    %27 = vector.broadcast %cst_20 : f32 to vector<256x128xf32>
    %28 = arith.maximumf %26, %27 : vector<256x128xf32>
    %29 = arith.truncf %28 : vector<256x128xf32> to vector<256x128xbf16>
    %c2 = arith.constant 2 : index
    %c0_21 = arith.constant 0 : index
    %c0_22 = arith.constant 0 : index
    %30 = vector.load %arg5[%c2, %c0_21, %c0_22] : memref<7x128x128xbf16, #tpu.memory_space<vmem>>, vector<1x128x128xbf16>
    %31 = vector.shape_cast %30 : vector<1x128x128xbf16> to vector<128x128xbf16>
    %cst_23 = arith.constant dense<0.000000e+00> : vector<256x128xf32>
    %32 = tpu.matmul %29, %31, %cst_23 {dimension_numbers = #tpu.dot_dimension_numbers<[1], [0], [0], [1], [0, 0, 1, 1], [], []>} : vector<256x128xbf16>, vector<128x128xbf16>, vector<256x128xf32> -> vector<256x128xf32>
    %c2_24 = arith.constant 2 : index
    %c0_25 = arith.constant 0 : index
    %c0_26 = arith.constant 0 : index
    %33 = vector.load %arg6[%c2_24, %c0_25, %c0_26] : memref<7x1x128xf32, #tpu.memory_space<vmem>>, vector<1x1x128xf32>
    %34 = vector.shape_cast %33 : vector<1x1x128xf32> to vector<1x128xf32>
    %35 = vector.broadcast %34 : vector<1x128xf32> to vector<256x128xf32>
    %36 = arith.addf %32, %35 : vector<256x128xf32>
    %cst_27 = arith.constant 0.000000e+00 : f32
    %37 = vector.broadcast %cst_27 : f32 to vector<256x128xf32>
    %38 = arith.maximumf %36, %37 : vector<256x128xf32>
    %39 = arith.truncf %38 : vector<256x128xf32> to vector<256x128xbf16>
    %c3 = arith.constant 3 : index
    %c0_28 = arith.constant 0 : index
    %c0_29 = arith.constant 0 : index
    %40 = vector.load %arg5[%c3, %c0_28, %c0_29] : memref<7x128x128xbf16, #tpu.memory_space<vmem>>, vector<1x128x128xbf16>
    %41 = vector.shape_cast %40 : vector<1x128x128xbf16> to vector<128x128xbf16>
    %cst_30 = arith.constant dense<0.000000e+00> : vector<256x128xf32>
    %42 = tpu.matmul %39, %41, %cst_30 {dimension_numbers = #tpu.dot_dimension_numbers<[1], [0], [0], [1], [0, 0, 1, 1], [], []>} : vector<256x128xbf16>, vector<128x128xbf16>, vector<256x128xf32> -> vector<256x128xf32>
    %c3_31 = arith.constant 3 : index
    %c0_32 = arith.constant 0 : index
    %c0_33 = arith.constant 0 : index
    %43 = vector.load %arg6[%c3_31, %c0_32, %c0_33] : memref<7x1x128xf32, #tpu.memory_space<vmem>>, vector<1x1x128xf32>
    %44 = vector.shape_cast %43 : vector<1x1x128xf32> to vector<1x128xf32>
    %45 = vector.broadcast %44 : vector<1x128xf32> to vector<256x128xf32>
    %46 = arith.addf %42, %45 : vector<256x128xf32>
    %cst_34 = arith.constant 0.000000e+00 : f32
    %47 = vector.broadcast %cst_34 : f32 to vector<256x128xf32>
    %48 = arith.maximumf %46, %47 : vector<256x128xf32>
    %49 = arith.truncf %48 : vector<256x128xf32> to vector<256x128xbf16>
    %c4 = arith.constant 4 : index
    %c0_35 = arith.constant 0 : index
    %c0_36 = arith.constant 0 : index
    %50 = vector.load %arg5[%c4, %c0_35, %c0_36] : memref<7x128x128xbf16, #tpu.memory_space<vmem>>, vector<1x128x128xbf16>
    %51 = vector.shape_cast %50 : vector<1x128x128xbf16> to vector<128x128xbf16>
    %cst_37 = arith.constant dense<0.000000e+00> : vector<256x128xf32>
    %52 = tpu.matmul %49, %51, %cst_37 {dimension_numbers = #tpu.dot_dimension_numbers<[1], [0], [0], [1], [0, 0, 1, 1], [], []>} : vector<256x128xbf16>, vector<128x128xbf16>, vector<256x128xf32> -> vector<256x128xf32>
    %c4_38 = arith.constant 4 : index
    %c0_39 = arith.constant 0 : index
    %c0_40 = arith.constant 0 : index
    %53 = vector.load %arg6[%c4_38, %c0_39, %c0_40] : memref<7x1x128xf32, #tpu.memory_space<vmem>>, vector<1x1x128xf32>
    %54 = vector.shape_cast %53 : vector<1x1x128xf32> to vector<1x128xf32>
    %55 = vector.broadcast %54 : vector<1x128xf32> to vector<256x128xf32>
    %56 = arith.addf %52, %55 : vector<256x128xf32>
    %cst_41 = arith.constant 0.000000e+00 : f32
    %57 = vector.broadcast %cst_41 : f32 to vector<256x128xf32>
    %58 = arith.maximumf %56, %57 : vector<256x128xf32>
    %59 = arith.truncf %58 : vector<256x128xf32> to vector<256x128xbf16>
    %c5 = arith.constant 5 : index
    %c0_42 = arith.constant 0 : index
    %c0_43 = arith.constant 0 : index
    %60 = vector.load %arg5[%c5, %c0_42, %c0_43] : memref<7x128x128xbf16, #tpu.memory_space<vmem>>, vector<1x128x128xbf16>
    %61 = vector.shape_cast %60 : vector<1x128x128xbf16> to vector<128x128xbf16>
    %cst_44 = arith.constant dense<0.000000e+00> : vector<256x128xf32>
    %62 = tpu.matmul %59, %61, %cst_44 {dimension_numbers = #tpu.dot_dimension_numbers<[1], [0], [0], [1], [0, 0, 1, 1], [], []>} : vector<256x128xbf16>, vector<128x128xbf16>, vector<256x128xf32> -> vector<256x128xf32>
    %c5_45 = arith.constant 5 : index
    %c0_46 = arith.constant 0 : index
    %c0_47 = arith.constant 0 : index
    %63 = vector.load %arg6[%c5_45, %c0_46, %c0_47] : memref<7x1x128xf32, #tpu.memory_space<vmem>>, vector<1x1x128xf32>
    %64 = vector.shape_cast %63 : vector<1x1x128xf32> to vector<1x128xf32>
    %65 = vector.broadcast %64 : vector<1x128xf32> to vector<256x128xf32>
    %66 = arith.addf %62, %65 : vector<256x128xf32>
    %cst_48 = arith.constant 0.000000e+00 : f32
    %67 = vector.broadcast %cst_48 : f32 to vector<256x128xf32>
    %68 = arith.maximumf %66, %67 : vector<256x128xf32>
    %69 = arith.truncf %68 : vector<256x128xf32> to vector<256x128xbf16>
    %c6 = arith.constant 6 : index
    %c0_49 = arith.constant 0 : index
    %c0_50 = arith.constant 0 : index
    %70 = vector.load %arg5[%c6, %c0_49, %c0_50] : memref<7x128x128xbf16, #tpu.memory_space<vmem>>, vector<1x128x128xbf16>
    %71 = vector.shape_cast %70 : vector<1x128x128xbf16> to vector<128x128xbf16>
    %cst_51 = arith.constant dense<0.000000e+00> : vector<256x128xf32>
    %72 = tpu.matmul %69, %71, %cst_51 {dimension_numbers = #tpu.dot_dimension_numbers<[1], [0], [0], [1], [0, 0, 1, 1], [], []>} : vector<256x128xbf16>, vector<128x128xbf16>, vector<256x128xf32> -> vector<256x128xf32>
    %c6_52 = arith.constant 6 : index
    %c0_53 = arith.constant 0 : index
    %c0_54 = arith.constant 0 : index
    %73 = vector.load %arg6[%c6_52, %c0_53, %c0_54] : memref<7x1x128xf32, #tpu.memory_space<vmem>>, vector<1x1x128xf32>
    %74 = vector.shape_cast %73 : vector<1x1x128xf32> to vector<1x128xf32>
    %75 = vector.broadcast %74 : vector<1x128xf32> to vector<256x128xf32>
    %76 = arith.addf %72, %75 : vector<256x128xf32>
    %cst_55 = arith.constant 0.000000e+00 : f32
    %77 = vector.broadcast %cst_55 : f32 to vector<256x128xf32>
    %78 = arith.maximumf %76, %77 : vector<256x128xf32>
    %79 = arith.truncf %78 : vector<256x128xf32> to vector<256x128xbf16>
    %c0_56 = arith.constant 0 : index
    %c0_57 = arith.constant 0 : index
    %80 = vector.load %arg12[%c0_56, %c0_57] : memref<256x256xbf16, #tpu.memory_space<vmem>>, vector<256x128xbf16>
    tpu.vector_store %arg12[%c0_56, %c0_57], %79 {strides = array<i32>} : memref<256x256xbf16, #tpu.memory_space<vmem>>, vector<256x128xbf16>,
    %c0_58 = arith.constant 0 : index
    %c0_59 = arith.constant 0 : index
    %81 = vector.load %arg2[%c0_58, %c0_59] : memref<256x128xf32, #tpu.memory_space<vmem>>, vector<256x128xf32>
    %cst_60 = arith.constant 0.000000e+00 : f32
    %82 = vector.broadcast %cst_60 : f32 to vector<256x128xf32>
    %83 = arith.maximumf %81, %82 : vector<256x128xf32>
    %84 = arith.truncf %83 : vector<256x128xf32> to vector<256x128xbf16>
    %c0_61 = arith.constant 0 : index
    %c128 = arith.constant 128 : index
    %85 = vector.load %arg12[%c0_61, %c128] : memref<256x256xbf16, #tpu.memory_space<vmem>>, vector<256x128xbf16>
    tpu.vector_store %arg12[%c0_61, %c128], %84 {strides = array<i32>} : memref<256x256xbf16, #tpu.memory_space<vmem>>, vector<256x128xbf16>,
    %c0_62 = arith.constant 0 : index
    %c0_63 = arith.constant 0 : index
    %86 = vector.load %arg12[%c0_62, %c0_63] : memref<256x256xbf16, #tpu.memory_space<vmem>>, vector<256x256xbf16>
    %c0_64 = arith.constant 0 : index
    %c0_65 = arith.constant 0 : index
    %87 = vector.load %arg7[%c0_64, %c0_65] : memref<256x1408xbf16, #tpu.memory_space<vmem>>, vector<256x1408xbf16>
    %cst_66 = arith.constant dense<0.000000e+00> : vector<256x1408xf32>
    %88 = tpu.matmul %86, %87, %cst_66 {dimension_numbers = #tpu.dot_dimension_numbers<[1], [0], [0], [1], [0, 0, 1, 1], [], []>} : vector<256x256xbf16>, vector<256x1408xbf16>, vector<256x1408xf32> -> vector<256x1408xf32>
    %c0_67 = arith.constant 0 : index
    %c0_68 = arith.constant 0 : index
    %89 = vector.load %arg8[%c0_67, %c0_68] : memref<1x1408xf32, #tpu.memory_space<vmem>>, vector<1x1408xf32>
    %90 = vector.broadcast %89 : vector<1x1408xf32> to vector<256x1408xf32>
    %91 = arith.addf %88, %90 : vector<256x1408xf32>
    %cst_69 = arith.constant 0.000000e+00 : f32
    %92 = vector.broadcast %cst_69 : f32 to vector<256x1408xf32>
    %93 = arith.maximumf %91, %92 : vector<256x1408xf32>
    %94 = arith.truncf %93 : vector<256x1408xf32> to vector<256x1408xbf16>
    %c0_70 = arith.constant 0 : index
    %c0_71 = arith.constant 0 : index
    %95 = vector.load %arg9[%c0_70, %c0_71] : memref<1408x128xbf16, #tpu.memory_space<vmem>>, vector<1408x128xbf16>
    %cst_72 = arith.constant dense<0.000000e+00> : vector<256x128xf32>
    %96 = tpu.matmul %94, %95, %cst_72 {dimension_numbers = #tpu.dot_dimension_numbers<[1], [0], [0], [1], [0, 0, 1, 1], [], []>} : vector<256x1408xbf16>, vector<1408x128xbf16>, vector<256x128xf32> -> vector<256x128xf32>
    %c0_73 = arith.constant 0 : index
    %c0_74 = arith.constant 0 : index
    %97 = vector.load %arg10[%c0_73, %c0_74] : memref<1x128xf32, #tpu.memory_space<vmem>>, vector<1x128xf32>
    %98 = vector.broadcast %97 : vector<1x128xf32> to vector<256x128xf32>
    %99 = arith.addf %96, %98 : vector<256x128xf32>
    %100 = vector.extract_strided_slice %0 {offsets = [0, 31], sizes = [256, 1], strides = [1, 1]} : vector<256x128xf32> to vector<256x1xf32>
    %101 = vector.extract_strided_slice %99 {offsets = [0, 42], sizes = [256, 1], strides = [1, 1]} : vector<256x128xf32> to vector<256x1xf32>
    %102 = vector.extract_strided_slice %99 {offsets = [0, 43], sizes = [256, 1], strides = [1, 1]} : vector<256x128xf32> to vector<256x1xf32>
    %103 = math.exp %102 : vector<256x1xf32>
    %104 = arith.subf %100, %101 : vector<256x1xf32>
    %105 = arith.mulf %104, %104 : vector<256x1xf32>
    %cst_75 = arith.constant 0.000000e+00 : f32
    %106 = vector.broadcast %cst_75 : f32 to vector<256x1xf32>
    %107 = arith.subf %106, %105 : vector<256x1xf32>
    %cst_76 = arith.constant 2.000000e+00 : f32
    %108 = vector.broadcast %cst_76 : f32 to vector<256x1xf32>
    %109 = arith.mulf %108, %103 : vector<256x1xf32>
    %110 = arith.mulf %109, %103 : vector<256x1xf32>
    %111 = arith.divf %107, %110 : vector<256x1xf32>
    %112 = math.exp %111 : vector<256x1xf32>
    %113 = tpu.iota {dimensions = array<i32: 1>} : vector<1x128xi32>
    %c23_i32 = arith.constant 23 : i32
    %114 = vector.broadcast %c23_i32 : i32 to vector<1x128xi32>
    %115 = arith.cmpi slt, %113, %114 : vector<1x128xi32>
    %cst_77 = arith.constant 0.000000e+00 : f32
    %116 = vector.shape_cast %115 : vector<1x128xi1> to vector<1x128xi1>
    %117 = vector.broadcast %116 : vector<1x128xi1> to vector<256x128xi1>
    %118 = vector.broadcast %cst_77 : f32 to vector<256x128xf32>
    %119 = arith.select %117, %0, %118 : vector<256x128xi1>, vector<256x128xf32>
    %120 = arith.addf %99, %119 : vector<256x128xf32>
    %c10_i32 = arith.constant 10 : i32
    %121 = vector.broadcast %c10_i32 : i32 to vector<1x128xi32>
    %122 = arith.cmpi eq, %113, %121 : vector<1x128xi32>
    %cst_78 = arith.constant 1.000000e+00 : f32
    %123 = vector.shape_cast %122 : vector<1x128xi1> to vector<1x128xi1>
    %124 = vector.broadcast %123 : vector<1x128xi1> to vector<256x128xi1>
    %125 = vector.shape_cast %112 : vector<256x1xf32> to vector<256x1xf32>
    %126 = vector.broadcast %125 : vector<256x1xf32> to vector<256x128xf32>
    %127 = vector.broadcast %cst_78 : f32 to vector<256x128xf32>
    %128 = arith.select %124, %126, %127 : vector<256x128xi1>, vector<256x128xf32>
    %129 = arith.mulf %120, %128 : vector<256x128xf32>
    %c43_i32 = arith.constant 43 : i32
    %130 = vector.broadcast %c43_i32 : i32 to vector<1x128xi32>
    %131 = arith.cmpi eq, %113, %130 : vector<1x128xi32>
    %132 = vector.shape_cast %131 : vector<1x128xi1> to vector<1x128xi1>
    %133 = vector.broadcast %132 : vector<1x128xi1> to vector<256x128xi1>
    %134 = vector.shape_cast %103 : vector<256x1xf32> to vector<256x1xf32>
    %135 = vector.broadcast %134 : vector<256x1xf32> to vector<256x128xf32>
    %136 = arith.select %133, %135, %129 : vector<256x128xi1>, vector<256x128xf32>
    %c0_79 = arith.constant 0 : index
    %c0_80 = arith.constant 0 : index
    %137 = vector.load %arg11[%c0_79, %c0_80] : memref<256x128xf32, #tpu.memory_space<vmem>>, vector<256x128xf32>
    tpu.vector_store %arg11[%c0_79, %c0_80], %136 {strides = array<i32>} : memref<256x128xf32, #tpu.memory_space<vmem>>, vector<256x128xf32>,
    return
  }
  func.func @transform_0(%arg0: i32) -> (i32, i32) {
    %c0_i32 = arith.constant 0 : i32
    %c0_i32_0 = arith.constant 0 : i32
    return %arg0, %c0_i32 : i32, i32
  }
  func.func @transform_1(%arg0: i32) -> (i32, i32) {
    %c0_i32 = arith.constant 0 : i32
    %c0_i32_0 = arith.constant 0 : i32
    return %arg0, %c0_i32 : i32, i32
  }
  func.func @transform_2(%arg0: i32) -> (i32, i32) {
    %c0_i32 = arith.constant 0 : i32
    %c0_i32_0 = arith.constant 0 : i32
    %c0_i32_1 = arith.constant 0 : i32
    return %c0_i32, %c0_i32_0 : i32, i32
  }
  func.func @transform_3(%arg0: i32) -> (i32, i32) {
    %c0_i32 = arith.constant 0 : i32
    %c0_i32_0 = arith.constant 0 : i32
    %c0_i32_1 = arith.constant 0 : i32
    return %c0_i32, %c0_i32_0 : i32, i32
  }
  func.func @transform_4(%arg0: i32) -> (i32, i32, i32) {
    %c0_i32 = arith.constant 0 : i32
    %c0_i32_0 = arith.constant 0 : i32
    %c0_i32_1 = arith.constant 0 : i32
    %c0_i32_2 = arith.constant 0 : i32
    return %c0_i32, %c0_i32_0, %c0_i32_1 : i32, i32, i32
  }
  func.func @transform_5(%arg0: i32) -> (i32, i32, i32) {
    %c0_i32 = arith.constant 0 : i32
    %c0_i32_0 = arith.constant 0 : i32
    %c0_i32_1 = arith.constant 0 : i32
    %c0_i32_2 = arith.constant 0 : i32
    return %c0_i32, %c0_i32_0, %c0_i32_1 : i32, i32, i32
  }
  func.func @transform_6(%arg0: i32) -> (i32, i32) {
    %c0_i32 = arith.constant 0 : i32
    %c0_i32_0 = arith.constant 0 : i32
    %c0_i32_1 = arith.constant 0 : i32
    return %c0_i32, %c0_i32_0 : i32, i32
  }
  func.func @transform_7(%arg0: i32) -> (i32, i32) {
    %c0_i32 = arith.constant 0 : i32
    %c0_i32_0 = arith.constant 0 : i32
    %c0_i32_1 = arith.constant 0 : i32
    return %c0_i32, %c0_i32_0 : i32, i32
  }
  func.func @transform_8(%arg0: i32) -> (i32, i32) {
    %c0_i32 = arith.constant 0 : i32
    %c0_i32_0 = arith.constant 0 : i32
    %c0_i32_1 = arith.constant 0 : i32
    return %c0_i32, %c0_i32_0 : i32, i32
  }
  func.func @transform_9(%arg0: i32) -> (i32, i32) {
    %c0_i32 = arith.constant 0 : i32
    %c0_i32_0 = arith.constant 0 : i32
    %c0_i32_1 = arith.constant 0 : i32
    return %c0_i32, %c0_i32_0 : i32, i32
  }
  func.func @transform_10(%arg0: i32) -> (i32, i32) {
    %c0_i32 = arith.constant 0 : i32
    %c0_i32_0 = arith.constant 0 : i32
    return %arg0, %c0_i32 : i32, i32
  }
}

</mosaic_0001>

<llo_original>
// kernel: tpu_custom_call.1
$region0: #{tpu_custom_call.1}
  #allocation0 [shape = 'u32[]', space=smem, size = 0x4, offset = 0x4, fixed_abs, tag = 'smem constant byte address 0x4 - core index']
  #allocation1 [shape = 'u32[144,128]{1,0:T(1,128)}', space=vmem, size = 0x12000, scoped, tag = 'internal scratch']
  #allocation2 [shape = 'bf16[256,256]{1,0:T(8,128)(2,1)}', space=vmem, size = 0x20000, scoped, tag = 'scratch operand']
  %s0 = inlined_call_operand.hbm [shape: f32[1024,128], index: 0, kind: input, shape index: {}]
  %s1 = inlined_call_operand.hbm [shape: f32[1024,128], index: 1, kind: input, shape index: {}]
  %s2 = inlined_call_operand.hbm [shape: bf16[128,128], index: 2, kind: input, shape index: {}]
  %s3 = inlined_call_operand.vmem [shape: f32[1,128], index: 3, kind: input, shape index: {}]
  %s4 = inlined_call_operand.hbm [shape: bf16[7,128,128], index: 4, kind: input, shape index: {}]
  %s5 = inlined_call_operand.hbm [shape: f32[7,1,128], index: 5, kind: input, shape index: {}]
  %s6 = inlined_call_operand.hbm [shape: bf16[256,1408], index: 6, kind: input, shape index: {}]
  %s7 = inlined_call_operand.vmem [shape: f32[1,1408], index: 7, kind: input, shape index: {}]
  %s8 = inlined_call_operand.hbm [shape: bf16[1408,128], index: 8, kind: input, shape index: {}]
  %s9 = inlined_call_operand.vmem [shape: f32[1,128], index: 9, kind: input, shape index: {}]
  %s10 = inlined_call_operand.hbm [shape: f32[1024,128], index: 10, kind: output, shape index: {}]
  %s11 = sld [smem:[#allocation0]]
  $region101: #{tpu_custom_call.1} parent=0
    _
  %s13 = ssub.s32 1, %s11
  %s14 = scalar_select 0, %s13, %s11
  $region1: #{tpu_custom_call.1} parent=0
    #allocation3 [shape = 'u8[262144]{0}', space=vmem, size = 0x40000, scoped, tag = 'input window, operand 0']
    #allocation4 [shape = 's32[2]{0}', space=sflag, size = 0x8, scoped, tag = 'scoped memory for tpu_custom_call.1']
    #allocation5 [shape = 's32[2]{0}', space=sflag, size = 0x8, scoped, tag = 'scoped memory for tpu_custom_call.1']
    #allocation6 [shape = 'u8[262144]{0}', space=vmem, size = 0x40000, scoped, tag = 'input window, operand 1']
    #allocation7 [shape = 's32[2]{0}', space=sflag, size = 0x8, scoped, tag = 'scoped memory for tpu_custom_call.1']
    #allocation8 [shape = 'u8[32768]{0}', space=vmem, size = 0x8000, scoped, tag = 'input window, operand 2, single buffered']
    #allocation9 [shape = 'u8[229376]{0}', space=vmem, size = 0x38000, scoped, tag = 'input window, operand 4, single buffered']
    #allocation10 [shape = 's32[1]{0}', space=sflag, size = 0x4, scoped, tag = 'scoped memory for tpu_custom_call.1']
    #allocation11 [shape = 'u8[3584]{0}', space=vmem, size = 0x1000, scoped, tag = 'input window, operand 5, single buffered']
    #allocation12 [shape = 'u8[720896]{0}', space=vmem, size = 0xb0000, scoped, tag = 'input window, operand 6, single buffered']
    #allocation13 [shape = 's32[1]{0}', space=sflag, size = 0x4, scoped, tag = 'scoped memory for tpu_custom_call.1']
    #allocation14 [shape = 'u8[360448]{0}', space=vmem, size = 0x58000, scoped, tag = 'input window, operand 8, single buffered']
    #allocation15 [shape = 'u8[262144]{0}', space=vmem, size = 0x40000, scoped, tag = 'output window, operand 0']
    %15 = vsyncpa [#allocation4], 0
    %s16 = scalar_lea.sflag [#allocation4], 1
    %17 = vsyncpa %s16, 0
    %18 = vsyncpa [#allocation7], 0
    %s19 = scalar_lea.sflag [#allocation7], 1
    %20 = vsyncpa %s19, 0
    %21 = vsyncpa [#allocation10], 0
    %22 = vsyncpa [#allocation13], 0
    %23 = vsyncpa [#allocation5], 0
    %s24 = scalar_lea.sflag [#allocation5], 1
    %25 = vsyncpa %s24, 0
    loop: start=0, step=1, limit=6
    $region2: #{tpu_custom_call.1} parent=1 // loop_pre_header
      _
    $region3: #{tpu_custom_call.1} parent=1 // loop_header
      %s27 = sphi 0, %s31
      %p28 = scmp.ge.s32.totalorder %s27, 6
      %s37 = sphi 0, %s39
      %s40 = sphi 0, %s37
      %s41 = sphi 0, %s40
      %s57 = sphi 0, %s41
      %s63 = sphi 0, %s65
      %s66 = sphi 0, %s63
      %s67 = sphi 0, %s66
      %s83 = sphi 0, %s67
      %s87 = sphi 0, %s87
      %s89 = sphi 0, %s87
      %s90 = sphi 0, %s89
      %s104 = sphi 0, %s90
      %s108 = sphi 0, %s108
      %s110 = sphi 0, %s108
      %s111 = sphi 0, %s110
      %s125 = sphi 0, %s111
      %s129 = sphi 0, %s129
      %s131 = sphi 0, %s129
      %s132 = sphi 0, %s131
      %s146 = sphi 0, %s132
      %s150 = sphi 0, %s150
      %s152 = sphi 0, %s150
      %s153 = sphi 0, %s152
      %s167 = sphi 0, %s153
      %s171 = sphi 0, %s171
      %s173 = sphi 0, %s171
      %s174 = sphi 0, %s173
      %s188 = sphi 0, %s174
      %s192 = sphi 0, %s192
      %s194 = sphi 0, %s192
      %s195 = sphi 0, %s194
      %s209 = sphi 0, %s195
      %s213 = sphi 0, %s213
      %s215 = sphi 0, %s213
      %s216 = sphi 0, %s215
      %s230 = sphi 0, %s216
      %s234 = sphi 0, %s234
      %s236 = sphi 0, %s234
      %s237 = sphi 0, %s236
      %s251 = sphi 0, %s237
      %s257 = sphi 0, %s259
      %s260 = sphi 0, %s257
      %s261 = sphi 0, %s260
      %s277 = sphi 0, %s261
    $region4: #{tpu_custom_call.1} parent=1 // loop_header_branch
      %30 = sbr.rel (%p28) target = $region8
    $region5: #{tpu_custom_call.1} parent=1 // loop_body
      %s32 = ssub.s32 %s27, 1
      %s33 = ssub.s32 %s27, 2
      %s34 = sadd.s32 %s27, 1
      %s35 = ssub.s32 %s27, %s34
      %p36 = scmp.eq.s32.totalorder %s35, 0
      %s38 = sadd.s32 %s37, 1
      %s39 = scalar_select %p36, %s37, %s38
      %p42 = pneg %p36
      %p43 = scmp.eq.s32.totalorder %s27, 3
      %p44 = por %p42, %p43
      %p45 = scmp.ne.s32.totalorder %s37, %s40
      %p46 = scmp.eq.s32.totalorder %s27, 0
      %p47 = por %p45, %p46
      %p48 = scmp.ne.s32.totalorder %s37, %s40
      %p49 = scmp.eq.s32.totalorder %s32, 3
      %p50 = por %p48, %p49
      %p51 = scmp.ne.s32.totalorder %s40, %s41
      %p52 = scmp.eq.s32.totalorder %s32, 0
      %p53 = por %p51, %p52
      %p54 = scmp.ne.s32.totalorder %s40, %s41
      %p55 = scmp.eq.s32.totalorder %s33, 3
      %p56 = por %p54, %p55
      %p58 = scmp.ne.s32.totalorder %s41, %s57
      %p59 = scmp.eq.s32.totalorder %s33, 0
      %p60 = por %p58, %p59
      %s61 = ssub.s32 %s27, %s34
      %p62 = scmp.eq.s32.totalorder %s61, 0
      %s64 = sadd.s32 %s63, 1
      %s65 = scalar_select %p62, %s63, %s64
      %p68 = pneg %p62
      %p69 = scmp.eq.s32.totalorder %s27, 3
      %p70 = por %p68, %p69
      %p71 = scmp.ne.s32.totalorder %s63, %s66
      %p72 = scmp.eq.s32.totalorder %s27, 0
      %p73 = por %p71, %p72
      %p74 = scmp.ne.s32.totalorder %s63, %s66
      %p75 = scmp.eq.s32.totalorder %s32, 3
      %p76 = por %p74, %p75
      %p77 = scmp.ne.s32.totalorder %s66, %s67
      %p78 = scmp.eq.s32.totalorder %s32, 0
      %p79 = por %p77, %p78
      %p80 = scmp.ne.s32.totalorder %s66, %s67
      %p81 = scmp.eq.s32.totalorder %s33, 3
      %p82 = por %p80, %p81
      %p84 = scmp.ne.s32.totalorder %s67, %s83
      %p85 = scmp.eq.s32.totalorder %s33, 0
      %p86 = por %p84, %p85
      %s88 = sadd.s32 %s87, 1
      %p91 = scmp.eq.s32.totalorder %s27, 3
      %p92 = scmp.ne.s32.totalorder %s87, %s89
      %p93 = scmp.eq.s32.totalorder %s27, 0
      %p94 = por %p92, %p93
      %p95 = scmp.ne.s32.totalorder %s87, %s89
      %p96 = scmp.eq.s32.totalorder %s32, 3
      %p97 = por %p95, %p96
      %p98 = scmp.ne.s32.totalorder %s89, %s90
      %p99 = scmp.eq.s32.totalorder %s32, 0
      %p100 = por %p98, %p99
      %p101 = scmp.ne.s32.totalorder %s89, %s90
      %p102 = scmp.eq.s32.totalorder %s33, 3
      %p103 = por %p101, %p102
      %p105 = scmp.ne.s32.totalorder %s90, %s104
      %p106 = scmp.eq.s32.totalorder %s33, 0
      %p107 = por %p105, %p106
      %s109 = sadd.s32 %s108, 1
      %p112 = scmp.eq.s32.totalorder %s27, 3
      %p113 = scmp.ne.s32.totalorder %s108, %s110
      %p114 = scmp.eq.s32.totalorder %s27, 0
      %p115 = por %p113, %p114
      %p116 = scmp.ne.s32.totalorder %s108, %s110
      %p117 = scmp.eq.s32.totalorder %s32, 3
      %p118 = por %p116, %p117
      %p119 = scmp.ne.s32.totalorder %s110, %s111
      %p120 = scmp.eq.s32.totalorder %s32, 0
      %p121 = por %p119, %p120
      %p122 = scmp.ne.s32.totalorder %s110, %s111
      %p123 = scmp.eq.s32.totalorder %s33, 3
      %p124 = por %p122, %p123
      %p126 = scmp.ne.s32.totalorder %s111, %s125
      %p127 = scmp.eq.s32.totalorder %s33, 0
      %p128 = por %p126, %p127
      %s130 = sadd.s32 %s129, 1
      %p133 = scmp.eq.s32.totalorder %s27, 3
      %p134 = scmp.ne.s32.totalorder %s129, %s131
      %p135 = scmp.eq.s32.totalorder %s27, 0
      %p136 = por %p134, %p135
      %p137 = scmp.ne.s32.totalorder %s129, %s131
      %p138 = scmp.eq.s32.totalorder %s32, 3
      %p139 = por %p137, %p138
      %p140 = scmp.ne.s32.totalorder %s131, %s132
      %p141 = scmp.eq.s32.totalorder %s32, 0
      %p142 = por %p140, %p141
      %p143 = scmp.ne.s32.totalorder %s131, %s132
      %p144 = scmp.eq.s32.totalorder %s33, 3
      %p145 = por %p143, %p144
      %p147 = scmp.ne.s32.totalorder %s132, %s146
      %p148 = scmp.eq.s32.totalorder %s33, 0
      %p149 = por %p147, %p148
      %s151 = sadd.s32 %s150, 1
      %p154 = scmp.eq.s32.totalorder %s27, 3
      %p155 = scmp.ne.s32.totalorder %s150, %s152
      %p156 = scmp.eq.s32.totalorder %s27, 0
      %p157 = por %p155, %p156
      %p158 = scmp.ne.s32.totalorder %s150, %s152
      %p159 = scmp.eq.s32.totalorder %s32, 3
      %p160 = por %p158, %p159
      %p161 = scmp.ne.s32.totalorder %s152, %s153
      %p162 = scmp.eq.s32.totalorder %s32, 0
      %p163 = por %p161, %p162
      %p164 = scmp.ne.s32.totalorder %s152, %s153
      %p165 = scmp.eq.s32.totalorder %s33, 3
      %p166 = por %p164, %p165
      %p168 = scmp.ne.s32.totalorder %s153, %s167
      %p169 = scmp.eq.s32.totalorder %s33, 0
      %p170 = por %p168, %p169
      %s172 = sadd.s32 %s171, 1
      %p175 = scmp.eq.s32.totalorder %s27, 3
      %p176 = scmp.ne.s32.totalorder %s171, %s173
      %p177 = scmp.eq.s32.totalorder %s27, 0
      %p178 = por %p176, %p177
      %p179 = scmp.ne.s32.totalorder %s171, %s173
      %p180 = scmp.eq.s32.totalorder %s32, 3
      %p181 = por %p179, %p180
      %p182 = scmp.ne.s32.totalorder %s173, %s174
      %p183 = scmp.eq.s32.totalorder %s32, 0
      %p184 = por %p182, %p183
      %p185 = scmp.ne.s32.totalorder %s173, %s174
      %p186 = scmp.eq.s32.totalorder %s33, 3
      %p187 = por %p185, %p186
      %p189 = scmp.ne.s32.totalorder %s174, %s188
      %p190 = scmp.eq.s32.totalorder %s33, 0
      %p191 = por %p189, %p190
      %s193 = sadd.s32 %s192, 1
      %p196 = scmp.eq.s32.totalorder %s27, 3
      %p197 = scmp.ne.s32.totalorder %s192, %s194
      %p198 = scmp.eq.s32.totalorder %s27, 0
      %p199 = por %p197, %p198
      %p200 = scmp.ne.s32.totalorder %s192, %s194
      %p201 = scmp.eq.s32.totalorder %s32, 3
      %p202 = por %p200, %p201
      %p203 = scmp.ne.s32.totalorder %s194, %s195
      %p204 = scmp.eq.s32.totalorder %s32, 0
      %p205 = por %p203, %p204
      %p206 = scmp.ne.s32.totalorder %s194, %s195
      %p207 = scmp.eq.s32.totalorder %s33, 3
      %p208 = por %p206, %p207
      %p210 = scmp.ne.s32.totalorder %s195, %s209
      %p211 = scmp.eq.s32.totalorder %s33, 0
      %p212 = por %p210, %p211
      %s214 = sadd.s32 %s213, 1
      %p217 = scmp.eq.s32.totalorder %s27, 3
      %p218 = scmp.ne.s32.totalorder %s213, %s215
      %p219 = scmp.eq.s32.totalorder %s27, 0
      %p220 = por %p218, %p219
      %p221 = scmp.ne.s32.totalorder %s213, %s215
      %p222 = scmp.eq.s32.totalorder %s32, 3
      %p223 = por %p221, %p222
      %p224 = scmp.ne.s32.totalorder %s215, %s216
      %p225 = scmp.eq.s32.totalorder %s32, 0
      %p226 = por %p224, %p225
      %p227 = scmp.ne.s32.totalorder %s215, %s216
      %p228 = scmp.eq.s32.totalorder %s33, 3
      %p229 = por %p227, %p228
      %p231 = scmp.ne.s32.totalorder %s216, %s230
      %p232 = scmp.eq.s32.totalorder %s33, 0
      %p233 = por %p231, %p232
      %s235 = sadd.s32 %s234, 1
      %p238 = scmp.eq.s32.totalorder %s27, 3
      %p239 = scmp.ne.s32.totalorder %s234, %s236
      %p240 = scmp.eq.s32.totalorder %s27, 0
      %p241 = por %p239, %p240
      %p242 = scmp.ne.s32.totalorder %s234, %s236
      %p243 = scmp.eq.s32.totalorder %s32, 3
      %p244 = por %p242, %p243
      %p245 = scmp.ne.s32.totalorder %s236, %s237
      %p246 = scmp.eq.s32.totalorder %s32, 0
      %p247 = por %p245, %p246
      %p248 = scmp.ne.s32.totalorder %s236, %s237
      %p249 = scmp.eq.s32.totalorder %s33, 3
      %p250 = por %p248, %p249
      %p252 = scmp.ne.s32.totalorder %s237, %s251
      %p253 = scmp.eq.s32.totalorder %s33, 0
      %p254 = por %p252, %p253
      %s255 = ssub.s32 %s27, %s34
      %p256 = scmp.eq.s32.totalorder %s255, 0
      %s258 = sadd.s32 %s257, 1
      %s259 = scalar_select %p256, %s257, %s258
      %p262 = pneg %p256
      %p263 = scmp.eq.s32.totalorder %s27, 3
      %p264 = por %p262, %p263
      %p265 = scmp.ne.s32.totalorder %s257, %s260
      %p266 = scmp.eq.s32.totalorder %s27, 0
      %p267 = por %p265, %p266
      %p268 = scmp.ne.s32.totalorder %s257, %s260
      %p269 = scmp.eq.s32.totalorder %s32, 3
      %p270 = por %p268, %p269
      %p271 = scmp.ne.s32.totalorder %s260, %s261
      %p272 = scmp.eq.s32.totalorder %s32, 0
      %p273 = por %p271, %p272
      %p274 = scmp.ne.s32.totalorder %s260, %s261
      %p275 = scmp.eq.s32.totalorder %s33, 3
      %p276 = por %p274, %p275
      %p278 = scmp.ne.s32.totalorder %s261, %s277
      %p279 = scmp.eq.s32.totalorder %s33, 0
      %p280 = por %p278, %p279
      %p281 = scmp.le.s32.totalorder 1, %s27
      %p282 = scmp.lt.s32.totalorder %s27, 5
      %p283 = pnand %p281, %p282
      %p284 = pneg %p283
      // Predicated region
      $region9: #{tpu_custom_call.1} parent=5 // pred_check
        _
      $region10: #{tpu_custom_call.1} parent=5 // pred_check_branch
        %286 = sbr.rel (%p283) target = $region12
      $region11: #{tpu_custom_call.1} parent=5 // pred_region
        %s287 = ssub.s32 %s27, 1
        // Predicated region
        $region13: #{tpu_custom_call.1} parent=11 // pred_check
          %p288 = pneg %p100
        $region14: #{tpu_custom_call.1} parent=11 // pred_check_branch
          %290 = sbr.rel (%p288) target = $region16
        $region15: #{tpu_custom_call.1} parent=11 // pred_region
          %s292 = ssub.s32 1024, 1024
          %293 = vsyncadd [#allocation7], %s292
          %s294 = sshll.u32 [#allocation8], 4
          %s295 = int_to_ptr.vmem [resolvable:$true] %s294
          %300 = dma.hbm_to_vmem [thread:$0]  %s2, 1024, %s295, [#allocation7], 64, 64, 4
        $region16: #{tpu_custom_call.1} parent=11 // pred_fallthru
          _
        // Predicated region
        $region17: #{tpu_custom_call.1} parent=11 // pred_check
          %p301 = pneg %p121
        $region18: #{tpu_custom_call.1} parent=11 // pred_check_branch
          %303 = sbr.rel (%p301) target = $region20
        $region19: #{tpu_custom_call.1} parent=11 // pred_region
          _
        $region20: #{tpu_custom_call.1} parent=11 // pred_fallthru
          _
        // Predicated region
        $region21: #{tpu_custom_call.1} parent=11 // pred_check
          %p304 = pneg %p142
        $region22: #{tpu_custom_call.1} parent=11 // pred_check_branch
          %306 = sbr.rel (%p304) target = $region24
        $region23: #{tpu_custom_call.1} parent=11 // pred_region
          %s308 = ssub.s32 7168, 7168
          %309 = vsyncadd [#allocation10], %s308
          %s310 = sshll.u32 [#allocation9], 4
          %s311 = int_to_ptr.vmem [resolvable:$true] %s310
          %316 = dma.hbm_to_vmem [thread:$0]  %s4, 7168, %s311, [#allocation10], 64, 64, 4
        $region24: #{tpu_custom_call.1} parent=11 // pred_fallthru
          _
        // Predicated region
        $region25: #{tpu_custom_call.1} parent=11 // pred_check
          %p317 = pneg %p163
        $region26: #{tpu_custom_call.1} parent=11 // pred_check_branch
          %319 = sbr.rel (%p317) target = $region28
        $region27: #{tpu_custom_call.1} parent=11 // pred_region
          %s321 = ssub.s32 112, 112
          %322 = vsyncadd [#allocation10], %s321
          %s323 = sshll.u32 [#allocation11], 4
          %s324 = int_to_ptr.vmem [resolvable:$true] %s323
          %329 = dma.hbm_to_vmem [thread:$0]  %s5, 112, %s324, [#allocation10], 16, 16, 1
        $region28: #{tpu_custom_call.1} parent=11 // pred_fallthru
          _
        // Predicated region
        $region29: #{tpu_custom_call.1} parent=11 // pred_check
          %p330 = pneg %p184
        $region30: #{tpu_custom_call.1} parent=11 // pred_check_branch
          %332 = sbr.rel (%p330) target = $region32
        $region31: #{tpu_custom_call.1} parent=11 // pred_region
          %s334 = ssub.s32 22528, 22528
          %335 = vsyncadd [#allocation13], %s334
          %s336 = sshll.u32 [#allocation12], 4
          %s337 = int_to_ptr.vmem [resolvable:$true] %s336
          %342 = dma.hbm_to_vmem [thread:$0]  %s6, 22528, %s337, [#allocation13], 704, 704, 44
        $region32: #{tpu_custom_call.1} parent=11 // pred_fallthru
          _
        // Predicated region
        $region33: #{tpu_custom_call.1} parent=11 // pred_check
          %p343 = pneg %p205
        $region34: #{tpu_custom_call.1} parent=11 // pred_check_branch
          %345 = sbr.rel (%p343) target = $region36
        $region35: #{tpu_custom_call.1} parent=11 // pred_region
          _
        $region36: #{tpu_custom_call.1} parent=11 // pred_fallthru
          _
        // Predicated region
        $region37: #{tpu_custom_call.1} parent=11 // pred_check
          %p346 = pneg %p226
        $region38: #{tpu_custom_call.1} parent=11 // pred_check_branch
          %348 = sbr.rel (%p346) target = $region40
        $region39: #{tpu_custom_call.1} parent=11 // pred_region
          %s350 = ssub.s32 11264, 11264
          %351 = vsyncadd [#allocation13], %s350
          %s352 = sshll.u32 [#allocation14], 4
          %s353 = int_to_ptr.vmem [resolvable:$true] %s352
          %358 = dma.hbm_to_vmem [thread:$0]  %s8, 11264, %s353, [#allocation13], 64, 64, 4
        $region40: #{tpu_custom_call.1} parent=11 // pred_fallthru
          _
        // Predicated region
        $region41: #{tpu_custom_call.1} parent=11 // pred_check
          %p359 = pneg %p247
        $region42: #{tpu_custom_call.1} parent=11 // pred_check_branch
          %361 = sbr.rel (%p359) target = $region44
        $region43: #{tpu_custom_call.1} parent=11 // pred_region
          _
        $region44: #{tpu_custom_call.1} parent=11 // pred_fallthru
          _
      $region12: #{tpu_custom_call.1} parent=5 // pred_fallthru
        _
      %p362 = scmp.lt.s32.totalorder %s27, 4
      // Predicated region
      $region45: #{tpu_custom_call.1} parent=5 // pred_check
        %p363 = pneg %p362
      $region46: #{tpu_custom_call.1} parent=5 // pred_check_branch
        %365 = sbr.rel (%p363) target = $region48
      $region47: #{tpu_custom_call.1} parent=5 // pred_region
        // Predicated region
        $region49: #{tpu_custom_call.1} parent=47 // pred_check
          %p366 = pneg %p47
        $region50: #{tpu_custom_call.1} parent=47 // pred_check_branch
          %368 = sbr.rel (%p366) target = $region52
        $region51: #{tpu_custom_call.1} parent=47 // pred_region
          %s369 = sand.u32 %s37, 1
          %s370 = scalar_lea.sflag [#allocation4], %s369
          %s371 = sand.u32 %s37, 1
          %s372 = smul.addr %s371, 256
          %s373 = scalar_lea.vmem [#allocation3], %s372
          %s374 = smul.u32 32, %s27
          %s376 = ssub.s32 4096, 4096
          %377 = vsyncadd %s370, %s376
          %s378 = smul.addr %s374, 128
          %s379 = scalar_lea.hbm %s0, %s378
          %s380 = sshll.u32 %s373, 4
          %s381 = int_to_ptr.vmem [resolvable:$true] %s380
          %386 = dma.hbm_to_vmem [thread:$0]  %s379, 4096, %s381, %s370, 128, 128, 8
        $region52: #{tpu_custom_call.1} parent=47 // pred_fallthru
          _
        // Predicated region
        $region53: #{tpu_custom_call.1} parent=47 // pred_check
          %p387 = pneg %p73
        $region54: #{tpu_custom_call.1} parent=47 // pred_check_branch
          %389 = sbr.rel (%p387) target = $region56
        $region55: #{tpu_custom_call.1} parent=47 // pred_region
          %s390 = sand.u32 %s27, 1
          %s391 = scalar_lea.sflag [#allocation7], %s390
          %s392 = sand.u32 %s63, 1
          %s393 = smul.addr %s392, 256
          %s394 = scalar_lea.vmem [#allocation6], %s393
          %s395 = smul.u32 32, %s27
          %s397 = ssub.s32 4096, 4096
          %398 = vsyncadd %s391, %s397
          %s399 = smul.addr %s395, 128
          %s400 = scalar_lea.hbm %s1, %s399
          %s401 = sshll.u32 %s394, 4
          %s402 = int_to_ptr.vmem [resolvable:$true] %s401
          %407 = dma.hbm_to_vmem [thread:$0]  %s400, 4096, %s402, %s391, 128, 128, 8
        $region56: #{tpu_custom_call.1} parent=47 // pred_fallthru
          _
      $region48: #{tpu_custom_call.1} parent=5 // pred_fallthru
        _
      %p408 = scmp.le.s32.totalorder 1, %s27
      %p409 = scmp.lt.s32.totalorder %s27, 5
      %p410 = pnand %p408, %p409
      %p411 = pneg %p410
      // Predicated region
      $region57: #{tpu_custom_call.1} parent=5 // pred_check
        _
      $region58: #{tpu_custom_call.1} parent=5 // pred_check_branch
        %413 = sbr.rel (%p410) target = $region60
      $region59: #{tpu_custom_call.1} parent=5 // pred_region
        %s414 = ssub.s32 %s27, 1
        %s415 = sand.u32 %s40, 1
        %s416 = scalar_lea.sflag [#allocation4], %s415
        %s417 = sand.u32 %s40, 1
        %s418 = smul.addr %s417, 256
        %s419 = scalar_lea.vmem [#allocation3], %s418
        // Predicated region
        $region61: #{tpu_custom_call.1} parent=59 // pred_check
          %p420 = pneg %p53
        $region62: #{tpu_custom_call.1} parent=59 // pred_check_branch
          %422 = sbr.rel (%p420) target = $region64
        $region63: #{tpu_custom_call.1} parent=59 // pred_region
          %423 = dma.done %s416, 4096
        $region64: #{tpu_custom_call.1} parent=59 // pred_fallthru
          _
        %s424 = sand.u32 %s32, 1
        %s425 = scalar_lea.sflag [#allocation7], %s424
        %s426 = sand.u32 %s66, 1
        %s427 = smul.addr %s426, 256
        %s428 = scalar_lea.vmem [#allocation6], %s427
        // Predicated region
        $region65: #{tpu_custom_call.1} parent=59 // pred_check
          %p429 = pneg %p79
        $region66: #{tpu_custom_call.1} parent=59 // pred_check_branch
          %431 = sbr.rel (%p429) target = $region68
        $region67: #{tpu_custom_call.1} parent=59 // pred_region
          %432 = dma.done %s425, 4096
        $region68: #{tpu_custom_call.1} parent=59 // pred_fallthru
          _
        // Predicated region
        $region69: #{tpu_custom_call.1} parent=59 // pred_check
          %p433 = pneg %p100
        $region70: #{tpu_custom_call.1} parent=59 // pred_check_branch
          %435 = sbr.rel (%p433) target = $region72
        $region71: #{tpu_custom_call.1} parent=59 // pred_region
          %436 = dma.done [#allocation7], 1024
        $region72: #{tpu_custom_call.1} parent=59 // pred_fallthru
          _
        // Predicated region
        $region73: #{tpu_custom_call.1} parent=59 // pred_check
          %p437 = pneg %p142
        $region74: #{tpu_custom_call.1} parent=59 // pred_check_branch
          %439 = sbr.rel (%p437) target = $region76
        $region75: #{tpu_custom_call.1} parent=59 // pred_region
          %440 = dma.done [#allocation10], 7168
        $region76: #{tpu_custom_call.1} parent=59 // pred_fallthru
          _
        // Predicated region
        $region77: #{tpu_custom_call.1} parent=59 // pred_check
          %p441 = pneg %p163
        $region78: #{tpu_custom_call.1} parent=59 // pred_check_branch
          %443 = sbr.rel (%p441) target = $region80
        $region79: #{tpu_custom_call.1} parent=59 // pred_region
          %444 = dma.done [#allocation10], 112
        $region80: #{tpu_custom_call.1} parent=59 // pred_fallthru
          _
        // Predicated region
        $region81: #{tpu_custom_call.1} parent=59 // pred_check
          %p445 = pneg %p184
        $region82: #{tpu_custom_call.1} parent=59 // pred_check_branch
          %447 = sbr.rel (%p445) target = $region84
        $region83: #{tpu_custom_call.1} parent=59 // pred_region
          %448 = dma.done [#allocation13], 22528
        $region84: #{tpu_custom_call.1} parent=59 // pred_fallthru
          _
        // Predicated region
        $region85: #{tpu_custom_call.1} parent=59 // pred_check
          %p449 = pneg %p226
        $region86: #{tpu_custom_call.1} parent=59 // pred_check_branch
          %451 = sbr.rel (%p449) target = $region88
        $region87: #{tpu_custom_call.1} parent=59 // pred_region
          %452 = dma.done [#allocation13], 11264
        $region88: #{tpu_custom_call.1} parent=59 // pred_fallthru
          _
        %s453 = sand.u32 %s40, 1
        %s454 = scalar_lea.sflag [#allocation4], %s453
        %s455 = sand.u32 %s40, 1
        %s456 = smul.addr %s455, 256
        %s457 = scalar_lea.vmem [#allocation3], %s456
        %p458 = pneg %p53
        %p459 = pneg %p50
        %s460 = sand.u32 %s32, 1
        %s461 = scalar_lea.sflag [#allocation7], %s460
        %s462 = sand.u32 %s66, 1
        %s463 = smul.addr %s462, 256
        %s464 = scalar_lea.vmem [#allocation6], %s463
        %p465 = pneg %p79
        %p466 = pneg %p76
        %p467 = pneg %p100
        %p468 = pneg %p97
        %p469 = pneg %p121
        %p470 = pneg %p118
        %p471 = pneg %p142
        %p472 = pneg %p139
        %p473 = pneg %p163
        %p474 = pneg %p160
        %p475 = pneg %p184
        %p476 = pneg %p181
        %p477 = pneg %p205
        %p478 = pneg %p202
        %p479 = pneg %p226
        %p480 = pneg %p223
        %p481 = pneg %p247
        %p482 = pneg %p244
        %p483 = pneg %p273
        %p484 = pneg %p270
        %s485 = sand.u32 %s260, 1
        %s486 = scalar_lea.sflag [#allocation5], %s485
        %s487 = sand.u32 %s260, 1
        %s488 = smul.addr %s487, 256
        %s489 = scalar_lea.vmem [#allocation15], %s488
        %s490 = smul.u32 32, %s32
        %s491 = smul.u32 32, %s32
        %s492 = smul.u32 32, %s32
        %v494 = vld [vmem:[%s419] sm:$0xff]
        %v495 = vld [vmem:[%s419 + $0x8] sm:$0xff]
        %v496 = vld [vmem:[%s419 + $0x10] sm:$0xff]
        %v497 = vld [vmem:[%s419 + $0x18] sm:$0xff]
        %v498 = vld [vmem:[%s419 + $0x20] sm:$0xff]
        %v499 = vld [vmem:[%s419 + $0x28] sm:$0xff]
        %v500 = vld [vmem:[%s419 + $0x30] sm:$0xff]
        %v501 = vld [vmem:[%s419 + $0x38] sm:$0xff]
        %v502 = vld [vmem:[%s419 + $0x40] sm:$0xff]
        %v503 = vld [vmem:[%s419 + $0x48] sm:$0xff]
        %v504 = vld [vmem:[%s419 + $0x50] sm:$0xff]
        %v505 = vld [vmem:[%s419 + $0x58] sm:$0xff]
        %v506 = vld [vmem:[%s419 + $0x60] sm:$0xff]
        %v507 = vld [vmem:[%s419 + $0x68] sm:$0xff]
        %v508 = vld [vmem:[%s419 + $0x70] sm:$0xff]
        %v509 = vld [vmem:[%s419 + $0x78] sm:$0xff]
        %v510 = vld [vmem:[%s419 + $0x80] sm:$0xff]
        %v511 = vld [vmem:[%s419 + $0x88] sm:$0xff]
        %v512 = vld [vmem:[%s419 + $0x90] sm:$0xff]
        %v513 = vld [vmem:[%s419 + $0x98] sm:$0xff]
        %v514 = vld [vmem:[%s419 + $0xa0] sm:$0xff]
        %v515 = vld [vmem:[%s419 + $0xa8] sm:$0xff]
        %v516 = vld [vmem:[%s419 + $0xb0] sm:$0xff]
        %v517 = vld [vmem:[%s419 + $0xb8] sm:$0xff]
        %v518 = vld [vmem:[%s419 + $0xc0] sm:$0xff]
        %v519 = vld [vmem:[%s419 + $0xc8] sm:$0xff]
        %v520 = vld [vmem:[%s419 + $0xd0] sm:$0xff]
        %v521 = vld [vmem:[%s419 + $0xd8] sm:$0xff]
        %v522 = vld [vmem:[%s419 + $0xe0] sm:$0xff]
        %v523 = vld [vmem:[%s419 + $0xe8] sm:$0xff]
        %v524 = vld [vmem:[%s419 + $0xf0] sm:$0xff]
        %v525 = vld [vmem:[%s419 + $0xf8] sm:$0xff]
        %v526 = vpack.c.bf16 %v495, %v494
        %v527 = vpack.c.bf16 %v497, %v496
        %v528 = vpack.c.bf16 %v499, %v498
        %v529 = vpack.c.bf16 %v501, %v500
        %v530 = vpack.c.bf16 %v503, %v502
        %v531 = vpack.c.bf16 %v505, %v504
        %v532 = vpack.c.bf16 %v507, %v506
        %v533 = vpack.c.bf16 %v509, %v508
        %v534 = vpack.c.bf16 %v511, %v510
        %v535 = vpack.c.bf16 %v513, %v512
        %v536 = vpack.c.bf16 %v515, %v514
        %v537 = vpack.c.bf16 %v517, %v516
        %v538 = vpack.c.bf16 %v519, %v518
        %v539 = vpack.c.bf16 %v521, %v520
        %v540 = vpack.c.bf16 %v523, %v522
        %v541 = vpack.c.bf16 %v525, %v524
        %v542 = vld [vmem:[#allocation8] sm:$0xf]
        %v543 = vld [vmem:[#allocation8 + $0x4] sm:$0xf]
        %v544 = vld [vmem:[#allocation8 + $0x8] sm:$0xf]
        %v545 = vld [vmem:[#allocation8 + $0xc] sm:$0xf]
        %v546 = vld [vmem:[#allocation8 + $0x10] sm:$0xf]
        %v547 = vld [vmem:[#allocation8 + $0x14] sm:$0xf]
        %v548 = vld [vmem:[#allocation8 + $0x18] sm:$0xf]
        %v549 = vld [vmem:[#allocation8 + $0x1c] sm:$0xf]
        %v550 = vld [vmem:[#allocation8 + $0x20] sm:$0xf]
        %v551 = vld [vmem:[#allocation8 + $0x24] sm:$0xf]
        %v552 = vld [vmem:[#allocation8 + $0x28] sm:$0xf]
        %v553 = vld [vmem:[#allocation8 + $0x2c] sm:$0xf]
        %v554 = vld [vmem:[#allocation8 + $0x30] sm:$0xf]
        %v555 = vld [vmem:[#allocation8 + $0x34] sm:$0xf]
        %v556 = vld [vmem:[#allocation8 + $0x38] sm:$0xf]
        %v557 = vld [vmem:[#allocation8 + $0x3c] sm:$0xf]
        %v558 = vld [vmem:[%s3] sm:$0x1]
        %v560 = vlaneseq
        %v561 = vshrl.u32 %v560, 7
        %v562 = vsub.s32 0, %v561
        %v563 = vrot.slane %v558, %v562
        %v581 = vunpack.c.l.b16 %v542
        %v582 = vunpack.c.l.b16 %v543
        %v583 = vunpack.c.l.b16 %v544
        %v584 = vunpack.c.l.b16 %v545
        %v585 = vunpack.c.l.b16 %v546
        %v586 = vunpack.c.l.b16 %v547
        %v587 = vunpack.c.l.b16 %v548
        %v588 = vunpack.c.l.b16 %v549
        %v589 = vunpack.c.l.b16 %v550
        %v590 = vunpack.c.l.b16 %v551
        %v591 = vunpack.c.l.b16 %v552
        %v592 = vunpack.c.l.b16 %v553
        %v593 = vunpack.c.l.b16 %v554
        %v594 = vunpack.c.l.b16 %v555
        %v595 = vunpack.c.l.b16 %v556
        %v596 = vunpack.c.l.b16 %v557
        %v597 = vpack.c.b16 %v582, %v581
        %v598 = vpack.c.b16 %v584, %v583
        %v599 = vpack.c.b16 %v586, %v585
        %v600 = vpack.c.b16 %v588, %v587
        %v601 = vpack.c.b16 %v590, %v589
        %v602 = vpack.c.b16 %v592, %v591
        %v603 = vpack.c.b16 %v594, %v593
        %v604 = vpack.c.b16 %v596, %v595
        %613 = vmatprep.subr.bf16.mxu0 0
        %614 = vmatpush1.bf16.msra.mxu0 %v604
        %615 = vmatprep.subr.bf16.mxu0 0
        %616 = vmatpush1.bf16.msra.mxu0 %v603
        %617 = vmatprep.subr.bf16.mxu0 0
        %618 = vmatpush1.bf16.msra.mxu0 %v602
        %619 = vmatprep.subr.bf16.mxu0 0
        %620 = vmatpush1.bf16.msra.mxu0 %v601
        %621 = vmatprep.subr.bf16.mxu0 0
        %622 = vmatpush1.bf16.msra.mxu0 %v600
        %623 = vmatprep.subr.bf16.mxu0 0
        %624 = vmatpush1.bf16.msra.mxu0 %v599
        %625 = vmatprep.subr.bf16.mxu0 0
        %626 = vmatpush1.bf16.msra.mxu0 %v598
        %627 = vmatprep.subr.bf16.mxu0 0
        %628 = vmatpush1.bf16.msra.mxu0 %v597
        %629 = vmatprep.subr.bf16.mxu0 0
        %630 = vmatpush2.bf16.msra.mxu0 0
        %631 = vmatprep.subr.bf16.mxu0 0
        %632 = vmatpush2.bf16.msra.mxu0 0
        %633 = vmatprep.subr.bf16.mxu0 0
        %634 = vmatpush2.bf16.msra.mxu0 0
        %635 = vmatprep.subr.bf16.mxu0 0
        %636 = vmatpush2.bf16.msra.mxu0 0
        %637 = vmatprep.subr.bf16.mxu0 0
        %638 = vmatpush2.bf16.msra.mxu0 0
        %639 = vmatprep.subr.bf16.mxu0 0
        %640 = vmatpush2.bf16.msra.mxu0 0
        %641 = vmatprep.subr.bf16.mxu0 0
        %642 = vmatpush2.bf16.msra.mxu0 0
        %643 = vmatprep.subr.bf16.mxu0 0
        %644 = vmatpush2.bf16.msra.mxu0 0
        %645 = vmatprep.mubr.bf16.mxu0 0
        %646 = vmatmul.mubr.bf16.gmra.mxu0 %v526
        %v647 = vpop.f32.mrf.mxu0
        %v648 = vadd.f32 %v563, %v647
        %v649 = vpop.f32.mrf.mxu0
        %v650 = vpop.f32.mrf.mxu0
        %v651 = vadd.f32 %v563, %v650
        %v652 = vpop.f32.mrf.mxu0
        %653 = vmatprep.mubr.bf16.mxu0 0
        %654 = vmatmul.mubr.bf16.gmra.mxu0 %v527
        %v655 = vpop.f32.mrf.mxu0
        %v656 = vadd.f32 %v563, %v655
        %v657 = vpop.f32.mrf.mxu0
        %v658 = vpop.f32.mrf.mxu0
        %v659 = vadd.f32 %v563, %v658
        %v660 = vpop.f32.mrf.mxu0
        %661 = vmatprep.mubr.bf16.mxu0 0
        %662 = vmatmul.mubr.bf16.gmra.mxu0 %v528
        %v663 = vpop.f32.mrf.mxu0
        %v664 = vadd.f32 %v563, %v663
        %v665 = vpop.f32.mrf.mxu0
        %v666 = vpop.f32.mrf.mxu0
        %v667 = vadd.f32 %v563, %v666
        %v668 = vpop.f32.mrf.mxu0
        %669 = vmatprep.mubr.bf16.mxu0 0
        %670 = vmatmul.mubr.bf16.gmra.mxu0 %v529
        %v671 = vpop.f32.mrf.mxu0
        %v672 = vadd.f32 %v563, %v671
        %v673 = vpop.f32.mrf.mxu0
        %v674 = vpop.f32.mrf.mxu0
        %v675 = vadd.f32 %v563, %v674
        %v676 = vpop.f32.mrf.mxu0
        %677 = vmatprep.mubr.bf16.mxu0 0
        %678 = vmatmul.mubr.bf16.gmra.mxu0 %v530
        %v679 = vpop.f32.mrf.mxu0
        %v680 = vadd.f32 %v563, %v679
        %v681 = vpop.f32.mrf.mxu0
        %v682 = vpop.f32.mrf.mxu0
        %v683 = vadd.f32 %v563, %v682
        %v684 = vpop.f32.mrf.mxu0
        %685 = vmatprep.mubr.bf16.mxu0 0
        %686 = vmatmul.mubr.bf16.gmra.mxu0 %v531
        %v687 = vpop.f32.mrf.mxu0
        %v688 = vadd.f32 %v563, %v687
        %v689 = vpop.f32.mrf.mxu0
        %v690 = vpop.f32.mrf.mxu0
        %v691 = vadd.f32 %v563, %v690
        %v692 = vpop.f32.mrf.mxu0
        %693 = vmatprep.mubr.bf16.mxu0 0
        %694 = vmatmul.mubr.bf16.gmra.mxu0 %v532
        %v695 = vpop.f32.mrf.mxu0
        %v696 = vadd.f32 %v563, %v695
        %v697 = vpop.f32.mrf.mxu0
        %v698 = vpop.f32.mrf.mxu0
        %v699 = vadd.f32 %v563, %v698
        %v700 = vpop.f32.mrf.mxu0
        %701 = vmatprep.mubr.bf16.mxu0 0
        %702 = vmatmul.mubr.bf16.gmra.mxu0 %v533
        %v703 = vpop.f32.mrf.mxu0
        %v704 = vadd.f32 %v563, %v703
        %v705 = vpop.f32.mrf.mxu0
        %v706 = vpop.f32.mrf.mxu0
        %v707 = vadd.f32 %v563, %v706
        %v708 = vpop.f32.mrf.mxu0
        %709 = vmatprep.mubr.bf16.mxu0 0
        %710 = vmatmul.mubr.bf16.gmra.mxu0 %v534
        %v711 = vpop.f32.mrf.mxu0
        %v712 = vadd.f32 %v563, %v711
        %v713 = vpop.f32.mrf.mxu0
        %v714 = vpop.f32.mrf.mxu0
        %v715 = vadd.f32 %v563, %v714
        %v716 = vpop.f32.mrf.mxu0
        %717 = vmatprep.mubr.bf16.mxu0 0
        %718 = vmatmul.mubr.bf16.gmra.mxu0 %v535
        %v719 = vpop.f32.mrf.mxu0
        %v720 = vadd.f32 %v563, %v719
        %v721 = vpop.f32.mrf.mxu0
        %v722 = vpop.f32.mrf.mxu0
        %v723 = vadd.f32 %v563, %v722
        %v724 = vpop.f32.mrf.mxu0
        %725 = vmatprep.mubr.bf16.mxu0 0
        %726 = vmatmul.mubr.bf16.gmra.mxu0 %v536
        %v727 = vpop.f32.mrf.mxu0
        %v728 = vadd.f32 %v563, %v727
        %v729 = vpop.f32.mrf.mxu0
        %v730 = vpop.f32.mrf.mxu0
        %v731 = vadd.f32 %v563, %v730
        %v732 = vpop.f32.mrf.mxu0
        %733 = vmatprep.mubr.bf16.mxu0 0
        %734 = vmatmul.mubr.bf16.gmra.mxu0 %v537
        %v735 = vpop.f32.mrf.mxu0
        %v736 = vadd.f32 %v563, %v735
        %v737 = vpop.f32.mrf.mxu0
        %v738 = vpop.f32.mrf.mxu0
        %v739 = vadd.f32 %v563, %v738
        %v740 = vpop.f32.mrf.mxu0
        %741 = vmatprep.mubr.bf16.mxu0 0
        %742 = vmatmul.mubr.bf16.gmra.mxu0 %v538
        %v743 = vpop.f32.mrf.mxu0
        %v744 = vadd.f32 %v563, %v743
        %v745 = vpop.f32.mrf.mxu0
        %v746 = vpop.f32.mrf.mxu0
        %v747 = vadd.f32 %v563, %v746
        %v748 = vpop.f32.mrf.mxu0
        %749 = vmatprep.mubr.bf16.mxu0 0
        %750 = vmatmul.mubr.bf16.gmra.mxu0 %v539
        %v751 = vpop.f32.mrf.mxu0
        %v752 = vadd.f32 %v563, %v751
        %v753 = vpop.f32.mrf.mxu0
        %v754 = vpop.f32.mrf.mxu0
        %v755 = vadd.f32 %v563, %v754
        %v756 = vpop.f32.mrf.mxu0
        %757 = vmatprep.mubr.bf16.mxu0 0
        %758 = vmatmul.mubr.bf16.gmra.mxu0 %v540
        %v759 = vpop.f32.mrf.mxu0
        %v760 = vadd.f32 %v563, %v759
        %v761 = vpop.f32.mrf.mxu0
        %v762 = vpop.f32.mrf.mxu0
        %v763 = vadd.f32 %v563, %v762
        %v764 = vpop.f32.mrf.mxu0
        %765 = vmatprep.mubr.bf16.mxu0 0
        %766 = vmatmul.mubr.bf16.gmra.mxu0 %v541
        %v767 = vpop.f32.mrf.mxu0
        %v768 = vadd.f32 %v563, %v767
        %v769 = vpop.f32.mrf.mxu0
        %v770 = vpop.f32.mrf.mxu0
        %v771 = vadd.f32 %v563, %v770
        %v772 = vpop.f32.mrf.mxu0
        %773 = vdwg.mxu0
        %v774 = vmax.f32 %v648, 0.0
        %v775 = vmax.f32 %v651, 0.0
        %v776 = vmax.f32 %v656, 0.0
        %v777 = vmax.f32 %v659, 0.0
        %v778 = vmax.f32 %v664, 0.0
        %v779 = vmax.f32 %v667, 0.0
        %v780 = vmax.f32 %v672, 0.0
        %v781 = vmax.f32 %v675, 0.0
        %v782 = vmax.f32 %v680, 0.0
        %v783 = vmax.f32 %v683, 0.0
        %v784 = vmax.f32 %v688, 0.0
        %v785 = vmax.f32 %v691, 0.0
        %v786 = vmax.f32 %v696, 0.0
        %v787 = vmax.f32 %v699, 0.0
        %v788 = vmax.f32 %v704, 0.0
        %v789 = vmax.f32 %v707, 0.0
        %v790 = vmax.f32 %v712, 0.0
        %v791 = vmax.f32 %v715, 0.0
        %v792 = vmax.f32 %v720, 0.0
        %v793 = vmax.f32 %v723, 0.0
        %v794 = vmax.f32 %v728, 0.0
        %v795 = vmax.f32 %v731, 0.0
        %v796 = vmax.f32 %v736, 0.0
        %v797 = vmax.f32 %v739, 0.0
        %v798 = vmax.f32 %v744, 0.0
        %v799 = vmax.f32 %v747, 0.0
        %v800 = vmax.f32 %v752, 0.0
        %v801 = vmax.f32 %v755, 0.0
        %v802 = vmax.f32 %v760, 0.0
        %v803 = vmax.f32 %v763, 0.0
        %v804 = vmax.f32 %v768, 0.0
        %v805 = vmax.f32 %v771, 0.0
        %v806 = vpack.c.bf16 %v775, %v774
        %v807 = vpack.c.bf16 %v777, %v776
        %v808 = vpack.c.bf16 %v779, %v778
        %v809 = vpack.c.bf16 %v781, %v780
        %v810 = vpack.c.bf16 %v783, %v782
        %v811 = vpack.c.bf16 %v785, %v784
        %v812 = vpack.c.bf16 %v787, %v786
        %v813 = vpack.c.bf16 %v789, %v788
        %v814 = vpack.c.bf16 %v791, %v790
        %v815 = vpack.c.bf16 %v793, %v792
        %v816 = vpack.c.bf16 %v795, %v794
        %v817 = vpack.c.bf16 %v797, %v796
        %v818 = vpack.c.bf16 %v799, %v798
        %v819 = vpack.c.bf16 %v801, %v800
        %v820 = vpack.c.bf16 %v803, %v802
        %v821 = vpack.c.bf16 %v805, %v804
        %v822 = vld [vmem:[#allocation9] sm:$0xf]
        %v823 = vld [vmem:[#allocation9 + $0x4] sm:$0xf]
        %v824 = vld [vmem:[#allocation9 + $0x8] sm:$0xf]
        %v825 = vld [vmem:[#allocation9 + $0xc] sm:$0xf]
        %v826 = vld [vmem:[#allocation9 + $0x10] sm:$0xf]
        %v827 = vld [vmem:[#allocation9 + $0x14] sm:$0xf]
        %v828 = vld [vmem:[#allocation9 + $0x18] sm:$0xf]
        %v829 = vld [vmem:[#allocation9 + $0x1c] sm:$0xf]
        %v830 = vld [vmem:[#allocation9 + $0x20] sm:$0xf]
        %v831 = vld [vmem:[#allocation9 + $0x24] sm:$0xf]
        %v832 = vld [vmem:[#allocation9 + $0x28] sm:$0xf]
        %v833 = vld [vmem:[#allocation9 + $0x2c] sm:$0xf]
        %v834 = vld [vmem:[#allocation9 + $0x30] sm:$0xf]
        %v835 = vld [vmem:[#allocation9 + $0x34] sm:$0xf]
        %v836 = vld [vmem:[#allocation9 + $0x38] sm:$0xf]
        %v837 = vld [vmem:[#allocation9 + $0x3c] sm:$0xf]
        %v838 = vld [vmem:[#allocation11] sm:$0x1]
        %v840 = vlaneseq
        %v841 = vshrl.u32 %v840, 7
        %v842 = vsub.s32 0, %v841
        %v843 = vrot.slane %v838, %v842
        %v861 = vunpack.c.l.b16 %v822
        %v862 = vunpack.c.l.b16 %v823
        %v863 = vunpack.c.l.b16 %v824
        %v864 = vunpack.c.l.b16 %v825
        %v865 = vunpack.c.l.b16 %v826
        %v866 = vunpack.c.l.b16 %v827
        %v867 = vunpack.c.l.b16 %v828
        %v868 = vunpack.c.l.b16 %v829
        %v869 = vunpack.c.l.b16 %v830
        %v870 = vunpack.c.l.b16 %v831
        %v871 = vunpack.c.l.b16 %v832
        %v872 = vunpack.c.l.b16 %v833
        %v873 = vunpack.c.l.b16 %v834
        %v874 = vunpack.c.l.b16 %v835
        %v875 = vunpack.c.l.b16 %v836
        %v876 = vunpack.c.l.b16 %v837
        %v877 = vpack.c.b16 %v862, %v861
        %v878 = vpack.c.b16 %v864, %v863
        %v879 = vpack.c.b16 %v866, %v865
        %v880 = vpack.c.b16 %v868, %v867
        %v881 = vpack.c.b16 %v870, %v869
        %v882 = vpack.c.b16 %v872, %v871
        %v883 = vpack.c.b16 %v874, %v873
        %v884 = vpack.c.b16 %v876, %v875
        %893 = vmatprep.subr.bf16.mxu0 0
        %894 = vmatpush1.bf16.msra.mxu0 %v884
        %895 = vmatprep.subr.bf16.mxu0 0
        %896 = vmatpush1.bf16.msra.mxu0 %v883
        %897 = vmatprep.subr.bf16.mxu0 0
        %898 = vmatpush1.bf16.msra.mxu0 %v882
        %899 = vmatprep.subr.bf16.mxu0 0
        %900 = vmatpush1.bf16.msra.mxu0 %v881
        %901 = vmatprep.subr.bf16.mxu0 0
        %902 = vmatpush1.bf16.msra.mxu0 %v880
        %903 = vmatprep.subr.bf16.mxu0 0
        %904 = vmatpush1.bf16.msra.mxu0 %v879
        %905 = vmatprep.subr.bf16.mxu0 0
        %906 = vmatpush1.bf16.msra.mxu0 %v878
        %907 = vmatprep.subr.bf16.mxu0 0
        %908 = vmatpush1.bf16.msra.mxu0 %v877
        %909 = vmatprep.subr.bf16.mxu0 0
        %910 = vmatpush2.bf16.msra.mxu0 0
        %911 = vmatprep.subr.bf16.mxu0 0
        %912 = vmatpush2.bf16.msra.mxu0 0
        %913 = vmatprep.subr.bf16.mxu0 0
        %914 = vmatpush2.bf16.msra.mxu0 0
        %915 = vmatprep.subr.bf16.mxu0 0
        %916 = vmatpush2.bf16.msra.mxu0 0
        %917 = vmatprep.subr.bf16.mxu0 0
        %918 = vmatpush2.bf16.msra.mxu0 0
        %919 = vmatprep.subr.bf16.mxu0 0
        %920 = vmatpush2.bf16.msra.mxu0 0
        %921 = vmatprep.subr.bf16.mxu0 0
        %922 = vmatpush2.bf16.msra.mxu0 0
        %923 = vmatprep.subr.bf16.mxu0 0
        %924 = vmatpush2.bf16.msra.mxu0 0
        %925 = vmatprep.mubr.bf16.mxu0 0
        %926 = vmatmul.mubr.bf16.gmra.mxu0 %v806
        %v927 = vpop.f32.mrf.mxu0
        %v928 = vadd.f32 %v843, %v927
        %v929 = vpop.f32.mrf.mxu0
        %v930 = vpop.f32.mrf.mxu0
        %v931 = vadd.f32 %v843, %v930
        %v932 = vpop.f32.mrf.mxu0
        %933 = vmatprep.mubr.bf16.mxu0 0
        %934 = vmatmul.mubr.bf16.gmra.mxu0 %v807
        %v935 = vpop.f32.mrf.mxu0
        %v936 = vadd.f32 %v843, %v935
        %v937 = vpop.f32.mrf.mxu0
        %v938 = vpop.f32.mrf.mxu0
        %v939 = vadd.f32 %v843, %v938
        %v940 = vpop.f32.mrf.mxu0
        %941 = vmatprep.mubr.bf16.mxu0 0
        %942 = vmatmul.mubr.bf16.gmra.mxu0 %v808
        %v943 = vpop.f32.mrf.mxu0
        %v944 = vadd.f32 %v843, %v943
        %v945 = vpop.f32.mrf.mxu0
        %v946 = vpop.f32.mrf.mxu0
        %v947 = vadd.f32 %v843, %v946
        %v948 = vpop.f32.mrf.mxu0
        %949 = vmatprep.mubr.bf16.mxu0 0
        %950 = vmatmul.mubr.bf16.gmra.mxu0 %v809
        %v951 = vpop.f32.mrf.mxu0
        %v952 = vadd.f32 %v843, %v951
        %v953 = vpop.f32.mrf.mxu0
        %v954 = vpop.f32.mrf.mxu0
        %v955 = vadd.f32 %v843, %v954
        %v956 = vpop.f32.mrf.mxu0
        %957 = vmatprep.mubr.bf16.mxu0 0
        %958 = vmatmul.mubr.bf16.gmra.mxu0 %v810
        %v959 = vpop.f32.mrf.mxu0
        %v960 = vadd.f32 %v843, %v959
        %v961 = vpop.f32.mrf.mxu0
        %v962 = vpop.f32.mrf.mxu0
        %v963 = vadd.f32 %v843, %v962
        %v964 = vpop.f32.mrf.mxu0
        %965 = vmatprep.mubr.bf16.mxu0 0
        %966 = vmatmul.mubr.bf16.gmra.mxu0 %v811
        %v967 = vpop.f32.mrf.mxu0
        %v968 = vadd.f32 %v843, %v967
        %v969 = vpop.f32.mrf.mxu0
        %v970 = vpop.f32.mrf.mxu0
        %v971 = vadd.f32 %v843, %v970
        %v972 = vpop.f32.mrf.mxu0
        %973 = vmatprep.mubr.bf16.mxu0 0
        %974 = vmatmul.mubr.bf16.gmra.mxu0 %v812
        %v975 = vpop.f32.mrf.mxu0
        %v976 = vadd.f32 %v843, %v975
        %v977 = vpop.f32.mrf.mxu0
        %v978 = vpop.f32.mrf.mxu0
        %v979 = vadd.f32 %v843, %v978
        %v980 = vpop.f32.mrf.mxu0
        %981 = vmatprep.mubr.bf16.mxu0 0
        %982 = vmatmul.mubr.bf16.gmra.mxu0 %v813
        %v983 = vpop.f32.mrf.mxu0
        %v984 = vadd.f32 %v843, %v983
        %v985 = vpop.f32.mrf.mxu0
        %v986 = vpop.f32.mrf.mxu0
        %v987 = vadd.f32 %v843, %v986
        %v988 = vpop.f32.mrf.mxu0
        %989 = vmatprep.mubr.bf16.mxu0 0
        %990 = vmatmul.mubr.bf16.gmra.mxu0 %v814
        %v991 = vpop.f32.mrf.mxu0
        %v992 = vadd.f32 %v843, %v991
        %v993 = vpop.f32.mrf.mxu0
        %v994 = vpop.f32.mrf.mxu0
        %v995 = vadd.f32 %v843, %v994
        %v996 = vpop.f32.mrf.mxu0
        %997 = vmatprep.mubr.bf16.mxu0 0
        %998 = vmatmul.mubr.bf16.gmra.mxu0 %v815
        %v999 = vpop.f32.mrf.mxu0
        %v1000 = vadd.f32 %v843, %v999
        %v1001 = vpop.f32.mrf.mxu0
        %v1002 = vpop.f32.mrf.mxu0
        %v1003 = vadd.f32 %v843, %v1002
        %v1004 = vpop.f32.mrf.mxu0
        %1005 = vmatprep.mubr.bf16.mxu0 0
        %1006 = vmatmul.mubr.bf16.gmra.mxu0 %v816
        %v1007 = vpop.f32.mrf.mxu0
        %v1008 = vadd.f32 %v843, %v1007
        %v1009 = vpop.f32.mrf.mxu0
        %v1010 = vpop.f32.mrf.mxu0
        %v1011 = vadd.f32 %v843, %v1010
        %v1012 = vpop.f32.mrf.mxu0
        %1013 = vmatprep.mubr.bf16.mxu0 0
        %1014 = vmatmul.mubr.bf16.gmra.mxu0 %v817
        %v1015 = vpop.f32.mrf.mxu0
        %v1016 = vadd.f32 %v843, %v1015
        %v1017 = vpop.f32.mrf.mxu0
        %v1018 = vpop.f32.mrf.mxu0
        %v1019 = vadd.f32 %v843, %v1018
        %v1020 = vpop.f32.mrf.mxu0
        %1021 = vmatprep.mubr.bf16.mxu0 0
        %1022 = vmatmul.mubr.bf16.gmra.mxu0 %v818
        %v1023 = vpop.f32.mrf.mxu0
        %v1024 = vadd.f32 %v843, %v1023
        %v1025 = vpop.f32.mrf.mxu0
        %v1026 = vpop.f32.mrf.mxu0
        %v1027 = vadd.f32 %v843, %v1026
        %v1028 = vpop.f32.mrf.mxu0
        %1029 = vmatprep.mubr.bf16.mxu0 0
        %1030 = vmatmul.mubr.bf16.gmra.mxu0 %v819
        %v1031 = vpop.f32.mrf.mxu0
        %v1032 = vadd.f32 %v843, %v1031
        %v1033 = vpop.f32.mrf.mxu0
        %v1034 = vpop.f32.mrf.mxu0
        %v1035 = vadd.f32 %v843, %v1034
        %v1036 = vpop.f32.mrf.mxu0
        %1037 = vmatprep.mubr.bf16.mxu0 0
        %1038 = vmatmul.mubr.bf16.gmra.mxu0 %v820
        %v1039 = vpop.f32.mrf.mxu0
        %v1040 = vadd.f32 %v843, %v1039
        %v1041 = vpop.f32.mrf.mxu0
        %v1042 = vpop.f32.mrf.mxu0
        %v1043 = vadd.f32 %v843, %v1042
        %v1044 = vpop.f32.mrf.mxu0
        %1045 = vmatprep.mubr.bf16.mxu0 0
        %1046 = vmatmul.mubr.bf16.gmra.mxu0 %v821
        %v1047 = vpop.f32.mrf.mxu0
        %v1048 = vadd.f32 %v843, %v1047
        %v1049 = vpop.f32.mrf.mxu0
        %v1050 = vpop.f32.mrf.mxu0
        %v1051 = vadd.f32 %v843, %v1050
        %v1052 = vpop.f32.mrf.mxu0
        %1053 = vdwg.mxu0
        %v1054 = vmax.f32 %v928, 0.0
        %v1055 = vmax.f32 %v931, 0.0
        %v1056 = vmax.f32 %v936, 0.0
        %v1057 = vmax.f32 %v939, 0.0
        %v1058 = vmax.f32 %v944, 0.0
        %v1059 = vmax.f32 %v947, 0.0
        %v1060 = vmax.f32 %v952, 0.0
        %v1061 = vmax.f32 %v955, 0.0
        %v1062 = vmax.f32 %v960, 0.0
        %v1063 = vmax.f32 %v963, 0.0
        %v1064 = vmax.f32 %v968, 0.0
        %v1065 = vmax.f32 %v971, 0.0
        %v1066 = vmax.f32 %v976, 0.0
        %v1067 = vmax.f32 %v979, 0.0
        %v1068 = vmax.f32 %v984, 0.0
        %v1069 = vmax.f32 %v987, 0.0
        %v1070 = vmax.f32 %v992, 0.0
        %v1071 = vmax.f32 %v995, 0.0
        %v1072 = vmax.f32 %v1000, 0.0
        %v1073 = vmax.f32 %v1003, 0.0
        %v1074 = vmax.f32 %v1008, 0.0
        %v1075 = vmax.f32 %v1011, 0.0
        %v1076 = vmax.f32 %v1016, 0.0
        %v1077 = vmax.f32 %v1019, 0.0
        %v1078 = vmax.f32 %v1024, 0.0
        %v1079 = vmax.f32 %v1027, 0.0
        %v1080 = vmax.f32 %v1032, 0.0
        %v1081 = vmax.f32 %v1035, 0.0
        %v1082 = vmax.f32 %v1040, 0.0
        %v1083 = vmax.f32 %v1043, 0.0
        %v1084 = vmax.f32 %v1048, 0.0
        %v1085 = vmax.f32 %v1051, 0.0
        %v1086 = vpack.c.bf16 %v1055, %v1054
        %v1087 = vpack.c.bf16 %v1057, %v1056
        %v1088 = vpack.c.bf16 %v1059, %v1058
        %v1089 = vpack.c.bf16 %v1061, %v1060
        %v1090 = vpack.c.bf16 %v1063, %v1062
        %v1091 = vpack.c.bf16 %v1065, %v1064
        %v1092 = vpack.c.bf16 %v1067, %v1066
        %v1093 = vpack.c.bf16 %v1069, %v1068
        %v1094 = vpack.c.bf16 %v1071, %v1070
        %v1095 = vpack.c.bf16 %v1073, %v1072
        %v1096 = vpack.c.bf16 %v1075, %v1074
        %v1097 = vpack.c.bf16 %v1077, %v1076
        %v1098 = vpack.c.bf16 %v1079, %v1078
        %v1099 = vpack.c.bf16 %v1081, %v1080
        %v1100 = vpack.c.bf16 %v1083, %v1082
        %v1101 = vpack.c.bf16 %v1085, %v1084
        %s1102 = scalar_lea.vmem [#allocation9], 64
        %v1103 = vld [vmem:[%s1102] sm:$0xf]
        %v1104 = vld [vmem:[%s1102 + $0x4] sm:$0xf]
        %v1105 = vld [vmem:[%s1102 + $0x8] sm:$0xf]
        %v1106 = vld [vmem:[%s1102 + $0xc] sm:$0xf]
        %v1107 = vld [vmem:[%s1102 + $0x10] sm:$0xf]
        %v1108 = vld [vmem:[%s1102 + $0x14] sm:$0xf]
        %v1109 = vld [vmem:[%s1102 + $0x18] sm:$0xf]
        %v1110 = vld [vmem:[%s1102 + $0x1c] sm:$0xf]
        %v1111 = vld [vmem:[%s1102 + $0x20] sm:$0xf]
        %v1112 = vld [vmem:[%s1102 + $0x24] sm:$0xf]
        %v1113 = vld [vmem:[%s1102 + $0x28] sm:$0xf]
        %v1114 = vld [vmem:[%s1102 + $0x2c] sm:$0xf]
        %v1115 = vld [vmem:[%s1102 + $0x30] sm:$0xf]
        %v1116 = vld [vmem:[%s1102 + $0x34] sm:$0xf]
        %v1117 = vld [vmem:[%s1102 + $0x38] sm:$0xf]
        %v1118 = vld [vmem:[%s1102 + $0x3c] sm:$0xf]
        %s1119 = scalar_lea.vmem [#allocation11], 1
        %v1120 = vld [vmem:[%s1119] sm:$0x1]
        %v1122 = vlaneseq
        %v1123 = vshrl.u32 %v1122, 7
        %v1124 = vsub.s32 0, %v1123
        %v1125 = vrot.slane %v1120, %v1124
        %v1143 = vunpack.c.l.b16 %v1103
        %v1144 = vunpack.c.l.b16 %v1104
        %v1145 = vunpack.c.l.b16 %v1105
        %v1146 = vunpack.c.l.b16 %v1106
        %v1147 = vunpack.c.l.b16 %v1107
        %v1148 = vunpack.c.l.b16 %v1108
        %v1149 = vunpack.c.l.b16 %v1109
        %v1150 = vunpack.c.l.b16 %v1110
        %v1151 = vunpack.c.l.b16 %v1111
        %v1152 = vunpack.c.l.b16 %v1112
        %v1153 = vunpack.c.l.b16 %v1113
        %v1154 = vunpack.c.l.b16 %v1114
        %v1155 = vunpack.c.l.b16 %v1115
        %v1156 = vunpack.c.l.b16 %v1116
        %v1157 = vunpack.c.l.b16 %v1117
        %v1158 = vunpack.c.l.b16 %v1118
        %v1159 = vpack.c.b16 %v1144, %v1143
        %v1160 = vpack.c.b16 %v1146, %v1145
        %v1161 = vpack.c.b16 %v1148, %v1147
        %v1162 = vpack.c.b16 %v1150, %v1149
        %v1163 = vpack.c.b16 %v1152, %v1151
        %v1164 = vpack.c.b16 %v1154, %v1153
        %v1165 = vpack.c.b16 %v1156, %v1155
        %v1166 = vpack.c.b16 %v1158, %v1157
        %1175 = vmatprep.subr.bf16.mxu0 0
        %1176 = vmatpush1.bf16.msra.mxu0 %v1166
        %1177 = vmatprep.subr.bf16.mxu0 0
        %1178 = vmatpush1.bf16.msra.mxu0 %v1165
        %1179 = vmatprep.subr.bf16.mxu0 0
        %1180 = vmatpush1.bf16.msra.mxu0 %v1164
        %1181 = vmatprep.subr.bf16.mxu0 0
        %1182 = vmatpush1.bf16.msra.mxu0 %v1163
        %1183 = vmatprep.subr.bf16.mxu0 0
        %1184 = vmatpush1.bf16.msra.mxu0 %v1162
        %1185 = vmatprep.subr.bf16.mxu0 0
        %1186 = vmatpush1.bf16.msra.mxu0 %v1161
        %1187 = vmatprep.subr.bf16.mxu0 0
        %1188 = vmatpush1.bf16.msra.mxu0 %v1160
        %1189 = vmatprep.subr.bf16.mxu0 0
        %1190 = vmatpush1.bf16.msra.mxu0 %v1159
        %1191 = vmatprep.subr.bf16.mxu0 0
        %1192 = vmatpush2.bf16.msra.mxu0 0
        %1193 = vmatprep.subr.bf16.mxu0 0
        %1194 = vmatpush2.bf16.msra.mxu0 0
        %1195 = vmatprep.subr.bf16.mxu0 0
        %1196 = vmatpush2.bf16.msra.mxu0 0
        %1197 = vmatprep.subr.bf16.mxu0 0
        %1198 = vmatpush2.bf16.msra.mxu0 0
        %1199 = vmatprep.subr.bf16.mxu0 0
        %1200 = vmatpush2.bf16.msra.mxu0 0
        %1201 = vmatprep.subr.bf16.mxu0 0
        %1202 = vmatpush2.bf16.msra.mxu0 0
        %1203 = vmatprep.subr.bf16.mxu0 0
        %1204 = vmatpush2.bf16.msra.mxu0 0
        %1205 = vmatprep.subr.bf16.mxu0 0
        %1206 = vmatpush2.bf16.msra.mxu0 0
        %1207 = vmatprep.mubr.bf16.mxu0 0
        %1208 = vmatmul.mubr.bf16.gmra.mxu0 %v1086
        %v1209 = vpop.f32.mrf.mxu0
        %v1210 = vadd.f32 %v1125, %v1209
        %v1211 = vpop.f32.mrf.mxu0
        %v1212 = vpop.f32.mrf.mxu0
        %v1213 = vadd.f32 %v1125, %v1212
        %v1214 = vpop.f32.mrf.mxu0
        %1215 = vmatprep.mubr.bf16.mxu0 0
        %1216 = vmatmul.mubr.bf16.gmra.mxu0 %v1087
        %v1217 = vpop.f32.mrf.mxu0
        %v1218 = vadd.f32 %v1125, %v1217
        %v1219 = vpop.f32.mrf.mxu0
        %v1220 = vpop.f32.mrf.mxu0
        %v1221 = vadd.f32 %v1125, %v1220
        %v1222 = vpop.f32.mrf.mxu0
        %1223 = vmatprep.mubr.bf16.mxu0 0
        %1224 = vmatmul.mubr.bf16.gmra.mxu0 %v1088
        %v1225 = vpop.f32.mrf.mxu0
        %v1226 = vadd.f32 %v1125, %v1225
        %v1227 = vpop.f32.mrf.mxu0
        %v1228 = vpop.f32.mrf.mxu0
        %v1229 = vadd.f32 %v1125, %v1228
        %v1230 = vpop.f32.mrf.mxu0
        %1231 = vmatprep.mubr.bf16.mxu0 0
        %1232 = vmatmul.mubr.bf16.gmra.mxu0 %v1089
        %v1233 = vpop.f32.mrf.mxu0
        %v1234 = vadd.f32 %v1125, %v1233
        %v1235 = vpop.f32.mrf.mxu0
        %v1236 = vpop.f32.mrf.mxu0
        %v1237 = vadd.f32 %v1125, %v1236
        %v1238 = vpop.f32.mrf.mxu0
        %1239 = vmatprep.mubr.bf16.mxu0 0
        %1240 = vmatmul.mubr.bf16.gmra.mxu0 %v1090
        %v1241 = vpop.f32.mrf.mxu0
        %v1242 = vadd.f32 %v1125, %v1241
        %v1243 = vpop.f32.mrf.mxu0
        %v1244 = vpop.f32.mrf.mxu0
        %v1245 = vadd.f32 %v1125, %v1244
        %v1246 = vpop.f32.mrf.mxu0
        %1247 = vmatprep.mubr.bf16.mxu0 0
        %1248 = vmatmul.mubr.bf16.gmra.mxu0 %v1091
        %v1249 = vpop.f32.mrf.mxu0
        %v1250 = vadd.f32 %v1125, %v1249
        %v1251 = vpop.f32.mrf.mxu0
        %v1252 = vpop.f32.mrf.mxu0
        %v1253 = vadd.f32 %v1125, %v1252
        %v1254 = vpop.f32.mrf.mxu0
        %1255 = vmatprep.mubr.bf16.mxu0 0
        %1256 = vmatmul.mubr.bf16.gmra.mxu0 %v1092
        %v1257 = vpop.f32.mrf.mxu0
        %v1258 = vadd.f32 %v1125, %v1257
        %v1259 = vpop.f32.mrf.mxu0
        %v1260 = vpop.f32.mrf.mxu0
        %v1261 = vadd.f32 %v1125, %v1260
        %v1262 = vpop.f32.mrf.mxu0
        %1263 = vmatprep.mubr.bf16.mxu0 0
        %1264 = vmatmul.mubr.bf16.gmra.mxu0 %v1093
        %v1265 = vpop.f32.mrf.mxu0
        %v1266 = vadd.f32 %v1125, %v1265
        %v1267 = vpop.f32.mrf.mxu0
        %v1268 = vpop.f32.mrf.mxu0
        %v1269 = vadd.f32 %v1125, %v1268
        %v1270 = vpop.f32.mrf.mxu0
        %1271 = vmatprep.mubr.bf16.mxu0 0
        %1272 = vmatmul.mubr.bf16.gmra.mxu0 %v1094
        %v1273 = vpop.f32.mrf.mxu0
        %v1274 = vadd.f32 %v1125, %v1273
        %v1275 = vpop.f32.mrf.mxu0
        %v1276 = vpop.f32.mrf.mxu0
        %v1277 = vadd.f32 %v1125, %v1276
        %v1278 = vpop.f32.mrf.mxu0
        %1279 = vmatprep.mubr.bf16.mxu0 0
        %1280 = vmatmul.mubr.bf16.gmra.mxu0 %v1095
        %v1281 = vpop.f32.mrf.mxu0
        %v1282 = vadd.f32 %v1125, %v1281
        %v1283 = vpop.f32.mrf.mxu0
        %v1284 = vpop.f32.mrf.mxu0
        %v1285 = vadd.f32 %v1125, %v1284
        %v1286 = vpop.f32.mrf.mxu0
        %1287 = vmatprep.mubr.bf16.mxu0 0
        %1288 = vmatmul.mubr.bf16.gmra.mxu0 %v1096
        %v1289 = vpop.f32.mrf.mxu0
        %v1290 = vadd.f32 %v1125, %v1289
        %v1291 = vpop.f32.mrf.mxu0
        %v1292 = vpop.f32.mrf.mxu0
        %v1293 = vadd.f32 %v1125, %v1292
        %v1294 = vpop.f32.mrf.mxu0
        %1295 = vmatprep.mubr.bf16.mxu0 0
        %1296 = vmatmul.mubr.bf16.gmra.mxu0 %v1097
        %v1297 = vpop.f32.mrf.mxu0
        %v1298 = vadd.f32 %v1125, %v1297
        %v1299 = vpop.f32.mrf.mxu0
        %v1300 = vpop.f32.mrf.mxu0
        %v1301 = vadd.f32 %v1125, %v1300
        %v1302 = vpop.f32.mrf.mxu0
        %1303 = vmatprep.mubr.bf16.mxu0 0
        %1304 = vmatmul.mubr.bf16.gmra.mxu0 %v1098
        %v1305 = vpop.f32.mrf.mxu0
        %v1306 = vadd.f32 %v1125, %v1305
        %v1307 = vpop.f32.mrf.mxu0
        %v1308 = vpop.f32.mrf.mxu0
        %v1309 = vadd.f32 %v1125, %v1308
        %v1310 = vpop.f32.mrf.mxu0
        %1311 = vmatprep.mubr.bf16.mxu0 0
        %1312 = vmatmul.mubr.bf16.gmra.mxu0 %v1099
        %v1313 = vpop.f32.mrf.mxu0
        %v1314 = vadd.f32 %v1125, %v1313
        %v1315 = vpop.f32.mrf.mxu0
        %v1316 = vpop.f32.mrf.mxu0
        %v1317 = vadd.f32 %v1125, %v1316
        %v1318 = vpop.f32.mrf.mxu0
        %1319 = vmatprep.mubr.bf16.mxu0 0
        %1320 = vmatmul.mubr.bf16.gmra.mxu0 %v1100
        %v1321 = vpop.f32.mrf.mxu0
        %v1322 = vadd.f32 %v1125, %v1321
        %v1323 = vpop.f32.mrf.mxu0
        %v1324 = vpop.f32.mrf.mxu0
        %v1325 = vadd.f32 %v1125, %v1324
        %v1326 = vpop.f32.mrf.mxu0
        %1327 = vmatprep.mubr.bf16.mxu0 0
        %1328 = vmatmul.mubr.bf16.gmra.mxu0 %v1101
        %v1329 = vpop.f32.mrf.mxu0
        %v1330 = vadd.f32 %v1125, %v1329
        %v1331 = vpop.f32.mrf.mxu0
        %v1332 = vpop.f32.mrf.mxu0
        %v1333 = vadd.f32 %v1125, %v1332
        %v1334 = vpop.f32.mrf.mxu0
        %1335 = vdwg.mxu0
        %v1336 = vmax.f32 %v1210, 0.0
        %v1337 = vmax.f32 %v1213, 0.0
        %v1338 = vmax.f32 %v1218, 0.0
        %v1339 = vmax.f32 %v1221, 0.0
        %v1340 = vmax.f32 %v1226, 0.0
        %v1341 = vmax.f32 %v1229, 0.0
        %v1342 = vmax.f32 %v1234, 0.0
        %v1343 = vmax.f32 %v1237, 0.0
        %v1344 = vmax.f32 %v1242, 0.0
        %v1345 = vmax.f32 %v1245, 0.0
        %v1346 = vmax.f32 %v1250, 0.0
        %v1347 = vmax.f32 %v1253, 0.0
        %v1348 = vmax.f32 %v1258, 0.0
        %v1349 = vmax.f32 %v1261, 0.0
        %v1350 = vmax.f32 %v1266, 0.0
        %v1351 = vmax.f32 %v1269, 0.0
        %v1352 = vmax.f32 %v1274, 0.0
        %v1353 = vmax.f32 %v1277, 0.0
        %v1354 = vmax.f32 %v1282, 0.0
        %v1355 = vmax.f32 %v1285, 0.0
        %v1356 = vmax.f32 %v1290, 0.0
        %v1357 = vmax.f32 %v1293, 0.0
        %v1358 = vmax.f32 %v1298, 0.0
        %v1359 = vmax.f32 %v1301, 0.0
        %v1360 = vmax.f32 %v1306, 0.0
        %v1361 = vmax.f32 %v1309, 0.0
        %v1362 = vmax.f32 %v1314, 0.0
        %v1363 = vmax.f32 %v1317, 0.0
        %v1364 = vmax.f32 %v1322, 0.0
        %v1365 = vmax.f32 %v1325, 0.0
        %v1366 = vmax.f32 %v1330, 0.0
        %v1367 = vmax.f32 %v1333, 0.0
        %v1368 = vpack.c.bf16 %v1337, %v1336
        %v1369 = vpack.c.bf16 %v1339, %v1338
        %v1370 = vpack.c.bf16 %v1341, %v1340
        %v1371 = vpack.c.bf16 %v1343, %v1342
        %v1372 = vpack.c.bf16 %v1345, %v1344
        %v1373 = vpack.c.bf16 %v1347, %v1346
        %v1374 = vpack.c.bf16 %v1349, %v1348
        %v1375 = vpack.c.bf16 %v1351, %v1350
        %v1376 = vpack.c.bf16 %v1353, %v1352
        %v1377 = vpack.c.bf16 %v1355, %v1354
        %v1378 = vpack.c.bf16 %v1357, %v1356
        %v1379 = vpack.c.bf16 %v1359, %v1358
        %v1380 = vpack.c.bf16 %v1361, %v1360
        %v1381 = vpack.c.bf16 %v1363, %v1362
        %v1382 = vpack.c.bf16 %v1365, %v1364
        %v1383 = vpack.c.bf16 %v1367, %v1366
        %s1384 = scalar_lea.vmem [#allocation9], 128
        %v1385 = vld [vmem:[%s1384] sm:$0xf]
        %v1386 = vld [vmem:[%s1384 + $0x4] sm:$0xf]
        %v1387 = vld [vmem:[%s1384 + $0x8] sm:$0xf]
        %v1388 = vld [vmem:[%s1384 + $0xc] sm:$0xf]
        %v1389 = vld [vmem:[%s1384 + $0x10] sm:$0xf]
        %v1390 = vld [vmem:[%s1384 + $0x14] sm:$0xf]
        %v1391 = vld [vmem:[%s1384 + $0x18] sm:$0xf]
        %v1392 = vld [vmem:[%s1384 + $0x1c] sm:$0xf]
        %v1393 = vld [vmem:[%s1384 + $0x20] sm:$0xf]
        %v1394 = vld [vmem:[%s1384 + $0x24] sm:$0xf]
        %v1395 = vld [vmem:[%s1384 + $0x28] sm:$0xf]
        %v1396 = vld [vmem:[%s1384 + $0x2c] sm:$0xf]
        %v1397 = vld [vmem:[%s1384 + $0x30] sm:$0xf]
        %v1398 = vld [vmem:[%s1384 + $0x34] sm:$0xf]
        %v1399 = vld [vmem:[%s1384 + $0x38] sm:$0xf]
        %v1400 = vld [vmem:[%s1384 + $0x3c] sm:$0xf]
        %s1401 = scalar_lea.vmem [#allocation11], 2
        %v1402 = vld [vmem:[%s1401] sm:$0x1]
        %v1404 = vlaneseq
        %v1405 = vshrl.u32 %v1404, 7
        %v1406 = vsub.s32 0, %v1405
        %v1407 = vrot.slane %v1402, %v1406
        %v1425 = vunpack.c.l.b16 %v1385
        %v1426 = vunpack.c.l.b16 %v1386
        %v1427 = vunpack.c.l.b16 %v1387
        %v1428 = vunpack.c.l.b16 %v1388
        %v1429 = vunpack.c.l.b16 %v1389
        %v1430 = vunpack.c.l.b16 %v1390
        %v1431 = vunpack.c.l.b16 %v1391
        %v1432 = vunpack.c.l.b16 %v1392
        %v1433 = vunpack.c.l.b16 %v1393
        %v1434 = vunpack.c.l.b16 %v1394
        %v1435 = vunpack.c.l.b16 %v1395
        %v1436 = vunpack.c.l.b16 %v1396
        %v1437 = vunpack.c.l.b16 %v1397
        %v1438 = vunpack.c.l.b16 %v1398
        %v1439 = vunpack.c.l.b16 %v1399
        %v1440 = vunpack.c.l.b16 %v1400
        %v1441 = vpack.c.b16 %v1426, %v1425
        %v1442 = vpack.c.b16 %v1428, %v1427
        %v1443 = vpack.c.b16 %v1430, %v1429
        %v1444 = vpack.c.b16 %v1432, %v1431
        %v1445 = vpack.c.b16 %v1434, %v1433
        %v1446 = vpack.c.b16 %v1436, %v1435
        %v1447 = vpack.c.b16 %v1438, %v1437
        %v1448 = vpack.c.b16 %v1440, %v1439
        %1457 = vmatprep.subr.bf16.mxu0 0
        %1458 = vmatpush1.bf16.msra.mxu0 %v1448
        %1459 = vmatprep.subr.bf16.mxu0 0
        %1460 = vmatpush1.bf16.msra.mxu0 %v1447
        %1461 = vmatprep.subr.bf16.mxu0 0
        %1462 = vmatpush1.bf16.msra.mxu0 %v1446
        %1463 = vmatprep.subr.bf16.mxu0 0
        %1464 = vmatpush1.bf16.msra.mxu0 %v1445
        %1465 = vmatprep.subr.bf16.mxu0 0
        %1466 = vmatpush1.bf16.msra.mxu0 %v1444
        %1467 = vmatprep.subr.bf16.mxu0 0
        %1468 = vmatpush1.bf16.msra.mxu0 %v1443
        %1469 = vmatprep.subr.bf16.mxu0 0
        %1470 = vmatpush1.bf16.msra.mxu0 %v1442
        %1471 = vmatprep.subr.bf16.mxu0 0
        %1472 = vmatpush1.bf16.msra.mxu0 %v1441
        %1473 = vmatprep.subr.bf16.mxu0 0
        %1474 = vmatpush2.bf16.msra.mxu0 0
        %1475 = vmatprep.subr.bf16.mxu0 0
        %1476 = vmatpush2.bf16.msra.mxu0 0
        %1477 = vmatprep.subr.bf16.mxu0 0
        %1478 = vmatpush2.bf16.msra.mxu0 0
        %1479 = vmatprep.subr.bf16.mxu0 0
        %1480 = vmatpush2.bf16.msra.mxu0 0
        %1481 = vmatprep.subr.bf16.mxu0 0
        %1482 = vmatpush2.bf16.msra.mxu0 0
        %1483 = vmatprep.subr.bf16.mxu0 0
        %1484 = vmatpush2.bf16.msra.mxu0 0
        %1485 = vmatprep.subr.bf16.mxu0 0
        %1486 = vmatpush2.bf16.msra.mxu0 0
        %1487 = vmatprep.subr.bf16.mxu0 0
        %1488 = vmatpush2.bf16.msra.mxu0 0
        %1489 = vmatprep.mubr.bf16.mxu0 0
        %1490 = vmatmul.mubr.bf16.gmra.mxu0 %v1368
        %v1491 = vpop.f32.mrf.mxu0
        %v1492 = vadd.f32 %v1407, %v1491
        %v1493 = vpop.f32.mrf.mxu0
        %v1494 = vpop.f32.mrf.mxu0
        %v1495 = vadd.f32 %v1407, %v1494
        %v1496 = vpop.f32.mrf.mxu0
        %1497 = vmatprep.mubr.bf16.mxu0 0
        %1498 = vmatmul.mubr.bf16.gmra.mxu0 %v1369
        %v1499 = vpop.f32.mrf.mxu0
        %v1500 = vadd.f32 %v1407, %v1499
        %v1501 = vpop.f32.mrf.mxu0
        %v1502 = vpop.f32.mrf.mxu0
        %v1503 = vadd.f32 %v1407, %v1502
        %v1504 = vpop.f32.mrf.mxu0
        %1505 = vmatprep.mubr.bf16.mxu0 0
        %1506 = vmatmul.mubr.bf16.gmra.mxu0 %v1370
        %v1507 = vpop.f32.mrf.mxu0
        %v1508 = vadd.f32 %v1407, %v1507
        %v1509 = vpop.f32.mrf.mxu0
        %v1510 = vpop.f32.mrf.mxu0
        %v1511 = vadd.f32 %v1407, %v1510
        %v1512 = vpop.f32.mrf.mxu0
        %1513 = vmatprep.mubr.bf16.mxu0 0
        %1514 = vmatmul.mubr.bf16.gmra.mxu0 %v1371
        %v1515 = vpop.f32.mrf.mxu0
        %v1516 = vadd.f32 %v1407, %v1515
        %v1517 = vpop.f32.mrf.mxu0
        %v1518 = vpop.f32.mrf.mxu0
        %v1519 = vadd.f32 %v1407, %v1518
        %v1520 = vpop.f32.mrf.mxu0
        %1521 = vmatprep.mubr.bf16.mxu0 0
        %1522 = vmatmul.mubr.bf16.gmra.mxu0 %v1372
        %v1523 = vpop.f32.mrf.mxu0
        %v1524 = vadd.f32 %v1407, %v1523
        %v1525 = vpop.f32.mrf.mxu0
        %v1526 = vpop.f32.mrf.mxu0
        %v1527 = vadd.f32 %v1407, %v1526
        %v1528 = vpop.f32.mrf.mxu0
        %1529 = vmatprep.mubr.bf16.mxu0 0
        %1530 = vmatmul.mubr.bf16.gmra.mxu0 %v1373
        %v1531 = vpop.f32.mrf.mxu0
        %v1532 = vadd.f32 %v1407, %v1531
        %v1533 = vpop.f32.mrf.mxu0
        %v1534 = vpop.f32.mrf.mxu0
        %v1535 = vadd.f32 %v1407, %v1534
        %v1536 = vpop.f32.mrf.mxu0
        %1537 = vmatprep.mubr.bf16.mxu0 0
        %1538 = vmatmul.mubr.bf16.gmra.mxu0 %v1374
        %v1539 = vpop.f32.mrf.mxu0
        %v1540 = vadd.f32 %v1407, %v1539
        %v1541 = vpop.f32.mrf.mxu0
        %v1542 = vpop.f32.mrf.mxu0
        %v1543 = vadd.f32 %v1407, %v1542
        %v1544 = vpop.f32.mrf.mxu0
        %1545 = vmatprep.mubr.bf16.mxu0 0
        %1546 = vmatmul.mubr.bf16.gmra.mxu0 %v1375
        %v1547 = vpop.f32.mrf.mxu0
        %v1548 = vadd.f32 %v1407, %v1547
        %v1549 = vpop.f32.mrf.mxu0
        %v1550 = vpop.f32.mrf.mxu0
        %v1551 = vadd.f32 %v1407, %v1550
        %v1552 = vpop.f32.mrf.mxu0
        %1553 = vmatprep.mubr.bf16.mxu0 0
        %1554 = vmatmul.mubr.bf16.gmra.mxu0 %v1376
        %v1555 = vpop.f32.mrf.mxu0
        %v1556 = vadd.f32 %v1407, %v1555
        %v1557 = vpop.f32.mrf.mxu0
        %v1558 = vpop.f32.mrf.mxu0
        %v1559 = vadd.f32 %v1407, %v1558
        %v1560 = vpop.f32.mrf.mxu0
        %1561 = vmatprep.mubr.bf16.mxu0 0
        %1562 = vmatmul.mubr.bf16.gmra.mxu0 %v1377
        %v1563 = vpop.f32.mrf.mxu0
        %v1564 = vadd.f32 %v1407, %v1563
        %v1565 = vpop.f32.mrf.mxu0
        %v1566 = vpop.f32.mrf.mxu0
        %v1567 = vadd.f32 %v1407, %v1566
        %v1568 = vpop.f32.mrf.mxu0
        %1569 = vmatprep.mubr.bf16.mxu0 0
        %1570 = vmatmul.mubr.bf16.gmra.mxu0 %v1378
        %v1571 = vpop.f32.mrf.mxu0
        %v1572 = vadd.f32 %v1407, %v1571
        %v1573 = vpop.f32.mrf.mxu0
        %v1574 = vpop.f32.mrf.mxu0
        %v1575 = vadd.f32 %v1407, %v1574
        %v1576 = vpop.f32.mrf.mxu0
        %1577 = vmatprep.mubr.bf16.mxu0 0
        %1578 = vmatmul.mubr.bf16.gmra.mxu0 %v1379
        %v1579 = vpop.f32.mrf.mxu0
        %v1580 = vadd.f32 %v1407, %v1579
        %v1581 = vpop.f32.mrf.mxu0
        %v1582 = vpop.f32.mrf.mxu0
        %v1583 = vadd.f32 %v1407, %v1582
        %v1584 = vpop.f32.mrf.mxu0
        %1585 = vmatprep.mubr.bf16.mxu0 0
        %1586 = vmatmul.mubr.bf16.gmra.mxu0 %v1380
        %v1587 = vpop.f32.mrf.mxu0
        %v1588 = vadd.f32 %v1407, %v1587
        %v1589 = vpop.f32.mrf.mxu0
        %v1590 = vpop.f32.mrf.mxu0
        %v1591 = vadd.f32 %v1407, %v1590
        %v1592 = vpop.f32.mrf.mxu0
        %1593 = vmatprep.mubr.bf16.mxu0 0
        %1594 = vmatmul.mubr.bf16.gmra.mxu0 %v1381
        %v1595 = vpop.f32.mrf.mxu0
        %v1596 = vadd.f32 %v1407, %v1595
        %v1597 = vpop.f32.mrf.mxu0
        %v1598 = vpop.f32.mrf.mxu0
        %v1599 = vadd.f32 %v1407, %v1598
        %v1600 = vpop.f32.mrf.mxu0
        %1601 = vmatprep.mubr.bf16.mxu0 0
        %1602 = vmatmul.mubr.bf16.gmra.mxu0 %v1382
        %v1603 = vpop.f32.mrf.mxu0
        %v1604 = vadd.f32 %v1407, %v1603
        %v1605 = vpop.f32.mrf.mxu0
        %v1606 = vpop.f32.mrf.mxu0
        %v1607 = vadd.f32 %v1407, %v1606
        %v1608 = vpop.f32.mrf.mxu0
        %1609 = vmatprep.mubr.bf16.mxu0 0
        %1610 = vmatmul.mubr.bf16.gmra.mxu0 %v1383
        %v1611 = vpop.f32.mrf.mxu0
        %v1612 = vadd.f32 %v1407, %v1611
        %v1613 = vpop.f32.mrf.mxu0
        %v1614 = vpop.f32.mrf.mxu0
        %v1615 = vadd.f32 %v1407, %v1614
        %v1616 = vpop.f32.mrf.mxu0
        %1617 = vdwg.mxu0
        %v1618 = vmax.f32 %v1492, 0.0
        %v1619 = vmax.f32 %v1495, 0.0
        %v1620 = vmax.f32 %v1500, 0.0
        %v1621 = vmax.f32 %v1503, 0.0
        %v1622 = vmax.f32 %v1508, 0.0
        %v1623 = vmax.f32 %v1511, 0.0
        %v1624 = vmax.f32 %v1516, 0.0
        %v1625 = vmax.f32 %v1519, 0.0
        %v1626 = vmax.f32 %v1524, 0.0
        %v1627 = vmax.f32 %v1527, 0.0
        %v1628 = vmax.f32 %v1532, 0.0
        %v1629 = vmax.f32 %v1535, 0.0
        %v1630 = vmax.f32 %v1540, 0.0
        %v1631 = vmax.f32 %v1543, 0.0
        %v1632 = vmax.f32 %v1548, 0.0
        %v1633 = vmax.f32 %v1551, 0.0
        %v1634 = vmax.f32 %v1556, 0.0
        %v1635 = vmax.f32 %v1559, 0.0
        %v1636 = vmax.f32 %v1564, 0.0
        %v1637 = vmax.f32 %v1567, 0.0
        %v1638 = vmax.f32 %v1572, 0.0
        %v1639 = vmax.f32 %v1575, 0.0
        %v1640 = vmax.f32 %v1580, 0.0
        %v1641 = vmax.f32 %v1583, 0.0
        %v1642 = vmax.f32 %v1588, 0.0
        %v1643 = vmax.f32 %v1591, 0.0
        %v1644 = vmax.f32 %v1596, 0.0
        %v1645 = vmax.f32 %v1599, 0.0
        %v1646 = vmax.f32 %v1604, 0.0
        %v1647 = vmax.f32 %v1607, 0.0
        %v1648 = vmax.f32 %v1612, 0.0
        %v1649 = vmax.f32 %v1615, 0.0
        %v1650 = vpack.c.bf16 %v1619, %v1618
        %v1651 = vpack.c.bf16 %v1621, %v1620
        %v1652 = vpack.c.bf16 %v1623, %v1622
        %v1653 = vpack.c.bf16 %v1625, %v1624
        %v1654 = vpack.c.bf16 %v1627, %v1626
        %v1655 = vpack.c.bf16 %v1629, %v1628
        %v1656 = vpack.c.bf16 %v1631, %v1630
        %v1657 = vpack.c.bf16 %v1633, %v1632
        %v1658 = vpack.c.bf16 %v1635, %v1634
        %v1659 = vpack.c.bf16 %v1637, %v1636
        %v1660 = vpack.c.bf16 %v1639, %v1638
        %v1661 = vpack.c.bf16 %v1641, %v1640
        %v1662 = vpack.c.bf16 %v1643, %v1642
        %v1663 = vpack.c.bf16 %v1645, %v1644
        %v1664 = vpack.c.bf16 %v1647, %v1646
        %v1665 = vpack.c.bf16 %v1649, %v1648
        %s1666 = scalar_lea.vmem [#allocation9], 192
        %v1667 = vld [vmem:[%s1666] sm:$0xf]
        %v1668 = vld [vmem:[%s1666 + $0x4] sm:$0xf]
        %v1669 = vld [vmem:[%s1666 + $0x8] sm:$0xf]
        %v1670 = vld [vmem:[%s1666 + $0xc] sm:$0xf]
        %v1671 = vld [vmem:[%s1666 + $0x10] sm:$0xf]
        %v1672 = vld [vmem:[%s1666 + $0x14] sm:$0xf]
        %v1673 = vld [vmem:[%s1666 + $0x18] sm:$0xf]
        %v1674 = vld [vmem:[%s1666 + $0x1c] sm:$0xf]
        %v1675 = vld [vmem:[%s1666 + $0x20] sm:$0xf]
        %v1676 = vld [vmem:[%s1666 + $0x24] sm:$0xf]
        %v1677 = vld [vmem:[%s1666 + $0x28] sm:$0xf]
        %v1678 = vld [vmem:[%s1666 + $0x2c] sm:$0xf]
        %v1679 = vld [vmem:[%s1666 + $0x30] sm:$0xf]
        %v1680 = vld [vmem:[%s1666 + $0x34] sm:$0xf]
        %v1681 = vld [vmem:[%s1666 + $0x38] sm:$0xf]
        %v1682 = vld [vmem:[%s1666 + $0x3c] sm:$0xf]
        %s1683 = scalar_lea.vmem [#allocation11], 3
        %v1684 = vld [vmem:[%s1683] sm:$0x1]
        %v1686 = vlaneseq
        %v1687 = vshrl.u32 %v1686, 7
        %v1688 = vsub.s32 0, %v1687
        %v1689 = vrot.slane %v1684, %v1688
        %v1707 = vunpack.c.l.b16 %v1667
        %v1708 = vunpack.c.l.b16 %v1668
        %v1709 = vunpack.c.l.b16 %v1669
        %v1710 = vunpack.c.l.b16 %v1670
        %v1711 = vunpack.c.l.b16 %v1671
        %v1712 = vunpack.c.l.b16 %v1672
        %v1713 = vunpack.c.l.b16 %v1673
        %v1714 = vunpack.c.l.b16 %v1674
        %v1715 = vunpack.c.l.b16 %v1675
        %v1716 = vunpack.c.l.b16 %v1676
        %v1717 = vunpack.c.l.b16 %v1677
        %v1718 = vunpack.c.l.b16 %v1678
        %v1719 = vunpack.c.l.b16 %v1679
        %v1720 = vunpack.c.l.b16 %v1680
        %v1721 = vunpack.c.l.b16 %v1681
        %v1722 = vunpack.c.l.b16 %v1682
        %v1723 = vpack.c.b16 %v1708, %v1707
        %v1724 = vpack.c.b16 %v1710, %v1709
        %v1725 = vpack.c.b16 %v1712, %v1711
        %v1726 = vpack.c.b16 %v1714, %v1713
        %v1727 = vpack.c.b16 %v1716, %v1715
        %v1728 = vpack.c.b16 %v1718, %v1717
        %v1729 = vpack.c.b16 %v1720, %v1719
        %v1730 = vpack.c.b16 %v1722, %v1721
        %1739 = vmatprep.subr.bf16.mxu0 0
        %1740 = vmatpush1.bf16.msra.mxu0 %v1730
        %1741 = vmatprep.subr.bf16.mxu0 0
        %1742 = vmatpush1.bf16.msra.mxu0 %v1729
        %1743 = vmatprep.subr.bf16.mxu0 0
        %1744 = vmatpush1.bf16.msra.mxu0 %v1728
        %1745 = vmatprep.subr.bf16.mxu0 0
        %1746 = vmatpush1.bf16.msra.mxu0 %v1727
        %1747 = vmatprep.subr.bf16.mxu0 0
        %1748 = vmatpush1.bf16.msra.mxu0 %v1726
        %1749 = vmatprep.subr.bf16.mxu0 0
        %1750 = vmatpush1.bf16.msra.mxu0 %v1725
        %1751 = vmatprep.subr.bf16.mxu0 0
        %1752 = vmatpush1.bf16.msra.mxu0 %v1724
        %1753 = vmatprep.subr.bf16.mxu0 0
        %1754 = vmatpush1.bf16.msra.mxu0 %v1723
        %1755 = vmatprep.subr.bf16.mxu0 0
        %1756 = vmatpush2.bf16.msra.mxu0 0
        %1757 = vmatprep.subr.bf16.mxu0 0
        %1758 = vmatpush2.bf16.msra.mxu0 0
        %1759 = vmatprep.subr.bf16.mxu0 0
        %1760 = vmatpush2.bf16.msra.mxu0 0
        %1761 = vmatprep.subr.bf16.mxu0 0
        %1762 = vmatpush2.bf16.msra.mxu0 0
        %1763 = vmatprep.subr.bf16.mxu0 0
        %1764 = vmatpush2.bf16.msra.mxu0 0
        %1765 = vmatprep.subr.bf16.mxu0 0
        %1766 = vmatpush2.bf16.msra.mxu0 0
        %1767 = vmatprep.subr.bf16.mxu0 0
        %1768 = vmatpush2.bf16.msra.mxu0 0
        %1769 = vmatprep.subr.bf16.mxu0 0
        %1770 = vmatpush2.bf16.msra.mxu0 0
        %1771 = vmatprep.mubr.bf16.mxu0 0
        %1772 = vmatmul.mubr.bf16.gmra.mxu0 %v1650
        %v1773 = vpop.f32.mrf.mxu0
        %v1774 = vadd.f32 %v1689, %v1773
        %v1775 = vpop.f32.mrf.mxu0
        %v1776 = vpop.f32.mrf.mxu0
        %v1777 = vadd.f32 %v1689, %v1776
        %v1778 = vpop.f32.mrf.mxu0
        %1779 = vmatprep.mubr.bf16.mxu0 0
        %1780 = vmatmul.mubr.bf16.gmra.mxu0 %v1651
        %v1781 = vpop.f32.mrf.mxu0
        %v1782 = vadd.f32 %v1689, %v1781
        %v1783 = vpop.f32.mrf.mxu0
        %v1784 = vpop.f32.mrf.mxu0
        %v1785 = vadd.f32 %v1689, %v1784
        %v1786 = vpop.f32.mrf.mxu0
        %1787 = vmatprep.mubr.bf16.mxu0 0
        %1788 = vmatmul.mubr.bf16.gmra.mxu0 %v1652
        %v1789 = vpop.f32.mrf.mxu0
        %v1790 = vadd.f32 %v1689, %v1789
        %v1791 = vpop.f32.mrf.mxu0
        %v1792 = vpop.f32.mrf.mxu0
        %v1793 = vadd.f32 %v1689, %v1792
        %v1794 = vpop.f32.mrf.mxu0
        %1795 = vmatprep.mubr.bf16.mxu0 0
        %1796 = vmatmul.mubr.bf16.gmra.mxu0 %v1653
        %v1797 = vpop.f32.mrf.mxu0
        %v1798 = vadd.f32 %v1689, %v1797
        %v1799 = vpop.f32.mrf.mxu0
        %v1800 = vpop.f32.mrf.mxu0
        %v1801 = vadd.f32 %v1689, %v1800
        %v1802 = vpop.f32.mrf.mxu0
        %1803 = vmatprep.mubr.bf16.mxu0 0
        %1804 = vmatmul.mubr.bf16.gmra.mxu0 %v1654
        %v1805 = vpop.f32.mrf.mxu0
        %v1806 = vadd.f32 %v1689, %v1805
        %v1807 = vpop.f32.mrf.mxu0
        %v1808 = vpop.f32.mrf.mxu0
        %v1809 = vadd.f32 %v1689, %v1808
        %v1810 = vpop.f32.mrf.mxu0
        %1811 = vmatprep.mubr.bf16.mxu0 0
        %1812 = vmatmul.mubr.bf16.gmra.mxu0 %v1655
        %v1813 = vpop.f32.mrf.mxu0
        %v1814 = vadd.f32 %v1689, %v1813
        %v1815 = vpop.f32.mrf.mxu0
        %v1816 = vpop.f32.mrf.mxu0
        %v1817 = vadd.f32 %v1689, %v1816
        %v1818 = vpop.f32.mrf.mxu0
        %1819 = vmatprep.mubr.bf16.mxu0 0
        %1820 = vmatmul.mubr.bf16.gmra.mxu0 %v1656
        %v1821 = vpop.f32.mrf.mxu0
        %v1822 = vadd.f32 %v1689, %v1821
        %v1823 = vpop.f32.mrf.mxu0
        %v1824 = vpop.f32.mrf.mxu0
        %v1825 = vadd.f32 %v1689, %v1824
        %v1826 = vpop.f32.mrf.mxu0
        %1827 = vmatprep.mubr.bf16.mxu0 0
        %1828 = vmatmul.mubr.bf16.gmra.mxu0 %v1657
        %v1829 = vpop.f32.mrf.mxu0
        %v1830 = vadd.f32 %v1689, %v1829
        %v1831 = vpop.f32.mrf.mxu0
        %v1832 = vpop.f32.mrf.mxu0
        %v1833 = vadd.f32 %v1689, %v1832
        %v1834 = vpop.f32.mrf.mxu0
        %1835 = vmatprep.mubr.bf16.mxu0 0
        %1836 = vmatmul.mubr.bf16.gmra.mxu0 %v1658
        %v1837 = vpop.f32.mrf.mxu0
        %v1838 = vadd.f32 %v1689, %v1837
        %v1839 = vpop.f32.mrf.mxu0
        %v1840 = vpop.f32.mrf.mxu0
        %v1841 = vadd.f32 %v1689, %v1840
        %v1842 = vpop.f32.mrf.mxu0
        %1843 = vmatprep.mubr.bf16.mxu0 0
        %1844 = vmatmul.mubr.bf16.gmra.mxu0 %v1659
        %v1845 = vpop.f32.mrf.mxu0
        %v1846 = vadd.f32 %v1689, %v1845
        %v1847 = vpop.f32.mrf.mxu0
        %v1848 = vpop.f32.mrf.mxu0
        %v1849 = vadd.f32 %v1689, %v1848
        %v1850 = vpop.f32.mrf.mxu0
        %1851 = vmatprep.mubr.bf16.mxu0 0
        %1852 = vmatmul.mubr.bf16.gmra.mxu0 %v1660
        %v1853 = vpop.f32.mrf.mxu0
        %v1854 = vadd.f32 %v1689, %v1853
        %v1855 = vpop.f32.mrf.mxu0
        %v1856 = vpop.f32.mrf.mxu0
        %v1857 = vadd.f32 %v1689, %v1856
        %v1858 = vpop.f32.mrf.mxu0
        %1859 = vmatprep.mubr.bf16.mxu0 0
        %1860 = vmatmul.mubr.bf16.gmra.mxu0 %v1661
        %v1861 = vpop.f32.mrf.mxu0
        %v1862 = vadd.f32 %v1689, %v1861
        %v1863 = vpop.f32.mrf.mxu0
        %v1864 = vpop.f32.mrf.mxu0
        %v1865 = vadd.f32 %v1689, %v1864
        %v1866 = vpop.f32.mrf.mxu0
        %1867 = vmatprep.mubr.bf16.mxu0 0
        %1868 = vmatmul.mubr.bf16.gmra.mxu0 %v1662
        %v1869 = vpop.f32.mrf.mxu0
        %v1870 = vadd.f32 %v1689, %v1869
        %v1871 = vpop.f32.mrf.mxu0
        %v1872 = vpop.f32.mrf.mxu0
        %v1873 = vadd.f32 %v1689, %v1872
        %v1874 = vpop.f32.mrf.mxu0
        %1875 = vmatprep.mubr.bf16.mxu0 0
        %1876 = vmatmul.mubr.bf16.gmra.mxu0 %v1663
        %v1877 = vpop.f32.mrf.mxu0
        %v1878 = vadd.f32 %v1689, %v1877
        %v1879 = vpop.f32.mrf.mxu0
        %v1880 = vpop.f32.mrf.mxu0
        %v1881 = vadd.f32 %v1689, %v1880
        %v1882 = vpop.f32.mrf.mxu0
        %1883 = vmatprep.mubr.bf16.mxu0 0
        %1884 = vmatmul.mubr.bf16.gmra.mxu0 %v1664
        %v1885 = vpop.f32.mrf.mxu0
        %v1886 = vadd.f32 %v1689, %v1885
        %v1887 = vpop.f32.mrf.mxu0
        %v1888 = vpop.f32.mrf.mxu0
        %v1889 = vadd.f32 %v1689, %v1888
        %v1890 = vpop.f32.mrf.mxu0
        %1891 = vmatprep.mubr.bf16.mxu0 0
        %1892 = vmatmul.mubr.bf16.gmra.mxu0 %v1665
        %v1893 = vpop.f32.mrf.mxu0
        %v1894 = vadd.f32 %v1689, %v1893
        %v1895 = vpop.f32.mrf.mxu0
        %v1896 = vpop.f32.mrf.mxu0
        %v1897 = vadd.f32 %v1689, %v1896
        %v1898 = vpop.f32.mrf.mxu0
        %1899 = vdwg.mxu0
        %v1900 = vmax.f32 %v1774, 0.0
        %v1901 = vmax.f32 %v1777, 0.0
        %v1902 = vmax.f32 %v1782, 0.0
        %v1903 = vmax.f32 %v1785, 0.0
        %v1904 = vmax.f32 %v1790, 0.0
        %v1905 = vmax.f32 %v1793, 0.0
        %v1906 = vmax.f32 %v1798, 0.0
        %v1907 = vmax.f32 %v1801, 0.0
        %v1908 = vmax.f32 %v1806, 0.0
        %v1909 = vmax.f32 %v1809, 0.0
        %v1910 = vmax.f32 %v1814, 0.0
        %v1911 = vmax.f32 %v1817, 0.0
        %v1912 = vmax.f32 %v1822, 0.0
        %v1913 = vmax.f32 %v1825, 0.0
        %v1914 = vmax.f32 %v1830, 0.0
        %v1915 = vmax.f32 %v1833, 0.0
        %v1916 = vmax.f32 %v1838, 0.0
        %v1917 = vmax.f32 %v1841, 0.0
        %v1918 = vmax.f32 %v1846, 0.0
        %v1919 = vmax.f32 %v1849, 0.0
        %v1920 = vmax.f32 %v1854, 0.0
        %v1921 = vmax.f32 %v1857, 0.0
        %v1922 = vmax.f32 %v1862, 0.0
        %v1923 = vmax.f32 %v1865, 0.0
        %v1924 = vmax.f32 %v1870, 0.0
        %v1925 = vmax.f32 %v1873, 0.0
        %v1926 = vmax.f32 %v1878, 0.0
        %v1927 = vmax.f32 %v1881, 0.0
        %v1928 = vmax.f32 %v1886, 0.0
        %v1929 = vmax.f32 %v1889, 0.0
        %v1930 = vmax.f32 %v1894, 0.0
        %v1931 = vmax.f32 %v1897, 0.0
        %v1932 = vpack.c.bf16 %v1901, %v1900
        %v1933 = vpack.c.bf16 %v1903, %v1902
        %v1934 = vpack.c.bf16 %v1905, %v1904
        %v1935 = vpack.c.bf16 %v1907, %v1906
        %v1936 = vpack.c.bf16 %v1909, %v1908
        %v1937 = vpack.c.bf16 %v1911, %v1910
        %v1938 = vpack.c.bf16 %v1913, %v1912
        %v1939 = vpack.c.bf16 %v1915, %v1914
        %v1940 = vpack.c.bf16 %v1917, %v1916
        %v1941 = vpack.c.bf16 %v1919, %v1918
        %v1942 = vpack.c.bf16 %v1921, %v1920
        %v1943 = vpack.c.bf16 %v1923, %v1922
        %v1944 = vpack.c.bf16 %v1925, %v1924
        %v1945 = vpack.c.bf16 %v1927, %v1926
        %v1946 = vpack.c.bf16 %v1929, %v1928
        %v1947 = vpack.c.bf16 %v1931, %v1930
        %s1948 = scalar_lea.vmem [#allocation9], 256
        %v1949 = vld [vmem:[%s1948] sm:$0xf]
        %v1950 = vld [vmem:[%s1948 + $0x4] sm:$0xf]
        %v1951 = vld [vmem:[%s1948 + $0x8] sm:$0xf]
        %v1952 = vld [vmem:[%s1948 + $0xc] sm:$0xf]
        %v1953 = vld [vmem:[%s1948 + $0x10] sm:$0xf]
        %v1954 = vld [vmem:[%s1948 + $0x14] sm:$0xf]
        %v1955 = vld [vmem:[%s1948 + $0x18] sm:$0xf]
        %v1956 = vld [vmem:[%s1948 + $0x1c] sm:$0xf]
        %v1957 = vld [vmem:[%s1948 + $0x20] sm:$0xf]
        %v1958 = vld [vmem:[%s1948 + $0x24] sm:$0xf]
        %v1959 = vld [vmem:[%s1948 + $0x28] sm:$0xf]
        %v1960 = vld [vmem:[%s1948 + $0x2c] sm:$0xf]
        %v1961 = vld [vmem:[%s1948 + $0x30] sm:$0xf]
        %v1962 = vld [vmem:[%s1948 + $0x34] sm:$0xf]
        %v1963 = vld [vmem:[%s1948 + $0x38] sm:$0xf]
        %v1964 = vld [vmem:[%s1948 + $0x3c] sm:$0xf]
        %s1965 = scalar_lea.vmem [#allocation11], 4
        %v1966 = vld [vmem:[%s1965] sm:$0x1]
        %v1968 = vlaneseq
        %v1969 = vshrl.u32 %v1968, 7
        %v1970 = vsub.s32 0, %v1969
        %v1971 = vrot.slane %v1966, %v1970
        %v1989 = vunpack.c.l.b16 %v1949
        %v1990 = vunpack.c.l.b16 %v1950
        %v1991 = vunpack.c.l.b16 %v1951
        %v1992 = vunpack.c.l.b16 %v1952
        %v1993 = vunpack.c.l.b16 %v1953
        %v1994 = vunpack.c.l.b16 %v1954
        %v1995 = vunpack.c.l.b16 %v1955
        %v1996 = vunpack.c.l.b16 %v1956
        %v1997 = vunpack.c.l.b16 %v1957
        %v1998 = vunpack.c.l.b16 %v1958
        %v1999 = vunpack.c.l.b16 %v1959
        %v2000 = vunpack.c.l.b16 %v1960
        %v2001 = vunpack.c.l.b16 %v1961
        %v2002 = vunpack.c.l.b16 %v1962
        %v2003 = vunpack.c.l.b16 %v1963
        %v2004 = vunpack.c.l.b16 %v1964
        %v2005 = vpack.c.b16 %v1990, %v1989
        %v2006 = vpack.c.b16 %v1992, %v1991
        %v2007 = vpack.c.b16 %v1994, %v1993
        %v2008 = vpack.c.b16 %v1996, %v1995
        %v2009 = vpack.c.b16 %v1998, %v1997
        %v2010 = vpack.c.b16 %v2000, %v1999
        %v2011 = vpack.c.b16 %v2002, %v2001
        %v2012 = vpack.c.b16 %v2004, %v2003
        %2021 = vmatprep.subr.bf16.mxu0 0
        %2022 = vmatpush1.bf16.msra.mxu0 %v2012
        %2023 = vmatprep.subr.bf16.mxu0 0
        %2024 = vmatpush1.bf16.msra.mxu0 %v2011
        %2025 = vmatprep.subr.bf16.mxu0 0
        %2026 = vmatpush1.bf16.msra.mxu0 %v2010
        %2027 = vmatprep.subr.bf16.mxu0 0
        %2028 = vmatpush1.bf16.msra.mxu0 %v2009
        %2029 = vmatprep.subr.bf16.mxu0 0
        %2030 = vmatpush1.bf16.msra.mxu0 %v2008
        %2031 = vmatprep.subr.bf16.mxu0 0
        %2032 = vmatpush1.bf16.msra.mxu0 %v2007
        %2033 = vmatprep.subr.bf16.mxu0 0
        %2034 = vmatpush1.bf16.msra.mxu0 %v2006
        %2035 = vmatprep.subr.bf16.mxu0 0
        %2036 = vmatpush1.bf16.msra.mxu0 %v2005
        %2037 = vmatprep.subr.bf16.mxu0 0
        %2038 = vmatpush2.bf16.msra.mxu0 0
        %2039 = vmatprep.subr.bf16.mxu0 0
        %2040 = vmatpush2.bf16.msra.mxu0 0
        %2041 = vmatprep.subr.bf16.mxu0 0
        %2042 = vmatpush2.bf16.msra.mxu0 0
        %2043 = vmatprep.subr.bf16.mxu0 0
        %2044 = vmatpush2.bf16.msra.mxu0 0
        %2045 = vmatprep.subr.bf16.mxu0 0
        %2046 = vmatpush2.bf16.msra.mxu0 0
        %2047 = vmatprep.subr.bf16.mxu0 0
        %2048 = vmatpush2.bf16.msra.mxu0 0
        %2049 = vmatprep.subr.bf16.mxu0 0
        %2050 = vmatpush2.bf16.msra.mxu0 0
        %2051 = vmatprep.subr.bf16.mxu0 0
        %2052 = vmatpush2.bf16.msra.mxu0 0
        %2053 = vmatprep.mubr.bf16.mxu0 0
        %2054 = vmatmul.mubr.bf16.gmra.mxu0 %v1932
        %v2055 = vpop.f32.mrf.mxu0
        %v2056 = vadd.f32 %v1971, %v2055
        %v2057 = vpop.f32.mrf.mxu0
        %v2058 = vpop.f32.mrf.mxu0
        %v2059 = vadd.f32 %v1971, %v2058
        %v2060 = vpop.f32.mrf.mxu0
        %2061 = vmatprep.mubr.bf16.mxu0 0
        %2062 = vmatmul.mubr.bf16.gmra.mxu0 %v1933
        %v2063 = vpop.f32.mrf.mxu0
        %v2064 = vadd.f32 %v1971, %v2063
        %v2065 = vpop.f32.mrf.mxu0
        %v2066 = vpop.f32.mrf.mxu0
        %v2067 = vadd.f32 %v1971, %v2066
        %v2068 = vpop.f32.mrf.mxu0
        %2069 = vmatprep.mubr.bf16.mxu0 0
        %2070 = vmatmul.mubr.bf16.gmra.mxu0 %v1934
        %v2071 = vpop.f32.mrf.mxu0
        %v2072 = vadd.f32 %v1971, %v2071
        %v2073 = vpop.f32.mrf.mxu0
        %v2074 = vpop.f32.mrf.mxu0
        %v2075 = vadd.f32 %v1971, %v2074
        %v2076 = vpop.f32.mrf.mxu0
        %2077 = vmatprep.mubr.bf16.mxu0 0
        %2078 = vmatmul.mubr.bf16.gmra.mxu0 %v1935
        %v2079 = vpop.f32.mrf.mxu0
        %v2080 = vadd.f32 %v1971, %v2079
        %v2081 = vpop.f32.mrf.mxu0
        %v2082 = vpop.f32.mrf.mxu0
        %v2083 = vadd.f32 %v1971, %v2082
        %v2084 = vpop.f32.mrf.mxu0
        %2085 = vmatprep.mubr.bf16.mxu0 0
        %2086 = vmatmul.mubr.bf16.gmra.mxu0 %v1936
        %v2087 = vpop.f32.mrf.mxu0
        %v2088 = vadd.f32 %v1971, %v2087
        %v2089 = vpop.f32.mrf.mxu0
        %v2090 = vpop.f32.mrf.mxu0
        %v2091 = vadd.f32 %v1971, %v2090
        %v2092 = vpop.f32.mrf.mxu0
        %2093 = vmatprep.mubr.bf16.mxu0 0
        %2094 = vmatmul.mubr.bf16.gmra.mxu0 %v1937
        %v2095 = vpop.f32.mrf.mxu0
        %v2096 = vadd.f32 %v1971, %v2095
        %v2097 = vpop.f32.mrf.mxu0
        %v2098 = vpop.f32.mrf.mxu0
        %v2099 = vadd.f32 %v1971, %v2098
        %v2100 = vpop.f32.mrf.mxu0
        %2101 = vmatprep.mubr.bf16.mxu0 0
        %2102 = vmatmul.mubr.bf16.gmra.mxu0 %v1938
        %v2103 = vpop.f32.mrf.mxu0
        %v2104 = vadd.f32 %v1971, %v2103
        %v2105 = vpop.f32.mrf.mxu0
        %v2106 = vpop.f32.mrf.mxu0
        %v2107 = vadd.f32 %v1971, %v2106
        %v2108 = vpop.f32.mrf.mxu0
        %2109 = vmatprep.mubr.bf16.mxu0 0
        %2110 = vmatmul.mubr.bf16.gmra.mxu0 %v1939
        %v2111 = vpop.f32.mrf.mxu0
        %v2112 = vadd.f32 %v1971, %v2111
        %v2113 = vpop.f32.mrf.mxu0
        %v2114 = vpop.f32.mrf.mxu0
        %v2115 = vadd.f32 %v1971, %v2114
        %v2116 = vpop.f32.mrf.mxu0
        %2117 = vmatprep.mubr.bf16.mxu0 0
        %2118 = vmatmul.mubr.bf16.gmra.mxu0 %v1940
        %v2119 = vpop.f32.mrf.mxu0
        %v2120 = vadd.f32 %v1971, %v2119
        %v2121 = vpop.f32.mrf.mxu0
        %v2122 = vpop.f32.mrf.mxu0
        %v2123 = vadd.f32 %v1971, %v2122
        %v2124 = vpop.f32.mrf.mxu0
        %2125 = vmatprep.mubr.bf16.mxu0 0
        %2126 = vmatmul.mubr.bf16.gmra.mxu0 %v1941
        %v2127 = vpop.f32.mrf.mxu0
        %v2128 = vadd.f32 %v1971, %v2127
        %v2129 = vpop.f32.mrf.mxu0
        %v2130 = vpop.f32.mrf.mxu0
        %v2131 = vadd.f32 %v1971, %v2130
        %v2132 = vpop.f32.mrf.mxu0
        %2133 = vmatprep.mubr.bf16.mxu0 0
        %2134 = vmatmul.mubr.bf16.gmra.mxu0 %v1942
        %v2135 = vpop.f32.mrf.mxu0
        %v2136 = vadd.f32 %v1971, %v2135
        %v2137 = vpop.f32.mrf.mxu0
        %v2138 = vpop.f32.mrf.mxu0
        %v2139 = vadd.f32 %v1971, %v2138
        %v2140 = vpop.f32.mrf.mxu0
        %2141 = vmatprep.mubr.bf16.mxu0 0
        %2142 = vmatmul.mubr.bf16.gmra.mxu0 %v1943
        %v2143 = vpop.f32.mrf.mxu0
        %v2144 = vadd.f32 %v1971, %v2143
        %v2145 = vpop.f32.mrf.mxu0
        %v2146 = vpop.f32.mrf.mxu0
        %v2147 = vadd.f32 %v1971, %v2146
        %v2148 = vpop.f32.mrf.mxu0
        %2149 = vmatprep.mubr.bf16.mxu0 0
        %2150 = vmatmul.mubr.bf16.gmra.mxu0 %v1944
        %v2151 = vpop.f32.mrf.mxu0
        %v2152 = vadd.f32 %v1971, %v2151
        %v2153 = vpop.f32.mrf.mxu0
        %v2154 = vpop.f32.mrf.mxu0
        %v2155 = vadd.f32 %v1971, %v2154
        %v2156 = vpop.f32.mrf.mxu0
        %2157 = vmatprep.mubr.bf16.mxu0 0
        %2158 = vmatmul.mubr.bf16.gmra.mxu0 %v1945
        %v2159 = vpop.f32.mrf.mxu0
        %v2160 = vadd.f32 %v1971, %v2159
        %v2161 = vpop.f32.mrf.mxu0
        %v2162 = vpop.f32.mrf.mxu0
        %v2163 = vadd.f32 %v1971, %v2162
        %v2164 = vpop.f32.mrf.mxu0
        %2165 = vmatprep.mubr.bf16.mxu0 0
        %2166 = vmatmul.mubr.bf16.gmra.mxu0 %v1946
        %v2167 = vpop.f32.mrf.mxu0
        %v2168 = vadd.f32 %v1971, %v2167
        %v2169 = vpop.f32.mrf.mxu0
        %v2170 = vpop.f32.mrf.mxu0
        %v2171 = vadd.f32 %v1971, %v2170
        %v2172 = vpop.f32.mrf.mxu0
        %2173 = vmatprep.mubr.bf16.mxu0 0
        %2174 = vmatmul.mubr.bf16.gmra.mxu0 %v1947
        %v2175 = vpop.f32.mrf.mxu0
        %v2176 = vadd.f32 %v1971, %v2175
        %v2177 = vpop.f32.mrf.mxu0
        %v2178 = vpop.f32.mrf.mxu0
        %v2179 = vadd.f32 %v1971, %v2178
        %v2180 = vpop.f32.mrf.mxu0
        %2181 = vdwg.mxu0
        %v2182 = vmax.f32 %v2056, 0.0
        %v2183 = vmax.f32 %v2059, 0.0
        %v2184 = vmax.f32 %v2064, 0.0
        %v2185 = vmax.f32 %v2067, 0.0
        %v2186 = vmax.f32 %v2072, 0.0
        %v2187 = vmax.f32 %v2075, 0.0
        %v2188 = vmax.f32 %v2080, 0.0
        %v2189 = vmax.f32 %v2083, 0.0
        %v2190 = vmax.f32 %v2088, 0.0
        %v2191 = vmax.f32 %v2091, 0.0
        %v2192 = vmax.f32 %v2096, 0.0
        %v2193 = vmax.f32 %v2099, 0.0
        %v2194 = vmax.f32 %v2104, 0.0
        %v2195 = vmax.f32 %v2107, 0.0
        %v2196 = vmax.f32 %v2112, 0.0
        %v2197 = vmax.f32 %v2115, 0.0
        %v2198 = vmax.f32 %v2120, 0.0
        %v2199 = vmax.f32 %v2123, 0.0
        %v2200 = vmax.f32 %v2128, 0.0
        %v2201 = vmax.f32 %v2131, 0.0
        %v2202 = vmax.f32 %v2136, 0.0
        %v2203 = vmax.f32 %v2139, 0.0
        %v2204 = vmax.f32 %v2144, 0.0
        %v2205 = vmax.f32 %v2147, 0.0
        %v2206 = vmax.f32 %v2152, 0.0
        %v2207 = vmax.f32 %v2155, 0.0
        %v2208 = vmax.f32 %v2160, 0.0
        %v2209 = vmax.f32 %v2163, 0.0
        %v2210 = vmax.f32 %v2168, 0.0
        %v2211 = vmax.f32 %v2171, 0.0
        %v2212 = vmax.f32 %v2176, 0.0
        %v2213 = vmax.f32 %v2179, 0.0
        %v2214 = vpack.c.bf16 %v2183, %v2182
        %v2215 = vpack.c.bf16 %v2185, %v2184
        %v2216 = vpack.c.bf16 %v2187, %v2186
        %v2217 = vpack.c.bf16 %v2189, %v2188
        %v2218 = vpack.c.bf16 %v2191, %v2190
        %v2219 = vpack.c.bf16 %v2193, %v2192
        %v2220 = vpack.c.bf16 %v2195, %v2194
        %v2221 = vpack.c.bf16 %v2197, %v2196
        %v2222 = vpack.c.bf16 %v2199, %v2198
        %v2223 = vpack.c.bf16 %v2201, %v2200
        %v2224 = vpack.c.bf16 %v2203, %v2202
        %v2225 = vpack.c.bf16 %v2205, %v2204
        %v2226 = vpack.c.bf16 %v2207, %v2206
        %v2227 = vpack.c.bf16 %v2209, %v2208
        %v2228 = vpack.c.bf16 %v2211, %v2210
        %v2229 = vpack.c.bf16 %v2213, %v2212
        %s2230 = scalar_lea.vmem [#allocation9], 320
        %v2231 = vld [vmem:[%s2230] sm:$0xf]
        %v2232 = vld [vmem:[%s2230 + $0x4] sm:$0xf]
        %v2233 = vld [vmem:[%s2230 + $0x8] sm:$0xf]
        %v2234 = vld [vmem:[%s2230 + $0xc] sm:$0xf]
        %v2235 = vld [vmem:[%s2230 + $0x10] sm:$0xf]
        %v2236 = vld [vmem:[%s2230 + $0x14] sm:$0xf]
        %v2237 = vld [vmem:[%s2230 + $0x18] sm:$0xf]
        %v2238 = vld [vmem:[%s2230 + $0x1c] sm:$0xf]
        %v2239 = vld [vmem:[%s2230 + $0x20] sm:$0xf]
        %v2240 = vld [vmem:[%s2230 + $0x24] sm:$0xf]
        %v2241 = vld [vmem:[%s2230 + $0x28] sm:$0xf]
        %v2242 = vld [vmem:[%s2230 + $0x2c] sm:$0xf]
        %v2243 = vld [vmem:[%s2230 + $0x30] sm:$0xf]
        %v2244 = vld [vmem:[%s2230 + $0x34] sm:$0xf]
        %v2245 = vld [vmem:[%s2230 + $0x38] sm:$0xf]
        %v2246 = vld [vmem:[%s2230 + $0x3c] sm:$0xf]
        %s2247 = scalar_lea.vmem [#allocation11], 5
        %v2248 = vld [vmem:[%s2247] sm:$0x1]
        %v2250 = vlaneseq
        %v2251 = vshrl.u32 %v2250, 7
        %v2252 = vsub.s32 0, %v2251
        %v2253 = vrot.slane %v2248, %v2252
        %v2271 = vunpack.c.l.b16 %v2231
        %v2272 = vunpack.c.l.b16 %v2232
        %v2273 = vunpack.c.l.b16 %v2233
        %v2274 = vunpack.c.l.b16 %v2234
        %v2275 = vunpack.c.l.b16 %v2235
        %v2276 = vunpack.c.l.b16 %v2236
        %v2277 = vunpack.c.l.b16 %v2237
        %v2278 = vunpack.c.l.b16 %v2238
        %v2279 = vunpack.c.l.b16 %v2239
        %v2280 = vunpack.c.l.b16 %v2240
        %v2281 = vunpack.c.l.b16 %v2241
        %v2282 = vunpack.c.l.b16 %v2242
        %v2283 = vunpack.c.l.b16 %v2243
        %v2284 = vunpack.c.l.b16 %v2244
        %v2285 = vunpack.c.l.b16 %v2245
        %v2286 = vunpack.c.l.b16 %v2246
        %v2287 = vpack.c.b16 %v2272, %v2271
        %v2288 = vpack.c.b16 %v2274, %v2273
        %v2289 = vpack.c.b16 %v2276, %v2275
        %v2290 = vpack.c.b16 %v2278, %v2277
        %v2291 = vpack.c.b16 %v2280, %v2279
        %v2292 = vpack.c.b16 %v2282, %v2281
        %v2293 = vpack.c.b16 %v2284, %v2283
        %v2294 = vpack.c.b16 %v2286, %v2285
        %2303 = vmatprep.subr.bf16.mxu0 0
        %2304 = vmatpush1.bf16.msra.mxu0 %v2294
        %2305 = vmatprep.subr.bf16.mxu0 0
        %2306 = vmatpush1.bf16.msra.mxu0 %v2293
        %2307 = vmatprep.subr.bf16.mxu0 0
        %2308 = vmatpush1.bf16.msra.mxu0 %v2292
        %2309 = vmatprep.subr.bf16.mxu0 0
        %2310 = vmatpush1.bf16.msra.mxu0 %v2291
        %2311 = vmatprep.subr.bf16.mxu0 0
        %2312 = vmatpush1.bf16.msra.mxu0 %v2290
        %2313 = vmatprep.subr.bf16.mxu0 0
        %2314 = vmatpush1.bf16.msra.mxu0 %v2289
        %2315 = vmatprep.subr.bf16.mxu0 0
        %2316 = vmatpush1.bf16.msra.mxu0 %v2288
        %2317 = vmatprep.subr.bf16.mxu0 0
        %2318 = vmatpush1.bf16.msra.mxu0 %v2287
        %2319 = vmatprep.subr.bf16.mxu0 0
        %2320 = vmatpush2.bf16.msra.mxu0 0
        %2321 = vmatprep.subr.bf16.mxu0 0
        %2322 = vmatpush2.bf16.msra.mxu0 0
        %2323 = vmatprep.subr.bf16.mxu0 0
        %2324 = vmatpush2.bf16.msra.mxu0 0
        %2325 = vmatprep.subr.bf16.mxu0 0
        %2326 = vmatpush2.bf16.msra.mxu0 0
        %2327 = vmatprep.subr.bf16.mxu0 0
        %2328 = vmatpush2.bf16.msra.mxu0 0
        %2329 = vmatprep.subr.bf16.mxu0 0
        %2330 = vmatpush2.bf16.msra.mxu0 0
        %2331 = vmatprep.subr.bf16.mxu0 0
        %2332 = vmatpush2.bf16.msra.mxu0 0
        %2333 = vmatprep.subr.bf16.mxu0 0
        %2334 = vmatpush2.bf16.msra.mxu0 0
        %2335 = vmatprep.mubr.bf16.mxu0 0
        %2336 = vmatmul.mubr.bf16.gmra.mxu0 %v2214
        %v2337 = vpop.f32.mrf.mxu0
        %v2338 = vadd.f32 %v2253, %v2337
        %v2339 = vpop.f32.mrf.mxu0
        %v2340 = vpop.f32.mrf.mxu0
        %v2341 = vadd.f32 %v2253, %v2340
        %v2342 = vpop.f32.mrf.mxu0
        %2343 = vmatprep.mubr.bf16.mxu0 0
        %2344 = vmatmul.mubr.bf16.gmra.mxu0 %v2215
        %v2345 = vpop.f32.mrf.mxu0
        %v2346 = vadd.f32 %v2253, %v2345
        %v2347 = vpop.f32.mrf.mxu0
        %v2348 = vpop.f32.mrf.mxu0
        %v2349 = vadd.f32 %v2253, %v2348
        %v2350 = vpop.f32.mrf.mxu0
        %2351 = vmatprep.mubr.bf16.mxu0 0
        %2352 = vmatmul.mubr.bf16.gmra.mxu0 %v2216
        %v2353 = vpop.f32.mrf.mxu0
        %v2354 = vadd.f32 %v2253, %v2353
        %v2355 = vpop.f32.mrf.mxu0
        %v2356 = vpop.f32.mrf.mxu0
        %v2357 = vadd.f32 %v2253, %v2356
        %v2358 = vpop.f32.mrf.mxu0
        %2359 = vmatprep.mubr.bf16.mxu0 0
        %2360 = vmatmul.mubr.bf16.gmra.mxu0 %v2217
        %v2361 = vpop.f32.mrf.mxu0
        %v2362 = vadd.f32 %v2253, %v2361
        %v2363 = vpop.f32.mrf.mxu0
        %v2364 = vpop.f32.mrf.mxu0
        %v2365 = vadd.f32 %v2253, %v2364
        %v2366 = vpop.f32.mrf.mxu0
        %2367 = vmatprep.mubr.bf16.mxu0 0
        %2368 = vmatmul.mubr.bf16.gmra.mxu0 %v2218
        %v2369 = vpop.f32.mrf.mxu0
        %v2370 = vadd.f32 %v2253, %v2369
        %v2371 = vpop.f32.mrf.mxu0
        %v2372 = vpop.f32.mrf.mxu0
        %v2373 = vadd.f32 %v2253, %v2372
        %v2374 = vpop.f32.mrf.mxu0
        %2375 = vmatprep.mubr.bf16.mxu0 0
        %2376 = vmatmul.mubr.bf16.gmra.mxu0 %v2219
        %v2377 = vpop.f32.mrf.mxu0
        %v2378 = vadd.f32 %v2253, %v2377
        %v2379 = vpop.f32.mrf.mxu0
        %v2380 = vpop.f32.mrf.mxu0
        %v2381 = vadd.f32 %v2253, %v2380
        %v2382 = vpop.f32.mrf.mxu0
        %2383 = vmatprep.mubr.bf16.mxu0 0
        %2384 = vmatmul.mubr.bf16.gmra.mxu0 %v2220
        %v2385 = vpop.f32.mrf.mxu0
        %v2386 = vadd.f32 %v2253, %v2385
        %v2387 = vpop.f32.mrf.mxu0
        %v2388 = vpop.f32.mrf.mxu0
        %v2389 = vadd.f32 %v2253, %v2388
        %v2390 = vpop.f32.mrf.mxu0
        %2391 = vmatprep.mubr.bf16.mxu0 0
        %2392 = vmatmul.mubr.bf16.gmra.mxu0 %v2221
        %v2393 = vpop.f32.mrf.mxu0
        %v2394 = vadd.f32 %v2253, %v2393
        %v2395 = vpop.f32.mrf.mxu0
        %v2396 = vpop.f32.mrf.mxu0
        %v2397 = vadd.f32 %v2253, %v2396
        %v2398 = vpop.f32.mrf.mxu0
        %2399 = vmatprep.mubr.bf16.mxu0 0
        %2400 = vmatmul.mubr.bf16.gmra.mxu0 %v2222
        %v2401 = vpop.f32.mrf.mxu0
        %v2402 = vadd.f32 %v2253, %v2401
        %v2403 = vpop.f32.mrf.mxu0
        %v2404 = vpop.f32.mrf.mxu0
        %v2405 = vadd.f32 %v2253, %v2404
        %v2406 = vpop.f32.mrf.mxu0
        %2407 = vmatprep.mubr.bf16.mxu0 0
        %2408 = vmatmul.mubr.bf16.gmra.mxu0 %v2223
        %v2409 = vpop.f32.mrf.mxu0
        %v2410 = vadd.f32 %v2253, %v2409
        %v2411 = vpop.f32.mrf.mxu0
        %v2412 = vpop.f32.mrf.mxu0
        %v2413 = vadd.f32 %v2253, %v2412
        %v2414 = vpop.f32.mrf.mxu0
        %2415 = vmatprep.mubr.bf16.mxu0 0
        %2416 = vmatmul.mubr.bf16.gmra.mxu0 %v2224
        %v2417 = vpop.f32.mrf.mxu0
        %v2418 = vadd.f32 %v2253, %v2417
        %v2419 = vpop.f32.mrf.mxu0
        %v2420 = vpop.f32.mrf.mxu0
        %v2421 = vadd.f32 %v2253, %v2420
        %v2422 = vpop.f32.mrf.mxu0
        %2423 = vmatprep.mubr.bf16.mxu0 0
        %2424 = vmatmul.mubr.bf16.gmra.mxu0 %v2225
        %v2425 = vpop.f32.mrf.mxu0
        %v2426 = vadd.f32 %v2253, %v2425
        %v2427 = vpop.f32.mrf.mxu0
        %v2428 = vpop.f32.mrf.mxu0
        %v2429 = vadd.f32 %v2253, %v2428
        %v2430 = vpop.f32.mrf.mxu0
        %2431 = vmatprep.mubr.bf16.mxu0 0
        %2432 = vmatmul.mubr.bf16.gmra.mxu0 %v2226
        %v2433 = vpop.f32.mrf.mxu0
        %v2434 = vadd.f32 %v2253, %v2433
        %v2435 = vpop.f32.mrf.mxu0
        %v2436 = vpop.f32.mrf.mxu0
        %v2437 = vadd.f32 %v2253, %v2436
        %v2438 = vpop.f32.mrf.mxu0
        %2439 = vmatprep.mubr.bf16.mxu0 0
        %2440 = vmatmul.mubr.bf16.gmra.mxu0 %v2227
        %v2441 = vpop.f32.mrf.mxu0
        %v2442 = vadd.f32 %v2253, %v2441
        %v2443 = vpop.f32.mrf.mxu0
        %v2444 = vpop.f32.mrf.mxu0
        %v2445 = vadd.f32 %v2253, %v2444
        %v2446 = vpop.f32.mrf.mxu0
        %2447 = vmatprep.mubr.bf16.mxu0 0
        %2448 = vmatmul.mubr.bf16.gmra.mxu0 %v2228
        %v2449 = vpop.f32.mrf.mxu0
        %v2450 = vadd.f32 %v2253, %v2449
        %v2451 = vpop.f32.mrf.mxu0
        %v2452 = vpop.f32.mrf.mxu0
        %v2453 = vadd.f32 %v2253, %v2452
        %v2454 = vpop.f32.mrf.mxu0
        %2455 = vmatprep.mubr.bf16.mxu0 0
        %2456 = vmatmul.mubr.bf16.gmra.mxu0 %v2229
        %v2457 = vpop.f32.mrf.mxu0
        %v2458 = vadd.f32 %v2253, %v2457
        %v2459 = vpop.f32.mrf.mxu0
        %v2460 = vpop.f32.mrf.mxu0
        %v2461 = vadd.f32 %v2253, %v2460
        %v2462 = vpop.f32.mrf.mxu0
        %2463 = vdwg.mxu0
        %v2464 = vmax.f32 %v2338, 0.0
        %v2465 = vmax.f32 %v2341, 0.0
        %v2466 = vmax.f32 %v2346, 0.0
        %v2467 = vmax.f32 %v2349, 0.0
        %v2468 = vmax.f32 %v2354, 0.0
        %v2469 = vmax.f32 %v2357, 0.0
        %v2470 = vmax.f32 %v2362, 0.0
        %v2471 = vmax.f32 %v2365, 0.0
        %v2472 = vmax.f32 %v2370, 0.0
        %v2473 = vmax.f32 %v2373, 0.0
        %v2474 = vmax.f32 %v2378, 0.0
        %v2475 = vmax.f32 %v2381, 0.0
        %v2476 = vmax.f32 %v2386, 0.0
        %v2477 = vmax.f32 %v2389, 0.0
        %v2478 = vmax.f32 %v2394, 0.0
        %v2479 = vmax.f32 %v2397, 0.0
        %v2480 = vmax.f32 %v2402, 0.0
        %v2481 = vmax.f32 %v2405, 0.0
        %v2482 = vmax.f32 %v2410, 0.0
        %v2483 = vmax.f32 %v2413, 0.0
        %v2484 = vmax.f32 %v2418, 0.0
        %v2485 = vmax.f32 %v2421, 0.0
        %v2486 = vmax.f32 %v2426, 0.0
        %v2487 = vmax.f32 %v2429, 0.0
        %v2488 = vmax.f32 %v2434, 0.0
        %v2489 = vmax.f32 %v2437, 0.0
        %v2490 = vmax.f32 %v2442, 0.0
        %v2491 = vmax.f32 %v2445, 0.0
        %v2492 = vmax.f32 %v2450, 0.0
        %v2493 = vmax.f32 %v2453, 0.0
        %v2494 = vmax.f32 %v2458, 0.0
        %v2495 = vmax.f32 %v2461, 0.0
        %v2496 = vpack.c.bf16 %v2465, %v2464
        %v2497 = vpack.c.bf16 %v2467, %v2466
        %v2498 = vpack.c.bf16 %v2469, %v2468
        %v2499 = vpack.c.bf16 %v2471, %v2470
        %v2500 = vpack.c.bf16 %v2473, %v2472
        %v2501 = vpack.c.bf16 %v2475, %v2474
        %v2502 = vpack.c.bf16 %v2477, %v2476
        %v2503 = vpack.c.bf16 %v2479, %v2478
        %v2504 = vpack.c.bf16 %v2481, %v2480
        %v2505 = vpack.c.bf16 %v2483, %v2482
        %v2506 = vpack.c.bf16 %v2485, %v2484
        %v2507 = vpack.c.bf16 %v2487, %v2486
        %v2508 = vpack.c.bf16 %v2489, %v2488
        %v2509 = vpack.c.bf16 %v2491, %v2490
        %v2510 = vpack.c.bf16 %v2493, %v2492
        %v2511 = vpack.c.bf16 %v2495, %v2494
        %s2512 = scalar_lea.vmem [#allocation9], 384
        %v2513 = vld [vmem:[%s2512] sm:$0xf]
        %v2514 = vld [vmem:[%s2512 + $0x4] sm:$0xf]
        %v2515 = vld [vmem:[%s2512 + $0x8] sm:$0xf]
        %v2516 = vld [vmem:[%s2512 + $0xc] sm:$0xf]
        %v2517 = vld [vmem:[%s2512 + $0x10] sm:$0xf]
        %v2518 = vld [vmem:[%s2512 + $0x14] sm:$0xf]
        %v2519 = vld [vmem:[%s2512 + $0x18] sm:$0xf]
        %v2520 = vld [vmem:[%s2512 + $0x1c] sm:$0xf]
        %v2521 = vld [vmem:[%s2512 + $0x20] sm:$0xf]
        %v2522 = vld [vmem:[%s2512 + $0x24] sm:$0xf]
        %v2523 = vld [vmem:[%s2512 + $0x28] sm:$0xf]
        %v2524 = vld [vmem:[%s2512 + $0x2c] sm:$0xf]
        %v2525 = vld [vmem:[%s2512 + $0x30] sm:$0xf]
        %v2526 = vld [vmem:[%s2512 + $0x34] sm:$0xf]
        %v2527 = vld [vmem:[%s2512 + $0x38] sm:$0xf]
        %v2528 = vld [vmem:[%s2512 + $0x3c] sm:$0xf]
        %s2529 = scalar_lea.vmem [#allocation11], 6
        %v2530 = vld [vmem:[%s2529] sm:$0x1]
        %v2532 = vlaneseq
        %v2533 = vshrl.u32 %v2532, 7
        %v2534 = vsub.s32 0, %v2533
        %v2535 = vrot.slane %v2530, %v2534
        %v2553 = vunpack.c.l.b16 %v2513
        %v2554 = vunpack.c.l.b16 %v2514
        %v2555 = vunpack.c.l.b16 %v2515
        %v2556 = vunpack.c.l.b16 %v2516
        %v2557 = vunpack.c.l.b16 %v2517
        %v2558 = vunpack.c.l.b16 %v2518
        %v2559 = vunpack.c.l.b16 %v2519
        %v2560 = vunpack.c.l.b16 %v2520
        %v2561 = vunpack.c.l.b16 %v2521
        %v2562 = vunpack.c.l.b16 %v2522
        %v2563 = vunpack.c.l.b16 %v2523
        %v2564 = vunpack.c.l.b16 %v2524
        %v2565 = vunpack.c.l.b16 %v2525
        %v2566 = vunpack.c.l.b16 %v2526
        %v2567 = vunpack.c.l.b16 %v2527
        %v2568 = vunpack.c.l.b16 %v2528
        %v2569 = vpack.c.b16 %v2554, %v2553
        %v2570 = vpack.c.b16 %v2556, %v2555
        %v2571 = vpack.c.b16 %v2558, %v2557
        %v2572 = vpack.c.b16 %v2560, %v2559
        %v2573 = vpack.c.b16 %v2562, %v2561
        %v2574 = vpack.c.b16 %v2564, %v2563
        %v2575 = vpack.c.b16 %v2566, %v2565
        %v2576 = vpack.c.b16 %v2568, %v2567
        %2585 = vmatprep.subr.bf16.mxu0 0
        %2586 = vmatpush1.bf16.msra.mxu0 %v2576
        %2587 = vmatprep.subr.bf16.mxu0 0
        %2588 = vmatpush1.bf16.msra.mxu0 %v2575
        %2589 = vmatprep.subr.bf16.mxu0 0
        %2590 = vmatpush1.bf16.msra.mxu0 %v2574
        %2591 = vmatprep.subr.bf16.mxu0 0
        %2592 = vmatpush1.bf16.msra.mxu0 %v2573
        %2593 = vmatprep.subr.bf16.mxu0 0
        %2594 = vmatpush1.bf16.msra.mxu0 %v2572
        %2595 = vmatprep.subr.bf16.mxu0 0
        %2596 = vmatpush1.bf16.msra.mxu0 %v2571
        %2597 = vmatprep.subr.bf16.mxu0 0
        %2598 = vmatpush1.bf16.msra.mxu0 %v2570
        %2599 = vmatprep.subr.bf16.mxu0 0
        %2600 = vmatpush1.bf16.msra.mxu0 %v2569
        %2601 = vmatprep.subr.bf16.mxu0 0
        %2602 = vmatpush2.bf16.msra.mxu0 0
        %2603 = vmatprep.subr.bf16.mxu0 0
        %2604 = vmatpush2.bf16.msra.mxu0 0
        %2605 = vmatprep.subr.bf16.mxu0 0
        %2606 = vmatpush2.bf16.msra.mxu0 0
        %2607 = vmatprep.subr.bf16.mxu0 0
        %2608 = vmatpush2.bf16.msra.mxu0 0
        %2609 = vmatprep.subr.bf16.mxu0 0
        %2610 = vmatpush2.bf16.msra.mxu0 0
        %2611 = vmatprep.subr.bf16.mxu0 0
        %2612 = vmatpush2.bf16.msra.mxu0 0
        %2613 = vmatprep.subr.bf16.mxu0 0
        %2614 = vmatpush2.bf16.msra.mxu0 0
        %2615 = vmatprep.subr.bf16.mxu0 0
        %2616 = vmatpush2.bf16.msra.mxu0 0
        %2617 = vmatprep.mubr.bf16.mxu0 0
        %2618 = vmatmul.mubr.bf16.gmra.mxu0 %v2496
        %v2619 = vpop.f32.mrf.mxu0
        %v2620 = vadd.f32 %v2535, %v2619
        %v2621 = vpop.f32.mrf.mxu0
        %v2622 = vpop.f32.mrf.mxu0
        %v2623 = vadd.f32 %v2535, %v2622
        %v2624 = vpop.f32.mrf.mxu0
        %2625 = vmatprep.mubr.bf16.mxu0 0
        %2626 = vmatmul.mubr.bf16.gmra.mxu0 %v2497
        %v2627 = vpop.f32.mrf.mxu0
        %v2628 = vadd.f32 %v2535, %v2627
        %v2629 = vpop.f32.mrf.mxu0
        %v2630 = vpop.f32.mrf.mxu0
        %v2631 = vadd.f32 %v2535, %v2630
        %v2632 = vpop.f32.mrf.mxu0
        %2633 = vmatprep.mubr.bf16.mxu0 0
        %2634 = vmatmul.mubr.bf16.gmra.mxu0 %v2498
        %v2635 = vpop.f32.mrf.mxu0
        %v2636 = vadd.f32 %v2535, %v2635
        %v2637 = vpop.f32.mrf.mxu0
        %v2638 = vpop.f32.mrf.mxu0
        %v2639 = vadd.f32 %v2535, %v2638
        %v2640 = vpop.f32.mrf.mxu0
        %2641 = vmatprep.mubr.bf16.mxu0 0
        %2642 = vmatmul.mubr.bf16.gmra.mxu0 %v2499
        %v2643 = vpop.f32.mrf.mxu0
        %v2644 = vadd.f32 %v2535, %v2643
        %v2645 = vpop.f32.mrf.mxu0
        %v2646 = vpop.f32.mrf.mxu0
        %v2647 = vadd.f32 %v2535, %v2646
        %v2648 = vpop.f32.mrf.mxu0
        %2649 = vmatprep.mubr.bf16.mxu0 0
        %2650 = vmatmul.mubr.bf16.gmra.mxu0 %v2500
        %v2651 = vpop.f32.mrf.mxu0
        %v2652 = vadd.f32 %v2535, %v2651
        %v2653 = vpop.f32.mrf.mxu0
        %v2654 = vpop.f32.mrf.mxu0
        %v2655 = vadd.f32 %v2535, %v2654
        %v2656 = vpop.f32.mrf.mxu0
        %2657 = vmatprep.mubr.bf16.mxu0 0
        %2658 = vmatmul.mubr.bf16.gmra.mxu0 %v2501
        %v2659 = vpop.f32.mrf.mxu0
        %v2660 = vadd.f32 %v2535, %v2659
        %v2661 = vpop.f32.mrf.mxu0
        %v2662 = vpop.f32.mrf.mxu0
        %v2663 = vadd.f32 %v2535, %v2662
        %v2664 = vpop.f32.mrf.mxu0
        %2665 = vmatprep.mubr.bf16.mxu0 0
        %2666 = vmatmul.mubr.bf16.gmra.mxu0 %v2502
        %v2667 = vpop.f32.mrf.mxu0
        %v2668 = vadd.f32 %v2535, %v2667
        %v2669 = vpop.f32.mrf.mxu0
        %v2670 = vpop.f32.mrf.mxu0
        %v2671 = vadd.f32 %v2535, %v2670
        %v2672 = vpop.f32.mrf.mxu0
        %2673 = vmatprep.mubr.bf16.mxu0 0
        %2674 = vmatmul.mubr.bf16.gmra.mxu0 %v2503
        %v2675 = vpop.f32.mrf.mxu0
        %v2676 = vadd.f32 %v2535, %v2675
        %v2677 = vpop.f32.mrf.mxu0
        %v2678 = vpop.f32.mrf.mxu0
        %v2679 = vadd.f32 %v2535, %v2678
        %v2680 = vpop.f32.mrf.mxu0
        %2681 = vmatprep.mubr.bf16.mxu0 0
        %2682 = vmatmul.mubr.bf16.gmra.mxu0 %v2504
        %v2683 = vpop.f32.mrf.mxu0
        %v2684 = vadd.f32 %v2535, %v2683
        %v2685 = vpop.f32.mrf.mxu0
        %v2686 = vpop.f32.mrf.mxu0
        %v2687 = vadd.f32 %v2535, %v2686
        %v2688 = vpop.f32.mrf.mxu0
        %2689 = vmatprep.mubr.bf16.mxu0 0
        %2690 = vmatmul.mubr.bf16.gmra.mxu0 %v2505
        %v2691 = vpop.f32.mrf.mxu0
        %v2692 = vadd.f32 %v2535, %v2691
        %v2693 = vpop.f32.mrf.mxu0
        %v2694 = vpop.f32.mrf.mxu0
        %v2695 = vadd.f32 %v2535, %v2694
        %v2696 = vpop.f32.mrf.mxu0
        %2697 = vmatprep.mubr.bf16.mxu0 0
        %2698 = vmatmul.mubr.bf16.gmra.mxu0 %v2506
        %v2699 = vpop.f32.mrf.mxu0
        %v2700 = vadd.f32 %v2535, %v2699
        %v2701 = vpop.f32.mrf.mxu0
        %v2702 = vpop.f32.mrf.mxu0
        %v2703 = vadd.f32 %v2535, %v2702
        %v2704 = vpop.f32.mrf.mxu0
        %2705 = vmatprep.mubr.bf16.mxu0 0
        %2706 = vmatmul.mubr.bf16.gmra.mxu0 %v2507
        %v2707 = vpop.f32.mrf.mxu0
        %v2708 = vadd.f32 %v2535, %v2707
        %v2709 = vpop.f32.mrf.mxu0
        %v2710 = vpop.f32.mrf.mxu0
        %v2711 = vadd.f32 %v2535, %v2710
        %v2712 = vpop.f32.mrf.mxu0
        %2713 = vmatprep.mubr.bf16.mxu0 0
        %2714 = vmatmul.mubr.bf16.gmra.mxu0 %v2508
        %v2715 = vpop.f32.mrf.mxu0
        %v2716 = vadd.f32 %v2535, %v2715
        %v2717 = vpop.f32.mrf.mxu0
        %v2718 = vpop.f32.mrf.mxu0
        %v2719 = vadd.f32 %v2535, %v2718
        %v2720 = vpop.f32.mrf.mxu0
        %2721 = vmatprep.mubr.bf16.mxu0 0
        %2722 = vmatmul.mubr.bf16.gmra.mxu0 %v2509
        %v2723 = vpop.f32.mrf.mxu0
        %v2724 = vadd.f32 %v2535, %v2723
        %v2725 = vpop.f32.mrf.mxu0
        %v2726 = vpop.f32.mrf.mxu0
        %v2727 = vadd.f32 %v2535, %v2726
        %v2728 = vpop.f32.mrf.mxu0
        %2729 = vmatprep.mubr.bf16.mxu0 0
        %2730 = vmatmul.mubr.bf16.gmra.mxu0 %v2510
        %v2731 = vpop.f32.mrf.mxu0
        %v2732 = vadd.f32 %v2535, %v2731
        %v2733 = vpop.f32.mrf.mxu0
        %v2734 = vpop.f32.mrf.mxu0
        %v2735 = vadd.f32 %v2535, %v2734
        %v2736 = vpop.f32.mrf.mxu0
        %2737 = vmatprep.mubr.bf16.mxu0 0
        %2738 = vmatmul.mubr.bf16.gmra.mxu0 %v2511
        %v2739 = vpop.f32.mrf.mxu0
        %v2740 = vadd.f32 %v2535, %v2739
        %v2741 = vpop.f32.mrf.mxu0
        %v2742 = vpop.f32.mrf.mxu0
        %v2743 = vadd.f32 %v2535, %v2742
        %v2744 = vpop.f32.mrf.mxu0
        %2745 = vdwg.mxu0
        %v2746 = vmax.f32 %v2620, 0.0
        %v2747 = vmax.f32 %v2623, 0.0
        %v2748 = vmax.f32 %v2628, 0.0
        %v2749 = vmax.f32 %v2631, 0.0
        %v2750 = vmax.f32 %v2636, 0.0
        %v2751 = vmax.f32 %v2639, 0.0
        %v2752 = vmax.f32 %v2644, 0.0
        %v2753 = vmax.f32 %v2647, 0.0
        %v2754 = vmax.f32 %v2652, 0.0
        %v2755 = vmax.f32 %v2655, 0.0
        %v2756 = vmax.f32 %v2660, 0.0
        %v2757 = vmax.f32 %v2663, 0.0
        %v2758 = vmax.f32 %v2668, 0.0
        %v2759 = vmax.f32 %v2671, 0.0
        %v2760 = vmax.f32 %v2676, 0.0
        %v2761 = vmax.f32 %v2679, 0.0
        %v2762 = vmax.f32 %v2684, 0.0
        %v2763 = vmax.f32 %v2687, 0.0
        %v2764 = vmax.f32 %v2692, 0.0
        %v2765 = vmax.f32 %v2695, 0.0
        %v2766 = vmax.f32 %v2700, 0.0
        %v2767 = vmax.f32 %v2703, 0.0
        %v2768 = vmax.f32 %v2708, 0.0
        %v2769 = vmax.f32 %v2711, 0.0
        %v2770 = vmax.f32 %v2716, 0.0
        %v2771 = vmax.f32 %v2719, 0.0
        %v2772 = vmax.f32 %v2724, 0.0
        %v2773 = vmax.f32 %v2727, 0.0
        %v2774 = vmax.f32 %v2732, 0.0
        %v2775 = vmax.f32 %v2735, 0.0
        %v2776 = vmax.f32 %v2740, 0.0
        %v2777 = vmax.f32 %v2743, 0.0
        %v2778 = vpack.c.bf16 %v2747, %v2746
        %v2779 = vpack.c.bf16 %v2749, %v2748
        %v2780 = vpack.c.bf16 %v2751, %v2750
        %v2781 = vpack.c.bf16 %v2753, %v2752
        %v2782 = vpack.c.bf16 %v2755, %v2754
        %v2783 = vpack.c.bf16 %v2757, %v2756
        %v2784 = vpack.c.bf16 %v2759, %v2758
        %v2785 = vpack.c.bf16 %v2761, %v2760
        %v2786 = vpack.c.bf16 %v2763, %v2762
        %v2787 = vpack.c.bf16 %v2765, %v2764
        %v2788 = vpack.c.bf16 %v2767, %v2766
        %v2789 = vpack.c.bf16 %v2769, %v2768
        %v2790 = vpack.c.bf16 %v2771, %v2770
        %v2791 = vpack.c.bf16 %v2773, %v2772
        %v2792 = vpack.c.bf16 %v2775, %v2774
        %v2793 = vpack.c.bf16 %v2777, %v2776
        %v2810 = vunpack.c.l.b16 %v2778
        %v2811 = vunpack.c.h.b16 %v2778
        %v2812 = vunpack.c.l.b16 %v2779
        %v2813 = vunpack.c.h.b16 %v2779
        %v2814 = vunpack.c.l.b16 %v2780
        %v2815 = vunpack.c.h.b16 %v2780
        %v2816 = vunpack.c.l.b16 %v2781
        %v2817 = vunpack.c.h.b16 %v2781
        %v2818 = vunpack.c.l.b16 %v2782
        %v2819 = vunpack.c.h.b16 %v2782
        %v2820 = vunpack.c.l.b16 %v2783
        %v2821 = vunpack.c.h.b16 %v2783
        %v2822 = vunpack.c.l.b16 %v2784
        %v2823 = vunpack.c.h.b16 %v2784
        %v2824 = vunpack.c.l.b16 %v2785
        %v2825 = vunpack.c.h.b16 %v2785
        %v2826 = vunpack.c.l.b16 %v2786
        %v2827 = vunpack.c.h.b16 %v2786
        %v2828 = vunpack.c.l.b16 %v2787
        %v2829 = vunpack.c.h.b16 %v2787
        %v2830 = vunpack.c.l.b16 %v2788
        %v2831 = vunpack.c.h.b16 %v2788
        %v2832 = vunpack.c.l.b16 %v2789
        %v2833 = vunpack.c.h.b16 %v2789
        %v2834 = vunpack.c.l.b16 %v2790
        %v2835 = vunpack.c.h.b16 %v2790
        %v2836 = vunpack.c.l.b16 %v2791
        %v2837 = vunpack.c.h.b16 %v2791
        %v2838 = vunpack.c.l.b16 %v2792
        %v2839 = vunpack.c.h.b16 %v2792
        %v2840 = vunpack.c.l.b16 %v2793
        %v2841 = vunpack.c.h.b16 %v2793
        %v2842 = vpack.c.b16 %v2810, %v2810
        %v2843 = vpack.c.b16 %v2811, %v2811
        %v2844 = vpack.c.b16 %v2812, %v2812
        %v2845 = vpack.c.b16 %v2813, %v2813
        %v2846 = vpack.c.b16 %v2814, %v2814
        %v2847 = vpack.c.b16 %v2815, %v2815
        %v2848 = vpack.c.b16 %v2816, %v2816
        %v2849 = vpack.c.b16 %v2817, %v2817
        %v2850 = vpack.c.b16 %v2818, %v2818
        %v2851 = vpack.c.b16 %v2819, %v2819
        %v2852 = vpack.c.b16 %v2820, %v2820
        %v2853 = vpack.c.b16 %v2821, %v2821
        %v2854 = vpack.c.b16 %v2822, %v2822
        %v2855 = vpack.c.b16 %v2823, %v2823
        %v2856 = vpack.c.b16 %v2824, %v2824
        %v2857 = vpack.c.b16 %v2825, %v2825
        %v2858 = vpack.c.b16 %v2826, %v2826
        %v2859 = vpack.c.b16 %v2827, %v2827
        %v2860 = vpack.c.b16 %v2828, %v2828
        %v2861 = vpack.c.b16 %v2829, %v2829
        %v2862 = vpack.c.b16 %v2830, %v2830
        %v2863 = vpack.c.b16 %v2831, %v2831
        %v2864 = vpack.c.b16 %v2832, %v2832
        %v2865 = vpack.c.b16 %v2833, %v2833
        %v2866 = vpack.c.b16 %v2834, %v2834
        %v2867 = vpack.c.b16 %v2835, %v2835
        %v2868 = vpack.c.b16 %v2836, %v2836
        %v2869 = vpack.c.b16 %v2837, %v2837
        %v2870 = vpack.c.b16 %v2838, %v2838
        %v2871 = vpack.c.b16 %v2839, %v2839
        %v2872 = vpack.c.b16 %v2840, %v2840
        %v2873 = vpack.c.b16 %v2841, %v2841
        %2906 = vst [vmem:[#allocation2] sm:$0xf] %v2842
        %2907 = vst [vmem:[#allocation2 + $0x8] sm:$0xf] %v2843
        %2908 = vst [vmem:[#allocation2 + $0x10] sm:$0xf] %v2844
        %2909 = vst [vmem:[#allocation2 + $0x18] sm:$0xf] %v2845
        %2910 = vst [vmem:[#allocation2 + $0x20] sm:$0xf] %v2846
        %2911 = vst [vmem:[#allocation2 + $0x28] sm:$0xf] %v2847
        %2912 = vst [vmem:[#allocation2 + $0x30] sm:$0xf] %v2848
        %2913 = vst [vmem:[#allocation2 + $0x38] sm:$0xf] %v2849
        %2914 = vst [vmem:[#allocation2 + $0x40] sm:$0xf] %v2850
        %2915 = vst [vmem:[#allocation2 + $0x48] sm:$0xf] %v2851
        %2916 = vst [vmem:[#allocation2 + $0x50] sm:$0xf] %v2852
        %2917 = vst [vmem:[#allocation2 + $0x58] sm:$0xf] %v2853
        %2918 = vst [vmem:[#allocation2 + $0x60] sm:$0xf] %v2854
        %2919 = vst [vmem:[#allocation2 + $0x68] sm:$0xf] %v2855
        %2920 = vst [vmem:[#allocation2 + $0x70] sm:$0xf] %v2856
        %2921 = vst [vmem:[#allocation2 + $0x78] sm:$0xf] %v2857
        %2922 = vst [vmem:[#allocation2 + $0x80] sm:$0xf] %v2858
        %2923 = vst [vmem:[#allocation2 + $0x88] sm:$0xf] %v2859
        %2924 = vst [vmem:[#allocation2 + $0x90] sm:$0xf] %v2860
        %2925 = vst [vmem:[#allocation2 + $0x98] sm:$0xf] %v2861
        %2926 = vst [vmem:[#allocation2 + $0xa0] sm:$0xf] %v2862
        %2927 = vst [vmem:[#allocation2 + $0xa8] sm:$0xf] %v2863
        %2928 = vst [vmem:[#allocation2 + $0xb0] sm:$0xf] %v2864
        %2929 = vst [vmem:[#allocation2 + $0xb8] sm:$0xf] %v2865
        %2930 = vst [vmem:[#allocation2 + $0xc0] sm:$0xf] %v2866
        %2931 = vst [vmem:[#allocation2 + $0xc8] sm:$0xf] %v2867
        %2932 = vst [vmem:[#allocation2 + $0xd0] sm:$0xf] %v2868
        %2933 = vst [vmem:[#allocation2 + $0xd8] sm:$0xf] %v2869
        %2934 = vst [vmem:[#allocation2 + $0xe0] sm:$0xf] %v2870
        %2935 = vst [vmem:[#allocation2 + $0xe8] sm:$0xf] %v2871
        %2936 = vst [vmem:[#allocation2 + $0xf0] sm:$0xf] %v2872
        %2937 = vst [vmem:[#allocation2 + $0xf8] sm:$0xf] %v2873
        %v2938 = vld [vmem:[%s428] sm:$0xff]
        %v2939 = vld [vmem:[%s428 + $0x8] sm:$0xff]
        %v2940 = vld [vmem:[%s428 + $0x10] sm:$0xff]
        %v2941 = vld [vmem:[%s428 + $0x18] sm:$0xff]
        %v2942 = vld [vmem:[%s428 + $0x20] sm:$0xff]
        %v2943 = vld [vmem:[%s428 + $0x28] sm:$0xff]
        %v2944 = vld [vmem:[%s428 + $0x30] sm:$0xff]
        %v2945 = vld [vmem:[%s428 + $0x38] sm:$0xff]
        %v2946 = vld [vmem:[%s428 + $0x40] sm:$0xff]
        %v2947 = vld [vmem:[%s428 + $0x48] sm:$0xff]
        %v2948 = vld [vmem:[%s428 + $0x50] sm:$0xff]
        %v2949 = vld [vmem:[%s428 + $0x58] sm:$0xff]
        %v2950 = vld [vmem:[%s428 + $0x60] sm:$0xff]
        %v2951 = vld [vmem:[%s428 + $0x68] sm:$0xff]
        %v2952 = vld [vmem:[%s428 + $0x70] sm:$0xff]
        %v2953 = vld [vmem:[%s428 + $0x78] sm:$0xff]
        %v2954 = vld [vmem:[%s428 + $0x80] sm:$0xff]
        %v2955 = vld [vmem:[%s428 + $0x88] sm:$0xff]
        %v2956 = vld [vmem:[%s428 + $0x90] sm:$0xff]
        %v2957 = vld [vmem:[%s428 + $0x98] sm:$0xff]
        %v2958 = vld [vmem:[%s428 + $0xa0] sm:$0xff]
        %v2959 = vld [vmem:[%s428 + $0xa8] sm:$0xff]
        %v2960 = vld [vmem:[%s428 + $0xb0] sm:$0xff]
        %v2961 = vld [vmem:[%s428 + $0xb8] sm:$0xff]
        %v2962 = vld [vmem:[%s428 + $0xc0] sm:$0xff]
        %v2963 = vld [vmem:[%s428 + $0xc8] sm:$0xff]
        %v2964 = vld [vmem:[%s428 + $0xd0] sm:$0xff]
        %v2965 = vld [vmem:[%s428 + $0xd8] sm:$0xff]
        %v2966 = vld [vmem:[%s428 + $0xe0] sm:$0xff]
        %v2967 = vld [vmem:[%s428 + $0xe8] sm:$0xff]
        %v2968 = vld [vmem:[%s428 + $0xf0] sm:$0xff]
        %v2969 = vld [vmem:[%s428 + $0xf8] sm:$0xff]
        %v2970 = vmax.f32 %v2938, 0.0
        %v2971 = vmax.f32 %v2939, 0.0
        %v2972 = vmax.f32 %v2940, 0.0
        %v2973 = vmax.f32 %v2941, 0.0
        %v2974 = vmax.f32 %v2942, 0.0
        %v2975 = vmax.f32 %v2943, 0.0
        %v2976 = vmax.f32 %v2944, 0.0
        %v2977 = vmax.f32 %v2945, 0.0
        %v2978 = vmax.f32 %v2946, 0.0
        %v2979 = vmax.f32 %v2947, 0.0
        %v2980 = vmax.f32 %v2948, 0.0
        %v2981 = vmax.f32 %v2949, 0.0
        %v2982 = vmax.f32 %v2950, 0.0
        %v2983 = vmax.f32 %v2951, 0.0
        %v2984 = vmax.f32 %v2952, 0.0
        %v2985 = vmax.f32 %v2953, 0.0
        %v2986 = vmax.f32 %v2954, 0.0
        %v2987 = vmax.f32 %v2955, 0.0
        %v2988 = vmax.f32 %v2956, 0.0
        %v2989 = vmax.f32 %v2957, 0.0
        %v2990 = vmax.f32 %v2958, 0.0
        %v2991 = vmax.f32 %v2959, 0.0
        %v2992 = vmax.f32 %v2960, 0.0
        %v2993 = vmax.f32 %v2961, 0.0
        %v2994 = vmax.f32 %v2962, 0.0
        %v2995 = vmax.f32 %v2963, 0.0
        %v2996 = vmax.f32 %v2964, 0.0
        %v2997 = vmax.f32 %v2965, 0.0
        %v2998 = vmax.f32 %v2966, 0.0
        %v2999 = vmax.f32 %v2967, 0.0
        %v3000 = vmax.f32 %v2968, 0.0
        %v3001 = vmax.f32 %v2969, 0.0
        %v3002 = vpack.c.bf16 %v2971, %v2970
        %v3003 = vpack.c.bf16 %v2973, %v2972
        %v3004 = vpack.c.bf16 %v2975, %v2974
        %v3005 = vpack.c.bf16 %v2977, %v2976
        %v3006 = vpack.c.bf16 %v2979, %v2978
        %v3007 = vpack.c.bf16 %v2981, %v2980
        %v3008 = vpack.c.bf16 %v2983, %v2982
        %v3009 = vpack.c.bf16 %v2985, %v2984
        %v3010 = vpack.c.bf16 %v2987, %v2986
        %v3011 = vpack.c.bf16 %v2989, %v2988
        %v3012 = vpack.c.bf16 %v2991, %v2990
        %v3013 = vpack.c.bf16 %v2993, %v2992
        %v3014 = vpack.c.bf16 %v2995, %v2994
        %v3015 = vpack.c.bf16 %v2997, %v2996
        %v3016 = vpack.c.bf16 %v2999, %v2998
        %v3017 = vpack.c.bf16 %v3001, %v3000
        %v3034 = vunpack.c.l.b16 %v3002
        %v3035 = vunpack.c.h.b16 %v3002
        %v3036 = vunpack.c.l.b16 %v3003
        %v3037 = vunpack.c.h.b16 %v3003
        %v3038 = vunpack.c.l.b16 %v3004
        %v3039 = vunpack.c.h.b16 %v3004
        %v3040 = vunpack.c.l.b16 %v3005
        %v3041 = vunpack.c.h.b16 %v3005
        %v3042 = vunpack.c.l.b16 %v3006
        %v3043 = vunpack.c.h.b16 %v3006
        %v3044 = vunpack.c.l.b16 %v3007
        %v3045 = vunpack.c.h.b16 %v3007
        %v3046 = vunpack.c.l.b16 %v3008
        %v3047 = vunpack.c.h.b16 %v3008
        %v3048 = vunpack.c.l.b16 %v3009
        %v3049 = vunpack.c.h.b16 %v3009
        %v3050 = vunpack.c.l.b16 %v3010
        %v3051 = vunpack.c.h.b16 %v3010
        %v3052 = vunpack.c.l.b16 %v3011
        %v3053 = vunpack.c.h.b16 %v3011
        %v3054 = vunpack.c.l.b16 %v3012
        %v3055 = vunpack.c.h.b16 %v3012
        %v3056 = vunpack.c.l.b16 %v3013
        %v3057 = vunpack.c.h.b16 %v3013
        %v3058 = vunpack.c.l.b16 %v3014
        %v3059 = vunpack.c.h.b16 %v3014
        %v3060 = vunpack.c.l.b16 %v3015
        %v3061 = vunpack.c.h.b16 %v3015
        %v3062 = vunpack.c.l.b16 %v3016
        %v3063 = vunpack.c.h.b16 %v3016
        %v3064 = vunpack.c.l.b16 %v3017
        %v3065 = vunpack.c.h.b16 %v3017
        %v3066 = vpack.c.b16 %v3034, %v3034
        %v3067 = vpack.c.b16 %v3035, %v3035
        %v3068 = vpack.c.b16 %v3036, %v3036
        %v3069 = vpack.c.b16 %v3037, %v3037
        %v3070 = vpack.c.b16 %v3038, %v3038
        %v3071 = vpack.c.b16 %v3039, %v3039
        %v3072 = vpack.c.b16 %v3040, %v3040
        %v3073 = vpack.c.b16 %v3041, %v3041
        %v3074 = vpack.c.b16 %v3042, %v3042
        %v3075 = vpack.c.b16 %v3043, %v3043
        %v3076 = vpack.c.b16 %v3044, %v3044
        %v3077 = vpack.c.b16 %v3045, %v3045
        %v3078 = vpack.c.b16 %v3046, %v3046
        %v3079 = vpack.c.b16 %v3047, %v3047
        %v3080 = vpack.c.b16 %v3048, %v3048
        %v3081 = vpack.c.b16 %v3049, %v3049
        %v3082 = vpack.c.b16 %v3050, %v3050
        %v3083 = vpack.c.b16 %v3051, %v3051
        %v3084 = vpack.c.b16 %v3052, %v3052
        %v3085 = vpack.c.b16 %v3053, %v3053
        %v3086 = vpack.c.b16 %v3054, %v3054
        %v3087 = vpack.c.b16 %v3055, %v3055
        %v3088 = vpack.c.b16 %v3056, %v3056
        %v3089 = vpack.c.b16 %v3057, %v3057
        %v3090 = vpack.c.b16 %v3058, %v3058
        %v3091 = vpack.c.b16 %v3059, %v3059
        %v3092 = vpack.c.b16 %v3060, %v3060
        %v3093 = vpack.c.b16 %v3061, %v3061
        %v3094 = vpack.c.b16 %v3062, %v3062
        %v3095 = vpack.c.b16 %v3063, %v3063
        %v3096 = vpack.c.b16 %v3064, %v3064
        %v3097 = vpack.c.b16 %v3065, %v3065
        %3130 = vst [vmem:[#allocation2 + $0x4] sm:$0xf] %v3066
        %3131 = vst [vmem:[#allocation2 + $0xc] sm:$0xf] %v3067
        %3132 = vst [vmem:[#allocation2 + $0x14] sm:$0xf] %v3068
        %3133 = vst [vmem:[#allocation2 + $0x1c] sm:$0xf] %v3069
        %3134 = vst [vmem:[#allocation2 + $0x24] sm:$0xf] %v3070
        %3135 = vst [vmem:[#allocation2 + $0x2c] sm:$0xf] %v3071
        %3136 = vst [vmem:[#allocation2 + $0x34] sm:$0xf] %v3072
        %3137 = vst [vmem:[#allocation2 + $0x3c] sm:$0xf] %v3073
        %3138 = vst [vmem:[#allocation2 + $0x44] sm:$0xf] %v3074
        %3139 = vst [vmem:[#allocation2 + $0x4c] sm:$0xf] %v3075
        %3140 = vst [vmem:[#allocation2 + $0x54] sm:$0xf] %v3076
        %3141 = vst [vmem:[#allocation2 + $0x5c] sm:$0xf] %v3077
        %3142 = vst [vmem:[#allocation2 + $0x64] sm:$0xf] %v3078
        %3143 = vst [vmem:[#allocation2 + $0x6c] sm:$0xf] %v3079
        %3144 = vst [vmem:[#allocation2 + $0x74] sm:$0xf] %v3080
        %3145 = vst [vmem:[#allocation2 + $0x7c] sm:$0xf] %v3081
        %3146 = vst [vmem:[#allocation2 + $0x84] sm:$0xf] %v3082
        %3147 = vst [vmem:[#allocation2 + $0x8c] sm:$0xf] %v3083
        %3148 = vst [vmem:[#allocation2 + $0x94] sm:$0xf] %v3084
        %3149 = vst [vmem:[#allocation2 + $0x9c] sm:$0xf] %v3085
        %3150 = vst [vmem:[#allocation2 + $0xa4] sm:$0xf] %v3086
        %3151 = vst [vmem:[#allocation2 + $0xac] sm:$0xf] %v3087
        %3152 = vst [vmem:[#allocation2 + $0xb4] sm:$0xf] %v3088
        %3153 = vst [vmem:[#allocation2 + $0xbc] sm:$0xf] %v3089
        %3154 = vst [vmem:[#allocation2 + $0xc4] sm:$0xf] %v3090
        %3155 = vst [vmem:[#allocation2 + $0xcc] sm:$0xf] %v3091
        %3156 = vst [vmem:[#allocation2 + $0xd4] sm:$0xf] %v3092
        %3157 = vst [vmem:[#allocation2 + $0xdc] sm:$0xf] %v3093
        %3158 = vst [vmem:[#allocation2 + $0xe4] sm:$0xf] %v3094
        %3159 = vst [vmem:[#allocation2 + $0xec] sm:$0xf] %v3095
        %3160 = vst [vmem:[#allocation2 + $0xf4] sm:$0xf] %v3096
        %3161 = vst [vmem:[#allocation2 + $0xfc] sm:$0xf] %v3097
        %v3162 = vld [vmem:[#allocation2] sm:$0xff]
        %v3163 = vld [vmem:[#allocation2 + $0x8] sm:$0xff]
        %v3164 = vld [vmem:[#allocation2 + $0x10] sm:$0xff]
        %v3165 = vld [vmem:[#allocation2 + $0x18] sm:$0xff]
        %v3166 = vld [vmem:[#allocation2 + $0x20] sm:$0xff]
        %v3167 = vld [vmem:[#allocation2 + $0x28] sm:$0xff]
        %v3168 = vld [vmem:[#allocation2 + $0x30] sm:$0xff]
        %v3169 = vld [vmem:[#allocation2 + $0x38] sm:$0xff]
        %v3170 = vld [vmem:[#allocation2 + $0x40] sm:$0xff]
        %v3171 = vld [vmem:[#allocation2 + $0x48] sm:$0xff]
        %v3172 = vld [vmem:[#allocation2 + $0x50] sm:$0xff]
        %v3173 = vld [vmem:[#allocation2 + $0x58] sm:$0xff]
        %v3174 = vld [vmem:[#allocation2 + $0x60] sm:$0xff]
        %v3175 = vld [vmem:[#allocation2 + $0x68] sm:$0xff]
        %v3176 = vld [vmem:[#allocation2 + $0x70] sm:$0xff]
        %v3177 = vld [vmem:[#allocation2 + $0x78] sm:$0xff]
        %v3178 = vld [vmem:[#allocation2 + $0x80] sm:$0xff]
        %v3179 = vld [vmem:[#allocation2 + $0x88] sm:$0xff]
        %v3180 = vld [vmem:[#allocation2 + $0x90] sm:$0xff]
        %v3181 = vld [vmem:[#allocation2 + $0x98] sm:$0xff]
        %v3182 = vld [vmem:[#allocation2 + $0xa0] sm:$0xff]
        %v3183 = vld [vmem:[#allocation2 + $0xa8] sm:$0xff]
        %v3184 = vld [vmem:[#allocation2 + $0xb0] sm:$0xff]
        %v3185 = vld [vmem:[#allocation2 + $0xb8] sm:$0xff]
        %v3186 = vld [vmem:[#allocation2 + $0xc0] sm:$0xff]
        %v3187 = vld [vmem:[#allocation2 + $0xc8] sm:$0xff]
        %v3188 = vld [vmem:[#allocation2 + $0xd0] sm:$0xff]
        %v3189 = vld [vmem:[#allocation2 + $0xd8] sm:$0xff]
        %v3190 = vld [vmem:[#allocation2 + $0xe0] sm:$0xff]
        %v3191 = vld [vmem:[#allocation2 + $0xe8] sm:$0xff]
        %v3192 = vld [vmem:[#allocation2 + $0xf0] sm:$0xff]
        %v3193 = vld [vmem:[#allocation2 + $0xf8] sm:$0xff]
        %v3194 = vld [vmem:[#allocation12] sm:$0xff]
        %v3195 = vld [vmem:[#allocation12 + $0x8] sm:$0xff]
        %v3196 = vld [vmem:[#allocation12 + $0x10] sm:$0xff]
        %v3197 = vld [vmem:[#allocation12 + $0x18] sm:$0xff]
        %v3198 = vld [vmem:[#allocation12 + $0x20] sm:$0xff]
        %v3199 = vld [vmem:[#allocation12 + $0x28] sm:$0xf]
        %v3200 = vld [vmem:[#allocation12 + $0x2c] sm:$0xff]
        %v3201 = vld [vmem:[#allocation12 + $0x34] sm:$0xff]
        %v3202 = vld [vmem:[#allocation12 + $0x3c] sm:$0xff]
        %v3203 = vld [vmem:[#allocation12 + $0x44] sm:$0xff]
        %v3204 = vld [vmem:[#allocation12 + $0x4c] sm:$0xff]
        %v3205 = vld [vmem:[#allocation12 + $0x54] sm:$0xf]
        %v3206 = vld [vmem:[#allocation12 + $0x58] sm:$0xff]
        %v3207 = vld [vmem:[#allocation12 + $0x60] sm:$0xff]
        %v3208 = vld [vmem:[#allocation12 + $0x68] sm:$0xff]
        %v3209 = vld [vmem:[#allocation12 + $0x70] sm:$0xff]
        %v3210 = vld [vmem:[#allocation12 + $0x78] sm:$0xff]
        %v3211 = vld [vmem:[#allocation12 + $0x80] sm:$0xf]
        %v3212 = vld [vmem:[#allocation12 + $0x84] sm:$0xff]
        %v3213 = vld [vmem:[#allocation12 + $0x8c] sm:$0xff]
        %v3214 = vld [vmem:[#allocation12 + $0x94] sm:$0xff]
        %v3215 = vld [vmem:[#allocation12 + $0x9c] sm:$0xff]
        %v3216 = vld [vmem:[#allocation12 + $0xa4] sm:$0xff]
        %v3217 = vld [vmem:[#allocation12 + $0xac] sm:$0xf]
        %v3218 = vld [vmem:[#allocation12 + $0xb0] sm:$0xff]
        %v3219 = vld [vmem:[#allocation12 + $0xb8] sm:$0xff]
        %v3220 = vld [vmem:[#allocation12 + $0xc0] sm:$0xff]
        %v3221 = vld [vmem:[#allocation12 + $0xc8] sm:$0xff]
        %v3222 = vld [vmem:[#allocation12 + $0xd0] sm:$0xff]
        %v3223 = vld [vmem:[#allocation12 + $0xd8] sm:$0xf]
        %v3224 = vld [vmem:[#allocation12 + $0xdc] sm:$0xff]
        %v3225 = vld [vmem:[#allocation12 + $0xe4] sm:$0xff]
        %v3226 = vld [vmem:[#allocation12 + $0xec] sm:$0xff]
        %v3227 = vld [vmem:[#allocation12 + $0xf4] sm:$0xff]
        %v3228 = vld [vmem:[#allocation12 + $0xfc] sm:$0xff]
        %v3229 = vld [vmem:[#allocation12 + $0x104] sm:$0xf]
        %v3230 = vld [vmem:[#allocation12 + $0x108] sm:$0xff]
        %v3231 = vld [vmem:[#allocation12 + $0x110] sm:$0xff]
        %v3232 = vld [vmem:[#allocation12 + $0x118] sm:$0xff]
        %v3233 = vld [vmem:[#allocation12 + $0x120] sm:$0xff]
        %v3234 = vld [vmem:[#allocation12 + $0x128] sm:$0xff]
        %v3235 = vld [vmem:[#allocation12 + $0x130] sm:$0xf]
        %v3236 = vld [vmem:[#allocation12 + $0x134] sm:$0xff]
        %v3237 = vld [vmem:[#allocation12 + $0x13c] sm:$0xff]
        %v3238 = vld [vmem:[#allocation12 + $0x144] sm:$0xff]
        %v3239 = vld [vmem:[#allocation12 + $0x14c] sm:$0xff]
        %v3240 = vld [vmem:[#allocation12 + $0x154] sm:$0xff]
        %v3241 = vld [vmem:[#allocation12 + $0x15c] sm:$0xf]
        %v3242 = vld [vmem:[#allocation12 + $0x160] sm:$0xff]
        %v3243 = vld [vmem:[#allocation12 + $0x168] sm:$0xff]
        %v3244 = vld [vmem:[#allocation12 + $0x170] sm:$0xff]
        %v3245 = vld [vmem:[#allocation12 + $0x178] sm:$0xff]
        %v3246 = vld [vmem:[#allocation12 + $0x180] sm:$0xff]
        %v3247 = vld [vmem:[#allocation12 + $0x188] sm:$0xf]
        %v3248 = vld [vmem:[#allocation12 + $0x18c] sm:$0xff]
        %v3249 = vld [vmem:[#allocation12 + $0x194] sm:$0xff]
        %v3250 = vld [vmem:[#allocation12 + $0x19c] sm:$0xff]
        %v3251 = vld [vmem:[#allocation12 + $0x1a4] sm:$0xff]
        %v3252 = vld [vmem:[#allocation12 + $0x1ac] sm:$0xff]
        %v3253 = vld [vmem:[#allocation12 + $0x1b4] sm:$0xf]
        %v3254 = vld [vmem:[#allocation12 + $0x1b8] sm:$0xff]
        %v3255 = vld [vmem:[#allocation12 + $0x1c0] sm:$0xff]
        %v3256 = vld [vmem:[#allocation12 + $0x1c8] sm:$0xff]
        %v3257 = vld [vmem:[#allocation12 + $0x1d0] sm:$0xff]
        %v3258 = vld [vmem:[#allocation12 + $0x1d8] sm:$0xff]
        %v3259 = vld [vmem:[#allocation12 + $0x1e0] sm:$0xf]
        %v3260 = vld [vmem:[#allocation12 + $0x1e4] sm:$0xff]
        %v3261 = vld [vmem:[#allocation12 + $0x1ec] sm:$0xff]
        %v3262 = vld [vmem:[#allocation12 + $0x1f4] sm:$0xff]
        %v3263 = vld [vmem:[#allocation12 + $0x1fc] sm:$0xff]
        %v3264 = vld [vmem:[#allocation12 + $0x204] sm:$0xff]
        %v3265 = vld [vmem:[#allocation12 + $0x20c] sm:$0xf]
        %v3266 = vld [vmem:[#allocation12 + $0x210] sm:$0xff]
        %v3267 = vld [vmem:[#allocation12 + $0x218] sm:$0xff]
        %v3268 = vld [vmem:[#allocation12 + $0x220] sm:$0xff]
        %v3269 = vld [vmem:[#allocation12 + $0x228] sm:$0xff]
        %v3270 = vld [vmem:[#allocation12 + $0x230] sm:$0xff]
        %v3271 = vld [vmem:[#allocation12 + $0x238] sm:$0xf]
        %v3272 = vld [vmem:[#allocation12 + $0x23c] sm:$0xff]
        %v3273 = vld [vmem:[#allocation12 + $0x244] sm:$0xff]
        %v3274 = vld [vmem:[#allocation12 + $0x24c] sm:$0xff]
        %v3275 = vld [vmem:[#allocation12 + $0x254] sm:$0xff]
        %v3276 = vld [vmem:[#allocation12 + $0x25c] sm:$0xff]
        %v3277 = vld [vmem:[#allocation12 + $0x264] sm:$0xf]
        %v3278 = vld [vmem:[#allocation12 + $0x268] sm:$0xff]
        %v3279 = vld [vmem:[#allocation12 + $0x270] sm:$0xff]
        %v3280 = vld [vmem:[#allocation12 + $0x278] sm:$0xff]
        %v3281 = vld [vmem:[#allocation12 + $0x280] sm:$0xff]
        %v3282 = vld [vmem:[#allocation12 + $0x288] sm:$0xff]
        %v3283 = vld [vmem:[#allocation12 + $0x290] sm:$0xf]
        %v3284 = vld [vmem:[#allocation12 + $0x294] sm:$0xff]
        %v3285 = vld [vmem:[#allocation12 + $0x29c] sm:$0xff]
        %v3286 = vld [vmem:[#allocation12 + $0x2a4] sm:$0xff]
        %v3287 = vld [vmem:[#allocation12 + $0x2ac] sm:$0xff]
        %v3288 = vld [vmem:[#allocation12 + $0x2b4] sm:$0xff]
        %v3289 = vld [vmem:[#allocation12 + $0x2bc] sm:$0xf]
        %v3290 = vld [vmem:[#allocation12 + $0x2c0] sm:$0xff]
        %v3291 = vld [vmem:[#allocation12 + $0x2c8] sm:$0xff]
        %v3292 = vld [vmem:[#allocation12 + $0x2d0] sm:$0xff]
        %v3293 = vld [vmem:[#allocation12 + $0x2d8] sm:$0xff]
        %v3294 = vld [vmem:[#allocation12 + $0x2e0] sm:$0xff]
        %v3295 = vld [vmem:[#allocation12 + $0x2e8] sm:$0xf]
        %v3296 = vld [vmem:[#allocation12 + $0x2ec] sm:$0xff]
        %v3297 = vld [vmem:[#allocation12 + $0x2f4] sm:$0xff]
        %v3298 = vld [vmem:[#allocation12 + $0x2fc] sm:$0xff]
        %v3299 = vld [vmem:[#allocation12 + $0x304] sm:$0xff]
        %v3300 = vld [vmem:[#allocation12 + $0x30c] sm:$0xff]
        %v3301 = vld [vmem:[#allocation12 + $0x314] sm:$0xf]
        %v3302 = vld [vmem:[#allocation12 + $0x318] sm:$0xff]
        %v3303 = vld [vmem:[#allocation12 + $0x320] sm:$0xff]
        %v3304 = vld [vmem:[#allocation12 + $0x328] sm:$0xff]
        %v3305 = vld [vmem:[#allocation12 + $0x330] sm:$0xff]
        %v3306 = vld [vmem:[#allocation12 + $0x338] sm:$0xff]
        %v3307 = vld [vmem:[#allocation12 + $0x340] sm:$0xf]
        %v3308 = vld [vmem:[#allocation12 + $0x344] sm:$0xff]
        %v3309 = vld [vmem:[#allocation12 + $0x34c] sm:$0xff]
        %v3310 = vld [vmem:[#allocation12 + $0x354] sm:$0xff]
        %v3311 = vld [vmem:[#allocation12 + $0x35c] sm:$0xff]
        %v3312 = vld [vmem:[#allocation12 + $0x364] sm:$0xff]
        %v3313 = vld [vmem:[#allocation12 + $0x36c] sm:$0xf]
        %v3314 = vld [vmem:[#allocation12 + $0x370] sm:$0xff]
        %v3315 = vld [vmem:[#allocation12 + $0x378] sm:$0xff]
        %v3316 = vld [vmem:[#allocation12 + $0x380] sm:$0xff]
        %v3317 = vld [vmem:[#allocation12 + $0x388] sm:$0xff]
        %v3318 = vld [vmem:[#allocation12 + $0x390] sm:$0xff]
        %v3319 = vld [vmem:[#allocation12 + $0x398] sm:$0xf]
        %v3320 = vld [vmem:[#allocation12 + $0x39c] sm:$0xff]
        %v3321 = vld [vmem:[#allocation12 + $0x3a4] sm:$0xff]
        %v3322 = vld [vmem:[#allocation12 + $0x3ac] sm:$0xff]
        %v3323 = vld [vmem:[#allocation12 + $0x3b4] sm:$0xff]
        %v3324 = vld [vmem:[#allocation12 + $0x3bc] sm:$0xff]
        %v3325 = vld [vmem:[#allocation12 + $0x3c4] sm:$0xf]
        %v3326 = vld [vmem:[#allocation12 + $0x3c8] sm:$0xff]
        %v3327 = vld [vmem:[#allocation12 + $0x3d0] sm:$0xff]
        %v3328 = vld [vmem:[#allocation12 + $0x3d8] sm:$0xff]
        %v3329 = vld [vmem:[#allocation12 + $0x3e0] sm:$0xff]
        %v3330 = vld [vmem:[#allocation12 + $0x3e8] sm:$0xff]
        %v3331 = vld [vmem:[#allocation12 + $0x3f0] sm:$0xf]
        %v3332 = vld [vmem:[#allocation12 + $0x3f4] sm:$0xff]
        %v3333 = vld [vmem:[#allocation12 + $0x3fc] sm:$0xff]
        %v3334 = vld [vmem:[#allocation12 + $0x404] sm:$0xff]
        %v3335 = vld [vmem:[#allocation12 + $0x40c] sm:$0xff]
        %v3336 = vld [vmem:[#allocation12 + $0x414] sm:$0xff]
        %v3337 = vld [vmem:[#allocation12 + $0x41c] sm:$0xf]
        %v3338 = vld [vmem:[#allocation12 + $0x420] sm:$0xff]
        %v3339 = vld [vmem:[#allocation12 + $0x428] sm:$0xff]
        %v3340 = vld [vmem:[#allocation12 + $0x430] sm:$0xff]
        %v3341 = vld [vmem:[#allocation12 + $0x438] sm:$0xff]
        %v3342 = vld [vmem:[#allocation12 + $0x440] sm:$0xff]
        %v3343 = vld [vmem:[#allocation12 + $0x448] sm:$0xf]
        %v3344 = vld [vmem:[#allocation12 + $0x44c] sm:$0xff]
        %v3345 = vld [vmem:[#allocation12 + $0x454] sm:$0xff]
        %v3346 = vld [vmem:[#allocation12 + $0x45c] sm:$0xff]
        %v3347 = vld [vmem:[#allocation12 + $0x464] sm:$0xff]
        %v3348 = vld [vmem:[#allocation12 + $0x46c] sm:$0xff]
        %v3349 = vld [vmem:[#allocation12 + $0x474] sm:$0xf]
        %v3350 = vld [vmem:[#allocation12 + $0x478] sm:$0xff]
        %v3351 = vld [vmem:[#allocation12 + $0x480] sm:$0xff]
        %v3352 = vld [vmem:[#allocation12 + $0x488] sm:$0xff]
        %v3353 = vld [vmem:[#allocation12 + $0x490] sm:$0xff]
        %v3354 = vld [vmem:[#allocation12 + $0x498] sm:$0xff]
        %v3355 = vld [vmem:[#allocation12 + $0x4a0] sm:$0xf]
        %v3356 = vld [vmem:[#allocation12 + $0x4a4] sm:$0xff]
        %v3357 = vld [vmem:[#allocation12 + $0x4ac] sm:$0xff]
        %v3358 = vld [vmem:[#allocation12 + $0x4b4] sm:$0xff]
        %v3359 = vld [vmem:[#allocation12 + $0x4bc] sm:$0xff]
        %v3360 = vld [vmem:[#allocation12 + $0x4c4] sm:$0xff]
        %v3361 = vld [vmem:[#allocation12 + $0x4cc] sm:$0xf]
        %v3362 = vld [vmem:[#allocation12 + $0x4d0] sm:$0xff]
        %v3363 = vld [vmem:[#allocation12 + $0x4d8] sm:$0xff]
        %v3364 = vld [vmem:[#allocation12 + $0x4e0] sm:$0xff]
        %v3365 = vld [vmem:[#allocation12 + $0x4e8] sm:$0xff]
        %v3366 = vld [vmem:[#allocation12 + $0x4f0] sm:$0xff]
        %v3367 = vld [vmem:[#allocation12 + $0x4f8] sm:$0xf]
        %v3368 = vld [vmem:[#allocation12 + $0x4fc] sm:$0xff]
        %v3369 = vld [vmem:[#allocation12 + $0x504] sm:$0xff]
        %v3370 = vld [vmem:[#allocation12 + $0x50c] sm:$0xff]
        %v3371 = vld [vmem:[#allocation12 + $0x514] sm:$0xff]
        %v3372 = vld [vmem:[#allocation12 + $0x51c] sm:$0xff]
        %v3373 = vld [vmem:[#allocation12 + $0x524] sm:$0xf]
        %v3374 = vld [vmem:[#allocation12 + $0x528] sm:$0xff]
        %v3375 = vld [vmem:[#allocation12 + $0x530] sm:$0xff]
        %v3376 = vld [vmem:[#allocation12 + $0x538] sm:$0xff]
        %v3377 = vld [vmem:[#allocation12 + $0x540] sm:$0xff]
        %v3378 = vld [vmem:[#allocation12 + $0x548] sm:$0xff]
        %v3379 = vld [vmem:[#allocation12 + $0x550] sm:$0xf]
        %v3380 = vld [vmem:[#allocation12 + $0x554] sm:$0xff]
        %v3381 = vld [vmem:[#allocation12 + $0x55c] sm:$0xff]
        %v3382 = vld [vmem:[#allocation12 + $0x564] sm:$0xff]
        %v3383 = vld [vmem:[#allocation12 + $0x56c] sm:$0xff]
        %v3384 = vld [vmem:[#allocation12 + $0x574] sm:$0xff]
        %v3385 = vld [vmem:[#allocation12 + $0x57c] sm:$0xf]
        %v3386 = vld [vmem:[%s7] sm:$0xff]
        %v3387 = vld [vmem:[%s7 + $0x8] sm:$0x7]
        %v3390 = vlaneseq
        %v3391 = vshrl.u32 %v3390, 7
        %v3392 = vsub.s32 0, %v3391
        %v3393 = vrot.slane %v3386, %v3392
        %v3394 = vlaneseq
        %v3395 = vshrl.u32 %v3394, 7
        %v3396 = vsub.s32 1, %v3395
        %v3397 = vrot.slane %v3386, %v3396
        %v3398 = vlaneseq
        %v3399 = vshrl.u32 %v3398, 7
        %v3400 = vsub.s32 2, %v3399
        %v3401 = vrot.slane %v3386, %v3400
        %v3402 = vlaneseq
        %v3403 = vshrl.u32 %v3402, 7
        %v3404 = vsub.s32 3, %v3403
        %v3405 = vrot.slane %v3386, %v3404
        %v3406 = vlaneseq
        %v3407 = vshrl.u32 %v3406, 7
        %v3408 = vsub.s32 4, %v3407
        %v3409 = vrot.slane %v3386, %v3408
        %v3410 = vlaneseq
        %v3411 = vshrl.u32 %v3410, 7
        %v3412 = vsub.s32 5, %v3411
        %v3413 = vrot.slane %v3386, %v3412
        %v3414 = vlaneseq
        %v3415 = vshrl.u32 %v3414, 7
        %v3416 = vsub.s32 6, %v3415
        %v3417 = vrot.slane %v3386, %v3416
        %v3418 = vlaneseq
        %v3419 = vshrl.u32 %v3418, 7
        %v3420 = vsub.s32 7, %v3419
        %v3421 = vrot.slane %v3386, %v3420
        %v3422 = vlaneseq
        %v3423 = vshrl.u32 %v3422, 7
        %v3424 = vsub.s32 0, %v3423
        %v3425 = vrot.slane %v3387, %v3424
        %v3426 = vlaneseq
        %v3427 = vshrl.u32 %v3426, 7
        %v3428 = vsub.s32 1, %v3427
        %v3429 = vrot.slane %v3387, %v3428
        %v3430 = vlaneseq
        %v3431 = vshrl.u32 %v3430, 7
        %v3432 = vsub.s32 2, %v3431
        %v3433 = vrot.slane %v3387, %v3432
        %v3477 = vunpack.c.l.b16 %v3162
        %v3478 = vunpack.c.h.b16 %v3162
        %v3479 = vunpack.c.l.b16 %v3163
        %v3480 = vunpack.c.h.b16 %v3163
        %v3481 = vunpack.c.l.b16 %v3164
        %v3482 = vunpack.c.h.b16 %v3164
        %v3483 = vunpack.c.l.b16 %v3165
        %v3484 = vunpack.c.h.b16 %v3165
        %v3485 = vunpack.c.l.b16 %v3166
        %v3486 = vunpack.c.h.b16 %v3166
        %v3487 = vunpack.c.l.b16 %v3167
        %v3488 = vunpack.c.h.b16 %v3167
        %v3489 = vunpack.c.l.b16 %v3168
        %v3490 = vunpack.c.h.b16 %v3168
        %v3491 = vunpack.c.l.b16 %v3169
        %v3492 = vunpack.c.h.b16 %v3169
        %v3493 = vunpack.c.l.b16 %v3170
        %v3494 = vunpack.c.h.b16 %v3170
        %v3495 = vunpack.c.l.b16 %v3171
        %v3496 = vunpack.c.h.b16 %v3171
        %v3497 = vunpack.c.l.b16 %v3172
        %v3498 = vunpack.c.h.b16 %v3172
        %v3499 = vunpack.c.l.b16 %v3173
        %v3500 = vunpack.c.h.b16 %v3173
        %v3501 = vunpack.c.l.b16 %v3174
        %v3502 = vunpack.c.h.b16 %v3174
        %v3503 = vunpack.c.l.b16 %v3175
        %v3504 = vunpack.c.h.b16 %v3175
        %v3505 = vunpack.c.l.b16 %v3176
        %v3506 = vunpack.c.h.b16 %v3176
        %v3507 = vunpack.c.l.b16 %v3177
        %v3508 = vunpack.c.h.b16 %v3177
        %v3509 = vunpack.c.l.b16 %v3178
        %v3510 = vunpack.c.h.b16 %v3178
        %v3511 = vunpack.c.l.b16 %v3179
        %v3512 = vunpack.c.h.b16 %v3179
        %v3513 = vunpack.c.l.b16 %v3180
        %v3514 = vunpack.c.h.b16 %v3180
        %v3515 = vunpack.c.l.b16 %v3181
        %v3516 = vunpack.c.h.b16 %v3181
        %v3517 = vunpack.c.l.b16 %v3182
        %v3518 = vunpack.c.h.b16 %v3182
        %v3519 = vunpack.c.l.b16 %v3183
        %v3520 = vunpack.c.h.b16 %v3183
        %v3521 = vunpack.c.l.b16 %v3184
        %v3522 = vunpack.c.h.b16 %v3184
        %v3523 = vunpack.c.l.b16 %v3185
        %v3524 = vunpack.c.h.b16 %v3185
        %v3525 = vunpack.c.l.b16 %v3186
        %v3526 = vunpack.c.h.b16 %v3186
        %v3527 = vunpack.c.l.b16 %v3187
        %v3528 = vunpack.c.h.b16 %v3187
        %v3529 = vunpack.c.l.b16 %v3188
        %v3530 = vunpack.c.h.b16 %v3188
        %v3531 = vunpack.c.l.b16 %v3189
        %v3532 = vunpack.c.h.b16 %v3189
        %v3533 = vunpack.c.l.b16 %v3190
        %v3534 = vunpack.c.h.b16 %v3190
        %v3535 = vunpack.c.l.b16 %v3191
        %v3536 = vunpack.c.h.b16 %v3191
        %v3537 = vunpack.c.l.b16 %v3192
        %v3538 = vunpack.c.h.b16 %v3192
        %v3539 = vunpack.c.l.b16 %v3193
        %v3540 = vunpack.c.h.b16 %v3193
        %v3541 = vpack.c.b16 %v3479, %v3477
        %v3542 = vpack.c.b16 %v3480, %v3478
        %v3543 = vpack.c.b16 %v3483, %v3481
        %v3544 = vpack.c.b16 %v3484, %v3482
        %v3545 = vpack.c.b16 %v3487, %v3485
        %v3546 = vpack.c.b16 %v3488, %v3486
        %v3547 = vpack.c.b16 %v3491, %v3489
        %v3548 = vpack.c.b16 %v3492, %v3490
        %v3549 = vpack.c.b16 %v3495, %v3493
        %v3550 = vpack.c.b16 %v3496, %v3494
        %v3551 = vpack.c.b16 %v3499, %v3497
        %v3552 = vpack.c.b16 %v3500, %v3498
        %v3553 = vpack.c.b16 %v3503, %v3501
        %v3554 = vpack.c.b16 %v3504, %v3502
        %v3555 = vpack.c.b16 %v3507, %v3505
        %v3556 = vpack.c.b16 %v3508, %v3506
        %v3557 = vpack.c.b16 %v3511, %v3509
        %v3558 = vpack.c.b16 %v3512, %v3510
        %v3559 = vpack.c.b16 %v3515, %v3513
        %v3560 = vpack.c.b16 %v3516, %v3514
        %v3561 = vpack.c.b16 %v3519, %v3517
        %v3562 = vpack.c.b16 %v3520, %v3518
        %v3563 = vpack.c.b16 %v3523, %v3521
        %v3564 = vpack.c.b16 %v3524, %v3522
        %v3565 = vpack.c.b16 %v3527, %v3525
        %v3566 = vpack.c.b16 %v3528, %v3526
        %v3567 = vpack.c.b16 %v3531, %v3529
        %v3568 = vpack.c.b16 %v3532, %v3530
        %v3569 = vpack.c.b16 %v3535, %v3533
        %v3570 = vpack.c.b16 %v3536, %v3534
        %v3571 = vpack.c.b16 %v3539, %v3537
        %v3572 = vpack.c.b16 %v3540, %v3538
        %v3797 = vunpack.c.l.b16 %v3194
        %v3798 = vunpack.c.h.b16 %v3194
        %v3799 = vunpack.c.l.b16 %v3195
        %v3800 = vunpack.c.h.b16 %v3195
        %v3801 = vunpack.c.l.b16 %v3196
        %v3802 = vunpack.c.h.b16 %v3196
        %v3803 = vunpack.c.l.b16 %v3197
        %v3804 = vunpack.c.h.b16 %v3197
        %v3805 = vunpack.c.l.b16 %v3198
        %v3806 = vunpack.c.h.b16 %v3198
        %v3807 = vunpack.c.l.b16 %v3199
        %v3808 = vunpack.c.l.b16 %v3200
        %v3809 = vunpack.c.h.b16 %v3200
        %v3810 = vunpack.c.l.b16 %v3201
        %v3811 = vunpack.c.h.b16 %v3201
        %v3812 = vunpack.c.l.b16 %v3202
        %v3813 = vunpack.c.h.b16 %v3202
        %v3814 = vunpack.c.l.b16 %v3203
        %v3815 = vunpack.c.h.b16 %v3203
        %v3816 = vunpack.c.l.b16 %v3204
        %v3817 = vunpack.c.h.b16 %v3204
        %v3818 = vunpack.c.l.b16 %v3205
        %v3819 = vunpack.c.l.b16 %v3206
        %v3820 = vunpack.c.h.b16 %v3206
        %v3821 = vunpack.c.l.b16 %v3207
        %v3822 = vunpack.c.h.b16 %v3207
        %v3823 = vunpack.c.l.b16 %v3208
        %v3824 = vunpack.c.h.b16 %v3208
        %v3825 = vunpack.c.l.b16 %v3209
        %v3826 = vunpack.c.h.b16 %v3209
        %v3827 = vunpack.c.l.b16 %v3210
        %v3828 = vunpack.c.h.b16 %v3210
        %v3829 = vunpack.c.l.b16 %v3211
        %v3830 = vunpack.c.l.b16 %v3212
        %v3831 = vunpack.c.h.b16 %v3212
        %v3832 = vunpack.c.l.b16 %v3213
        %v3833 = vunpack.c.h.b16 %v3213
        %v3834 = vunpack.c.l.b16 %v3214
        %v3835 = vunpack.c.h.b16 %v3214
        %v3836 = vunpack.c.l.b16 %v3215
        %v3837 = vunpack.c.h.b16 %v3215
        %v3838 = vunpack.c.l.b16 %v3216
        %v3839 = vunpack.c.h.b16 %v3216
        %v3840 = vunpack.c.l.b16 %v3217
        %v3841 = vunpack.c.l.b16 %v3218
        %v3842 = vunpack.c.h.b16 %v3218
        %v3843 = vunpack.c.l.b16 %v3219
        %v3844 = vunpack.c.h.b16 %v3219
        %v3845 = vunpack.c.l.b16 %v3220
        %v3846 = vunpack.c.h.b16 %v3220
        %v3847 = vunpack.c.l.b16 %v3221
        %v3848 = vunpack.c.h.b16 %v3221
        %v3849 = vunpack.c.l.b16 %v3222
        %v3850 = vunpack.c.h.b16 %v3222
        %v3851 = vunpack.c.l.b16 %v3223
        %v3852 = vunpack.c.l.b16 %v3224
        %v3853 = vunpack.c.h.b16 %v3224
        %v3854 = vunpack.c.l.b16 %v3225
        %v3855 = vunpack.c.h.b16 %v3225
        %v3856 = vunpack.c.l.b16 %v3226
        %v3857 = vunpack.c.h.b16 %v3226
        %v3858 = vunpack.c.l.b16 %v3227
        %v3859 = vunpack.c.h.b16 %v3227
        %v3860 = vunpack.c.l.b16 %v3228
        %v3861 = vunpack.c.h.b16 %v3228
        %v3862 = vunpack.c.l.b16 %v3229
        %v3863 = vunpack.c.l.b16 %v3230
        %v3864 = vunpack.c.h.b16 %v3230
        %v3865 = vunpack.c.l.b16 %v3231
        %v3866 = vunpack.c.h.b16 %v3231
        %v3867 = vunpack.c.l.b16 %v3232
        %v3868 = vunpack.c.h.b16 %v3232
        %v3869 = vunpack.c.l.b16 %v3233
        %v3870 = vunpack.c.h.b16 %v3233
        %v3871 = vunpack.c.l.b16 %v3234
        %v3872 = vunpack.c.h.b16 %v3234
        %v3873 = vunpack.c.l.b16 %v3235
        %v3874 = vunpack.c.l.b16 %v3236
        %v3875 = vunpack.c.h.b16 %v3236
        %v3876 = vunpack.c.l.b16 %v3237
        %v3877 = vunpack.c.h.b16 %v3237
        %v3878 = vunpack.c.l.b16 %v3238
        %v3879 = vunpack.c.h.b16 %v3238
        %v3880 = vunpack.c.l.b16 %v3239
        %v3881 = vunpack.c.h.b16 %v3239
        %v3882 = vunpack.c.l.b16 %v3240
        %v3883 = vunpack.c.h.b16 %v3240
        %v3884 = vunpack.c.l.b16 %v3241
        %v3885 = vunpack.c.l.b16 %v3242
        %v3886 = vunpack.c.h.b16 %v3242
        %v3887 = vunpack.c.l.b16 %v3243
        %v3888 = vunpack.c.h.b16 %v3243
        %v3889 = vunpack.c.l.b16 %v3244
        %v3890 = vunpack.c.h.b16 %v3244
        %v3891 = vunpack.c.l.b16 %v3245
        %v3892 = vunpack.c.h.b16 %v3245
        %v3893 = vunpack.c.l.b16 %v3246
        %v3894 = vunpack.c.h.b16 %v3246
        %v3895 = vunpack.c.l.b16 %v3247
        %v3896 = vunpack.c.l.b16 %v3248
        %v3897 = vunpack.c.h.b16 %v3248
        %v3898 = vunpack.c.l.b16 %v3249
        %v3899 = vunpack.c.h.b16 %v3249
        %v3900 = vunpack.c.l.b16 %v3250
        %v3901 = vunpack.c.h.b16 %v3250
        %v3902 = vunpack.c.l.b16 %v3251
        %v3903 = vunpack.c.h.b16 %v3251
        %v3904 = vunpack.c.l.b16 %v3252
        %v3905 = vunpack.c.h.b16 %v3252
        %v3906 = vunpack.c.l.b16 %v3253
        %v3907 = vunpack.c.l.b16 %v3254
        %v3908 = vunpack.c.h.b16 %v3254
        %v3909 = vunpack.c.l.b16 %v3255
        %v3910 = vunpack.c.h.b16 %v3255
        %v3911 = vunpack.c.l.b16 %v3256
        %v3912 = vunpack.c.h.b16 %v3256
        %v3913 = vunpack.c.l.b16 %v3257
        %v3914 = vunpack.c.h.b16 %v3257
        %v3915 = vunpack.c.l.b16 %v3258
        %v3916 = vunpack.c.h.b16 %v3258
        %v3917 = vunpack.c.l.b16 %v3259
        %v3918 = vunpack.c.l.b16 %v3260
        %v3919 = vunpack.c.h.b16 %v3260
        %v3920 = vunpack.c.l.b16 %v3261
        %v3921 = vunpack.c.h.b16 %v3261
        %v3922 = vunpack.c.l.b16 %v3262
        %v3923 = vunpack.c.h.b16 %v3262
        %v3924 = vunpack.c.l.b16 %v3263
        %v3925 = vunpack.c.h.b16 %v3263
        %v3926 = vunpack.c.l.b16 %v3264
        %v3927 = vunpack.c.h.b16 %v3264
        %v3928 = vunpack.c.l.b16 %v3265
        %v3929 = vunpack.c.l.b16 %v3266
        %v3930 = vunpack.c.h.b16 %v3266
        %v3931 = vunpack.c.l.b16 %v3267
        %v3932 = vunpack.c.h.b16 %v3267
        %v3933 = vunpack.c.l.b16 %v3268
        %v3934 = vunpack.c.h.b16 %v3268
        %v3935 = vunpack.c.l.b16 %v3269
        %v3936 = vunpack.c.h.b16 %v3269
        %v3937 = vunpack.c.l.b16 %v3270
        %v3938 = vunpack.c.h.b16 %v3270
        %v3939 = vunpack.c.l.b16 %v3271
        %v3940 = vunpack.c.l.b16 %v3272
        %v3941 = vunpack.c.h.b16 %v3272
        %v3942 = vunpack.c.l.b16 %v3273
        %v3943 = vunpack.c.h.b16 %v3273
        %v3944 = vunpack.c.l.b16 %v3274
        %v3945 = vunpack.c.h.b16 %v3274
        %v3946 = vunpack.c.l.b16 %v3275
        %v3947 = vunpack.c.h.b16 %v3275
        %v3948 = vunpack.c.l.b16 %v3276
        %v3949 = vunpack.c.h.b16 %v3276
        %v3950 = vunpack.c.l.b16 %v3277
        %v3951 = vunpack.c.l.b16 %v3278
        %v3952 = vunpack.c.h.b16 %v3278
        %v3953 = vunpack.c.l.b16 %v3279
        %v3954 = vunpack.c.h.b16 %v3279
        %v3955 = vunpack.c.l.b16 %v3280
        %v3956 = vunpack.c.h.b16 %v3280
        %v3957 = vunpack.c.l.b16 %v3281
        %v3958 = vunpack.c.h.b16 %v3281
        %v3959 = vunpack.c.l.b16 %v3282
        %v3960 = vunpack.c.h.b16 %v3282
        %v3961 = vunpack.c.l.b16 %v3283
        %v3962 = vunpack.c.l.b16 %v3284
        %v3963 = vunpack.c.h.b16 %v3284
        %v3964 = vunpack.c.l.b16 %v3285
        %v3965 = vunpack.c.h.b16 %v3285
        %v3966 = vunpack.c.l.b16 %v3286
        %v3967 = vunpack.c.h.b16 %v3286
        %v3968 = vunpack.c.l.b16 %v3287
        %v3969 = vunpack.c.h.b16 %v3287
        %v3970 = vunpack.c.l.b16 %v3288
        %v3971 = vunpack.c.h.b16 %v3288
        %v3972 = vunpack.c.l.b16 %v3289
        %v3973 = vunpack.c.l.b16 %v3290
        %v3974 = vunpack.c.h.b16 %v3290
        %v3975 = vunpack.c.l.b16 %v3291
        %v3976 = vunpack.c.h.b16 %v3291
        %v3977 = vunpack.c.l.b16 %v3292
        %v3978 = vunpack.c.h.b16 %v3292
        %v3979 = vunpack.c.l.b16 %v3293
        %v3980 = vunpack.c.h.b16 %v3293
        %v3981 = vunpack.c.l.b16 %v3294
        %v3982 = vunpack.c.h.b16 %v3294
        %v3983 = vunpack.c.l.b16 %v3295
        %v3984 = vunpack.c.l.b16 %v3296
        %v3985 = vunpack.c.h.b16 %v3296
        %v3986 = vunpack.c.l.b16 %v3297
        %v3987 = vunpack.c.h.b16 %v3297
        %v3988 = vunpack.c.l.b16 %v3298
        %v3989 = vunpack.c.h.b16 %v3298
        %v3990 = vunpack.c.l.b16 %v3299
        %v3991 = vunpack.c.h.b16 %v3299
        %v3992 = vunpack.c.l.b16 %v3300
        %v3993 = vunpack.c.h.b16 %v3300
        %v3994 = vunpack.c.l.b16 %v3301
        %v3995 = vunpack.c.l.b16 %v3302
        %v3996 = vunpack.c.h.b16 %v3302
        %v3997 = vunpack.c.l.b16 %v3303
        %v3998 = vunpack.c.h.b16 %v3303
        %v3999 = vunpack.c.l.b16 %v3304
        %v4000 = vunpack.c.h.b16 %v3304
        %v4001 = vunpack.c.l.b16 %v3305
        %v4002 = vunpack.c.h.b16 %v3305
        %v4003 = vunpack.c.l.b16 %v3306
        %v4004 = vunpack.c.h.b16 %v3306
        %v4005 = vunpack.c.l.b16 %v3307
        %v4006 = vunpack.c.l.b16 %v3308
        %v4007 = vunpack.c.h.b16 %v3308
        %v4008 = vunpack.c.l.b16 %v3309
        %v4009 = vunpack.c.h.b16 %v3309
        %v4010 = vunpack.c.l.b16 %v3310
        %v4011 = vunpack.c.h.b16 %v3310
        %v4012 = vunpack.c.l.b16 %v3311
        %v4013 = vunpack.c.h.b16 %v3311
        %v4014 = vunpack.c.l.b16 %v3312
        %v4015 = vunpack.c.h.b16 %v3312
        %v4016 = vunpack.c.l.b16 %v3313
        %v4017 = vunpack.c.l.b16 %v3314
        %v4018 = vunpack.c.h.b16 %v3314
        %v4019 = vunpack.c.l.b16 %v3315
        %v4020 = vunpack.c.h.b16 %v3315
        %v4021 = vunpack.c.l.b16 %v3316
        %v4022 = vunpack.c.h.b16 %v3316
        %v4023 = vunpack.c.l.b16 %v3317
        %v4024 = vunpack.c.h.b16 %v3317
        %v4025 = vunpack.c.l.b16 %v3318
        %v4026 = vunpack.c.h.b16 %v3318
        %v4027 = vunpack.c.l.b16 %v3319
        %v4028 = vunpack.c.l.b16 %v3320
        %v4029 = vunpack.c.h.b16 %v3320
        %v4030 = vunpack.c.l.b16 %v3321
        %v4031 = vunpack.c.h.b16 %v3321
        %v4032 = vunpack.c.l.b16 %v3322
        %v4033 = vunpack.c.h.b16 %v3322
        %v4034 = vunpack.c.l.b16 %v3323
        %v4035 = vunpack.c.h.b16 %v3323
        %v4036 = vunpack.c.l.b16 %v3324
        %v4037 = vunpack.c.h.b16 %v3324
        %v4038 = vunpack.c.l.b16 %v3325
        %v4039 = vunpack.c.l.b16 %v3326
        %v4040 = vunpack.c.h.b16 %v3326
        %v4041 = vunpack.c.l.b16 %v3327
        %v4042 = vunpack.c.h.b16 %v3327
        %v4043 = vunpack.c.l.b16 %v3328
        %v4044 = vunpack.c.h.b16 %v3328
        %v4045 = vunpack.c.l.b16 %v3329
        %v4046 = vunpack.c.h.b16 %v3329
        %v4047 = vunpack.c.l.b16 %v3330
        %v4048 = vunpack.c.h.b16 %v3330
        %v4049 = vunpack.c.l.b16 %v3331
        %v4050 = vunpack.c.l.b16 %v3332
        %v4051 = vunpack.c.h.b16 %v3332
        %v4052 = vunpack.c.l.b16 %v3333
        %v4053 = vunpack.c.h.b16 %v3333
        %v4054 = vunpack.c.l.b16 %v3334
        %v4055 = vunpack.c.h.b16 %v3334
        %v4056 = vunpack.c.l.b16 %v3335
        %v4057 = vunpack.c.h.b16 %v3335
        %v4058 = vunpack.c.l.b16 %v3336
        %v4059 = vunpack.c.h.b16 %v3336
        %v4060 = vunpack.c.l.b16 %v3337
        %v4061 = vunpack.c.l.b16 %v3338
        %v4062 = vunpack.c.h.b16 %v3338
        %v4063 = vunpack.c.l.b16 %v3339
        %v4064 = vunpack.c.h.b16 %v3339
        %v4065 = vunpack.c.l.b16 %v3340
        %v4066 = vunpack.c.h.b16 %v3340
        %v4067 = vunpack.c.l.b16 %v3341
        %v4068 = vunpack.c.h.b16 %v3341
        %v4069 = vunpack.c.l.b16 %v3342
        %v4070 = vunpack.c.h.b16 %v3342
        %v4071 = vunpack.c.l.b16 %v3343
        %v4072 = vunpack.c.l.b16 %v3344
        %v4073 = vunpack.c.h.b16 %v3344
        %v4074 = vunpack.c.l.b16 %v3345
        %v4075 = vunpack.c.h.b16 %v3345
        %v4076 = vunpack.c.l.b16 %v3346
        %v4077 = vunpack.c.h.b16 %v3346
        %v4078 = vunpack.c.l.b16 %v3347
        %v4079 = vunpack.c.h.b16 %v3347
        %v4080 = vunpack.c.l.b16 %v3348
        %v4081 = vunpack.c.h.b16 %v3348
        %v4082 = vunpack.c.l.b16 %v3349
        %v4083 = vunpack.c.l.b16 %v3350
        %v4084 = vunpack.c.h.b16 %v3350
        %v4085 = vunpack.c.l.b16 %v3351
        %v4086 = vunpack.c.h.b16 %v3351
        %v4087 = vunpack.c.l.b16 %v3352
        %v4088 = vunpack.c.h.b16 %v3352
        %v4089 = vunpack.c.l.b16 %v3353
        %v4090 = vunpack.c.h.b16 %v3353
        %v4091 = vunpack.c.l.b16 %v3354
        %v4092 = vunpack.c.h.b16 %v3354
        %v4093 = vunpack.c.l.b16 %v3355
        %v4094 = vunpack.c.l.b16 %v3356
        %v4095 = vunpack.c.h.b16 %v3356
        %v4096 = vunpack.c.l.b16 %v3357
        %v4097 = vunpack.c.h.b16 %v3357
        %v4098 = vunpack.c.l.b16 %v3358
        %v4099 = vunpack.c.h.b16 %v3358
        %v4100 = vunpack.c.l.b16 %v3359
        %v4101 = vunpack.c.h.b16 %v3359
        %v4102 = vunpack.c.l.b16 %v3360
        %v4103 = vunpack.c.h.b16 %v3360
        %v4104 = vunpack.c.l.b16 %v3361
        %v4105 = vunpack.c.l.b16 %v3362
        %v4106 = vunpack.c.h.b16 %v3362
        %v4107 = vunpack.c.l.b16 %v3363
        %v4108 = vunpack.c.h.b16 %v3363
        %v4109 = vunpack.c.l.b16 %v3364
        %v4110 = vunpack.c.h.b16 %v3364
        %v4111 = vunpack.c.l.b16 %v3365
        %v4112 = vunpack.c.h.b16 %v3365
        %v4113 = vunpack.c.l.b16 %v3366
        %v4114 = vunpack.c.h.b16 %v3366
        %v4115 = vunpack.c.l.b16 %v3367
        %v4116 = vunpack.c.l.b16 %v3368
        %v4117 = vunpack.c.h.b16 %v3368
        %v4118 = vunpack.c.l.b16 %v3369
        %v4119 = vunpack.c.h.b16 %v3369
        %v4120 = vunpack.c.l.b16 %v3370
        %v4121 = vunpack.c.h.b16 %v3370
        %v4122 = vunpack.c.l.b16 %v3371
        %v4123 = vunpack.c.h.b16 %v3371
        %v4124 = vunpack.c.l.b16 %v3372
        %v4125 = vunpack.c.h.b16 %v3372
        %v4126 = vunpack.c.l.b16 %v3373
        %v4127 = vunpack.c.l.b16 %v3374
        %v4128 = vunpack.c.h.b16 %v3374
        %v4129 = vunpack.c.l.b16 %v3375
        %v4130 = vunpack.c.h.b16 %v3375
        %v4131 = vunpack.c.l.b16 %v3376
        %v4132 = vunpack.c.h.b16 %v3376
        %v4133 = vunpack.c.l.b16 %v3377
        %v4134 = vunpack.c.h.b16 %v3377
        %v4135 = vunpack.c.l.b16 %v3378
        %v4136 = vunpack.c.h.b16 %v3378
        %v4137 = vunpack.c.l.b16 %v3379
        %v4138 = vunpack.c.l.b16 %v3380
        %v4139 = vunpack.c.h.b16 %v3380
        %v4140 = vunpack.c.l.b16 %v3381
        %v4141 = vunpack.c.h.b16 %v3381
        %v4142 = vunpack.c.l.b16 %v3382
        %v4143 = vunpack.c.h.b16 %v3382
        %v4144 = vunpack.c.l.b16 %v3383
        %v4145 = vunpack.c.h.b16 %v3383
        %v4146 = vunpack.c.l.b16 %v3384
        %v4147 = vunpack.c.h.b16 %v3384
        %v4148 = vunpack.c.l.b16 %v3385
        %v4149 = vpack.c.b16 %v3808, %v3797
        %v4150 = vpack.c.b16 %v3809, %v3798
        %v4151 = vpack.c.b16 %v3810, %v3799
        %v4152 = vpack.c.b16 %v3811, %v3800
        %v4153 = vpack.c.b16 %v3812, %v3801
        %v4154 = vpack.c.b16 %v3813, %v3802
        %v4155 = vpack.c.b16 %v3814, %v3803
        %v4156 = vpack.c.b16 %v3815, %v3804
        %v4157 = vpack.c.b16 %v3816, %v3805
        %v4158 = vpack.c.b16 %v3817, %v3806
        %v4159 = vpack.c.b16 %v3818, %v3807
        %v4160 = vpack.c.b16 %v3830, %v3819
        %v4161 = vpack.c.b16 %v3831, %v3820
        %v4162 = vpack.c.b16 %v3832, %v3821
        %v4163 = vpack.c.b16 %v3833, %v3822
        %v4164 = vpack.c.b16 %v3834, %v3823
        %v4165 = vpack.c.b16 %v3835, %v3824
        %v4166 = vpack.c.b16 %v3836, %v3825
        %v4167 = vpack.c.b16 %v3837, %v3826
        %v4168 = vpack.c.b16 %v3838, %v3827
        %v4169 = vpack.c.b16 %v3839, %v3828
        %v4170 = vpack.c.b16 %v3840, %v3829
        %v4171 = vpack.c.b16 %v3852, %v3841
        %v4172 = vpack.c.b16 %v3853, %v3842
        %v4173 = vpack.c.b16 %v3854, %v3843
        %v4174 = vpack.c.b16 %v3855, %v3844
        %v4175 = vpack.c.b16 %v3856, %v3845
        %v4176 = vpack.c.b16 %v3857, %v3846
        %v4177 = vpack.c.b16 %v3858, %v3847
        %v4178 = vpack.c.b16 %v3859, %v3848
        %v4179 = vpack.c.b16 %v3860, %v3849
        %v4180 = vpack.c.b16 %v3861, %v3850
        %v4181 = vpack.c.b16 %v3862, %v3851
        %v4182 = vpack.c.b16 %v3874, %v3863
        %v4183 = vpack.c.b16 %v3875, %v3864
        %v4184 = vpack.c.b16 %v3876, %v3865
        %v4185 = vpack.c.b16 %v3877, %v3866
        %v4186 = vpack.c.b16 %v3878, %v3867
        %v4187 = vpack.c.b16 %v3879, %v3868
        %v4188 = vpack.c.b16 %v3880, %v3869
        %v4189 = vpack.c.b16 %v3881, %v3870
        %v4190 = vpack.c.b16 %v3882, %v3871
        %v4191 = vpack.c.b16 %v3883, %v3872
        %v4192 = vpack.c.b16 %v3884, %v3873
        %v4193 = vpack.c.b16 %v3896, %v3885
        %v4194 = vpack.c.b16 %v3897, %v3886
        %v4195 = vpack.c.b16 %v3898, %v3887
        %v4196 = vpack.c.b16 %v3899, %v3888
        %v4197 = vpack.c.b16 %v3900, %v3889
        %v4198 = vpack.c.b16 %v3901, %v3890
        %v4199 = vpack.c.b16 %v3902, %v3891
        %v4200 = vpack.c.b16 %v3903, %v3892
        %v4201 = vpack.c.b16 %v3904, %v3893
        %v4202 = vpack.c.b16 %v3905, %v3894
        %v4203 = vpack.c.b16 %v3906, %v3895
        %v4204 = vpack.c.b16 %v3918, %v3907
        %v4205 = vpack.c.b16 %v3919, %v3908
        %v4206 = vpack.c.b16 %v3920, %v3909
        %v4207 = vpack.c.b16 %v3921, %v3910
        %v4208 = vpack.c.b16 %v3922, %v3911
        %v4209 = vpack.c.b16 %v3923, %v3912
        %v4210 = vpack.c.b16 %v3924, %v3913
        %v4211 = vpack.c.b16 %v3925, %v3914
        %v4212 = vpack.c.b16 %v3926, %v3915
        %v4213 = vpack.c.b16 %v3927, %v3916
        %v4214 = vpack.c.b16 %v3928, %v3917
        %v4215 = vpack.c.b16 %v3940, %v3929
        %v4216 = vpack.c.b16 %v3941, %v3930
        %v4217 = vpack.c.b16 %v3942, %v3931
        %v4218 = vpack.c.b16 %v3943, %v3932
        %v4219 = vpack.c.b16 %v3944, %v3933
        %v4220 = vpack.c.b16 %v3945, %v3934
        %v4221 = vpack.c.b16 %v3946, %v3935
        %v4222 = vpack.c.b16 %v3947, %v3936
        %v4223 = vpack.c.b16 %v3948, %v3937
        %v4224 = vpack.c.b16 %v3949, %v3938
        %v4225 = vpack.c.b16 %v3950, %v3939
        %v4226 = vpack.c.b16 %v3962, %v3951
        %v4227 = vpack.c.b16 %v3963, %v3952
        %v4228 = vpack.c.b16 %v3964, %v3953
        %v4229 = vpack.c.b16 %v3965, %v3954
        %v4230 = vpack.c.b16 %v3966, %v3955
        %v4231 = vpack.c.b16 %v3967, %v3956
        %v4232 = vpack.c.b16 %v3968, %v3957
        %v4233 = vpack.c.b16 %v3969, %v3958
        %v4234 = vpack.c.b16 %v3970, %v3959
        %v4235 = vpack.c.b16 %v3971, %v3960
        %v4236 = vpack.c.b16 %v3972, %v3961
        %v4237 = vpack.c.b16 %v3984, %v3973
        %v4238 = vpack.c.b16 %v3985, %v3974
        %v4239 = vpack.c.b16 %v3986, %v3975
        %v4240 = vpack.c.b16 %v3987, %v3976
        %v4241 = vpack.c.b16 %v3988, %v3977
        %v4242 = vpack.c.b16 %v3989, %v3978
        %v4243 = vpack.c.b16 %v3990, %v3979
        %v4244 = vpack.c.b16 %v3991, %v3980
        %v4245 = vpack.c.b16 %v3992, %v3981
        %v4246 = vpack.c.b16 %v3993, %v3982
        %v4247 = vpack.c.b16 %v3994, %v3983
        %v4248 = vpack.c.b16 %v4006, %v3995
        %v4249 = vpack.c.b16 %v4007, %v3996
        %v4250 = vpack.c.b16 %v4008, %v3997
        %v4251 = vpack.c.b16 %v4009, %v3998
        %v4252 = vpack.c.b16 %v4010, %v3999
        %v4253 = vpack.c.b16 %v4011, %v4000
        %v4254 = vpack.c.b16 %v4012, %v4001
        %v4255 = vpack.c.b16 %v4013, %v4002
        %v4256 = vpack.c.b16 %v4014, %v4003
        %v4257 = vpack.c.b16 %v4015, %v4004
        %v4258 = vpack.c.b16 %v4016, %v4005
        %v4259 = vpack.c.b16 %v4028, %v4017
        %v4260 = vpack.c.b16 %v4029, %v4018
        %v4261 = vpack.c.b16 %v4030, %v4019
        %v4262 = vpack.c.b16 %v4031, %v4020
        %v4263 = vpack.c.b16 %v4032, %v4021
        %v4264 = vpack.c.b16 %v4033, %v4022
        %v4265 = vpack.c.b16 %v4034, %v4023
        %v4266 = vpack.c.b16 %v4035, %v4024
        %v4267 = vpack.c.b16 %v4036, %v4025
        %v4268 = vpack.c.b16 %v4037, %v4026
        %v4269 = vpack.c.b16 %v4038, %v4027
        %v4270 = vpack.c.b16 %v4050, %v4039
        %v4271 = vpack.c.b16 %v4051, %v4040
        %v4272 = vpack.c.b16 %v4052, %v4041
        %v4273 = vpack.c.b16 %v4053, %v4042
        %v4274 = vpack.c.b16 %v4054, %v4043
        %v4275 = vpack.c.b16 %v4055, %v4044
        %v4276 = vpack.c.b16 %v4056, %v4045
        %v4277 = vpack.c.b16 %v4057, %v4046
        %v4278 = vpack.c.b16 %v4058, %v4047
        %v4279 = vpack.c.b16 %v4059, %v4048
        %v4280 = vpack.c.b16 %v4060, %v4049
        %v4281 = vpack.c.b16 %v4072, %v4061
        %v4282 = vpack.c.b16 %v4073, %v4062
        %v4283 = vpack.c.b16 %v4074, %v4063
        %v4284 = vpack.c.b16 %v4075, %v4064
        %v4285 = vpack.c.b16 %v4076, %v4065
        %v4286 = vpack.c.b16 %v4077, %v4066
        %v4287 = vpack.c.b16 %v4078, %v4067
        %v4288 = vpack.c.b16 %v4079, %v4068
        %v4289 = vpack.c.b16 %v4080, %v4069
        %v4290 = vpack.c.b16 %v4081, %v4070
        %v4291 = vpack.c.b16 %v4082, %v4071
        %v4292 = vpack.c.b16 %v4094, %v4083
        %v4293 = vpack.c.b16 %v4095, %v4084
        %v4294 = vpack.c.b16 %v4096, %v4085
        %v4295 = vpack.c.b16 %v4097, %v4086
        %v4296 = vpack.c.b16 %v4098, %v4087
        %v4297 = vpack.c.b16 %v4099, %v4088
        %v4298 = vpack.c.b16 %v4100, %v4089
        %v4299 = vpack.c.b16 %v4101, %v4090
        %v4300 = vpack.c.b16 %v4102, %v4091
        %v4301 = vpack.c.b16 %v4103, %v4092
        %v4302 = vpack.c.b16 %v4104, %v4093
        %v4303 = vpack.c.b16 %v4116, %v4105
        %v4304 = vpack.c.b16 %v4117, %v4106
        %v4305 = vpack.c.b16 %v4118, %v4107
        %v4306 = vpack.c.b16 %v4119, %v4108
        %v4307 = vpack.c.b16 %v4120, %v4109
        %v4308 = vpack.c.b16 %v4121, %v4110
        %v4309 = vpack.c.b16 %v4122, %v4111
        %v4310 = vpack.c.b16 %v4123, %v4112
        %v4311 = vpack.c.b16 %v4124, %v4113
        %v4312 = vpack.c.b16 %v4125, %v4114
        %v4313 = vpack.c.b16 %v4126, %v4115
        %v4314 = vpack.c.b16 %v4138, %v4127
        %v4315 = vpack.c.b16 %v4139, %v4128
        %v4316 = vpack.c.b16 %v4140, %v4129
        %v4317 = vpack.c.b16 %v4141, %v4130
        %v4318 = vpack.c.b16 %v4142, %v4131
        %v4319 = vpack.c.b16 %v4143, %v4132
        %v4320 = vpack.c.b16 %v4144, %v4133
        %v4321 = vpack.c.b16 %v4145, %v4134
        %v4322 = vpack.c.b16 %v4146, %v4135
        %v4323 = vpack.c.b16 %v4147, %v4136
        %v4324 = vpack.c.b16 %v4148, %v4137
        %4501 = vmatprep.subr.bf16.mxu0 %v4227
        %4502 = vmatpush1.bf16.msra.mxu0 %v4226
        %4503 = vmatprep.subr.bf16.mxu0 %v4216
        %4504 = vmatpush1.bf16.msra.mxu0 %v4215
        %4505 = vmatprep.subr.bf16.mxu0 %v4205
        %4506 = vmatpush1.bf16.msra.mxu0 %v4204
        %4507 = vmatprep.subr.bf16.mxu0 %v4194
        %4508 = vmatpush1.bf16.msra.mxu0 %v4193
        %4509 = vmatprep.subr.bf16.mxu0 %v4183
        %4510 = vmatpush1.bf16.msra.mxu0 %v4182
        %4511 = vmatprep.subr.bf16.mxu0 %v4172
        %4512 = vmatpush1.bf16.msra.mxu0 %v4171
        %4513 = vmatprep.subr.bf16.mxu0 %v4161
        %4514 = vmatpush1.bf16.msra.mxu0 %v4160
        %4515 = vmatprep.subr.bf16.mxu0 %v4150
        %4516 = vmatpush1.bf16.msra.mxu0 %v4149
        %4517 = vmatprep.subr.bf16.mxu0 %v4315
        %4518 = vmatpush2.bf16.msra.mxu0 %v4314
        %4519 = vmatprep.subr.bf16.mxu0 %v4304
        %4520 = vmatpush2.bf16.msra.mxu0 %v4303
        %4521 = vmatprep.subr.bf16.mxu0 %v4293
        %4522 = vmatpush2.bf16.msra.mxu0 %v4292
        %4523 = vmatprep.subr.bf16.mxu0 %v4282
        %4524 = vmatpush2.bf16.msra.mxu0 %v4281
        %4525 = vmatprep.subr.bf16.mxu0 %v4271
        %4526 = vmatpush2.bf16.msra.mxu0 %v4270
        %4527 = vmatprep.subr.bf16.mxu0 %v4260
        %4528 = vmatpush2.bf16.msra.mxu0 %v4259
        %4529 = vmatprep.subr.bf16.mxu0 %v4249
        %4530 = vmatpush2.bf16.msra.mxu0 %v4248
        %4531 = vmatprep.subr.bf16.mxu0 %v4238
        %4532 = vmatpush2.bf16.msra.mxu0 %v4237
        %4533 = vmatprep.mubr.bf16.mxu0 %v3542
        %4534 = vmatmul.mubr.bf16.gmra.mxu0 %v3541
        %v4535 = vpop.f32.mrf.mxu0
        %v4536 = vadd.f32 %v3393, %v4535
        %v4537 = vpop.f32.mrf.mxu0
        %v4538 = vadd.f32 %v3397, %v4537
        %v4539 = vpop.f32.mrf.mxu0
        %v4540 = vadd.f32 %v3393, %v4539
        %v4541 = vpop.f32.mrf.mxu0
        %v4542 = vadd.f32 %v3397, %v4541
        %4543 = vmatprep.mubr.bf16.mxu0 %v3544
        %4544 = vmatmul.mubr.bf16.gmra.mxu0 %v3543
        %v4545 = vpop.f32.mrf.mxu0
        %v4546 = vadd.f32 %v3393, %v4545
        %v4547 = vpop.f32.mrf.mxu0
        %v4548 = vadd.f32 %v3397, %v4547
        %v4549 = vpop.f32.mrf.mxu0
        %v4550 = vadd.f32 %v3393, %v4549
        %v4551 = vpop.f32.mrf.mxu0
        %v4552 = vadd.f32 %v3397, %v4551
        %4553 = vmatprep.mubr.bf16.mxu0 %v3546
        %4554 = vmatmul.mubr.bf16.gmra.mxu0 %v3545
        %v4555 = vpop.f32.mrf.mxu0
        %v4556 = vadd.f32 %v3393, %v4555
        %v4557 = vpop.f32.mrf.mxu0
        %v4558 = vadd.f32 %v3397, %v4557
        %v4559 = vpop.f32.mrf.mxu0
        %v4560 = vadd.f32 %v3393, %v4559
        %v4561 = vpop.f32.mrf.mxu0
        %v4562 = vadd.f32 %v3397, %v4561
        %4563 = vmatprep.mubr.bf16.mxu0 %v3548
        %4564 = vmatmul.mubr.bf16.gmra.mxu0 %v3547
        %v4565 = vpop.f32.mrf.mxu0
        %v4566 = vadd.f32 %v3393, %v4565
        %v4567 = vpop.f32.mrf.mxu0
        %v4568 = vadd.f32 %v3397, %v4567
        %v4569 = vpop.f32.mrf.mxu0
        %v4570 = vadd.f32 %v3393, %v4569
        %v4571 = vpop.f32.mrf.mxu0
        %v4572 = vadd.f32 %v3397, %v4571
        %4573 = vmatprep.mubr.bf16.mxu0 %v3550
        %4574 = vmatmul.mubr.bf16.gmra.mxu0 %v3549
        %v4575 = vpop.f32.mrf.mxu0
        %v4576 = vadd.f32 %v3393, %v4575
        %v4577 = vpop.f32.mrf.mxu0
        %v4578 = vadd.f32 %v3397, %v4577
        %v4579 = vpop.f32.mrf.mxu0
        %v4580 = vadd.f32 %v3393, %v4579
        %v4581 = vpop.f32.mrf.mxu0
        %v4582 = vadd.f32 %v3397, %v4581
        %4583 = vmatprep.mubr.bf16.mxu0 %v3552
        %4584 = vmatmul.mubr.bf16.gmra.mxu0 %v3551
        %v4585 = vpop.f32.mrf.mxu0
        %v4586 = vadd.f32 %v3393, %v4585
        %v4587 = vpop.f32.mrf.mxu0
        %v4588 = vadd.f32 %v3397, %v4587
        %v4589 = vpop.f32.mrf.mxu0
        %v4590 = vadd.f32 %v3393, %v4589
        %v4591 = vpop.f32.mrf.mxu0
        %v4592 = vadd.f32 %v3397, %v4591
        %4593 = vmatprep.mubr.bf16.mxu0 %v3554
        %4594 = vmatmul.mubr.bf16.gmra.mxu0 %v3553
        %v4595 = vpop.f32.mrf.mxu0
        %v4596 = vadd.f32 %v3393, %v4595
        %v4597 = vpop.f32.mrf.mxu0
        %v4598 = vadd.f32 %v3397, %v4597
        %v4599 = vpop.f32.mrf.mxu0
        %v4600 = vadd.f32 %v3393, %v4599
        %v4601 = vpop.f32.mrf.mxu0
        %v4602 = vadd.f32 %v3397, %v4601
        %4603 = vmatprep.mubr.bf16.mxu0 %v3556
        %4604 = vmatmul.mubr.bf16.gmra.mxu0 %v3555
        %v4605 = vpop.f32.mrf.mxu0
        %v4606 = vadd.f32 %v3393, %v4605
        %v4607 = vpop.f32.mrf.mxu0
        %v4608 = vadd.f32 %v3397, %v4607
        %v4609 = vpop.f32.mrf.mxu0
        %v4610 = vadd.f32 %v3393, %v4609
        %v4611 = vpop.f32.mrf.mxu0
        %v4612 = vadd.f32 %v3397, %v4611
        %4613 = vmatprep.mubr.bf16.mxu0 %v3558
        %4614 = vmatmul.mubr.bf16.gmra.mxu0 %v3557
        %v4615 = vpop.f32.mrf.mxu0
        %v4616 = vadd.f32 %v3393, %v4615
        %v4617 = vpop.f32.mrf.mxu0
        %v4618 = vadd.f32 %v3397, %v4617
        %v4619 = vpop.f32.mrf.mxu0
        %v4620 = vadd.f32 %v3393, %v4619
        %v4621 = vpop.f32.mrf.mxu0
        %v4622 = vadd.f32 %v3397, %v4621
        %4623 = vmatprep.mubr.bf16.mxu0 %v3560
        %4624 = vmatmul.mubr.bf16.gmra.mxu0 %v3559
        %v4625 = vpop.f32.mrf.mxu0
        %v4626 = vadd.f32 %v3393, %v4625
        %v4627 = vpop.f32.mrf.mxu0
        %v4628 = vadd.f32 %v3397, %v4627
        %v4629 = vpop.f32.mrf.mxu0
        %v4630 = vadd.f32 %v3393, %v4629
        %v4631 = vpop.f32.mrf.mxu0
        %v4632 = vadd.f32 %v3397, %v4631
        %4633 = vmatprep.mubr.bf16.mxu0 %v3562
        %4634 = vmatmul.mubr.bf16.gmra.mxu0 %v3561
        %v4635 = vpop.f32.mrf.mxu0
        %v4636 = vadd.f32 %v3393, %v4635
        %v4637 = vpop.f32.mrf.mxu0
        %v4638 = vadd.f32 %v3397, %v4637
        %v4639 = vpop.f32.mrf.mxu0
        %v4640 = vadd.f32 %v3393, %v4639
        %v4641 = vpop.f32.mrf.mxu0
        %v4642 = vadd.f32 %v3397, %v4641
        %4643 = vmatprep.mubr.bf16.mxu0 %v3564
        %4644 = vmatmul.mubr.bf16.gmra.mxu0 %v3563
        %v4645 = vpop.f32.mrf.mxu0
        %v4646 = vadd.f32 %v3393, %v4645
        %v4647 = vpop.f32.mrf.mxu0
        %v4648 = vadd.f32 %v3397, %v4647
        %v4649 = vpop.f32.mrf.mxu0
        %v4650 = vadd.f32 %v3393, %v4649
        %v4651 = vpop.f32.mrf.mxu0
        %v4652 = vadd.f32 %v3397, %v4651
        %4653 = vmatprep.mubr.bf16.mxu0 %v3566
        %4654 = vmatmul.mubr.bf16.gmra.mxu0 %v3565
        %v4655 = vpop.f32.mrf.mxu0
        %v4656 = vadd.f32 %v3393, %v4655
        %v4657 = vpop.f32.mrf.mxu0
        %v4658 = vadd.f32 %v3397, %v4657
        %v4659 = vpop.f32.mrf.mxu0
        %v4660 = vadd.f32 %v3393, %v4659
        %v4661 = vpop.f32.mrf.mxu0
        %v4662 = vadd.f32 %v3397, %v4661
        %4663 = vmatprep.mubr.bf16.mxu0 %v3568
        %4664 = vmatmul.mubr.bf16.gmra.mxu0 %v3567
        %v4665 = vpop.f32.mrf.mxu0
        %v4666 = vadd.f32 %v3393, %v4665
        %v4667 = vpop.f32.mrf.mxu0
        %v4668 = vadd.f32 %v3397, %v4667
        %v4669 = vpop.f32.mrf.mxu0
        %v4670 = vadd.f32 %v3393, %v4669
        %v4671 = vpop.f32.mrf.mxu0
        %v4672 = vadd.f32 %v3397, %v4671
        %4673 = vmatprep.mubr.bf16.mxu0 %v3570
        %4674 = vmatmul.mubr.bf16.gmra.mxu0 %v3569
        %v4675 = vpop.f32.mrf.mxu0
        %v4676 = vadd.f32 %v3393, %v4675
        %v4677 = vpop.f32.mrf.mxu0
        %v4678 = vadd.f32 %v3397, %v4677
        %v4679 = vpop.f32.mrf.mxu0
        %v4680 = vadd.f32 %v3393, %v4679
        %v4681 = vpop.f32.mrf.mxu0
        %v4682 = vadd.f32 %v3397, %v4681
        %4683 = vmatprep.mubr.bf16.mxu0 %v3572
        %4684 = vmatmul.mubr.bf16.gmra.mxu0 %v3571
        %v4685 = vpop.f32.mrf.mxu0
        %v4686 = vadd.f32 %v3393, %v4685
        %v4687 = vpop.f32.mrf.mxu0
        %v4688 = vadd.f32 %v3397, %v4687
        %v4689 = vpop.f32.mrf.mxu0
        %v4690 = vadd.f32 %v3393, %v4689
        %v4691 = vpop.f32.mrf.mxu0
        %v4692 = vadd.f32 %v3397, %v4691
        %4693 = vdwg.mxu0
        %4694 = vmatprep.subr.bf16.mxu0 %v4229
        %4695 = vmatpush1.bf16.msra.mxu0 %v4228
        %4696 = vmatprep.subr.bf16.mxu0 %v4218
        %4697 = vmatpush1.bf16.msra.mxu0 %v4217
        %4698 = vmatprep.subr.bf16.mxu0 %v4207
        %4699 = vmatpush1.bf16.msra.mxu0 %v4206
        %4700 = vmatprep.subr.bf16.mxu0 %v4196
        %4701 = vmatpush1.bf16.msra.mxu0 %v4195
        %4702 = vmatprep.subr.bf16.mxu0 %v4185
        %4703 = vmatpush1.bf16.msra.mxu0 %v4184
        %4704 = vmatprep.subr.bf16.mxu0 %v4174
        %4705 = vmatpush1.bf16.msra.mxu0 %v4173
        %4706 = vmatprep.subr.bf16.mxu0 %v4163
        %4707 = vmatpush1.bf16.msra.mxu0 %v4162
        %4708 = vmatprep.subr.bf16.mxu0 %v4152
        %4709 = vmatpush1.bf16.msra.mxu0 %v4151
        %4710 = vmatprep.subr.bf16.mxu0 %v4317
        %4711 = vmatpush2.bf16.msra.mxu0 %v4316
        %4712 = vmatprep.subr.bf16.mxu0 %v4306
        %4713 = vmatpush2.bf16.msra.mxu0 %v4305
        %4714 = vmatprep.subr.bf16.mxu0 %v4295
        %4715 = vmatpush2.bf16.msra.mxu0 %v4294
        %4716 = vmatprep.subr.bf16.mxu0 %v4284
        %4717 = vmatpush2.bf16.msra.mxu0 %v4283
        %4718 = vmatprep.subr.bf16.mxu0 %v4273
        %4719 = vmatpush2.bf16.msra.mxu0 %v4272
        %4720 = vmatprep.subr.bf16.mxu0 %v4262
        %4721 = vmatpush2.bf16.msra.mxu0 %v4261
        %4722 = vmatprep.subr.bf16.mxu0 %v4251
        %4723 = vmatpush2.bf16.msra.mxu0 %v4250
        %4724 = vmatprep.subr.bf16.mxu0 %v4240
        %4725 = vmatpush2.bf16.msra.mxu0 %v4239
        %4726 = vmatprep.mubr.bf16.mxu0 %v3542
        %4727 = vmatmul.mubr.bf16.gmra.mxu0 %v3541
        %v4728 = vpop.f32.mrf.mxu0
        %v4729 = vadd.f32 %v3401, %v4728
        %v4730 = vpop.f32.mrf.mxu0
        %v4731 = vadd.f32 %v3405, %v4730
        %v4732 = vpop.f32.mrf.mxu0
        %v4733 = vadd.f32 %v3401, %v4732
        %v4734 = vpop.f32.mrf.mxu0
        %v4735 = vadd.f32 %v3405, %v4734
        %4736 = vmatprep.mubr.bf16.mxu0 %v3544
        %4737 = vmatmul.mubr.bf16.gmra.mxu0 %v3543
        %v4738 = vpop.f32.mrf.mxu0
        %v4739 = vadd.f32 %v3401, %v4738
        %v4740 = vpop.f32.mrf.mxu0
        %v4741 = vadd.f32 %v3405, %v4740
        %v4742 = vpop.f32.mrf.mxu0
        %v4743 = vadd.f32 %v3401, %v4742
        %v4744 = vpop.f32.mrf.mxu0
        %v4745 = vadd.f32 %v3405, %v4744
        %4746 = vmatprep.mubr.bf16.mxu0 %v3546
        %4747 = vmatmul.mubr.bf16.gmra.mxu0 %v3545
        %v4748 = vpop.f32.mrf.mxu0
        %v4749 = vadd.f32 %v3401, %v4748
        %v4750 = vpop.f32.mrf.mxu0
        %v4751 = vadd.f32 %v3405, %v4750
        %v4752 = vpop.f32.mrf.mxu0
        %v4753 = vadd.f32 %v3401, %v4752
        %v4754 = vpop.f32.mrf.mxu0
        %v4755 = vadd.f32 %v3405, %v4754
        %4756 = vmatprep.mubr.bf16.mxu0 %v3548
        %4757 = vmatmul.mubr.bf16.gmra.mxu0 %v3547
        %v4758 = vpop.f32.mrf.mxu0
        %v4759 = vadd.f32 %v3401, %v4758
        %v4760 = vpop.f32.mrf.mxu0
        %v4761 = vadd.f32 %v3405, %v4760
        %v4762 = vpop.f32.mrf.mxu0
        %v4763 = vadd.f32 %v3401, %v4762
        %v4764 = vpop.f32.mrf.mxu0
        %v4765 = vadd.f32 %v3405, %v4764
        %4766 = vmatprep.mubr.bf16.mxu0 %v3550
        %4767 = vmatmul.mubr.bf16.gmra.mxu0 %v3549
        %v4768 = vpop.f32.mrf.mxu0
        %v4769 = vadd.f32 %v3401, %v4768
        %v4770 = vpop.f32.mrf.mxu0
        %v4771 = vadd.f32 %v3405, %v4770
        %v4772 = vpop.f32.mrf.mxu0
        %v4773 = vadd.f32 %v3401, %v4772
        %v4774 = vpop.f32.mrf.mxu0
        %v4775 = vadd.f32 %v3405, %v4774
        %4776 = vmatprep.mubr.bf16.mxu0 %v3552
        %4777 = vmatmul.mubr.bf16.gmra.mxu0 %v3551
        %v4778 = vpop.f32.mrf.mxu0
        %v4779 = vadd.f32 %v3401, %v4778
        %v4780 = vpop.f32.mrf.mxu0
        %v4781 = vadd.f32 %v3405, %v4780
        %v4782 = vpop.f32.mrf.mxu0
        %v4783 = vadd.f32 %v3401, %v4782
        %v4784 = vpop.f32.mrf.mxu0
        %v4785 = vadd.f32 %v3405, %v4784
        %4786 = vmatprep.mubr.bf16.mxu0 %v3554
        %4787 = vmatmul.mubr.bf16.gmra.mxu0 %v3553
        %v4788 = vpop.f32.mrf.mxu0
        %v4789 = vadd.f32 %v3401, %v4788
        %v4790 = vpop.f32.mrf.mxu0
        %v4791 = vadd.f32 %v3405, %v4790
        %v4792 = vpop.f32.mrf.mxu0
        %v4793 = vadd.f32 %v3401, %v4792
        %v4794 = vpop.f32.mrf.mxu0
        %v4795 = vadd.f32 %v3405, %v4794
        %4796 = vmatprep.mubr.bf16.mxu0 %v3556
        %4797 = vmatmul.mubr.bf16.gmra.mxu0 %v3555
        %v4798 = vpop.f32.mrf.mxu0
        %v4799 = vadd.f32 %v3401, %v4798
        %v4800 = vpop.f32.mrf.mxu0
        %v4801 = vadd.f32 %v3405, %v4800
        %v4802 = vpop.f32.mrf.mxu0
        %v4803 = vadd.f32 %v3401, %v4802
        %v4804 = vpop.f32.mrf.mxu0
        %v4805 = vadd.f32 %v3405, %v4804
        %4806 = vmatprep.mubr.bf16.mxu0 %v3558
        %4807 = vmatmul.mubr.bf16.gmra.mxu0 %v3557
        %v4808 = vpop.f32.mrf.mxu0
        %v4809 = vadd.f32 %v3401, %v4808
        %v4810 = vpop.f32.mrf.mxu0
        %v4811 = vadd.f32 %v3405, %v4810
        %v4812 = vpop.f32.mrf.mxu0
        %v4813 = vadd.f32 %v3401, %v4812
        %v4814 = vpop.f32.mrf.mxu0
        %v4815 = vadd.f32 %v3405, %v4814
        %4816 = vmatprep.mubr.bf16.mxu0 %v3560
        %4817 = vmatmul.mubr.bf16.gmra.mxu0 %v3559
        %v4818 = vpop.f32.mrf.mxu0
        %v4819 = vadd.f32 %v3401, %v4818
        %v4820 = vpop.f32.mrf.mxu0
        %v4821 = vadd.f32 %v3405, %v4820
        %v4822 = vpop.f32.mrf.mxu0
        %v4823 = vadd.f32 %v3401, %v4822
        %v4824 = vpop.f32.mrf.mxu0
        %v4825 = vadd.f32 %v3405, %v4824
        %4826 = vmatprep.mubr.bf16.mxu0 %v3562
        %4827 = vmatmul.mubr.bf16.gmra.mxu0 %v3561
        %v4828 = vpop.f32.mrf.mxu0
        %v4829 = vadd.f32 %v3401, %v4828
        %v4830 = vpop.f32.mrf.mxu0
        %v4831 = vadd.f32 %v3405, %v4830
        %v4832 = vpop.f32.mrf.mxu0
        %v4833 = vadd.f32 %v3401, %v4832
        %v4834 = vpop.f32.mrf.mxu0
        %v4835 = vadd.f32 %v3405, %v4834
        %4836 = vmatprep.mubr.bf16.mxu0 %v3564
        %4837 = vmatmul.mubr.bf16.gmra.mxu0 %v3563
        %v4838 = vpop.f32.mrf.mxu0
        %v4839 = vadd.f32 %v3401, %v4838
        %v4840 = vpop.f32.mrf.mxu0
        %v4841 = vadd.f32 %v3405, %v4840
        %v4842 = vpop.f32.mrf.mxu0
        %v4843 = vadd.f32 %v3401, %v4842
        %v4844 = vpop.f32.mrf.mxu0
        %v4845 = vadd.f32 %v3405, %v4844
        %4846 = vmatprep.mubr.bf16.mxu0 %v3566
        %4847 = vmatmul.mubr.bf16.gmra.mxu0 %v3565
        %v4848 = vpop.f32.mrf.mxu0
        %v4849 = vadd.f32 %v3401, %v4848
        %v4850 = vpop.f32.mrf.mxu0
        %v4851 = vadd.f32 %v3405, %v4850
        %v4852 = vpop.f32.mrf.mxu0
        %v4853 = vadd.f32 %v3401, %v4852
        %v4854 = vpop.f32.mrf.mxu0
        %v4855 = vadd.f32 %v3405, %v4854
        %4856 = vmatprep.mubr.bf16.mxu0 %v3568
        %4857 = vmatmul.mubr.bf16.gmra.mxu0 %v3567
        %v4858 = vpop.f32.mrf.mxu0
        %v4859 = vadd.f32 %v3401, %v4858
        %v4860 = vpop.f32.mrf.mxu0
        %v4861 = vadd.f32 %v3405, %v4860
        %v4862 = vpop.f32.mrf.mxu0
        %v4863 = vadd.f32 %v3401, %v4862
        %v4864 = vpop.f32.mrf.mxu0
        %v4865 = vadd.f32 %v3405, %v4864
        %4866 = vmatprep.mubr.bf16.mxu0 %v3570
        %4867 = vmatmul.mubr.bf16.gmra.mxu0 %v3569
        %v4868 = vpop.f32.mrf.mxu0
        %v4869 = vadd.f32 %v3401, %v4868
        %v4870 = vpop.f32.mrf.mxu0
        %v4871 = vadd.f32 %v3405, %v4870
        %v4872 = vpop.f32.mrf.mxu0
        %v4873 = vadd.f32 %v3401, %v4872
        %v4874 = vpop.f32.mrf.mxu0
        %v4875 = vadd.f32 %v3405, %v4874
        %4876 = vmatprep.mubr.bf16.mxu0 %v3572
        %4877 = vmatmul.mubr.bf16.gmra.mxu0 %v3571
        %v4878 = vpop.f32.mrf.mxu0
        %v4879 = vadd.f32 %v3401, %v4878
        %v4880 = vpop.f32.mrf.mxu0
        %v4881 = vadd.f32 %v3405, %v4880
        %v4882 = vpop.f32.mrf.mxu0
        %v4883 = vadd.f32 %v3401, %v4882
        %v4884 = vpop.f32.mrf.mxu0
        %v4885 = vadd.f32 %v3405, %v4884
        %4886 = vdwg.mxu0
        %4887 = vmatprep.subr.bf16.mxu0 %v4231
        %4888 = vmatpush1.bf16.msra.mxu0 %v4230
        %4889 = vmatprep.subr.bf16.mxu0 %v4220
        %4890 = vmatpush1.bf16.msra.mxu0 %v4219
        %4891 = vmatprep.subr.bf16.mxu0 %v4209
        %4892 = vmatpush1.bf16.msra.mxu0 %v4208
        %4893 = vmatprep.subr.bf16.mxu0 %v4198
        %4894 = vmatpush1.bf16.msra.mxu0 %v4197
        %4895 = vmatprep.subr.bf16.mxu0 %v4187
        %4896 = vmatpush1.bf16.msra.mxu0 %v4186
        %4897 = vmatprep.subr.bf16.mxu0 %v4176
        %4898 = vmatpush1.bf16.msra.mxu0 %v4175
        %4899 = vmatprep.subr.bf16.mxu0 %v4165
        %4900 = vmatpush1.bf16.msra.mxu0 %v4164
        %4901 = vmatprep.subr.bf16.mxu0 %v4154
        %4902 = vmatpush1.bf16.msra.mxu0 %v4153
        %4903 = vmatprep.subr.bf16.mxu0 %v4319
        %4904 = vmatpush2.bf16.msra.mxu0 %v4318
        %4905 = vmatprep.subr.bf16.mxu0 %v4308
        %4906 = vmatpush2.bf16.msra.mxu0 %v4307
        %4907 = vmatprep.subr.bf16.mxu0 %v4297
        %4908 = vmatpush2.bf16.msra.mxu0 %v4296
        %4909 = vmatprep.subr.bf16.mxu0 %v4286
        %4910 = vmatpush2.bf16.msra.mxu0 %v4285
        %4911 = vmatprep.subr.bf16.mxu0 %v4275
        %4912 = vmatpush2.bf16.msra.mxu0 %v4274
        %4913 = vmatprep.subr.bf16.mxu0 %v4264
        %4914 = vmatpush2.bf16.msra.mxu0 %v4263
        %4915 = vmatprep.subr.bf16.mxu0 %v4253
        %4916 = vmatpush2.bf16.msra.mxu0 %v4252
        %4917 = vmatprep.subr.bf16.mxu0 %v4242
        %4918 = vmatpush2.bf16.msra.mxu0 %v4241
        %4919 = vmatprep.mubr.bf16.mxu0 %v3542
        %4920 = vmatmul.mubr.bf16.gmra.mxu0 %v3541
        %v4921 = vpop.f32.mrf.mxu0
        %v4922 = vadd.f32 %v3409, %v4921
        %v4923 = vpop.f32.mrf.mxu0
        %v4924 = vadd.f32 %v3413, %v4923
        %v4925 = vpop.f32.mrf.mxu0
        %v4926 = vadd.f32 %v3409, %v4925
        %v4927 = vpop.f32.mrf.mxu0
        %v4928 = vadd.f32 %v3413, %v4927
        %4929 = vmatprep.mubr.bf16.mxu0 %v3544
        %4930 = vmatmul.mubr.bf16.gmra.mxu0 %v3543
        %v4931 = vpop.f32.mrf.mxu0
        %v4932 = vadd.f32 %v3409, %v4931
        %v4933 = vpop.f32.mrf.mxu0
        %v4934 = vadd.f32 %v3413, %v4933
        %v4935 = vpop.f32.mrf.mxu0
        %v4936 = vadd.f32 %v3409, %v4935
        %v4937 = vpop.f32.mrf.mxu0
        %v4938 = vadd.f32 %v3413, %v4937
        %4939 = vmatprep.mubr.bf16.mxu0 %v3546
        %4940 = vmatmul.mubr.bf16.gmra.mxu0 %v3545
        %v4941 = vpop.f32.mrf.mxu0
        %v4942 = vadd.f32 %v3409, %v4941
        %v4943 = vpop.f32.mrf.mxu0
        %v4944 = vadd.f32 %v3413, %v4943
        %v4945 = vpop.f32.mrf.mxu0
        %v4946 = vadd.f32 %v3409, %v4945
        %v4947 = vpop.f32.mrf.mxu0
        %v4948 = vadd.f32 %v3413, %v4947
        %4949 = vmatprep.mubr.bf16.mxu0 %v3548
        %4950 = vmatmul.mubr.bf16.gmra.mxu0 %v3547
        %v4951 = vpop.f32.mrf.mxu0
        %v4952 = vadd.f32 %v3409, %v4951
        %v4953 = vpop.f32.mrf.mxu0
        %v4954 = vadd.f32 %v3413, %v4953
        %v4955 = vpop.f32.mrf.mxu0
        %v4956 = vadd.f32 %v3409, %v4955
        %v4957 = vpop.f32.mrf.mxu0
        %v4958 = vadd.f32 %v3413, %v4957
        %4959 = vmatprep.mubr.bf16.mxu0 %v3550
        %4960 = vmatmul.mubr.bf16.gmra.mxu0 %v3549
        %v4961 = vpop.f32.mrf.mxu0
        %v4962 = vadd.f32 %v3409, %v4961
        %v4963 = vpop.f32.mrf.mxu0
        %v4964 = vadd.f32 %v3413, %v4963
        %v4965 = vpop.f32.mrf.mxu0
        %v4966 = vadd.f32 %v3409, %v4965
        %v4967 = vpop.f32.mrf.mxu0
        %v4968 = vadd.f32 %v3413, %v4967
        %4969 = vmatprep.mubr.bf16.mxu0 %v3552
        %4970 = vmatmul.mubr.bf16.gmra.mxu0 %v3551
        %v4971 = vpop.f32.mrf.mxu0
        %v4972 = vadd.f32 %v3409, %v4971
        %v4973 = vpop.f32.mrf.mxu0
        %v4974 = vadd.f32 %v3413, %v4973
        %v4975 = vpop.f32.mrf.mxu0
        %v4976 = vadd.f32 %v3409, %v4975
        %v4977 = vpop.f32.mrf.mxu0
        %v4978 = vadd.f32 %v3413, %v4977
        %4979 = vmatprep.mubr.bf16.mxu0 %v3554
        %4980 = vmatmul.mubr.bf16.gmra.mxu0 %v3553
        %v4981 = vpop.f32.mrf.mxu0
        %v4982 = vadd.f32 %v3409, %v4981
        %v4983 = vpop.f32.mrf.mxu0
        %v4984 = vadd.f32 %v3413, %v4983
        %v4985 = vpop.f32.mrf.mxu0
        %v4986 = vadd.f32 %v3409, %v4985
        %v4987 = vpop.f32.mrf.mxu0
        %v4988 = vadd.f32 %v3413, %v4987
        %4989 = vmatprep.mubr.bf16.mxu0 %v3556
        %4990 = vmatmul.mubr.bf16.gmra.mxu0 %v3555
        %v4991 = vpop.f32.mrf.mxu0
        %v4992 = vadd.f32 %v3409, %v4991
        %v4993 = vpop.f32.mrf.mxu0
        %v4994 = vadd.f32 %v3413, %v4993
        %v4995 = vpop.f32.mrf.mxu0
        %v4996 = vadd.f32 %v3409, %v4995
        %v4997 = vpop.f32.mrf.mxu0
        %v4998 = vadd.f32 %v3413, %v4997
        %4999 = vmatprep.mubr.bf16.mxu0 %v3558
        %5000 = vmatmul.mubr.bf16.gmra.mxu0 %v3557
        %v5001 = vpop.f32.mrf.mxu0
        %v5002 = vadd.f32 %v3409, %v5001
        %v5003 = vpop.f32.mrf.mxu0
        %v5004 = vadd.f32 %v3413, %v5003
        %v5005 = vpop.f32.mrf.mxu0
        %v5006 = vadd.f32 %v3409, %v5005
        %v5007 = vpop.f32.mrf.mxu0
        %v5008 = vadd.f32 %v3413, %v5007
        %5009 = vmatprep.mubr.bf16.mxu0 %v3560
        %5010 = vmatmul.mubr.bf16.gmra.mxu0 %v3559
        %v5011 = vpop.f32.mrf.mxu0
        %v5012 = vadd.f32 %v3409, %v5011
        %v5013 = vpop.f32.mrf.mxu0
        %v5014 = vadd.f32 %v3413, %v5013
        %v5015 = vpop.f32.mrf.mxu0
        %v5016 = vadd.f32 %v3409, %v5015
        %v5017 = vpop.f32.mrf.mxu0
        %v5018 = vadd.f32 %v3413, %v5017
        %5019 = vmatprep.mubr.bf16.mxu0 %v3562
        %5020 = vmatmul.mubr.bf16.gmra.mxu0 %v3561
        %v5021 = vpop.f32.mrf.mxu0
        %v5022 = vadd.f32 %v3409, %v5021
        %v5023 = vpop.f32.mrf.mxu0
        %v5024 = vadd.f32 %v3413, %v5023
        %v5025 = vpop.f32.mrf.mxu0
        %v5026 = vadd.f32 %v3409, %v5025
        %v5027 = vpop.f32.mrf.mxu0
        %v5028 = vadd.f32 %v3413, %v5027
        %5029 = vmatprep.mubr.bf16.mxu0 %v3564
        %5030 = vmatmul.mubr.bf16.gmra.mxu0 %v3563
        %v5031 = vpop.f32.mrf.mxu0
        %v5032 = vadd.f32 %v3409, %v5031
        %v5033 = vpop.f32.mrf.mxu0
        %v5034 = vadd.f32 %v3413, %v5033
        %v5035 = vpop.f32.mrf.mxu0
        %v5036 = vadd.f32 %v3409, %v5035
        %v5037 = vpop.f32.mrf.mxu0
        %v5038 = vadd.f32 %v3413, %v5037
        %5039 = vmatprep.mubr.bf16.mxu0 %v3566
        %5040 = vmatmul.mubr.bf16.gmra.mxu0 %v3565
        %v5041 = vpop.f32.mrf.mxu0
        %v5042 = vadd.f32 %v3409, %v5041
        %v5043 = vpop.f32.mrf.mxu0
        %v5044 = vadd.f32 %v3413, %v5043
        %v5045 = vpop.f32.mrf.mxu0
        %v5046 = vadd.f32 %v3409, %v5045
        %v5047 = vpop.f32.mrf.mxu0
        %v5048 = vadd.f32 %v3413, %v5047
        %5049 = vmatprep.mubr.bf16.mxu0 %v3568
        %5050 = vmatmul.mubr.bf16.gmra.mxu0 %v3567
        %v5051 = vpop.f32.mrf.mxu0
        %v5052 = vadd.f32 %v3409, %v5051
        %v5053 = vpop.f32.mrf.mxu0
        %v5054 = vadd.f32 %v3413, %v5053
        %v5055 = vpop.f32.mrf.mxu0
        %v5056 = vadd.f32 %v3409, %v5055
        %v5057 = vpop.f32.mrf.mxu0
        %v5058 = vadd.f32 %v3413, %v5057
        %5059 = vmatprep.mubr.bf16.mxu0 %v3570
        %5060 = vmatmul.mubr.bf16.gmra.mxu0 %v3569
        %v5061 = vpop.f32.mrf.mxu0
        %v5062 = vadd.f32 %v3409, %v5061
        %v5063 = vpop.f32.mrf.mxu0
        %v5064 = vadd.f32 %v3413, %v5063
        %v5065 = vpop.f32.mrf.mxu0
        %v5066 = vadd.f32 %v3409, %v5065
        %v5067 = vpop.f32.mrf.mxu0
        %v5068 = vadd.f32 %v3413, %v5067
        %5069 = vmatprep.mubr.bf16.mxu0 %v3572
        %5070 = vmatmul.mubr.bf16.gmra.mxu0 %v3571
        %v5071 = vpop.f32.mrf.mxu0
        %v5072 = vadd.f32 %v3409, %v5071
        %v5073 = vpop.f32.mrf.mxu0
        %v5074 = vadd.f32 %v3413, %v5073
        %v5075 = vpop.f32.mrf.mxu0
        %v5076 = vadd.f32 %v3409, %v5075
        %v5077 = vpop.f32.mrf.mxu0
        %v5078 = vadd.f32 %v3413, %v5077
        %5079 = vdwg.mxu0
        %5080 = vmatprep.subr.bf16.mxu0 %v4233
        %5081 = vmatpush1.bf16.msra.mxu0 %v4232
        %5082 = vmatprep.subr.bf16.mxu0 %v4222
        %5083 = vmatpush1.bf16.msra.mxu0 %v4221
        %5084 = vmatprep.subr.bf16.mxu0 %v4211
        %5085 = vmatpush1.bf16.msra.mxu0 %v4210
        %5086 = vmatprep.subr.bf16.mxu0 %v4200
        %5087 = vmatpush1.bf16.msra.mxu0 %v4199
        %5088 = vmatprep.subr.bf16.mxu0 %v4189
        %5089 = vmatpush1.bf16.msra.mxu0 %v4188
        %5090 = vmatprep.subr.bf16.mxu0 %v4178
        %5091 = vmatpush1.bf16.msra.mxu0 %v4177
        %5092 = vmatprep.subr.bf16.mxu0 %v4167
        %5093 = vmatpush1.bf16.msra.mxu0 %v4166
        %5094 = vmatprep.subr.bf16.mxu0 %v4156
        %5095 = vmatpush1.bf16.msra.mxu0 %v4155
        %5096 = vmatprep.subr.bf16.mxu0 %v4321
        %5097 = vmatpush2.bf16.msra.mxu0 %v4320
        %5098 = vmatprep.subr.bf16.mxu0 %v4310
        %5099 = vmatpush2.bf16.msra.mxu0 %v4309
        %5100 = vmatprep.subr.bf16.mxu0 %v4299
        %5101 = vmatpush2.bf16.msra.mxu0 %v4298
        %5102 = vmatprep.subr.bf16.mxu0 %v4288
        %5103 = vmatpush2.bf16.msra.mxu0 %v4287
        %5104 = vmatprep.subr.bf16.mxu0 %v4277
        %5105 = vmatpush2.bf16.msra.mxu0 %v4276
        %5106 = vmatprep.subr.bf16.mxu0 %v4266
        %5107 = vmatpush2.bf16.msra.mxu0 %v4265
        %5108 = vmatprep.subr.bf16.mxu0 %v4255
        %5109 = vmatpush2.bf16.msra.mxu0 %v4254
        %5110 = vmatprep.subr.bf16.mxu0 %v4244
        %5111 = vmatpush2.bf16.msra.mxu0 %v4243
        %5112 = vmatprep.mubr.bf16.mxu0 %v3542
        %5113 = vmatmul.mubr.bf16.gmra.mxu0 %v3541
        %v5114 = vpop.f32.mrf.mxu0
        %v5115 = vadd.f32 %v3417, %v5114
        %v5116 = vpop.f32.mrf.mxu0
        %v5117 = vadd.f32 %v3421, %v5116
        %v5118 = vpop.f32.mrf.mxu0
        %v5119 = vadd.f32 %v3417, %v5118
        %v5120 = vpop.f32.mrf.mxu0
        %v5121 = vadd.f32 %v3421, %v5120
        %5122 = vmatprep.mubr.bf16.mxu0 %v3544
        %5123 = vmatmul.mubr.bf16.gmra.mxu0 %v3543
        %v5124 = vpop.f32.mrf.mxu0
        %v5125 = vadd.f32 %v3417, %v5124
        %v5126 = vpop.f32.mrf.mxu0
        %v5127 = vadd.f32 %v3421, %v5126
        %v5128 = vpop.f32.mrf.mxu0
        %v5129 = vadd.f32 %v3417, %v5128
        %v5130 = vpop.f32.mrf.mxu0
        %v5131 = vadd.f32 %v3421, %v5130
        %5132 = vmatprep.mubr.bf16.mxu0 %v3546
        %5133 = vmatmul.mubr.bf16.gmra.mxu0 %v3545
        %v5134 = vpop.f32.mrf.mxu0
        %v5135 = vadd.f32 %v3417, %v5134
        %v5136 = vpop.f32.mrf.mxu0
        %v5137 = vadd.f32 %v3421, %v5136
        %v5138 = vpop.f32.mrf.mxu0
        %v5139 = vadd.f32 %v3417, %v5138
        %v5140 = vpop.f32.mrf.mxu0
        %v5141 = vadd.f32 %v3421, %v5140
        %5142 = vmatprep.mubr.bf16.mxu0 %v3548
        %5143 = vmatmul.mubr.bf16.gmra.mxu0 %v3547
        %v5144 = vpop.f32.mrf.mxu0
        %v5145 = vadd.f32 %v3417, %v5144
        %v5146 = vpop.f32.mrf.mxu0
        %v5147 = vadd.f32 %v3421, %v5146
        %v5148 = vpop.f32.mrf.mxu0
        %v5149 = vadd.f32 %v3417, %v5148
        %v5150 = vpop.f32.mrf.mxu0
        %v5151 = vadd.f32 %v3421, %v5150
        %5152 = vmatprep.mubr.bf16.mxu0 %v3550
        %5153 = vmatmul.mubr.bf16.gmra.mxu0 %v3549
        %v5154 = vpop.f32.mrf.mxu0
        %v5155 = vadd.f32 %v3417, %v5154
        %v5156 = vpop.f32.mrf.mxu0
        %v5157 = vadd.f32 %v3421, %v5156
        %v5158 = vpop.f32.mrf.mxu0
        %v5159 = vadd.f32 %v3417, %v5158
        %v5160 = vpop.f32.mrf.mxu0
        %v5161 = vadd.f32 %v3421, %v5160
        %5162 = vmatprep.mubr.bf16.mxu0 %v3552
        %5163 = vmatmul.mubr.bf16.gmra.mxu0 %v3551
        %v5164 = vpop.f32.mrf.mxu0
        %v5165 = vadd.f32 %v3417, %v5164
        %v5166 = vpop.f32.mrf.mxu0
        %v5167 = vadd.f32 %v3421, %v5166
        %v5168 = vpop.f32.mrf.mxu0
        %v5169 = vadd.f32 %v3417, %v5168
        %v5170 = vpop.f32.mrf.mxu0
        %v5171 = vadd.f32 %v3421, %v5170
        %5172 = vmatprep.mubr.bf16.mxu0 %v3554
        %5173 = vmatmul.mubr.bf16.gmra.mxu0 %v3553
        %v5174 = vpop.f32.mrf.mxu0
        %v5175 = vadd.f32 %v3417, %v5174
        %v5176 = vpop.f32.mrf.mxu0
        %v5177 = vadd.f32 %v3421, %v5176
        %v5178 = vpop.f32.mrf.mxu0
        %v5179 = vadd.f32 %v3417, %v5178
        %v5180 = vpop.f32.mrf.mxu0
        %v5181 = vadd.f32 %v3421, %v5180
        %5182 = vmatprep.mubr.bf16.mxu0 %v3556
        %5183 = vmatmul.mubr.bf16.gmra.mxu0 %v3555
        %v5184 = vpop.f32.mrf.mxu0
        %v5185 = vadd.f32 %v3417, %v5184
        %v5186 = vpop.f32.mrf.mxu0
        %v5187 = vadd.f32 %v3421, %v5186
        %v5188 = vpop.f32.mrf.mxu0
        %v5189 = vadd.f32 %v3417, %v5188
        %v5190 = vpop.f32.mrf.mxu0
        %v5191 = vadd.f32 %v3421, %v5190
        %5192 = vmatprep.mubr.bf16.mxu0 %v3558
        %5193 = vmatmul.mubr.bf16.gmra.mxu0 %v3557
        %v5194 = vpop.f32.mrf.mxu0
        %v5195 = vadd.f32 %v3417, %v5194
        %v5196 = vpop.f32.mrf.mxu0
        %v5197 = vadd.f32 %v3421, %v5196
        %v5198 = vpop.f32.mrf.mxu0
        %v5199 = vadd.f32 %v3417, %v5198
        %v5200 = vpop.f32.mrf.mxu0
        %v5201 = vadd.f32 %v3421, %v5200
        %5202 = vmatprep.mubr.bf16.mxu0 %v3560
        %5203 = vmatmul.mubr.bf16.gmra.mxu0 %v3559
        %v5204 = vpop.f32.mrf.mxu0
        %v5205 = vadd.f32 %v3417, %v5204
        %v5206 = vpop.f32.mrf.mxu0
        %v5207 = vadd.f32 %v3421, %v5206
        %v5208 = vpop.f32.mrf.mxu0
        %v5209 = vadd.f32 %v3417, %v5208
        %v5210 = vpop.f32.mrf.mxu0
        %v5211 = vadd.f32 %v3421, %v5210
        %5212 = vmatprep.mubr.bf16.mxu0 %v3562
        %5213 = vmatmul.mubr.bf16.gmra.mxu0 %v3561
        %v5214 = vpop.f32.mrf.mxu0
        %v5215 = vadd.f32 %v3417, %v5214
        %v5216 = vpop.f32.mrf.mxu0
        %v5217 = vadd.f32 %v3421, %v5216
        %v5218 = vpop.f32.mrf.mxu0
        %v5219 = vadd.f32 %v3417, %v5218
        %v5220 = vpop.f32.mrf.mxu0
        %v5221 = vadd.f32 %v3421, %v5220
        %5222 = vmatprep.mubr.bf16.mxu0 %v3564
        %5223 = vmatmul.mubr.bf16.gmra.mxu0 %v3563
        %v5224 = vpop.f32.mrf.mxu0
        %v5225 = vadd.f32 %v3417, %v5224
        %v5226 = vpop.f32.mrf.mxu0
        %v5227 = vadd.f32 %v3421, %v5226
        %v5228 = vpop.f32.mrf.mxu0
        %v5229 = vadd.f32 %v3417, %v5228
        %v5230 = vpop.f32.mrf.mxu0
        %v5231 = vadd.f32 %v3421, %v5230
        %5232 = vmatprep.mubr.bf16.mxu0 %v3566
        %5233 = vmatmul.mubr.bf16.gmra.mxu0 %v3565
        %v5234 = vpop.f32.mrf.mxu0
        %v5235 = vadd.f32 %v3417, %v5234
        %v5236 = vpop.f32.mrf.mxu0
        %v5237 = vadd.f32 %v3421, %v5236
        %v5238 = vpop.f32.mrf.mxu0
        %v5239 = vadd.f32 %v3417, %v5238
        %v5240 = vpop.f32.mrf.mxu0
        %v5241 = vadd.f32 %v3421, %v5240
        %5242 = vmatprep.mubr.bf16.mxu0 %v3568
        %5243 = vmatmul.mubr.bf16.gmra.mxu0 %v3567
        %v5244 = vpop.f32.mrf.mxu0
        %v5245 = vadd.f32 %v3417, %v5244
        %v5246 = vpop.f32.mrf.mxu0
        %v5247 = vadd.f32 %v3421, %v5246
        %v5248 = vpop.f32.mrf.mxu0
        %v5249 = vadd.f32 %v3417, %v5248
        %v5250 = vpop.f32.mrf.mxu0
        %v5251 = vadd.f32 %v3421, %v5250
        %5252 = vmatprep.mubr.bf16.mxu0 %v3570
        %5253 = vmatmul.mubr.bf16.gmra.mxu0 %v3569
        %v5254 = vpop.f32.mrf.mxu0
        %v5255 = vadd.f32 %v3417, %v5254
        %v5256 = vpop.f32.mrf.mxu0
        %v5257 = vadd.f32 %v3421, %v5256
        %v5258 = vpop.f32.mrf.mxu0
        %v5259 = vadd.f32 %v3417, %v5258
        %v5260 = vpop.f32.mrf.mxu0
        %v5261 = vadd.f32 %v3421, %v5260
        %5262 = vmatprep.mubr.bf16.mxu0 %v3572
        %5263 = vmatmul.mubr.bf16.gmra.mxu0 %v3571
        %v5264 = vpop.f32.mrf.mxu0
        %v5265 = vadd.f32 %v3417, %v5264
        %v5266 = vpop.f32.mrf.mxu0
        %v5267 = vadd.f32 %v3421, %v5266
        %v5268 = vpop.f32.mrf.mxu0
        %v5269 = vadd.f32 %v3417, %v5268
        %v5270 = vpop.f32.mrf.mxu0
        %v5271 = vadd.f32 %v3421, %v5270
        %5272 = vdwg.mxu0
        %5273 = vmatprep.subr.bf16.mxu0 %v4235
        %5274 = vmatpush1.bf16.msra.mxu0 %v4234
        %5275 = vmatprep.subr.bf16.mxu0 %v4224
        %5276 = vmatpush1.bf16.msra.mxu0 %v4223
        %5277 = vmatprep.subr.bf16.mxu0 %v4213
        %5278 = vmatpush1.bf16.msra.mxu0 %v4212
        %5279 = vmatprep.subr.bf16.mxu0 %v4202
        %5280 = vmatpush1.bf16.msra.mxu0 %v4201
        %5281 = vmatprep.subr.bf16.mxu0 %v4191
        %5282 = vmatpush1.bf16.msra.mxu0 %v4190
        %5283 = vmatprep.subr.bf16.mxu0 %v4180
        %5284 = vmatpush1.bf16.msra.mxu0 %v4179
        %5285 = vmatprep.subr.bf16.mxu0 %v4169
        %5286 = vmatpush1.bf16.msra.mxu0 %v4168
        %5287 = vmatprep.subr.bf16.mxu0 %v4158
        %5288 = vmatpush1.bf16.msra.mxu0 %v4157
        %5289 = vmatprep.subr.bf16.mxu0 %v4323
        %5290 = vmatpush2.bf16.msra.mxu0 %v4322
        %5291 = vmatprep.subr.bf16.mxu0 %v4312
        %5292 = vmatpush2.bf16.msra.mxu0 %v4311
        %5293 = vmatprep.subr.bf16.mxu0 %v4301
        %5294 = vmatpush2.bf16.msra.mxu0 %v4300
        %5295 = vmatprep.subr.bf16.mxu0 %v4290
        %5296 = vmatpush2.bf16.msra.mxu0 %v4289
        %5297 = vmatprep.subr.bf16.mxu0 %v4279
        %5298 = vmatpush2.bf16.msra.mxu0 %v4278
        %5299 = vmatprep.subr.bf16.mxu0 %v4268
        %5300 = vmatpush2.bf16.msra.mxu0 %v4267
        %5301 = vmatprep.subr.bf16.mxu0 %v4257
        %5302 = vmatpush2.bf16.msra.mxu0 %v4256
        %5303 = vmatprep.subr.bf16.mxu0 %v4246
        %5304 = vmatpush2.bf16.msra.mxu0 %v4245
        %5305 = vmatprep.mubr.bf16.mxu0 %v3542
        %5306 = vmatmul.mubr.bf16.gmra.mxu0 %v3541
        %v5307 = vpop.f32.mrf.mxu0
        %v5308 = vadd.f32 %v3425, %v5307
        %v5309 = vpop.f32.mrf.mxu0
        %v5310 = vadd.f32 %v3429, %v5309
        %v5311 = vpop.f32.mrf.mxu0
        %v5312 = vadd.f32 %v3425, %v5311
        %v5313 = vpop.f32.mrf.mxu0
        %v5314 = vadd.f32 %v3429, %v5313
        %5315 = vmatprep.mubr.bf16.mxu0 %v3544
        %5316 = vmatmul.mubr.bf16.gmra.mxu0 %v3543
        %v5317 = vpop.f32.mrf.mxu0
        %v5318 = vadd.f32 %v3425, %v5317
        %v5319 = vpop.f32.mrf.mxu0
        %v5320 = vadd.f32 %v3429, %v5319
        %v5321 = vpop.f32.mrf.mxu0
        %v5322 = vadd.f32 %v3425, %v5321
        %v5323 = vpop.f32.mrf.mxu0
        %v5324 = vadd.f32 %v3429, %v5323
        %5325 = vmatprep.mubr.bf16.mxu0 %v3546
        %5326 = vmatmul.mubr.bf16.gmra.mxu0 %v3545
        %v5327 = vpop.f32.mrf.mxu0
        %v5328 = vadd.f32 %v3425, %v5327
        %v5329 = vpop.f32.mrf.mxu0
        %v5330 = vadd.f32 %v3429, %v5329
        %v5331 = vpop.f32.mrf.mxu0
        %v5332 = vadd.f32 %v3425, %v5331
        %v5333 = vpop.f32.mrf.mxu0
        %v5334 = vadd.f32 %v3429, %v5333
        %5335 = vmatprep.mubr.bf16.mxu0 %v3548
        %5336 = vmatmul.mubr.bf16.gmra.mxu0 %v3547
        %v5337 = vpop.f32.mrf.mxu0
        %v5338 = vadd.f32 %v3425, %v5337
        %v5339 = vpop.f32.mrf.mxu0
        %v5340 = vadd.f32 %v3429, %v5339
        %v5341 = vpop.f32.mrf.mxu0
        %v5342 = vadd.f32 %v3425, %v5341
        %v5343 = vpop.f32.mrf.mxu0
        %v5344 = vadd.f32 %v3429, %v5343
        %5345 = vmatprep.mubr.bf16.mxu0 %v3550
        %5346 = vmatmul.mubr.bf16.gmra.mxu0 %v3549
        %v5347 = vpop.f32.mrf.mxu0
        %v5348 = vadd.f32 %v3425, %v5347
        %v5349 = vpop.f32.mrf.mxu0
        %v5350 = vadd.f32 %v3429, %v5349
        %v5351 = vpop.f32.mrf.mxu0
        %v5352 = vadd.f32 %v3425, %v5351
        %v5353 = vpop.f32.mrf.mxu0
        %v5354 = vadd.f32 %v3429, %v5353
        %5355 = vmatprep.mubr.bf16.mxu0 %v3552
        %5356 = vmatmul.mubr.bf16.gmra.mxu0 %v3551
        %v5357 = vpop.f32.mrf.mxu0
        %v5358 = vadd.f32 %v3425, %v5357
        %v5359 = vpop.f32.mrf.mxu0
        %v5360 = vadd.f32 %v3429, %v5359
        %v5361 = vpop.f32.mrf.mxu0
        %v5362 = vadd.f32 %v3425, %v5361
        %v5363 = vpop.f32.mrf.mxu0
        %v5364 = vadd.f32 %v3429, %v5363
        %5365 = vmatprep.mubr.bf16.mxu0 %v3554
        %5366 = vmatmul.mubr.bf16.gmra.mxu0 %v3553
        %v5367 = vpop.f32.mrf.mxu0
        %v5368 = vadd.f32 %v3425, %v5367
        %v5369 = vpop.f32.mrf.mxu0
        %v5370 = vadd.f32 %v3429, %v5369
        %v5371 = vpop.f32.mrf.mxu0
        %v5372 = vadd.f32 %v3425, %v5371
        %v5373 = vpop.f32.mrf.mxu0
        %v5374 = vadd.f32 %v3429, %v5373
        %5375 = vmatprep.mubr.bf16.mxu0 %v3556
        %5376 = vmatmul.mubr.bf16.gmra.mxu0 %v3555
        %v5377 = vpop.f32.mrf.mxu0
        %v5378 = vadd.f32 %v3425, %v5377
        %v5379 = vpop.f32.mrf.mxu0
        %v5380 = vadd.f32 %v3429, %v5379
        %v5381 = vpop.f32.mrf.mxu0
        %v5382 = vadd.f32 %v3425, %v5381
        %v5383 = vpop.f32.mrf.mxu0
        %v5384 = vadd.f32 %v3429, %v5383
        %5385 = vmatprep.mubr.bf16.mxu0 %v3558
        %5386 = vmatmul.mubr.bf16.gmra.mxu0 %v3557
        %v5387 = vpop.f32.mrf.mxu0
        %v5388 = vadd.f32 %v3425, %v5387
        %v5389 = vpop.f32.mrf.mxu0
        %v5390 = vadd.f32 %v3429, %v5389
        %v5391 = vpop.f32.mrf.mxu0
        %v5392 = vadd.f32 %v3425, %v5391
        %v5393 = vpop.f32.mrf.mxu0
        %v5394 = vadd.f32 %v3429, %v5393
        %5395 = vmatprep.mubr.bf16.mxu0 %v3560
        %5396 = vmatmul.mubr.bf16.gmra.mxu0 %v3559
        %v5397 = vpop.f32.mrf.mxu0
        %v5398 = vadd.f32 %v3425, %v5397
        %v5399 = vpop.f32.mrf.mxu0
        %v5400 = vadd.f32 %v3429, %v5399
        %v5401 = vpop.f32.mrf.mxu0
        %v5402 = vadd.f32 %v3425, %v5401
        %v5403 = vpop.f32.mrf.mxu0
        %v5404 = vadd.f32 %v3429, %v5403
        %5405 = vmatprep.mubr.bf16.mxu0 %v3562
        %5406 = vmatmul.mubr.bf16.gmra.mxu0 %v3561
        %v5407 = vpop.f32.mrf.mxu0
        %v5408 = vadd.f32 %v3425, %v5407
        %v5409 = vpop.f32.mrf.mxu0
        %v5410 = vadd.f32 %v3429, %v5409
        %v5411 = vpop.f32.mrf.mxu0
        %v5412 = vadd.f32 %v3425, %v5411
        %v5413 = vpop.f32.mrf.mxu0
        %v5414 = vadd.f32 %v3429, %v5413
        %5415 = vmatprep.mubr.bf16.mxu0 %v3564
        %5416 = vmatmul.mubr.bf16.gmra.mxu0 %v3563
        %v5417 = vpop.f32.mrf.mxu0
        %v5418 = vadd.f32 %v3425, %v5417
        %v5419 = vpop.f32.mrf.mxu0
        %v5420 = vadd.f32 %v3429, %v5419
        %v5421 = vpop.f32.mrf.mxu0
        %v5422 = vadd.f32 %v3425, %v5421
        %v5423 = vpop.f32.mrf.mxu0
        %v5424 = vadd.f32 %v3429, %v5423
        %5425 = vmatprep.mubr.bf16.mxu0 %v3566
        %5426 = vmatmul.mubr.bf16.gmra.mxu0 %v3565
        %v5427 = vpop.f32.mrf.mxu0
        %v5428 = vadd.f32 %v3425, %v5427
        %v5429 = vpop.f32.mrf.mxu0
        %v5430 = vadd.f32 %v3429, %v5429
        %v5431 = vpop.f32.mrf.mxu0
        %v5432 = vadd.f32 %v3425, %v5431
        %v5433 = vpop.f32.mrf.mxu0
        %v5434 = vadd.f32 %v3429, %v5433
        %5435 = vmatprep.mubr.bf16.mxu0 %v3568
        %5436 = vmatmul.mubr.bf16.gmra.mxu0 %v3567
        %v5437 = vpop.f32.mrf.mxu0
        %v5438 = vadd.f32 %v3425, %v5437
        %v5439 = vpop.f32.mrf.mxu0
        %v5440 = vadd.f32 %v3429, %v5439
        %v5441 = vpop.f32.mrf.mxu0
        %v5442 = vadd.f32 %v3425, %v5441
        %v5443 = vpop.f32.mrf.mxu0
        %v5444 = vadd.f32 %v3429, %v5443
        %5445 = vmatprep.mubr.bf16.mxu0 %v3570
        %5446 = vmatmul.mubr.bf16.gmra.mxu0 %v3569
        %v5447 = vpop.f32.mrf.mxu0
        %v5448 = vadd.f32 %v3425, %v5447
        %v5449 = vpop.f32.mrf.mxu0
        %v5450 = vadd.f32 %v3429, %v5449
        %v5451 = vpop.f32.mrf.mxu0
        %v5452 = vadd.f32 %v3425, %v5451
        %v5453 = vpop.f32.mrf.mxu0
        %v5454 = vadd.f32 %v3429, %v5453
        %5455 = vmatprep.mubr.bf16.mxu0 %v3572
        %5456 = vmatmul.mubr.bf16.gmra.mxu0 %v3571
        %v5457 = vpop.f32.mrf.mxu0
        %v5458 = vadd.f32 %v3425, %v5457
        %v5459 = vpop.f32.mrf.mxu0
        %v5460 = vadd.f32 %v3429, %v5459
        %v5461 = vpop.f32.mrf.mxu0
        %v5462 = vadd.f32 %v3425, %v5461
        %v5463 = vpop.f32.mrf.mxu0
        %v5464 = vadd.f32 %v3429, %v5463
        %5465 = vdwg.mxu0
        %5466 = vmatprep.subr.bf16.mxu0 0
        %5467 = vmatpush1.bf16.msra.mxu0 %v4236
        %5468 = vmatprep.subr.bf16.mxu0 0
        %5469 = vmatpush1.bf16.msra.mxu0 %v4225
        %5470 = vmatprep.subr.bf16.mxu0 0
        %5471 = vmatpush1.bf16.msra.mxu0 %v4214
        %5472 = vmatprep.subr.bf16.mxu0 0
        %5473 = vmatpush1.bf16.msra.mxu0 %v4203
        %5474 = vmatprep.subr.bf16.mxu0 0
        %5475 = vmatpush1.bf16.msra.mxu0 %v4192
        %5476 = vmatprep.subr.bf16.mxu0 0
        %5477 = vmatpush1.bf16.msra.mxu0 %v4181
        %5478 = vmatprep.subr.bf16.mxu0 0
        %5479 = vmatpush1.bf16.msra.mxu0 %v4170
        %5480 = vmatprep.subr.bf16.mxu0 0
        %5481 = vmatpush1.bf16.msra.mxu0 %v4159
        %5482 = vmatprep.subr.bf16.mxu0 0
        %5483 = vmatpush2.bf16.msra.mxu0 %v4324
        %5484 = vmatprep.subr.bf16.mxu0 0
        %5485 = vmatpush2.bf16.msra.mxu0 %v4313
        %5486 = vmatprep.subr.bf16.mxu0 0
        %5487 = vmatpush2.bf16.msra.mxu0 %v4302
        %5488 = vmatprep.subr.bf16.mxu0 0
        %5489 = vmatpush2.bf16.msra.mxu0 %v4291
        %5490 = vmatprep.subr.bf16.mxu0 0
        %5491 = vmatpush2.bf16.msra.mxu0 %v4280
        %5492 = vmatprep.subr.bf16.mxu0 0
        %5493 = vmatpush2.bf16.msra.mxu0 %v4269
        %5494 = vmatprep.subr.bf16.mxu0 0
        %5495 = vmatpush2.bf16.msra.mxu0 %v4258
        %5496 = vmatprep.subr.bf16.mxu0 0
        %5497 = vmatpush2.bf16.msra.mxu0 %v4247
        %5498 = vmatprep.mubr.bf16.mxu0 %v3542
        %5499 = vmatmul.mubr.bf16.gmra.mxu0 %v3541
        %v5500 = vpop.f32.mrf.mxu0
        %v5501 = vadd.f32 %v3433, %v5500
        %v5502 = vpop.f32.mrf.mxu0
        %v5503 = vpop.f32.mrf.mxu0
        %v5504 = vadd.f32 %v3433, %v5503
        %v5505 = vpop.f32.mrf.mxu0
        %5506 = vmatprep.mubr.bf16.mxu0 %v3544
        %5507 = vmatmul.mubr.bf16.gmra.mxu0 %v3543
        %v5508 = vpop.f32.mrf.mxu0
        %v5509 = vadd.f32 %v3433, %v5508
        %v5510 = vpop.f32.mrf.mxu0
        %v5511 = vpop.f32.mrf.mxu0
        %v5512 = vadd.f32 %v3433, %v5511
        %v5513 = vpop.f32.mrf.mxu0
        %5514 = vmatprep.mubr.bf16.mxu0 %v3546
        %5515 = vmatmul.mubr.bf16.gmra.mxu0 %v3545
        %v5516 = vpop.f32.mrf.mxu0
        %v5517 = vadd.f32 %v3433, %v5516
        %v5518 = vpop.f32.mrf.mxu0
        %v5519 = vpop.f32.mrf.mxu0
        %v5520 = vadd.f32 %v3433, %v5519
        %v5521 = vpop.f32.mrf.mxu0
        %5522 = vmatprep.mubr.bf16.mxu0 %v3548
        %5523 = vmatmul.mubr.bf16.gmra.mxu0 %v3547
        %v5524 = vpop.f32.mrf.mxu0
        %v5525 = vadd.f32 %v3433, %v5524
        %v5526 = vpop.f32.mrf.mxu0
        %v5527 = vpop.f32.mrf.mxu0
        %v5528 = vadd.f32 %v3433, %v5527
        %v5529 = vpop.f32.mrf.mxu0
        %5530 = vmatprep.mubr.bf16.mxu0 %v3550
        %5531 = vmatmul.mubr.bf16.gmra.mxu0 %v3549
        %v5532 = vpop.f32.mrf.mxu0
        %v5533 = vadd.f32 %v3433, %v5532
        %v5534 = vpop.f32.mrf.mxu0
        %v5535 = vpop.f32.mrf.mxu0
        %v5536 = vadd.f32 %v3433, %v5535
        %v5537 = vpop.f32.mrf.mxu0
        %5538 = vmatprep.mubr.bf16.mxu0 %v3552
        %5539 = vmatmul.mubr.bf16.gmra.mxu0 %v3551
        %v5540 = vpop.f32.mrf.mxu0
        %v5541 = vadd.f32 %v3433, %v5540
        %v5542 = vpop.f32.mrf.mxu0
        %v5543 = vpop.f32.mrf.mxu0
        %v5544 = vadd.f32 %v3433, %v5543
        %v5545 = vpop.f32.mrf.mxu0
        %5546 = vmatprep.mubr.bf16.mxu0 %v3554
        %5547 = vmatmul.mubr.bf16.gmra.mxu0 %v3553
        %v5548 = vpop.f32.mrf.mxu0
        %v5549 = vadd.f32 %v3433, %v5548
        %v5550 = vpop.f32.mrf.mxu0
        %v5551 = vpop.f32.mrf.mxu0
        %v5552 = vadd.f32 %v3433, %v5551
        %v5553 = vpop.f32.mrf.mxu0
        %5554 = vmatprep.mubr.bf16.mxu0 %v3556
        %5555 = vmatmul.mubr.bf16.gmra.mxu0 %v3555
        %v5556 = vpop.f32.mrf.mxu0
        %v5557 = vadd.f32 %v3433, %v5556
        %v5558 = vpop.f32.mrf.mxu0
        %v5559 = vpop.f32.mrf.mxu0
        %v5560 = vadd.f32 %v3433, %v5559
        %v5561 = vpop.f32.mrf.mxu0
        %5562 = vmatprep.mubr.bf16.mxu0 %v3558
        %5563 = vmatmul.mubr.bf16.gmra.mxu0 %v3557
        %v5564 = vpop.f32.mrf.mxu0
        %v5565 = vadd.f32 %v3433, %v5564
        %v5566 = vpop.f32.mrf.mxu0
        %v5567 = vpop.f32.mrf.mxu0
        %v5568 = vadd.f32 %v3433, %v5567
        %v5569 = vpop.f32.mrf.mxu0
        %5570 = vmatprep.mubr.bf16.mxu0 %v3560
        %5571 = vmatmul.mubr.bf16.gmra.mxu0 %v3559
        %v5572 = vpop.f32.mrf.mxu0
        %v5573 = vadd.f32 %v3433, %v5572
        %v5574 = vpop.f32.mrf.mxu0
        %v5575 = vpop.f32.mrf.mxu0
        %v5576 = vadd.f32 %v3433, %v5575
        %v5577 = vpop.f32.mrf.mxu0
        %5578 = vmatprep.mubr.bf16.mxu0 %v3562
        %5579 = vmatmul.mubr.bf16.gmra.mxu0 %v3561
        %v5580 = vpop.f32.mrf.mxu0
        %v5581 = vadd.f32 %v3433, %v5580
        %v5582 = vpop.f32.mrf.mxu0
        %v5583 = vpop.f32.mrf.mxu0
        %v5584 = vadd.f32 %v3433, %v5583
        %v5585 = vpop.f32.mrf.mxu0
        %5586 = vmatprep.mubr.bf16.mxu0 %v3564
        %5587 = vmatmul.mubr.bf16.gmra.mxu0 %v3563
        %v5588 = vpop.f32.mrf.mxu0
        %v5589 = vadd.f32 %v3433, %v5588
        %v5590 = vpop.f32.mrf.mxu0
        %v5591 = vpop.f32.mrf.mxu0
        %v5592 = vadd.f32 %v3433, %v5591
        %v5593 = vpop.f32.mrf.mxu0
        %5594 = vmatprep.mubr.bf16.mxu0 %v3566
        %5595 = vmatmul.mubr.bf16.gmra.mxu0 %v3565
        %v5596 = vpop.f32.mrf.mxu0
        %v5597 = vadd.f32 %v3433, %v5596
        %v5598 = vpop.f32.mrf.mxu0
        %v5599 = vpop.f32.mrf.mxu0
        %v5600 = vadd.f32 %v3433, %v5599
        %v5601 = vpop.f32.mrf.mxu0
        %5602 = vmatprep.mubr.bf16.mxu0 %v3568
        %5603 = vmatmul.mubr.bf16.gmra.mxu0 %v3567
        %v5604 = vpop.f32.mrf.mxu0
        %v5605 = vadd.f32 %v3433, %v5604
        %v5606 = vpop.f32.mrf.mxu0
        %v5607 = vpop.f32.mrf.mxu0
        %v5608 = vadd.f32 %v3433, %v5607
        %v5609 = vpop.f32.mrf.mxu0
        %5610 = vmatprep.mubr.bf16.mxu0 %v3570
        %5611 = vmatmul.mubr.bf16.gmra.mxu0 %v3569
        %v5612 = vpop.f32.mrf.mxu0
        %v5613 = vadd.f32 %v3433, %v5612
        %v5614 = vpop.f32.mrf.mxu0
        %v5615 = vpop.f32.mrf.mxu0
        %v5616 = vadd.f32 %v3433, %v5615
        %v5617 = vpop.f32.mrf.mxu0
        %5618 = vmatprep.mubr.bf16.mxu0 %v3572
        %5619 = vmatmul.mubr.bf16.gmra.mxu0 %v3571
        %v5620 = vpop.f32.mrf.mxu0
        %v5621 = vadd.f32 %v3433, %v5620
        %v5622 = vpop.f32.mrf.mxu0
        %v5623 = vpop.f32.mrf.mxu0
        %v5624 = vadd.f32 %v3433, %v5623
        %v5625 = vpop.f32.mrf.mxu0
        %5626 = vdwg.mxu0
        %v5627 = vmax.f32 %v4536, 0.0
        %v5628 = vmax.f32 %v4538, 0.0
        %v5629 = vmax.f32 %v4729, 0.0
        %v5630 = vmax.f32 %v4731, 0.0
        %v5631 = vmax.f32 %v4922, 0.0
        %v5632 = vmax.f32 %v4924, 0.0
        %v5633 = vmax.f32 %v5115, 0.0
        %v5634 = vmax.f32 %v5117, 0.0
        %v5635 = vmax.f32 %v5308, 0.0
        %v5636 = vmax.f32 %v5310, 0.0
        %v5637 = vmax.f32 %v5501, 0.0
        %v5638 = vmax.f32 %v4540, 0.0
        %v5639 = vmax.f32 %v4542, 0.0
        %v5640 = vmax.f32 %v4733, 0.0
        %v5641 = vmax.f32 %v4735, 0.0
        %v5642 = vmax.f32 %v4926, 0.0
        %v5643 = vmax.f32 %v4928, 0.0
        %v5644 = vmax.f32 %v5119, 0.0
        %v5645 = vmax.f32 %v5121, 0.0
        %v5646 = vmax.f32 %v5312, 0.0
        %v5647 = vmax.f32 %v5314, 0.0
        %v5648 = vmax.f32 %v5504, 0.0
        %v5649 = vmax.f32 %v4546, 0.0
        %v5650 = vmax.f32 %v4548, 0.0
        %v5651 = vmax.f32 %v4739, 0.0
        %v5652 = vmax.f32 %v4741, 0.0
        %v5653 = vmax.f32 %v4932, 0.0
        %v5654 = vmax.f32 %v4934, 0.0
        %v5655 = vmax.f32 %v5125, 0.0
        %v5656 = vmax.f32 %v5127, 0.0
        %v5657 = vmax.f32 %v5318, 0.0
        %v5658 = vmax.f32 %v5320, 0.0
        %v5659 = vmax.f32 %v5509, 0.0
        %v5660 = vmax.f32 %v4550, 0.0
        %v5661 = vmax.f32 %v4552, 0.0
        %v5662 = vmax.f32 %v4743, 0.0
        %v5663 = vmax.f32 %v4745, 0.0
        %v5664 = vmax.f32 %v4936, 0.0
        %v5665 = vmax.f32 %v4938, 0.0
        %v5666 = vmax.f32 %v5129, 0.0
        %v5667 = vmax.f32 %v5131, 0.0
        %v5668 = vmax.f32 %v5322, 0.0
        %v5669 = vmax.f32 %v5324, 0.0
        %v5670 = vmax.f32 %v5512, 0.0
        %v5671 = vmax.f32 %v4556, 0.0
        %v5672 = vmax.f32 %v4558, 0.0
        %v5673 = vmax.f32 %v4749, 0.0
        %v5674 = vmax.f32 %v4751, 0.0
        %v5675 = vmax.f32 %v4942, 0.0
        %v5676 = vmax.f32 %v4944, 0.0
        %v5677 = vmax.f32 %v5135, 0.0
        %v5678 = vmax.f32 %v5137, 0.0
        %v5679 = vmax.f32 %v5328, 0.0
        %v5680 = vmax.f32 %v5330, 0.0
        %v5681 = vmax.f32 %v5517, 0.0
        %v5682 = vmax.f32 %v4560, 0.0
        %v5683 = vmax.f32 %v4562, 0.0
        %v5684 = vmax.f32 %v4753, 0.0
        %v5685 = vmax.f32 %v4755, 0.0
        %v5686 = vmax.f32 %v4946, 0.0
        %v5687 = vmax.f32 %v4948, 0.0
        %v5688 = vmax.f32 %v5139, 0.0
        %v5689 = vmax.f32 %v5141, 0.0
        %v5690 = vmax.f32 %v5332, 0.0
        %v5691 = vmax.f32 %v5334, 0.0
        %v5692 = vmax.f32 %v5520, 0.0
        %v5693 = vmax.f32 %v4566, 0.0
        %v5694 = vmax.f32 %v4568, 0.0
        %v5695 = vmax.f32 %v4759, 0.0
        %v5696 = vmax.f32 %v4761, 0.0
        %v5697 = vmax.f32 %v4952, 0.0
        %v5698 = vmax.f32 %v4954, 0.0
        %v5699 = vmax.f32 %v5145, 0.0
        %v5700 = vmax.f32 %v5147, 0.0
        %v5701 = vmax.f32 %v5338, 0.0
        %v5702 = vmax.f32 %v5340, 0.0
        %v5703 = vmax.f32 %v5525, 0.0
        %v5704 = vmax.f32 %v4570, 0.0
        %v5705 = vmax.f32 %v4572, 0.0
        %v5706 = vmax.f32 %v4763, 0.0
        %v5707 = vmax.f32 %v4765, 0.0
        %v5708 = vmax.f32 %v4956, 0.0
        %v5709 = vmax.f32 %v4958, 0.0
        %v5710 = vmax.f32 %v5149, 0.0
        %v5711 = vmax.f32 %v5151, 0.0
        %v5712 = vmax.f32 %v5342, 0.0
        %v5713 = vmax.f32 %v5344, 0.0
        %v5714 = vmax.f32 %v5528, 0.0
        %v5715 = vmax.f32 %v4576, 0.0
        %v5716 = vmax.f32 %v4578, 0.0
        %v5717 = vmax.f32 %v4769, 0.0
        %v5718 = vmax.f32 %v4771, 0.0
        %v5719 = vmax.f32 %v4962, 0.0
        %v5720 = vmax.f32 %v4964, 0.0
        %v5721 = vmax.f32 %v5155, 0.0
        %v5722 = vmax.f32 %v5157, 0.0
        %v5723 = vmax.f32 %v5348, 0.0
        %v5724 = vmax.f32 %v5350, 0.0
        %v5725 = vmax.f32 %v5533, 0.0
        %v5726 = vmax.f32 %v4580, 0.0
        %v5727 = vmax.f32 %v4582, 0.0
        %v5728 = vmax.f32 %v4773, 0.0
        %v5729 = vmax.f32 %v4775, 0.0
        %v5730 = vmax.f32 %v4966, 0.0
        %v5731 = vmax.f32 %v4968, 0.0
        %v5732 = vmax.f32 %v5159, 0.0
        %v5733 = vmax.f32 %v5161, 0.0
        %v5734 = vmax.f32 %v5352, 0.0
        %v5735 = vmax.f32 %v5354, 0.0
        %v5736 = vmax.f32 %v5536, 0.0
        %v5737 = vmax.f32 %v4586, 0.0
        %v5738 = vmax.f32 %v4588, 0.0
        %v5739 = vmax.f32 %v4779, 0.0
        %v5740 = vmax.f32 %v4781, 0.0
        %v5741 = vmax.f32 %v4972, 0.0
        %v5742 = vmax.f32 %v4974, 0.0
        %v5743 = vmax.f32 %v5165, 0.0
        %v5744 = vmax.f32 %v5167, 0.0
        %v5745 = vmax.f32 %v5358, 0.0
        %v5746 = vmax.f32 %v5360, 0.0
        %v5747 = vmax.f32 %v5541, 0.0
        %v5748 = vmax.f32 %v4590, 0.0
        %v5749 = vmax.f32 %v4592, 0.0
        %v5750 = vmax.f32 %v4783, 0.0
        %v5751 = vmax.f32 %v4785, 0.0
        %v5752 = vmax.f32 %v4976, 0.0
        %v5753 = vmax.f32 %v4978, 0.0
        %v5754 = vmax.f32 %v5169, 0.0
        %v5755 = vmax.f32 %v5171, 0.0
        %v5756 = vmax.f32 %v5362, 0.0
        %v5757 = vmax.f32 %v5364, 0.0
        %v5758 = vmax.f32 %v5544, 0.0
        %v5759 = vmax.f32 %v4596, 0.0
        %v5760 = vmax.f32 %v4598, 0.0
        %v5761 = vmax.f32 %v4789, 0.0
        %v5762 = vmax.f32 %v4791, 0.0
        %v5763 = vmax.f32 %v4982, 0.0
        %v5764 = vmax.f32 %v4984, 0.0
        %v5765 = vmax.f32 %v5175, 0.0
        %v5766 = vmax.f32 %v5177, 0.0
        %v5767 = vmax.f32 %v5368, 0.0
        %v5768 = vmax.f32 %v5370, 0.0
        %v5769 = vmax.f32 %v5549, 0.0
        %v5770 = vmax.f32 %v4600, 0.0
        %v5771 = vmax.f32 %v4602, 0.0
        %v5772 = vmax.f32 %v4793, 0.0
        %v5773 = vmax.f32 %v4795, 0.0
        %v5774 = vmax.f32 %v4986, 0.0
        %v5775 = vmax.f32 %v4988, 0.0
        %v5776 = vmax.f32 %v5179, 0.0
        %v5777 = vmax.f32 %v5181, 0.0
        %v5778 = vmax.f32 %v5372, 0.0
        %v5779 = vmax.f32 %v5374, 0.0
        %v5780 = vmax.f32 %v5552, 0.0
        %v5781 = vmax.f32 %v4606, 0.0
        %v5782 = vmax.f32 %v4608, 0.0
        %v5783 = vmax.f32 %v4799, 0.0
        %v5784 = vmax.f32 %v4801, 0.0
        %v5785 = vmax.f32 %v4992, 0.0
        %v5786 = vmax.f32 %v4994, 0.0
        %v5787 = vmax.f32 %v5185, 0.0
        %v5788 = vmax.f32 %v5187, 0.0
        %v5789 = vmax.f32 %v5378, 0.0
        %v5790 = vmax.f32 %v5380, 0.0
        %v5791 = vmax.f32 %v5557, 0.0
        %v5792 = vmax.f32 %v4610, 0.0
        %v5793 = vmax.f32 %v4612, 0.0
        %v5794 = vmax.f32 %v4803, 0.0
        %v5795 = vmax.f32 %v4805, 0.0
        %v5796 = vmax.f32 %v4996, 0.0
        %v5797 = vmax.f32 %v4998, 0.0
        %v5798 = vmax.f32 %v5189, 0.0
        %v5799 = vmax.f32 %v5191, 0.0
        %v5800 = vmax.f32 %v5382, 0.0
        %v5801 = vmax.f32 %v5384, 0.0
        %v5802 = vmax.f32 %v5560, 0.0
        %v5803 = vmax.f32 %v4616, 0.0
        %v5804 = vmax.f32 %v4618, 0.0
        %v5805 = vmax.f32 %v4809, 0.0
        %v5806 = vmax.f32 %v4811, 0.0
        %v5807 = vmax.f32 %v5002, 0.0
        %v5808 = vmax.f32 %v5004, 0.0
        %v5809 = vmax.f32 %v5195, 0.0
        %v5810 = vmax.f32 %v5197, 0.0
        %v5811 = vmax.f32 %v5388, 0.0
        %v5812 = vmax.f32 %v5390, 0.0
        %v5813 = vmax.f32 %v5565, 0.0
        %v5814 = vmax.f32 %v4620, 0.0
        %v5815 = vmax.f32 %v4622, 0.0
        %v5816 = vmax.f32 %v4813, 0.0
        %v5817 = vmax.f32 %v4815, 0.0
        %v5818 = vmax.f32 %v5006, 0.0
        %v5819 = vmax.f32 %v5008, 0.0
        %v5820 = vmax.f32 %v5199, 0.0
        %v5821 = vmax.f32 %v5201, 0.0
        %v5822 = vmax.f32 %v5392, 0.0
        %v5823 = vmax.f32 %v5394, 0.0
        %v5824 = vmax.f32 %v5568, 0.0
        %v5825 = vmax.f32 %v4626, 0.0
        %v5826 = vmax.f32 %v4628, 0.0
        %v5827 = vmax.f32 %v4819, 0.0
        %v5828 = vmax.f32 %v4821, 0.0
        %v5829 = vmax.f32 %v5012, 0.0
        %v5830 = vmax.f32 %v5014, 0.0
        %v5831 = vmax.f32 %v5205, 0.0
        %v5832 = vmax.f32 %v5207, 0.0
        %v5833 = vmax.f32 %v5398, 0.0
        %v5834 = vmax.f32 %v5400, 0.0
        %v5835 = vmax.f32 %v5573, 0.0
        %v5836 = vmax.f32 %v4630, 0.0
        %v5837 = vmax.f32 %v4632, 0.0
        %v5838 = vmax.f32 %v4823, 0.0
        %v5839 = vmax.f32 %v4825, 0.0
        %v5840 = vmax.f32 %v5016, 0.0
        %v5841 = vmax.f32 %v5018, 0.0
        %v5842 = vmax.f32 %v5209, 0.0
        %v5843 = vmax.f32 %v5211, 0.0
        %v5844 = vmax.f32 %v5402, 0.0
        %v5845 = vmax.f32 %v5404, 0.0
        %v5846 = vmax.f32 %v5576, 0.0
        %v5847 = vmax.f32 %v4636, 0.0
        %v5848 = vmax.f32 %v4638, 0.0
        %v5849 = vmax.f32 %v4829, 0.0
        %v5850 = vmax.f32 %v4831, 0.0
        %v5851 = vmax.f32 %v5022, 0.0
        %v5852 = vmax.f32 %v5024, 0.0
        %v5853 = vmax.f32 %v5215, 0.0
        %v5854 = vmax.f32 %v5217, 0.0
        %v5855 = vmax.f32 %v5408, 0.0
        %v5856 = vmax.f32 %v5410, 0.0
        %v5857 = vmax.f32 %v5581, 0.0
        %v5858 = vmax.f32 %v4640, 0.0
        %v5859 = vmax.f32 %v4642, 0.0
        %v5860 = vmax.f32 %v4833, 0.0
        %v5861 = vmax.f32 %v4835, 0.0
        %v5862 = vmax.f32 %v5026, 0.0
        %v5863 = vmax.f32 %v5028, 0.0
        %v5864 = vmax.f32 %v5219, 0.0
        %v5865 = vmax.f32 %v5221, 0.0
        %v5866 = vmax.f32 %v5412, 0.0
        %v5867 = vmax.f32 %v5414, 0.0
        %v5868 = vmax.f32 %v5584, 0.0
        %v5869 = vmax.f32 %v4646, 0.0
        %v5870 = vmax.f32 %v4648, 0.0
        %v5871 = vmax.f32 %v4839, 0.0
        %v5872 = vmax.f32 %v4841, 0.0
        %v5873 = vmax.f32 %v5032, 0.0
        %v5874 = vmax.f32 %v5034, 0.0
        %v5875 = vmax.f32 %v5225, 0.0
        %v5876 = vmax.f32 %v5227, 0.0
        %v5877 = vmax.f32 %v5418, 0.0
        %v5878 = vmax.f32 %v5420, 0.0
        %v5879 = vmax.f32 %v5589, 0.0
        %v5880 = vmax.f32 %v4650, 0.0
        %v5881 = vmax.f32 %v4652, 0.0
        %v5882 = vmax.f32 %v4843, 0.0
        %v5883 = vmax.f32 %v4845, 0.0
        %v5884 = vmax.f32 %v5036, 0.0
        %v5885 = vmax.f32 %v5038, 0.0
        %v5886 = vmax.f32 %v5229, 0.0
        %v5887 = vmax.f32 %v5231, 0.0
        %v5888 = vmax.f32 %v5422, 0.0
        %v5889 = vmax.f32 %v5424, 0.0
        %v5890 = vmax.f32 %v5592, 0.0
        %v5891 = vmax.f32 %v4656, 0.0
        %v5892 = vmax.f32 %v4658, 0.0
        %v5893 = vmax.f32 %v4849, 0.0
        %v5894 = vmax.f32 %v4851, 0.0
        %v5895 = vmax.f32 %v5042, 0.0
        %v5896 = vmax.f32 %v5044, 0.0
        %v5897 = vmax.f32 %v5235, 0.0
        %v5898 = vmax.f32 %v5237, 0.0
        %v5899 = vmax.f32 %v5428, 0.0
        %v5900 = vmax.f32 %v5430, 0.0
        %v5901 = vmax.f32 %v5597, 0.0
        %v5902 = vmax.f32 %v4660, 0.0
        %v5903 = vmax.f32 %v4662, 0.0
        %v5904 = vmax.f32 %v4853, 0.0
        %v5905 = vmax.f32 %v4855, 0.0
        %v5906 = vmax.f32 %v5046, 0.0
        %v5907 = vmax.f32 %v5048, 0.0
        %v5908 = vmax.f32 %v5239, 0.0
        %v5909 = vmax.f32 %v5241, 0.0
        %v5910 = vmax.f32 %v5432, 0.0
        %v5911 = vmax.f32 %v5434, 0.0
        %v5912 = vmax.f32 %v5600, 0.0
        %v5913 = vmax.f32 %v4666, 0.0
        %v5914 = vmax.f32 %v4668, 0.0
        %v5915 = vmax.f32 %v4859, 0.0
        %v5916 = vmax.f32 %v4861, 0.0
        %v5917 = vmax.f32 %v5052, 0.0
        %v5918 = vmax.f32 %v5054, 0.0
        %v5919 = vmax.f32 %v5245, 0.0
        %v5920 = vmax.f32 %v5247, 0.0
        %v5921 = vmax.f32 %v5438, 0.0
        %v5922 = vmax.f32 %v5440, 0.0
        %v5923 = vmax.f32 %v5605, 0.0
        %v5924 = vmax.f32 %v4670, 0.0
        %v5925 = vmax.f32 %v4672, 0.0
        %v5926 = vmax.f32 %v4863, 0.0
        %v5927 = vmax.f32 %v4865, 0.0
        %v5928 = vmax.f32 %v5056, 0.0
        %v5929 = vmax.f32 %v5058, 0.0
        %v5930 = vmax.f32 %v5249, 0.0
        %v5931 = vmax.f32 %v5251, 0.0
        %v5932 = vmax.f32 %v5442, 0.0
        %v5933 = vmax.f32 %v5444, 0.0
        %v5934 = vmax.f32 %v5608, 0.0
        %v5935 = vmax.f32 %v4676, 0.0
        %v5936 = vmax.f32 %v4678, 0.0
        %v5937 = vmax.f32 %v4869, 0.0
        %v5938 = vmax.f32 %v4871, 0.0
        %v5939 = vmax.f32 %v5062, 0.0
        %v5940 = vmax.f32 %v5064, 0.0
        %v5941 = vmax.f32 %v5255, 0.0
        %v5942 = vmax.f32 %v5257, 0.0
        %v5943 = vmax.f32 %v5448, 0.0
        %v5944 = vmax.f32 %v5450, 0.0
        %v5945 = vmax.f32 %v5613, 0.0
        %v5946 = vmax.f32 %v4680, 0.0
        %v5947 = vmax.f32 %v4682, 0.0
        %v5948 = vmax.f32 %v4873, 0.0
        %v5949 = vmax.f32 %v4875, 0.0
        %v5950 = vmax.f32 %v5066, 0.0
        %v5951 = vmax.f32 %v5068, 0.0
        %v5952 = vmax.f32 %v5259, 0.0
        %v5953 = vmax.f32 %v5261, 0.0
        %v5954 = vmax.f32 %v5452, 0.0
        %v5955 = vmax.f32 %v5454, 0.0
        %v5956 = vmax.f32 %v5616, 0.0
        %v5957 = vmax.f32 %v4686, 0.0
        %v5958 = vmax.f32 %v4688, 0.0
        %v5959 = vmax.f32 %v4879, 0.0
        %v5960 = vmax.f32 %v4881, 0.0
        %v5961 = vmax.f32 %v5072, 0.0
        %v5962 = vmax.f32 %v5074, 0.0
        %v5963 = vmax.f32 %v5265, 0.0
        %v5964 = vmax.f32 %v5267, 0.0
        %v5965 = vmax.f32 %v5458, 0.0
        %v5966 = vmax.f32 %v5460, 0.0
        %v5967 = vmax.f32 %v5621, 0.0
        %v5968 = vmax.f32 %v4690, 0.0
        %v5969 = vmax.f32 %v4692, 0.0
        %v5970 = vmax.f32 %v4883, 0.0
        %v5971 = vmax.f32 %v4885, 0.0
        %v5972 = vmax.f32 %v5076, 0.0
        %v5973 = vmax.f32 %v5078, 0.0
        %v5974 = vmax.f32 %v5269, 0.0
        %v5975 = vmax.f32 %v5271, 0.0
        %v5976 = vmax.f32 %v5462, 0.0
        %v5977 = vmax.f32 %v5464, 0.0
        %v5978 = vmax.f32 %v5624, 0.0
        %v5979 = vpack.c.bf16 %v5638, %v5627
        %v5980 = vpack.c.bf16 %v5639, %v5628
        %v5981 = vpack.c.bf16 %v5640, %v5629
        %v5982 = vpack.c.bf16 %v5641, %v5630
        %v5983 = vpack.c.bf16 %v5642, %v5631
        %v5984 = vpack.c.bf16 %v5643, %v5632
        %v5985 = vpack.c.bf16 %v5644, %v5633
        %v5986 = vpack.c.bf16 %v5645, %v5634
        %v5987 = vpack.c.bf16 %v5646, %v5635
        %v5988 = vpack.c.bf16 %v5647, %v5636
        %v5989 = vpack.c.bf16 %v5648, %v5637
        %v5990 = vpack.c.bf16 %v5660, %v5649
        %v5991 = vpack.c.bf16 %v5661, %v5650
        %v5992 = vpack.c.bf16 %v5662, %v5651
        %v5993 = vpack.c.bf16 %v5663, %v5652
        %v5994 = vpack.c.bf16 %v5664, %v5653
        %v5995 = vpack.c.bf16 %v5665, %v5654
        %v5996 = vpack.c.bf16 %v5666, %v5655
        %v5997 = vpack.c.bf16 %v5667, %v5656
        %v5998 = vpack.c.bf16 %v5668, %v5657
        %v5999 = vpack.c.bf16 %v5669, %v5658
        %v6000 = vpack.c.bf16 %v5670, %v5659
        %v6001 = vpack.c.bf16 %v5682, %v5671
        %v6002 = vpack.c.bf16 %v5683, %v5672
        %v6003 = vpack.c.bf16 %v5684, %v5673
        %v6004 = vpack.c.bf16 %v5685, %v5674
        %v6005 = vpack.c.bf16 %v5686, %v5675
        %v6006 = vpack.c.bf16 %v5687, %v5676
        %v6007 = vpack.c.bf16 %v5688, %v5677
        %v6008 = vpack.c.bf16 %v5689, %v5678
        %v6009 = vpack.c.bf16 %v5690, %v5679
        %v6010 = vpack.c.bf16 %v5691, %v5680
        %v6011 = vpack.c.bf16 %v5692, %v5681
        %v6012 = vpack.c.bf16 %v5704, %v5693
        %v6013 = vpack.c.bf16 %v5705, %v5694
        %v6014 = vpack.c.bf16 %v5706, %v5695
        %v6015 = vpack.c.bf16 %v5707, %v5696
        %v6016 = vpack.c.bf16 %v5708, %v5697
        %v6017 = vpack.c.bf16 %v5709, %v5698
        %v6018 = vpack.c.bf16 %v5710, %v5699
        %v6019 = vpack.c.bf16 %v5711, %v5700
        %v6020 = vpack.c.bf16 %v5712, %v5701
        %v6021 = vpack.c.bf16 %v5713, %v5702
        %v6022 = vpack.c.bf16 %v5714, %v5703
        %v6023 = vpack.c.bf16 %v5726, %v5715
        %v6024 = vpack.c.bf16 %v5727, %v5716
        %v6025 = vpack.c.bf16 %v5728, %v5717
        %v6026 = vpack.c.bf16 %v5729, %v5718
        %v6027 = vpack.c.bf16 %v5730, %v5719
        %v6028 = vpack.c.bf16 %v5731, %v5720
        %v6029 = vpack.c.bf16 %v5732, %v5721
        %v6030 = vpack.c.bf16 %v5733, %v5722
        %v6031 = vpack.c.bf16 %v5734, %v5723
        %v6032 = vpack.c.bf16 %v5735, %v5724
        %v6033 = vpack.c.bf16 %v5736, %v5725
        %v6034 = vpack.c.bf16 %v5748, %v5737
        %v6035 = vpack.c.bf16 %v5749, %v5738
        %v6036 = vpack.c.bf16 %v5750, %v5739
        %v6037 = vpack.c.bf16 %v5751, %v5740
        %v6038 = vpack.c.bf16 %v5752, %v5741
        %v6039 = vpack.c.bf16 %v5753, %v5742
        %v6040 = vpack.c.bf16 %v5754, %v5743
        %v6041 = vpack.c.bf16 %v5755, %v5744
        %v6042 = vpack.c.bf16 %v5756, %v5745
        %v6043 = vpack.c.bf16 %v5757, %v5746
        %v6044 = vpack.c.bf16 %v5758, %v5747
        %v6045 = vpack.c.bf16 %v5770, %v5759
        %v6046 = vpack.c.bf16 %v5771, %v5760
        %v6047 = vpack.c.bf16 %v5772, %v5761
        %v6048 = vpack.c.bf16 %v5773, %v5762
        %v6049 = vpack.c.bf16 %v5774, %v5763
        %v6050 = vpack.c.bf16 %v5775, %v5764
        %v6051 = vpack.c.bf16 %v5776, %v5765
        %v6052 = vpack.c.bf16 %v5777, %v5766
        %v6053 = vpack.c.bf16 %v5778, %v5767
        %v6054 = vpack.c.bf16 %v5779, %v5768
        %v6055 = vpack.c.bf16 %v5780, %v5769
        %v6056 = vpack.c.bf16 %v5792, %v5781
        %v6057 = vpack.c.bf16 %v5793, %v5782
        %v6058 = vpack.c.bf16 %v5794, %v5783
        %v6059 = vpack.c.bf16 %v5795, %v5784
        %v6060 = vpack.c.bf16 %v5796, %v5785
        %v6061 = vpack.c.bf16 %v5797, %v5786
        %v6062 = vpack.c.bf16 %v5798, %v5787
        %v6063 = vpack.c.bf16 %v5799, %v5788
        %v6064 = vpack.c.bf16 %v5800, %v5789
        %v6065 = vpack.c.bf16 %v5801, %v5790
        %v6066 = vpack.c.bf16 %v5802, %v5791
        %v6067 = vpack.c.bf16 %v5814, %v5803
        %v6068 = vpack.c.bf16 %v5815, %v5804
        %v6069 = vpack.c.bf16 %v5816, %v5805
        %v6070 = vpack.c.bf16 %v5817, %v5806
        %v6071 = vpack.c.bf16 %v5818, %v5807
        %v6072 = vpack.c.bf16 %v5819, %v5808
        %v6073 = vpack.c.bf16 %v5820, %v5809
        %v6074 = vpack.c.bf16 %v5821, %v5810
        %v6075 = vpack.c.bf16 %v5822, %v5811
        %v6076 = vpack.c.bf16 %v5823, %v5812
        %v6077 = vpack.c.bf16 %v5824, %v5813
        %v6078 = vpack.c.bf16 %v5836, %v5825
        %v6079 = vpack.c.bf16 %v5837, %v5826
        %v6080 = vpack.c.bf16 %v5838, %v5827
        %v6081 = vpack.c.bf16 %v5839, %v5828
        %v6082 = vpack.c.bf16 %v5840, %v5829
        %v6083 = vpack.c.bf16 %v5841, %v5830
        %v6084 = vpack.c.bf16 %v5842, %v5831
        %v6085 = vpack.c.bf16 %v5843, %v5832
        %v6086 = vpack.c.bf16 %v5844, %v5833
        %v6087 = vpack.c.bf16 %v5845, %v5834
        %v6088 = vpack.c.bf16 %v5846, %v5835
        %v6089 = vpack.c.bf16 %v5858, %v5847
        %v6090 = vpack.c.bf16 %v5859, %v5848
        %v6091 = vpack.c.bf16 %v5860, %v5849
        %v6092 = vpack.c.bf16 %v5861, %v5850
        %v6093 = vpack.c.bf16 %v5862, %v5851
        %v6094 = vpack.c.bf16 %v5863, %v5852
        %v6095 = vpack.c.bf16 %v5864, %v5853
        %v6096 = vpack.c.bf16 %v5865, %v5854
        %v6097 = vpack.c.bf16 %v5866, %v5855
        %v6098 = vpack.c.bf16 %v5867, %v5856
        %v6099 = vpack.c.bf16 %v5868, %v5857
        %v6100 = vpack.c.bf16 %v5880, %v5869
        %v6101 = vpack.c.bf16 %v5881, %v5870
        %v6102 = vpack.c.bf16 %v5882, %v5871
        %v6103 = vpack.c.bf16 %v5883, %v5872
        %v6104 = vpack.c.bf16 %v5884, %v5873
        %v6105 = vpack.c.bf16 %v5885, %v5874
        %v6106 = vpack.c.bf16 %v5886, %v5875
        %v6107 = vpack.c.bf16 %v5887, %v5876
        %v6108 = vpack.c.bf16 %v5888, %v5877
        %v6109 = vpack.c.bf16 %v5889, %v5878
        %v6110 = vpack.c.bf16 %v5890, %v5879
        %v6111 = vpack.c.bf16 %v5902, %v5891
        %v6112 = vpack.c.bf16 %v5903, %v5892
        %v6113 = vpack.c.bf16 %v5904, %v5893
        %v6114 = vpack.c.bf16 %v5905, %v5894
        %v6115 = vpack.c.bf16 %v5906, %v5895
        %v6116 = vpack.c.bf16 %v5907, %v5896
        %v6117 = vpack.c.bf16 %v5908, %v5897
        %v6118 = vpack.c.bf16 %v5909, %v5898
        %v6119 = vpack.c.bf16 %v5910, %v5899
        %v6120 = vpack.c.bf16 %v5911, %v5900
        %v6121 = vpack.c.bf16 %v5912, %v5901
        %v6122 = vpack.c.bf16 %v5924, %v5913
        %v6123 = vpack.c.bf16 %v5925, %v5914
        %v6124 = vpack.c.bf16 %v5926, %v5915
        %v6125 = vpack.c.bf16 %v5927, %v5916
        %v6126 = vpack.c.bf16 %v5928, %v5917
        %v6127 = vpack.c.bf16 %v5929, %v5918
        %v6128 = vpack.c.bf16 %v5930, %v5919
        %v6129 = vpack.c.bf16 %v5931, %v5920
        %v6130 = vpack.c.bf16 %v5932, %v5921
        %v6131 = vpack.c.bf16 %v5933, %v5922
        %v6132 = vpack.c.bf16 %v5934, %v5923
        %v6133 = vpack.c.bf16 %v5946, %v5935
        %v6134 = vpack.c.bf16 %v5947, %v5936
        %v6135 = vpack.c.bf16 %v5948, %v5937
        %v6136 = vpack.c.bf16 %v5949, %v5938
        %v6137 = vpack.c.bf16 %v5950, %v5939
        %v6138 = vpack.c.bf16 %v5951, %v5940
        %v6139 = vpack.c.bf16 %v5952, %v5941
        %v6140 = vpack.c.bf16 %v5953, %v5942
        %v6141 = vpack.c.bf16 %v5954, %v5943
        %v6142 = vpack.c.bf16 %v5955, %v5944
        %v6143 = vpack.c.bf16 %v5956, %v5945
        %v6144 = vpack.c.bf16 %v5968, %v5957
        %v6145 = vpack.c.bf16 %v5969, %v5958
        %v6146 = vpack.c.bf16 %v5970, %v5959
        %v6147 = vpack.c.bf16 %v5971, %v5960
        %v6148 = vpack.c.bf16 %v5972, %v5961
        %v6149 = vpack.c.bf16 %v5973, %v5962
        %v6150 = vpack.c.bf16 %v5974, %v5963
        %v6151 = vpack.c.bf16 %v5975, %v5964
        %v6152 = vpack.c.bf16 %v5976, %v5965
        %v6153 = vpack.c.bf16 %v5977, %v5966
        %v6154 = vpack.c.bf16 %v5978, %v5967
        %v6155 = vld [vmem:[#allocation14] sm:$0xf]
        %v6156 = vld [vmem:[#allocation14 + $0x4] sm:$0xf]
        %v6157 = vld [vmem:[#allocation14 + $0x8] sm:$0xf]
        %v6158 = vld [vmem:[#allocation14 + $0xc] sm:$0xf]
        %v6159 = vld [vmem:[#allocation14 + $0x10] sm:$0xf]
        %v6160 = vld [vmem:[#allocation14 + $0x14] sm:$0xf]
        %v6161 = vld [vmem:[#allocation14 + $0x18] sm:$0xf]
        %v6162 = vld [vmem:[#allocation14 + $0x1c] sm:$0xf]
        %v6163 = vld [vmem:[#allocation14 + $0x20] sm:$0xf]
        %v6164 = vld [vmem:[#allocation14 + $0x24] sm:$0xf]
        %v6165 = vld [vmem:[#allocation14 + $0x28] sm:$0xf]
        %v6166 = vld [vmem:[#allocation14 + $0x2c] sm:$0xf]
        %v6167 = vld [vmem:[#allocation14 + $0x30] sm:$0xf]
        %v6168 = vld [vmem:[#allocation14 + $0x34] sm:$0xf]
        %v6169 = vld [vmem:[#allocation14 + $0x38] sm:$0xf]
        %v6170 = vld [vmem:[#allocation14 + $0x3c] sm:$0xf]
        %v6171 = vld [vmem:[#allocation14 + $0x40] sm:$0xf]
        %v6172 = vld [vmem:[#allocation14 + $0x44] sm:$0xf]
        %v6173 = vld [vmem:[#allocation14 + $0x48] sm:$0xf]
        %v6174 = vld [vmem:[#allocation14 + $0x4c] sm:$0xf]
        %v6175 = vld [vmem:[#allocation14 + $0x50] sm:$0xf]
        %v6176 = vld [vmem:[#allocation14 + $0x54] sm:$0xf]
        %v6177 = vld [vmem:[#allocation14 + $0x58] sm:$0xf]
        %v6178 = vld [vmem:[#allocation14 + $0x5c] sm:$0xf]
        %v6179 = vld [vmem:[#allocation14 + $0x60] sm:$0xf]
        %v6180 = vld [vmem:[#allocation14 + $0x64] sm:$0xf]
        %v6181 = vld [vmem:[#allocation14 + $0x68] sm:$0xf]
        %v6182 = vld [vmem:[#allocation14 + $0x6c] sm:$0xf]
        %v6183 = vld [vmem:[#allocation14 + $0x70] sm:$0xf]
        %v6184 = vld [vmem:[#allocation14 + $0x74] sm:$0xf]
        %v6185 = vld [vmem:[#allocation14 + $0x78] sm:$0xf]
        %v6186 = vld [vmem:[#allocation14 + $0x7c] sm:$0xf]
        %v6187 = vld [vmem:[#allocation14 + $0x80] sm:$0xf]
        %v6188 = vld [vmem:[#allocation14 + $0x84] sm:$0xf]
        %v6189 = vld [vmem:[#allocation14 + $0x88] sm:$0xf]
        %v6190 = vld [vmem:[#allocation14 + $0x8c] sm:$0xf]
        %v6191 = vld [vmem:[#allocation14 + $0x90] sm:$0xf]
        %v6192 = vld [vmem:[#allocation14 + $0x94] sm:$0xf]
        %v6193 = vld [vmem:[#allocation14 + $0x98] sm:$0xf]
        %v6194 = vld [vmem:[#allocation14 + $0x9c] sm:$0xf]
        %v6195 = vld [vmem:[#allocation14 + $0xa0] sm:$0xf]
        %v6196 = vld [vmem:[#allocation14 + $0xa4] sm:$0xf]
        %v6197 = vld [vmem:[#allocation14 + $0xa8] sm:$0xf]
        %v6198 = vld [vmem:[#allocation14 + $0xac] sm:$0xf]
        %v6199 = vld [vmem:[#allocation14 + $0xb0] sm:$0xf]
        %v6200 = vld [vmem:[#allocation14 + $0xb4] sm:$0xf]
        %v6201 = vld [vmem:[#allocation14 + $0xb8] sm:$0xf]
        %v6202 = vld [vmem:[#allocation14 + $0xbc] sm:$0xf]
        %v6203 = vld [vmem:[#allocation14 + $0xc0] sm:$0xf]
        %v6204 = vld [vmem:[#allocation14 + $0xc4] sm:$0xf]
        %v6205 = vld [vmem:[#allocation14 + $0xc8] sm:$0xf]
        %v6206 = vld [vmem:[#allocation14 + $0xcc] sm:$0xf]
        %v6207 = vld [vmem:[#allocation14 + $0xd0] sm:$0xf]
        %v6208 = vld [vmem:[#allocation14 + $0xd4] sm:$0xf]
        %v6209 = vld [vmem:[#allocation14 + $0xd8] sm:$0xf]
        %v6210 = vld [vmem:[#allocation14 + $0xdc] sm:$0xf]
        %v6211 = vld [vmem:[#allocation14 + $0xe0] sm:$0xf]
        %v6212 = vld [vmem:[#allocation14 + $0xe4] sm:$0xf]
        %v6213 = vld [vmem:[#allocation14 + $0xe8] sm:$0xf]
        %v6214 = vld [vmem:[#allocation14 + $0xec] sm:$0xf]
        %v6215 = vld [vmem:[#allocation14 + $0xf0] sm:$0xf]
        %v6216 = vld [vmem:[#allocation14 + $0xf4] sm:$0xf]
        %v6217 = vld [vmem:[#allocation14 + $0xf8] sm:$0xf]
        %v6218 = vld [vmem:[#allocation14 + $0xfc] sm:$0xf]
        %v6219 = vld [vmem:[#allocation14 + $0x100] sm:$0xf]
        %v6220 = vld [vmem:[#allocation14 + $0x104] sm:$0xf]
        %v6221 = vld [vmem:[#allocation14 + $0x108] sm:$0xf]
        %v6222 = vld [vmem:[#allocation14 + $0x10c] sm:$0xf]
        %v6223 = vld [vmem:[#allocation14 + $0x110] sm:$0xf]
        %v6224 = vld [vmem:[#allocation14 + $0x114] sm:$0xf]
        %v6225 = vld [vmem:[#allocation14 + $0x118] sm:$0xf]
        %v6226 = vld [vmem:[#allocation14 + $0x11c] sm:$0xf]
        %v6227 = vld [vmem:[#allocation14 + $0x120] sm:$0xf]
        %v6228 = vld [vmem:[#allocation14 + $0x124] sm:$0xf]
        %v6229 = vld [vmem:[#allocation14 + $0x128] sm:$0xf]
        %v6230 = vld [vmem:[#allocation14 + $0x12c] sm:$0xf]
        %v6231 = vld [vmem:[#allocation14 + $0x130] sm:$0xf]
        %v6232 = vld [vmem:[#allocation14 + $0x134] sm:$0xf]
        %v6233 = vld [vmem:[#allocation14 + $0x138] sm:$0xf]
        %v6234 = vld [vmem:[#allocation14 + $0x13c] sm:$0xf]
        %v6235 = vld [vmem:[#allocation14 + $0x140] sm:$0xf]
        %v6236 = vld [vmem:[#allocation14 + $0x144] sm:$0xf]
        %v6237 = vld [vmem:[#allocation14 + $0x148] sm:$0xf]
        %v6238 = vld [vmem:[#allocation14 + $0x14c] sm:$0xf]
        %v6239 = vld [vmem:[#allocation14 + $0x150] sm:$0xf]
        %v6240 = vld [vmem:[#allocation14 + $0x154] sm:$0xf]
        %v6241 = vld [vmem:[#allocation14 + $0x158] sm:$0xf]
        %v6242 = vld [vmem:[#allocation14 + $0x15c] sm:$0xf]
        %v6243 = vld [vmem:[#allocation14 + $0x160] sm:$0xf]
        %v6244 = vld [vmem:[#allocation14 + $0x164] sm:$0xf]
        %v6245 = vld [vmem:[#allocation14 + $0x168] sm:$0xf]
        %v6246 = vld [vmem:[#allocation14 + $0x16c] sm:$0xf]
        %v6247 = vld [vmem:[#allocation14 + $0x170] sm:$0xf]
        %v6248 = vld [vmem:[#allocation14 + $0x174] sm:$0xf]
        %v6249 = vld [vmem:[#allocation14 + $0x178] sm:$0xf]
        %v6250 = vld [vmem:[#allocation14 + $0x17c] sm:$0xf]
        %v6251 = vld [vmem:[#allocation14 + $0x180] sm:$0xf]
        %v6252 = vld [vmem:[#allocation14 + $0x184] sm:$0xf]
        %v6253 = vld [vmem:[#allocation14 + $0x188] sm:$0xf]
        %v6254 = vld [vmem:[#allocation14 + $0x18c] sm:$0xf]
        %v6255 = vld [vmem:[#allocation14 + $0x190] sm:$0xf]
        %v6256 = vld [vmem:[#allocation14 + $0x194] sm:$0xf]
        %v6257 = vld [vmem:[#allocation14 + $0x198] sm:$0xf]
        %v6258 = vld [vmem:[#allocation14 + $0x19c] sm:$0xf]
        %v6259 = vld [vmem:[#allocation14 + $0x1a0] sm:$0xf]
        %v6260 = vld [vmem:[#allocation14 + $0x1a4] sm:$0xf]
        %v6261 = vld [vmem:[#allocation14 + $0x1a8] sm:$0xf]
        %v6262 = vld [vmem:[#allocation14 + $0x1ac] sm:$0xf]
        %v6263 = vld [vmem:[#allocation14 + $0x1b0] sm:$0xf]
        %v6264 = vld [vmem:[#allocation14 + $0x1b4] sm:$0xf]
        %v6265 = vld [vmem:[#allocation14 + $0x1b8] sm:$0xf]
        %v6266 = vld [vmem:[#allocation14 + $0x1bc] sm:$0xf]
        %v6267 = vld [vmem:[#allocation14 + $0x1c0] sm:$0xf]
        %v6268 = vld [vmem:[#allocation14 + $0x1c4] sm:$0xf]
        %v6269 = vld [vmem:[#allocation14 + $0x1c8] sm:$0xf]
        %v6270 = vld [vmem:[#allocation14 + $0x1cc] sm:$0xf]
        %v6271 = vld [vmem:[#allocation14 + $0x1d0] sm:$0xf]
        %v6272 = vld [vmem:[#allocation14 + $0x1d4] sm:$0xf]
        %v6273 = vld [vmem:[#allocation14 + $0x1d8] sm:$0xf]
        %v6274 = vld [vmem:[#allocation14 + $0x1dc] sm:$0xf]
        %v6275 = vld [vmem:[#allocation14 + $0x1e0] sm:$0xf]
        %v6276 = vld [vmem:[#allocation14 + $0x1e4] sm:$0xf]
        %v6277 = vld [vmem:[#allocation14 + $0x1e8] sm:$0xf]
        %v6278 = vld [vmem:[#allocation14 + $0x1ec] sm:$0xf]
        %v6279 = vld [vmem:[#allocation14 + $0x1f0] sm:$0xf]
        %v6280 = vld [vmem:[#allocation14 + $0x1f4] sm:$0xf]
        %v6281 = vld [vmem:[#allocation14 + $0x1f8] sm:$0xf]
        %v6282 = vld [vmem:[#allocation14 + $0x1fc] sm:$0xf]
        %v6283 = vld [vmem:[#allocation14 + $0x200] sm:$0xf]
        %v6284 = vld [vmem:[#allocation14 + $0x204] sm:$0xf]
        %v6285 = vld [vmem:[#allocation14 + $0x208] sm:$0xf]
        %v6286 = vld [vmem:[#allocation14 + $0x20c] sm:$0xf]
        %v6287 = vld [vmem:[#allocation14 + $0x210] sm:$0xf]
        %v6288 = vld [vmem:[#allocation14 + $0x214] sm:$0xf]
        %v6289 = vld [vmem:[#allocation14 + $0x218] sm:$0xf]
        %v6290 = vld [vmem:[#allocation14 + $0x21c] sm:$0xf]
        %v6291 = vld [vmem:[#allocation14 + $0x220] sm:$0xf]
        %v6292 = vld [vmem:[#allocation14 + $0x224] sm:$0xf]
        %v6293 = vld [vmem:[#allocation14 + $0x228] sm:$0xf]
        %v6294 = vld [vmem:[#allocation14 + $0x22c] sm:$0xf]
        %v6295 = vld [vmem:[#allocation14 + $0x230] sm:$0xf]
        %v6296 = vld [vmem:[#allocation14 + $0x234] sm:$0xf]
        %v6297 = vld [vmem:[#allocation14 + $0x238] sm:$0xf]
        %v6298 = vld [vmem:[#allocation14 + $0x23c] sm:$0xf]
        %v6299 = vld [vmem:[#allocation14 + $0x240] sm:$0xf]
        %v6300 = vld [vmem:[#allocation14 + $0x244] sm:$0xf]
        %v6301 = vld [vmem:[#allocation14 + $0x248] sm:$0xf]
        %v6302 = vld [vmem:[#allocation14 + $0x24c] sm:$0xf]
        %v6303 = vld [vmem:[#allocation14 + $0x250] sm:$0xf]
        %v6304 = vld [vmem:[#allocation14 + $0x254] sm:$0xf]
        %v6305 = vld [vmem:[#allocation14 + $0x258] sm:$0xf]
        %v6306 = vld [vmem:[#allocation14 + $0x25c] sm:$0xf]
        %v6307 = vld [vmem:[#allocation14 + $0x260] sm:$0xf]
        %v6308 = vld [vmem:[#allocation14 + $0x264] sm:$0xf]
        %v6309 = vld [vmem:[#allocation14 + $0x268] sm:$0xf]
        %v6310 = vld [vmem:[#allocation14 + $0x26c] sm:$0xf]
        %v6311 = vld [vmem:[#allocation14 + $0x270] sm:$0xf]
        %v6312 = vld [vmem:[#allocation14 + $0x274] sm:$0xf]
        %v6313 = vld [vmem:[#allocation14 + $0x278] sm:$0xf]
        %v6314 = vld [vmem:[#allocation14 + $0x27c] sm:$0xf]
        %v6315 = vld [vmem:[#allocation14 + $0x280] sm:$0xf]
        %v6316 = vld [vmem:[#allocation14 + $0x284] sm:$0xf]
        %v6317 = vld [vmem:[#allocation14 + $0x288] sm:$0xf]
        %v6318 = vld [vmem:[#allocation14 + $0x28c] sm:$0xf]
        %v6319 = vld [vmem:[#allocation14 + $0x290] sm:$0xf]
        %v6320 = vld [vmem:[#allocation14 + $0x294] sm:$0xf]
        %v6321 = vld [vmem:[#allocation14 + $0x298] sm:$0xf]
        %v6322 = vld [vmem:[#allocation14 + $0x29c] sm:$0xf]
        %v6323 = vld [vmem:[#allocation14 + $0x2a0] sm:$0xf]
        %v6324 = vld [vmem:[#allocation14 + $0x2a4] sm:$0xf]
        %v6325 = vld [vmem:[#allocation14 + $0x2a8] sm:$0xf]
        %v6326 = vld [vmem:[#allocation14 + $0x2ac] sm:$0xf]
        %v6327 = vld [vmem:[#allocation14 + $0x2b0] sm:$0xf]
        %v6328 = vld [vmem:[#allocation14 + $0x2b4] sm:$0xf]
        %v6329 = vld [vmem:[#allocation14 + $0x2b8] sm:$0xf]
        %v6330 = vld [vmem:[#allocation14 + $0x2bc] sm:$0xf]
        %v6331 = vld [vmem:[%s9] sm:$0x1]
        %v6333 = vlaneseq
        %v6334 = vshrl.u32 %v6333, 7
        %v6335 = vsub.s32 0, %v6334
        %v6336 = vrot.slane %v6331, %v6335
        %v6514 = vunpack.c.l.b16 %v6155
        %v6515 = vunpack.c.l.b16 %v6156
        %v6516 = vunpack.c.l.b16 %v6157
        %v6517 = vunpack.c.l.b16 %v6158
        %v6518 = vunpack.c.l.b16 %v6159
        %v6519 = vunpack.c.l.b16 %v6160
        %v6520 = vunpack.c.l.b16 %v6161
        %v6521 = vunpack.c.l.b16 %v6162
        %v6522 = vunpack.c.l.b16 %v6163
        %v6523 = vunpack.c.l.b16 %v6164
        %v6524 = vunpack.c.l.b16 %v6165
        %v6525 = vunpack.c.l.b16 %v6166
        %v6526 = vunpack.c.l.b16 %v6167
        %v6527 = vunpack.c.l.b16 %v6168
        %v6528 = vunpack.c.l.b16 %v6169
        %v6529 = vunpack.c.l.b16 %v6170
        %v6530 = vunpack.c.l.b16 %v6171
        %v6531 = vunpack.c.l.b16 %v6172
        %v6532 = vunpack.c.l.b16 %v6173
        %v6533 = vunpack.c.l.b16 %v6174
        %v6534 = vunpack.c.l.b16 %v6175
        %v6535 = vunpack.c.l.b16 %v6176
        %v6536 = vunpack.c.l.b16 %v6177
        %v6537 = vunpack.c.l.b16 %v6178
        %v6538 = vunpack.c.l.b16 %v6179
        %v6539 = vunpack.c.l.b16 %v6180
        %v6540 = vunpack.c.l.b16 %v6181
        %v6541 = vunpack.c.l.b16 %v6182
        %v6542 = vunpack.c.l.b16 %v6183
        %v6543 = vunpack.c.l.b16 %v6184
        %v6544 = vunpack.c.l.b16 %v6185
        %v6545 = vunpack.c.l.b16 %v6186
        %v6546 = vunpack.c.l.b16 %v6187
        %v6547 = vunpack.c.l.b16 %v6188
        %v6548 = vunpack.c.l.b16 %v6189
        %v6549 = vunpack.c.l.b16 %v6190
        %v6550 = vunpack.c.l.b16 %v6191
        %v6551 = vunpack.c.l.b16 %v6192
        %v6552 = vunpack.c.l.b16 %v6193
        %v6553 = vunpack.c.l.b16 %v6194
        %v6554 = vunpack.c.l.b16 %v6195
        %v6555 = vunpack.c.l.b16 %v6196
        %v6556 = vunpack.c.l.b16 %v6197
        %v6557 = vunpack.c.l.b16 %v6198
        %v6558 = vunpack.c.l.b16 %v6199
        %v6559 = vunpack.c.l.b16 %v6200
        %v6560 = vunpack.c.l.b16 %v6201
        %v6561 = vunpack.c.l.b16 %v6202
        %v6562 = vunpack.c.l.b16 %v6203
        %v6563 = vunpack.c.l.b16 %v6204
        %v6564 = vunpack.c.l.b16 %v6205
        %v6565 = vunpack.c.l.b16 %v6206
        %v6566 = vunpack.c.l.b16 %v6207
        %v6567 = vunpack.c.l.b16 %v6208
        %v6568 = vunpack.c.l.b16 %v6209
        %v6569 = vunpack.c.l.b16 %v6210
        %v6570 = vunpack.c.l.b16 %v6211
        %v6571 = vunpack.c.l.b16 %v6212
        %v6572 = vunpack.c.l.b16 %v6213
        %v6573 = vunpack.c.l.b16 %v6214
        %v6574 = vunpack.c.l.b16 %v6215
        %v6575 = vunpack.c.l.b16 %v6216
        %v6576 = vunpack.c.l.b16 %v6217
        %v6577 = vunpack.c.l.b16 %v6218
        %v6578 = vunpack.c.l.b16 %v6219
        %v6579 = vunpack.c.l.b16 %v6220
        %v6580 = vunpack.c.l.b16 %v6221
        %v6581 = vunpack.c.l.b16 %v6222
        %v6582 = vunpack.c.l.b16 %v6223
        %v6583 = vunpack.c.l.b16 %v6224
        %v6584 = vunpack.c.l.b16 %v6225
        %v6585 = vunpack.c.l.b16 %v6226
        %v6586 = vunpack.c.l.b16 %v6227
        %v6587 = vunpack.c.l.b16 %v6228
        %v6588 = vunpack.c.l.b16 %v6229
        %v6589 = vunpack.c.l.b16 %v6230
        %v6590 = vunpack.c.l.b16 %v6231
        %v6591 = vunpack.c.l.b16 %v6232
        %v6592 = vunpack.c.l.b16 %v6233
        %v6593 = vunpack.c.l.b16 %v6234
        %v6594 = vunpack.c.l.b16 %v6235
        %v6595 = vunpack.c.l.b16 %v6236
        %v6596 = vunpack.c.l.b16 %v6237
        %v6597 = vunpack.c.l.b16 %v6238
        %v6598 = vunpack.c.l.b16 %v6239
        %v6599 = vunpack.c.l.b16 %v6240
        %v6600 = vunpack.c.l.b16 %v6241
        %v6601 = vunpack.c.l.b16 %v6242
        %v6602 = vunpack.c.l.b16 %v6243
        %v6603 = vunpack.c.l.b16 %v6244
        %v6604 = vunpack.c.l.b16 %v6245
        %v6605 = vunpack.c.l.b16 %v6246
        %v6606 = vunpack.c.l.b16 %v6247
        %v6607 = vunpack.c.l.b16 %v6248
        %v6608 = vunpack.c.l.b16 %v6249
        %v6609 = vunpack.c.l.b16 %v6250
        %v6610 = vunpack.c.l.b16 %v6251
        %v6611 = vunpack.c.l.b16 %v6252
        %v6612 = vunpack.c.l.b16 %v6253
        %v6613 = vunpack.c.l.b16 %v6254
        %v6614 = vunpack.c.l.b16 %v6255
        %v6615 = vunpack.c.l.b16 %v6256
        %v6616 = vunpack.c.l.b16 %v6257
        %v6617 = vunpack.c.l.b16 %v6258
        %v6618 = vunpack.c.l.b16 %v6259
        %v6619 = vunpack.c.l.b16 %v6260
        %v6620 = vunpack.c.l.b16 %v6261
        %v6621 = vunpack.c.l.b16 %v6262
        %v6622 = vunpack.c.l.b16 %v6263
        %v6623 = vunpack.c.l.b16 %v6264
        %v6624 = vunpack.c.l.b16 %v6265
        %v6625 = vunpack.c.l.b16 %v6266
        %v6626 = vunpack.c.l.b16 %v6267
        %v6627 = vunpack.c.l.b16 %v6268
        %v6628 = vunpack.c.l.b16 %v6269
        %v6629 = vunpack.c.l.b16 %v6270
        %v6630 = vunpack.c.l.b16 %v6271
        %v6631 = vunpack.c.l.b16 %v6272
        %v6632 = vunpack.c.l.b16 %v6273
        %v6633 = vunpack.c.l.b16 %v6274
        %v6634 = vunpack.c.l.b16 %v6275
        %v6635 = vunpack.c.l.b16 %v6276
        %v6636 = vunpack.c.l.b16 %v6277
        %v6637 = vunpack.c.l.b16 %v6278
        %v6638 = vunpack.c.l.b16 %v6279
        %v6639 = vunpack.c.l.b16 %v6280
        %v6640 = vunpack.c.l.b16 %v6281
        %v6641 = vunpack.c.l.b16 %v6282
        %v6642 = vunpack.c.l.b16 %v6283
        %v6643 = vunpack.c.l.b16 %v6284
        %v6644 = vunpack.c.l.b16 %v6285
        %v6645 = vunpack.c.l.b16 %v6286
        %v6646 = vunpack.c.l.b16 %v6287
        %v6647 = vunpack.c.l.b16 %v6288
        %v6648 = vunpack.c.l.b16 %v6289
        %v6649 = vunpack.c.l.b16 %v6290
        %v6650 = vunpack.c.l.b16 %v6291
        %v6651 = vunpack.c.l.b16 %v6292
        %v6652 = vunpack.c.l.b16 %v6293
        %v6653 = vunpack.c.l.b16 %v6294
        %v6654 = vunpack.c.l.b16 %v6295
        %v6655 = vunpack.c.l.b16 %v6296
        %v6656 = vunpack.c.l.b16 %v6297
        %v6657 = vunpack.c.l.b16 %v6298
        %v6658 = vunpack.c.l.b16 %v6299
        %v6659 = vunpack.c.l.b16 %v6300
        %v6660 = vunpack.c.l.b16 %v6301
        %v6661 = vunpack.c.l.b16 %v6302
        %v6662 = vunpack.c.l.b16 %v6303
        %v6663 = vunpack.c.l.b16 %v6304
        %v6664 = vunpack.c.l.b16 %v6305
        %v6665 = vunpack.c.l.b16 %v6306
        %v6666 = vunpack.c.l.b16 %v6307
        %v6667 = vunpack.c.l.b16 %v6308
        %v6668 = vunpack.c.l.b16 %v6309
        %v6669 = vunpack.c.l.b16 %v6310
        %v6670 = vunpack.c.l.b16 %v6311
        %v6671 = vunpack.c.l.b16 %v6312
        %v6672 = vunpack.c.l.b16 %v6313
        %v6673 = vunpack.c.l.b16 %v6314
        %v6674 = vunpack.c.l.b16 %v6315
        %v6675 = vunpack.c.l.b16 %v6316
        %v6676 = vunpack.c.l.b16 %v6317
        %v6677 = vunpack.c.l.b16 %v6318
        %v6678 = vunpack.c.l.b16 %v6319
        %v6679 = vunpack.c.l.b16 %v6320
        %v6680 = vunpack.c.l.b16 %v6321
        %v6681 = vunpack.c.l.b16 %v6322
        %v6682 = vunpack.c.l.b16 %v6323
        %v6683 = vunpack.c.l.b16 %v6324
        %v6684 = vunpack.c.l.b16 %v6325
        %v6685 = vunpack.c.l.b16 %v6326
        %v6686 = vunpack.c.l.b16 %v6327
        %v6687 = vunpack.c.l.b16 %v6328
        %v6688 = vunpack.c.l.b16 %v6329
        %v6689 = vunpack.c.l.b16 %v6330
        %v6690 = vpack.c.b16 %v6515, %v6514
        %v6691 = vpack.c.b16 %v6517, %v6516
        %v6692 = vpack.c.b16 %v6519, %v6518
        %v6693 = vpack.c.b16 %v6521, %v6520
        %v6694 = vpack.c.b16 %v6523, %v6522
        %v6695 = vpack.c.b16 %v6525, %v6524
        %v6696 = vpack.c.b16 %v6527, %v6526
        %v6697 = vpack.c.b16 %v6529, %v6528
        %v6698 = vpack.c.b16 %v6531, %v6530
        %v6699 = vpack.c.b16 %v6533, %v6532
        %v6700 = vpack.c.b16 %v6535, %v6534
        %v6701 = vpack.c.b16 %v6537, %v6536
        %v6702 = vpack.c.b16 %v6539, %v6538
        %v6703 = vpack.c.b16 %v6541, %v6540
        %v6704 = vpack.c.b16 %v6543, %v6542
        %v6705 = vpack.c.b16 %v6545, %v6544
        %v6706 = vpack.c.b16 %v6547, %v6546
        %v6707 = vpack.c.b16 %v6549, %v6548
        %v6708 = vpack.c.b16 %v6551, %v6550
        %v6709 = vpack.c.b16 %v6553, %v6552
        %v6710 = vpack.c.b16 %v6555, %v6554
        %v6711 = vpack.c.b16 %v6557, %v6556
        %v6712 = vpack.c.b16 %v6559, %v6558
        %v6713 = vpack.c.b16 %v6561, %v6560
        %v6714 = vpack.c.b16 %v6563, %v6562
        %v6715 = vpack.c.b16 %v6565, %v6564
        %v6716 = vpack.c.b16 %v6567, %v6566
        %v6717 = vpack.c.b16 %v6569, %v6568
        %v6718 = vpack.c.b16 %v6571, %v6570
        %v6719 = vpack.c.b16 %v6573, %v6572
        %v6720 = vpack.c.b16 %v6575, %v6574
        %v6721 = vpack.c.b16 %v6577, %v6576
        %v6722 = vpack.c.b16 %v6579, %v6578
        %v6723 = vpack.c.b16 %v6581, %v6580
        %v6724 = vpack.c.b16 %v6583, %v6582
        %v6725 = vpack.c.b16 %v6585, %v6584
        %v6726 = vpack.c.b16 %v6587, %v6586
        %v6727 = vpack.c.b16 %v6589, %v6588
        %v6728 = vpack.c.b16 %v6591, %v6590
        %v6729 = vpack.c.b16 %v6593, %v6592
        %v6730 = vpack.c.b16 %v6595, %v6594
        %v6731 = vpack.c.b16 %v6597, %v6596
        %v6732 = vpack.c.b16 %v6599, %v6598
        %v6733 = vpack.c.b16 %v6601, %v6600
        %v6734 = vpack.c.b16 %v6603, %v6602
        %v6735 = vpack.c.b16 %v6605, %v6604
        %v6736 = vpack.c.b16 %v6607, %v6606
        %v6737 = vpack.c.b16 %v6609, %v6608
        %v6738 = vpack.c.b16 %v6611, %v6610
        %v6739 = vpack.c.b16 %v6613, %v6612
        %v6740 = vpack.c.b16 %v6615, %v6614
        %v6741 = vpack.c.b16 %v6617, %v6616
        %v6742 = vpack.c.b16 %v6619, %v6618
        %v6743 = vpack.c.b16 %v6621, %v6620
        %v6744 = vpack.c.b16 %v6623, %v6622
        %v6745 = vpack.c.b16 %v6625, %v6624
        %v6746 = vpack.c.b16 %v6627, %v6626
        %v6747 = vpack.c.b16 %v6629, %v6628
        %v6748 = vpack.c.b16 %v6631, %v6630
        %v6749 = vpack.c.b16 %v6633, %v6632
        %v6750 = vpack.c.b16 %v6635, %v6634
        %v6751 = vpack.c.b16 %v6637, %v6636
        %v6752 = vpack.c.b16 %v6639, %v6638
        %v6753 = vpack.c.b16 %v6641, %v6640
        %v6754 = vpack.c.b16 %v6643, %v6642
        %v6755 = vpack.c.b16 %v6645, %v6644
        %v6756 = vpack.c.b16 %v6647, %v6646
        %v6757 = vpack.c.b16 %v6649, %v6648
        %v6758 = vpack.c.b16 %v6651, %v6650
        %v6759 = vpack.c.b16 %v6653, %v6652
        %v6760 = vpack.c.b16 %v6655, %v6654
        %v6761 = vpack.c.b16 %v6657, %v6656
        %v6762 = vpack.c.b16 %v6659, %v6658
        %v6763 = vpack.c.b16 %v6661, %v6660
        %v6764 = vpack.c.b16 %v6663, %v6662
        %v6765 = vpack.c.b16 %v6665, %v6664
        %v6766 = vpack.c.b16 %v6667, %v6666
        %v6767 = vpack.c.b16 %v6669, %v6668
        %v6768 = vpack.c.b16 %v6671, %v6670
        %v6769 = vpack.c.b16 %v6673, %v6672
        %v6770 = vpack.c.b16 %v6675, %v6674
        %v6771 = vpack.c.b16 %v6677, %v6676
        %v6772 = vpack.c.b16 %v6679, %v6678
        %v6773 = vpack.c.b16 %v6681, %v6680
        %v6774 = vpack.c.b16 %v6683, %v6682
        %v6775 = vpack.c.b16 %v6685, %v6684
        %v6776 = vpack.c.b16 %v6687, %v6686
        %v6777 = vpack.c.b16 %v6689, %v6688
        %6866 = vmatprep.subr.bf16.mxu0 0
        %6867 = vmatpush1.bf16.msra.mxu0 %v6697
        %6868 = vmatprep.subr.bf16.mxu0 0
        %6869 = vmatpush1.bf16.msra.mxu0 %v6696
        %6870 = vmatprep.subr.bf16.mxu0 0
        %6871 = vmatpush1.bf16.msra.mxu0 %v6695
        %6872 = vmatprep.subr.bf16.mxu0 0
        %6873 = vmatpush1.bf16.msra.mxu0 %v6694
        %6874 = vmatprep.subr.bf16.mxu0 0
        %6875 = vmatpush1.bf16.msra.mxu0 %v6693
        %6876 = vmatprep.subr.bf16.mxu0 0
        %6877 = vmatpush1.bf16.msra.mxu0 %v6692
        %6878 = vmatprep.subr.bf16.mxu0 0
        %6879 = vmatpush1.bf16.msra.mxu0 %v6691
        %6880 = vmatprep.subr.bf16.mxu0 0
        %6881 = vmatpush1.bf16.msra.mxu0 %v6690
        %6882 = vmatprep.subr.bf16.mxu0 0
        %6883 = vmatpush2.bf16.msra.mxu0 %v6705
        %6884 = vmatprep.subr.bf16.mxu0 0
        %6885 = vmatpush2.bf16.msra.mxu0 %v6704
        %6886 = vmatprep.subr.bf16.mxu0 0
        %6887 = vmatpush2.bf16.msra.mxu0 %v6703
        %6888 = vmatprep.subr.bf16.mxu0 0
        %6889 = vmatpush2.bf16.msra.mxu0 %v6702
        %6890 = vmatprep.subr.bf16.mxu0 0
        %6891 = vmatpush2.bf16.msra.mxu0 %v6701
        %6892 = vmatprep.subr.bf16.mxu0 0
        %6893 = vmatpush2.bf16.msra.mxu0 %v6700
        %6894 = vmatprep.subr.bf16.mxu0 0
        %6895 = vmatpush2.bf16.msra.mxu0 %v6699
        %6896 = vmatprep.subr.bf16.mxu0 0
        %6897 = vmatpush2.bf16.msra.mxu0 %v6698
        %6898 = vmatprep.mubr.bf16.mxu0 %v5980
        %6899 = vmatmul.mubr.bf16.gmra.mxu0 %v5979
        %v6900 = vpop.f32.mrf.mxu0
        %v6901 = vadd.f32 %v6336, %v6900
        %v6902 = vpop.f32.mrf.mxu0
        %v6903 = vpop.f32.mrf.mxu0
        %v6904 = vadd.f32 %v6336, %v6903
        %v6905 = vpop.f32.mrf.mxu0
        %6906 = vmatprep.mubr.bf16.mxu0 %v5991
        %6907 = vmatmul.mubr.bf16.gmra.mxu0 %v5990
        %v6908 = vpop.f32.mrf.mxu0
        %v6909 = vadd.f32 %v6336, %v6908
        %v6910 = vpop.f32.mrf.mxu0
        %v6911 = vpop.f32.mrf.mxu0
        %v6912 = vadd.f32 %v6336, %v6911
        %v6913 = vpop.f32.mrf.mxu0
        %6914 = vmatprep.mubr.bf16.mxu0 %v6002
        %6915 = vmatmul.mubr.bf16.gmra.mxu0 %v6001
        %v6916 = vpop.f32.mrf.mxu0
        %v6917 = vadd.f32 %v6336, %v6916
        %v6918 = vpop.f32.mrf.mxu0
        %v6919 = vpop.f32.mrf.mxu0
        %v6920 = vadd.f32 %v6336, %v6919
        %v6921 = vpop.f32.mrf.mxu0
        %6922 = vmatprep.mubr.bf16.mxu0 %v6013
        %6923 = vmatmul.mubr.bf16.gmra.mxu0 %v6012
        %v6924 = vpop.f32.mrf.mxu0
        %v6925 = vadd.f32 %v6336, %v6924
        %v6926 = vpop.f32.mrf.mxu0
        %v6927 = vpop.f32.mrf.mxu0
        %v6928 = vadd.f32 %v6336, %v6927
        %v6929 = vpop.f32.mrf.mxu0
        %6930 = vmatprep.mubr.bf16.mxu0 %v6024
        %6931 = vmatmul.mubr.bf16.gmra.mxu0 %v6023
        %v6932 = vpop.f32.mrf.mxu0
        %v6933 = vadd.f32 %v6336, %v6932
        %v6934 = vpop.f32.mrf.mxu0
        %v6935 = vpop.f32.mrf.mxu0
        %v6936 = vadd.f32 %v6336, %v6935
        %v6937 = vpop.f32.mrf.mxu0
        %6938 = vmatprep.mubr.bf16.mxu0 %v6035
        %6939 = vmatmul.mubr.bf16.gmra.mxu0 %v6034
        %v6940 = vpop.f32.mrf.mxu0
        %v6941 = vadd.f32 %v6336, %v6940
        %v6942 = vpop.f32.mrf.mxu0
        %v6943 = vpop.f32.mrf.mxu0
        %v6944 = vadd.f32 %v6336, %v6943
        %v6945 = vpop.f32.mrf.mxu0
        %6946 = vmatprep.mubr.bf16.mxu0 %v6046
        %6947 = vmatmul.mubr.bf16.gmra.mxu0 %v6045
        %v6948 = vpop.f32.mrf.mxu0
        %v6949 = vadd.f32 %v6336, %v6948
        %v6950 = vpop.f32.mrf.mxu0
        %v6951 = vpop.f32.mrf.mxu0
        %v6952 = vadd.f32 %v6336, %v6951
        %v6953 = vpop.f32.mrf.mxu0
        %6954 = vmatprep.mubr.bf16.mxu0 %v6057
        %6955 = vmatmul.mubr.bf16.gmra.mxu0 %v6056
        %v6956 = vpop.f32.mrf.mxu0
        %v6957 = vadd.f32 %v6336, %v6956
        %v6958 = vpop.f32.mrf.mxu0
        %v6959 = vpop.f32.mrf.mxu0
        %v6960 = vadd.f32 %v6336, %v6959
        %v6961 = vpop.f32.mrf.mxu0
        %6962 = vmatprep.mubr.bf16.mxu0 %v6068
        %6963 = vmatmul.mubr.bf16.gmra.mxu0 %v6067
        %v6964 = vpop.f32.mrf.mxu0
        %v6965 = vadd.f32 %v6336, %v6964
        %v6966 = vpop.f32.mrf.mxu0
        %v6967 = vpop.f32.mrf.mxu0
        %v6968 = vadd.f32 %v6336, %v6967
        %v6969 = vpop.f32.mrf.mxu0
        %6970 = vmatprep.mubr.bf16.mxu0 %v6079
        %6971 = vmatmul.mubr.bf16.gmra.mxu0 %v6078
        %v6972 = vpop.f32.mrf.mxu0
        %v6973 = vadd.f32 %v6336, %v6972
        %v6974 = vpop.f32.mrf.mxu0
        %v6975 = vpop.f32.mrf.mxu0
        %v6976 = vadd.f32 %v6336, %v6975
        %v6977 = vpop.f32.mrf.mxu0
        %6978 = vmatprep.mubr.bf16.mxu0 %v6090
        %6979 = vmatmul.mubr.bf16.gmra.mxu0 %v6089
        %v6980 = vpop.f32.mrf.mxu0
        %v6981 = vadd.f32 %v6336, %v6980
        %v6982 = vpop.f32.mrf.mxu0
        %v6983 = vpop.f32.mrf.mxu0
        %v6984 = vadd.f32 %v6336, %v6983
        %v6985 = vpop.f32.mrf.mxu0
        %6986 = vmatprep.mubr.bf16.mxu0 %v6101
        %6987 = vmatmul.mubr.bf16.gmra.mxu0 %v6100
        %v6988 = vpop.f32.mrf.mxu0
        %v6989 = vadd.f32 %v6336, %v6988
        %v6990 = vpop.f32.mrf.mxu0
        %v6991 = vpop.f32.mrf.mxu0
        %v6992 = vadd.f32 %v6336, %v6991
        %v6993 = vpop.f32.mrf.mxu0
        %6994 = vmatprep.mubr.bf16.mxu0 %v6112
        %6995 = vmatmul.mubr.bf16.gmra.mxu0 %v6111
        %v6996 = vpop.f32.mrf.mxu0
        %v6997 = vadd.f32 %v6336, %v6996
        %v6998 = vpop.f32.mrf.mxu0
        %v6999 = vpop.f32.mrf.mxu0
        %v7000 = vadd.f32 %v6336, %v6999
        %v7001 = vpop.f32.mrf.mxu0
        %7002 = vmatprep.mubr.bf16.mxu0 %v6123
        %7003 = vmatmul.mubr.bf16.gmra.mxu0 %v6122
        %v7004 = vpop.f32.mrf.mxu0
        %v7005 = vadd.f32 %v6336, %v7004
        %v7006 = vpop.f32.mrf.mxu0
        %v7007 = vpop.f32.mrf.mxu0
        %v7008 = vadd.f32 %v6336, %v7007
        %v7009 = vpop.f32.mrf.mxu0
        %7010 = vmatprep.mubr.bf16.mxu0 %v6134
        %7011 = vmatmul.mubr.bf16.gmra.mxu0 %v6133
        %v7012 = vpop.f32.mrf.mxu0
        %v7013 = vadd.f32 %v6336, %v7012
        %v7014 = vpop.f32.mrf.mxu0
        %v7015 = vpop.f32.mrf.mxu0
        %v7016 = vadd.f32 %v6336, %v7015
        %v7017 = vpop.f32.mrf.mxu0
        %7018 = vmatprep.mubr.bf16.mxu0 %v6145
        %7019 = vmatmul.mubr.bf16.gmra.mxu0 %v6144
        %v7020 = vpop.f32.mrf.mxu0
        %v7021 = vadd.f32 %v6336, %v7020
        %v7022 = vpop.f32.mrf.mxu0
        %v7023 = vpop.f32.mrf.mxu0
        %v7024 = vadd.f32 %v6336, %v7023
        %v7025 = vpop.f32.mrf.mxu0
        %7026 = vdwg.mxu0
        %7027 = vmatprep.subr.bf16.mxu0 0
        %7028 = vmatpush1.bf16.msra.mxu0 %v6713
        %7029 = vmatprep.subr.bf16.mxu0 0
        %7030 = vmatpush1.bf16.msra.mxu0 %v6712
        %7031 = vmatprep.subr.bf16.mxu0 0
        %7032 = vmatpush1.bf16.msra.mxu0 %v6711
        %7033 = vmatprep.subr.bf16.mxu0 0
        %7034 = vmatpush1.bf16.msra.mxu0 %v6710
        %7035 = vmatprep.subr.bf16.mxu0 0
        %7036 = vmatpush1.bf16.msra.mxu0 %v6709
        %7037 = vmatprep.subr.bf16.mxu0 0
        %7038 = vmatpush1.bf16.msra.mxu0 %v6708
        %7039 = vmatprep.subr.bf16.mxu0 0
        %7040 = vmatpush1.bf16.msra.mxu0 %v6707
        %7041 = vmatprep.subr.bf16.mxu0 0
        %7042 = vmatpush1.bf16.msra.mxu0 %v6706
        %7043 = vmatprep.subr.bf16.mxu0 0
        %7044 = vmatpush2.bf16.msra.mxu0 %v6721
        %7045 = vmatprep.subr.bf16.mxu0 0
        %7046 = vmatpush2.bf16.msra.mxu0 %v6720
        %7047 = vmatprep.subr.bf16.mxu0 0
        %7048 = vmatpush2.bf16.msra.mxu0 %v6719
        %7049 = vmatprep.subr.bf16.mxu0 0
        %7050 = vmatpush2.bf16.msra.mxu0 %v6718
        %7051 = vmatprep.subr.bf16.mxu0 0
        %7052 = vmatpush2.bf16.msra.mxu0 %v6717
        %7053 = vmatprep.subr.bf16.mxu0 0
        %7054 = vmatpush2.bf16.msra.mxu0 %v6716
        %7055 = vmatprep.subr.bf16.mxu0 0
        %7056 = vmatpush2.bf16.msra.mxu0 %v6715
        %7057 = vmatprep.subr.bf16.mxu0 0
        %7058 = vmatpush2.bf16.msra.mxu0 %v6714
        %7059 = vmatprep.mubr.bf16.mxu0 %v5982
        %7060 = vmatmul.mubr.bf16.gmra.mxu0 %v5981
        %v7061 = vpop.f32.mrf.mxu0
        %v7062 = vadd.f32 %v6901, %v7061
        %v7063 = vpop.f32.mrf.mxu0
        %v7064 = vpop.f32.mrf.mxu0
        %v7065 = vadd.f32 %v6904, %v7064
        %v7066 = vpop.f32.mrf.mxu0
        %7067 = vmatprep.mubr.bf16.mxu0 %v5993
        %7068 = vmatmul.mubr.bf16.gmra.mxu0 %v5992
        %v7069 = vpop.f32.mrf.mxu0
        %v7070 = vadd.f32 %v6909, %v7069
        %v7071 = vpop.f32.mrf.mxu0
        %v7072 = vpop.f32.mrf.mxu0
        %v7073 = vadd.f32 %v6912, %v7072
        %v7074 = vpop.f32.mrf.mxu0
        %7075 = vmatprep.mubr.bf16.mxu0 %v6004
        %7076 = vmatmul.mubr.bf16.gmra.mxu0 %v6003
        %v7077 = vpop.f32.mrf.mxu0
        %v7078 = vadd.f32 %v6917, %v7077
        %v7079 = vpop.f32.mrf.mxu0
        %v7080 = vpop.f32.mrf.mxu0
        %v7081 = vadd.f32 %v6920, %v7080
        %v7082 = vpop.f32.mrf.mxu0
        %7083 = vmatprep.mubr.bf16.mxu0 %v6015
        %7084 = vmatmul.mubr.bf16.gmra.mxu0 %v6014
        %v7085 = vpop.f32.mrf.mxu0
        %v7086 = vadd.f32 %v6925, %v7085
        %v7087 = vpop.f32.mrf.mxu0
        %v7088 = vpop.f32.mrf.mxu0
        %v7089 = vadd.f32 %v6928, %v7088
        %v7090 = vpop.f32.mrf.mxu0
        %7091 = vmatprep.mubr.bf16.mxu0 %v6026
        %7092 = vmatmul.mubr.bf16.gmra.mxu0 %v6025
        %v7093 = vpop.f32.mrf.mxu0
        %v7094 = vadd.f32 %v6933, %v7093
        %v7095 = vpop.f32.mrf.mxu0
        %v7096 = vpop.f32.mrf.mxu0
        %v7097 = vadd.f32 %v6936, %v7096
        %v7098 = vpop.f32.mrf.mxu0
        %7099 = vmatprep.mubr.bf16.mxu0 %v6037
        %7100 = vmatmul.mubr.bf16.gmra.mxu0 %v6036
        %v7101 = vpop.f32.mrf.mxu0
        %v7102 = vadd.f32 %v6941, %v7101
        %v7103 = vpop.f32.mrf.mxu0
        %v7104 = vpop.f32.mrf.mxu0
        %v7105 = vadd.f32 %v6944, %v7104
        %v7106 = vpop.f32.mrf.mxu0
        %7107 = vmatprep.mubr.bf16.mxu0 %v6048
        %7108 = vmatmul.mubr.bf16.gmra.mxu0 %v6047
        %v7109 = vpop.f32.mrf.mxu0
        %v7110 = vadd.f32 %v6949, %v7109
        %v7111 = vpop.f32.mrf.mxu0
        %v7112 = vpop.f32.mrf.mxu0
        %v7113 = vadd.f32 %v6952, %v7112
        %v7114 = vpop.f32.mrf.mxu0
        %7115 = vmatprep.mubr.bf16.mxu0 %v6059
        %7116 = vmatmul.mubr.bf16.gmra.mxu0 %v6058
        %v7117 = vpop.f32.mrf.mxu0
        %v7118 = vadd.f32 %v6957, %v7117
        %v7119 = vpop.f32.mrf.mxu0
        %v7120 = vpop.f32.mrf.mxu0
        %v7121 = vadd.f32 %v6960, %v7120
        %v7122 = vpop.f32.mrf.mxu0
        %7123 = vmatprep.mubr.bf16.mxu0 %v6070
        %7124 = vmatmul.mubr.bf16.gmra.mxu0 %v6069
        %v7125 = vpop.f32.mrf.mxu0
        %v7126 = vadd.f32 %v6965, %v7125
        %v7127 = vpop.f32.mrf.mxu0
        %v7128 = vpop.f32.mrf.mxu0
        %v7129 = vadd.f32 %v6968, %v7128
        %v7130 = vpop.f32.mrf.mxu0
        %7131 = vmatprep.mubr.bf16.mxu0 %v6081
        %7132 = vmatmul.mubr.bf16.gmra.mxu0 %v6080
        %v7133 = vpop.f32.mrf.mxu0
        %v7134 = vadd.f32 %v6973, %v7133
        %v7135 = vpop.f32.mrf.mxu0
        %v7136 = vpop.f32.mrf.mxu0
        %v7137 = vadd.f32 %v6976, %v7136
        %v7138 = vpop.f32.mrf.mxu0
        %7139 = vmatprep.mubr.bf16.mxu0 %v6092
        %7140 = vmatmul.mubr.bf16.gmra.mxu0 %v6091
        %v7141 = vpop.f32.mrf.mxu0
        %v7142 = vadd.f32 %v6981, %v7141
        %v7143 = vpop.f32.mrf.mxu0
        %v7144 = vpop.f32.mrf.mxu0
        %v7145 = vadd.f32 %v6984, %v7144
        %v7146 = vpop.f32.mrf.mxu0
        %7147 = vmatprep.mubr.bf16.mxu0 %v6103
        %7148 = vmatmul.mubr.bf16.gmra.mxu0 %v6102
        %v7149 = vpop.f32.mrf.mxu0
        %v7150 = vadd.f32 %v6989, %v7149
        %v7151 = vpop.f32.mrf.mxu0
        %v7152 = vpop.f32.mrf.mxu0
        %v7153 = vadd.f32 %v6992, %v7152
        %v7154 = vpop.f32.mrf.mxu0
        %7155 = vmatprep.mubr.bf16.mxu0 %v6114
        %7156 = vmatmul.mubr.bf16.gmra.mxu0 %v6113
        %v7157 = vpop.f32.mrf.mxu0
        %v7158 = vadd.f32 %v6997, %v7157
        %v7159 = vpop.f32.mrf.mxu0
        %v7160 = vpop.f32.mrf.mxu0
        %v7161 = vadd.f32 %v7000, %v7160
        %v7162 = vpop.f32.mrf.mxu0
        %7163 = vmatprep.mubr.bf16.mxu0 %v6125
        %7164 = vmatmul.mubr.bf16.gmra.mxu0 %v6124
        %v7165 = vpop.f32.mrf.mxu0
        %v7166 = vadd.f32 %v7005, %v7165
        %v7167 = vpop.f32.mrf.mxu0
        %v7168 = vpop.f32.mrf.mxu0
        %v7169 = vadd.f32 %v7008, %v7168
        %v7170 = vpop.f32.mrf.mxu0
        %7171 = vmatprep.mubr.bf16.mxu0 %v6136
        %7172 = vmatmul.mubr.bf16.gmra.mxu0 %v6135
        %v7173 = vpop.f32.mrf.mxu0
        %v7174 = vadd.f32 %v7013, %v7173
        %v7175 = vpop.f32.mrf.mxu0
        %v7176 = vpop.f32.mrf.mxu0
        %v7177 = vadd.f32 %v7016, %v7176
        %v7178 = vpop.f32.mrf.mxu0
        %7179 = vmatprep.mubr.bf16.mxu0 %v6147
        %7180 = vmatmul.mubr.bf16.gmra.mxu0 %v6146
        %v7181 = vpop.f32.mrf.mxu0
        %v7182 = vadd.f32 %v7021, %v7181
        %v7183 = vpop.f32.mrf.mxu0
        %v7184 = vpop.f32.mrf.mxu0
        %v7185 = vadd.f32 %v7024, %v7184
        %v7186 = vpop.f32.mrf.mxu0
        %7187 = vdwg.mxu0
        %7188 = vmatprep.subr.bf16.mxu0 0
        %7189 = vmatpush1.bf16.msra.mxu0 %v6729
        %7190 = vmatprep.subr.bf16.mxu0 0
        %7191 = vmatpush1.bf16.msra.mxu0 %v6728
        %7192 = vmatprep.subr.bf16.mxu0 0
        %7193 = vmatpush1.bf16.msra.mxu0 %v6727
        %7194 = vmatprep.subr.bf16.mxu0 0
        %7195 = vmatpush1.bf16.msra.mxu0 %v6726
        %7196 = vmatprep.subr.bf16.mxu0 0
        %7197 = vmatpush1.bf16.msra.mxu0 %v6725
        %7198 = vmatprep.subr.bf16.mxu0 0
        %7199 = vmatpush1.bf16.msra.mxu0 %v6724
        %7200 = vmatprep.subr.bf16.mxu0 0
        %7201 = vmatpush1.bf16.msra.mxu0 %v6723
        %7202 = vmatprep.subr.bf16.mxu0 0
        %7203 = vmatpush1.bf16.msra.mxu0 %v6722
        %7204 = vmatprep.subr.bf16.mxu0 0
        %7205 = vmatpush2.bf16.msra.mxu0 %v6737
        %7206 = vmatprep.subr.bf16.mxu0 0
        %7207 = vmatpush2.bf16.msra.mxu0 %v6736
        %7208 = vmatprep.subr.bf16.mxu0 0
        %7209 = vmatpush2.bf16.msra.mxu0 %v6735
        %7210 = vmatprep.subr.bf16.mxu0 0
        %7211 = vmatpush2.bf16.msra.mxu0 %v6734
        %7212 = vmatprep.subr.bf16.mxu0 0
        %7213 = vmatpush2.bf16.msra.mxu0 %v6733
        %7214 = vmatprep.subr.bf16.mxu0 0
        %7215 = vmatpush2.bf16.msra.mxu0 %v6732
        %7216 = vmatprep.subr.bf16.mxu0 0
        %7217 = vmatpush2.bf16.msra.mxu0 %v6731
        %7218 = vmatprep.subr.bf16.mxu0 0
        %7219 = vmatpush2.bf16.msra.mxu0 %v6730
        %7220 = vmatprep.mubr.bf16.mxu0 %v5984
        %7221 = vmatmul.mubr.bf16.gmra.mxu0 %v5983
        %v7222 = vpop.f32.mrf.mxu0
        %v7223 = vadd.f32 %v7062, %v7222
        %v7224 = vpop.f32.mrf.mxu0
        %v7225 = vpop.f32.mrf.mxu0
        %v7226 = vadd.f32 %v7065, %v7225
        %v7227 = vpop.f32.mrf.mxu0
        %7228 = vmatprep.mubr.bf16.mxu0 %v5995
        %7229 = vmatmul.mubr.bf16.gmra.mxu0 %v5994
        %v7230 = vpop.f32.mrf.mxu0
        %v7231 = vadd.f32 %v7070, %v7230
        %v7232 = vpop.f32.mrf.mxu0
        %v7233 = vpop.f32.mrf.mxu0
        %v7234 = vadd.f32 %v7073, %v7233
        %v7235 = vpop.f32.mrf.mxu0
        %7236 = vmatprep.mubr.bf16.mxu0 %v6006
        %7237 = vmatmul.mubr.bf16.gmra.mxu0 %v6005
        %v7238 = vpop.f32.mrf.mxu0
        %v7239 = vadd.f32 %v7078, %v7238
        %v7240 = vpop.f32.mrf.mxu0
        %v7241 = vpop.f32.mrf.mxu0
        %v7242 = vadd.f32 %v7081, %v7241
        %v7243 = vpop.f32.mrf.mxu0
        %7244 = vmatprep.mubr.bf16.mxu0 %v6017
        %7245 = vmatmul.mubr.bf16.gmra.mxu0 %v6016
        %v7246 = vpop.f32.mrf.mxu0
        %v7247 = vadd.f32 %v7086, %v7246
        %v7248 = vpop.f32.mrf.mxu0
        %v7249 = vpop.f32.mrf.mxu0
        %v7250 = vadd.f32 %v7089, %v7249
        %v7251 = vpop.f32.mrf.mxu0
        %7252 = vmatprep.mubr.bf16.mxu0 %v6028
        %7253 = vmatmul.mubr.bf16.gmra.mxu0 %v6027
        %v7254 = vpop.f32.mrf.mxu0
        %v7255 = vadd.f32 %v7094, %v7254
        %v7256 = vpop.f32.mrf.mxu0
        %v7257 = vpop.f32.mrf.mxu0
        %v7258 = vadd.f32 %v7097, %v7257
        %v7259 = vpop.f32.mrf.mxu0
        %7260 = vmatprep.mubr.bf16.mxu0 %v6039
        %7261 = vmatmul.mubr.bf16.gmra.mxu0 %v6038
        %v7262 = vpop.f32.mrf.mxu0
        %v7263 = vadd.f32 %v7102, %v7262
        %v7264 = vpop.f32.mrf.mxu0
        %v7265 = vpop.f32.mrf.mxu0
        %v7266 = vadd.f32 %v7105, %v7265
        %v7267 = vpop.f32.mrf.mxu0
        %7268 = vmatprep.mubr.bf16.mxu0 %v6050
        %7269 = vmatmul.mubr.bf16.gmra.mxu0 %v6049
        %v7270 = vpop.f32.mrf.mxu0
        %v7271 = vadd.f32 %v7110, %v7270
        %v7272 = vpop.f32.mrf.mxu0
        %v7273 = vpop.f32.mrf.mxu0
        %v7274 = vadd.f32 %v7113, %v7273
        %v7275 = vpop.f32.mrf.mxu0
        %7276 = vmatprep.mubr.bf16.mxu0 %v6061
        %7277 = vmatmul.mubr.bf16.gmra.mxu0 %v6060
        %v7278 = vpop.f32.mrf.mxu0
        %v7279 = vadd.f32 %v7118, %v7278
        %v7280 = vpop.f32.mrf.mxu0
        %v7281 = vpop.f32.mrf.mxu0
        %v7282 = vadd.f32 %v7121, %v7281
        %v7283 = vpop.f32.mrf.mxu0
        %7284 = vmatprep.mubr.bf16.mxu0 %v6072
        %7285 = vmatmul.mubr.bf16.gmra.mxu0 %v6071
        %v7286 = vpop.f32.mrf.mxu0
        %v7287 = vadd.f32 %v7126, %v7286
        %v7288 = vpop.f32.mrf.mxu0
        %v7289 = vpop.f32.mrf.mxu0
        %v7290 = vadd.f32 %v7129, %v7289
        %v7291 = vpop.f32.mrf.mxu0
        %7292 = vmatprep.mubr.bf16.mxu0 %v6083
        %7293 = vmatmul.mubr.bf16.gmra.mxu0 %v6082
        %v7294 = vpop.f32.mrf.mxu0
        %v7295 = vadd.f32 %v7134, %v7294
        %v7296 = vpop.f32.mrf.mxu0
        %v7297 = vpop.f32.mrf.mxu0
        %v7298 = vadd.f32 %v7137, %v7297
        %v7299 = vpop.f32.mrf.mxu0
        %7300 = vmatprep.mubr.bf16.mxu0 %v6094
        %7301 = vmatmul.mubr.bf16.gmra.mxu0 %v6093
        %v7302 = vpop.f32.mrf.mxu0
        %v7303 = vadd.f32 %v7142, %v7302
        %v7304 = vpop.f32.mrf.mxu0
        %v7305 = vpop.f32.mrf.mxu0
        %v7306 = vadd.f32 %v7145, %v7305
        %v7307 = vpop.f32.mrf.mxu0
        %7308 = vmatprep.mubr.bf16.mxu0 %v6105
        %7309 = vmatmul.mubr.bf16.gmra.mxu0 %v6104
        %v7310 = vpop.f32.mrf.mxu0
        %v7311 = vadd.f32 %v7150, %v7310
        %v7312 = vpop.f32.mrf.mxu0
        %v7313 = vpop.f32.mrf.mxu0
        %v7314 = vadd.f32 %v7153, %v7313
        %v7315 = vpop.f32.mrf.mxu0
        %7316 = vmatprep.mubr.bf16.mxu0 %v6116
        %7317 = vmatmul.mubr.bf16.gmra.mxu0 %v6115
        %v7318 = vpop.f32.mrf.mxu0
        %v7319 = vadd.f32 %v7158, %v7318
        %v7320 = vpop.f32.mrf.mxu0
        %v7321 = vpop.f32.mrf.mxu0
        %v7322 = vadd.f32 %v7161, %v7321
        %v7323 = vpop.f32.mrf.mxu0
        %7324 = vmatprep.mubr.bf16.mxu0 %v6127
        %7325 = vmatmul.mubr.bf16.gmra.mxu0 %v6126
        %v7326 = vpop.f32.mrf.mxu0
        %v7327 = vadd.f32 %v7166, %v7326
        %v7328 = vpop.f32.mrf.mxu0
        %v7329 = vpop.f32.mrf.mxu0
        %v7330 = vadd.f32 %v7169, %v7329
        %v7331 = vpop.f32.mrf.mxu0
        %7332 = vmatprep.mubr.bf16.mxu0 %v6138
        %7333 = vmatmul.mubr.bf16.gmra.mxu0 %v6137
        %v7334 = vpop.f32.mrf.mxu0
        %v7335 = vadd.f32 %v7174, %v7334
        %v7336 = vpop.f32.mrf.mxu0
        %v7337 = vpop.f32.mrf.mxu0
        %v7338 = vadd.f32 %v7177, %v7337
        %v7339 = vpop.f32.mrf.mxu0
        %7340 = vmatprep.mubr.bf16.mxu0 %v6149
        %7341 = vmatmul.mubr.bf16.gmra.mxu0 %v6148
        %v7342 = vpop.f32.mrf.mxu0
        %v7343 = vadd.f32 %v7182, %v7342
        %v7344 = vpop.f32.mrf.mxu0
        %v7345 = vpop.f32.mrf.mxu0
        %v7346 = vadd.f32 %v7185, %v7345
        %v7347 = vpop.f32.mrf.mxu0
        %7348 = vdwg.mxu0
        %7349 = vmatprep.subr.bf16.mxu0 0
        %7350 = vmatpush1.bf16.msra.mxu0 %v6745
        %7351 = vmatprep.subr.bf16.mxu0 0
        %7352 = vmatpush1.bf16.msra.mxu0 %v6744
        %7353 = vmatprep.subr.bf16.mxu0 0
        %7354 = vmatpush1.bf16.msra.mxu0 %v6743
        %7355 = vmatprep.subr.bf16.mxu0 0
        %7356 = vmatpush1.bf16.msra.mxu0 %v6742
        %7357 = vmatprep.subr.bf16.mxu0 0
        %7358 = vmatpush1.bf16.msra.mxu0 %v6741
        %7359 = vmatprep.subr.bf16.mxu0 0
        %7360 = vmatpush1.bf16.msra.mxu0 %v6740
        %7361 = vmatprep.subr.bf16.mxu0 0
        %7362 = vmatpush1.bf16.msra.mxu0 %v6739
        %7363 = vmatprep.subr.bf16.mxu0 0
        %7364 = vmatpush1.bf16.msra.mxu0 %v6738
        %7365 = vmatprep.subr.bf16.mxu0 0
        %7366 = vmatpush2.bf16.msra.mxu0 %v6753
        %7367 = vmatprep.subr.bf16.mxu0 0
        %7368 = vmatpush2.bf16.msra.mxu0 %v6752
        %7369 = vmatprep.subr.bf16.mxu0 0
        %7370 = vmatpush2.bf16.msra.mxu0 %v6751
        %7371 = vmatprep.subr.bf16.mxu0 0
        %7372 = vmatpush2.bf16.msra.mxu0 %v6750
        %7373 = vmatprep.subr.bf16.mxu0 0
        %7374 = vmatpush2.bf16.msra.mxu0 %v6749
        %7375 = vmatprep.subr.bf16.mxu0 0
        %7376 = vmatpush2.bf16.msra.mxu0 %v6748
        %7377 = vmatprep.subr.bf16.mxu0 0
        %7378 = vmatpush2.bf16.msra.mxu0 %v6747
        %7379 = vmatprep.subr.bf16.mxu0 0
        %7380 = vmatpush2.bf16.msra.mxu0 %v6746
        %7381 = vmatprep.mubr.bf16.mxu0 %v5986
        %7382 = vmatmul.mubr.bf16.gmra.mxu0 %v5985
        %v7383 = vpop.f32.mrf.mxu0
        %v7384 = vadd.f32 %v7223, %v7383
        %v7385 = vpop.f32.mrf.mxu0
        %v7386 = vpop.f32.mrf.mxu0
        %v7387 = vadd.f32 %v7226, %v7386
        %v7388 = vpop.f32.mrf.mxu0
        %7389 = vmatprep.mubr.bf16.mxu0 %v5997
        %7390 = vmatmul.mubr.bf16.gmra.mxu0 %v5996
        %v7391 = vpop.f32.mrf.mxu0
        %v7392 = vadd.f32 %v7231, %v7391
        %v7393 = vpop.f32.mrf.mxu0
        %v7394 = vpop.f32.mrf.mxu0
        %v7395 = vadd.f32 %v7234, %v7394
        %v7396 = vpop.f32.mrf.mxu0
        %7397 = vmatprep.mubr.bf16.mxu0 %v6008
        %7398 = vmatmul.mubr.bf16.gmra.mxu0 %v6007
        %v7399 = vpop.f32.mrf.mxu0
        %v7400 = vadd.f32 %v7239, %v7399
        %v7401 = vpop.f32.mrf.mxu0
        %v7402 = vpop.f32.mrf.mxu0
        %v7403 = vadd.f32 %v7242, %v7402
        %v7404 = vpop.f32.mrf.mxu0
        %7405 = vmatprep.mubr.bf16.mxu0 %v6019
        %7406 = vmatmul.mubr.bf16.gmra.mxu0 %v6018
        %v7407 = vpop.f32.mrf.mxu0
        %v7408 = vadd.f32 %v7247, %v7407
        %v7409 = vpop.f32.mrf.mxu0
        %v7410 = vpop.f32.mrf.mxu0
        %v7411 = vadd.f32 %v7250, %v7410
        %v7412 = vpop.f32.mrf.mxu0
        %7413 = vmatprep.mubr.bf16.mxu0 %v6030
        %7414 = vmatmul.mubr.bf16.gmra.mxu0 %v6029
        %v7415 = vpop.f32.mrf.mxu0
        %v7416 = vadd.f32 %v7255, %v7415
        %v7417 = vpop.f32.mrf.mxu0
        %v7418 = vpop.f32.mrf.mxu0
        %v7419 = vadd.f32 %v7258, %v7418
        %v7420 = vpop.f32.mrf.mxu0
        %7421 = vmatprep.mubr.bf16.mxu0 %v6041
        %7422 = vmatmul.mubr.bf16.gmra.mxu0 %v6040
        %v7423 = vpop.f32.mrf.mxu0
        %v7424 = vadd.f32 %v7263, %v7423
        %v7425 = vpop.f32.mrf.mxu0
        %v7426 = vpop.f32.mrf.mxu0
        %v7427 = vadd.f32 %v7266, %v7426
        %v7428 = vpop.f32.mrf.mxu0
        %7429 = vmatprep.mubr.bf16.mxu0 %v6052
        %7430 = vmatmul.mubr.bf16.gmra.mxu0 %v6051
        %v7431 = vpop.f32.mrf.mxu0
        %v7432 = vadd.f32 %v7271, %v7431
        %v7433 = vpop.f32.mrf.mxu0
        %v7434 = vpop.f32.mrf.mxu0
        %v7435 = vadd.f32 %v7274, %v7434
        %v7436 = vpop.f32.mrf.mxu0
        %7437 = vmatprep.mubr.bf16.mxu0 %v6063
        %7438 = vmatmul.mubr.bf16.gmra.mxu0 %v6062
        %v7439 = vpop.f32.mrf.mxu0
        %v7440 = vadd.f32 %v7279, %v7439
        %v7441 = vpop.f32.mrf.mxu0
        %v7442 = vpop.f32.mrf.mxu0
        %v7443 = vadd.f32 %v7282, %v7442
        %v7444 = vpop.f32.mrf.mxu0
        %7445 = vmatprep.mubr.bf16.mxu0 %v6074
        %7446 = vmatmul.mubr.bf16.gmra.mxu0 %v6073
        %v7447 = vpop.f32.mrf.mxu0
        %v7448 = vadd.f32 %v7287, %v7447
        %v7449 = vpop.f32.mrf.mxu0
        %v7450 = vpop.f32.mrf.mxu0
        %v7451 = vadd.f32 %v7290, %v7450
        %v7452 = vpop.f32.mrf.mxu0
        %7453 = vmatprep.mubr.bf16.mxu0 %v6085
        %7454 = vmatmul.mubr.bf16.gmra.mxu0 %v6084
        %v7455 = vpop.f32.mrf.mxu0
        %v7456 = vadd.f32 %v7295, %v7455
        %v7457 = vpop.f32.mrf.mxu0
        %v7458 = vpop.f32.mrf.mxu0
        %v7459 = vadd.f32 %v7298, %v7458
        %v7460 = vpop.f32.mrf.mxu0
        %7461 = vmatprep.mubr.bf16.mxu0 %v6096
        %7462 = vmatmul.mubr.bf16.gmra.mxu0 %v6095
        %v7463 = vpop.f32.mrf.mxu0
        %v7464 = vadd.f32 %v7303, %v7463
        %v7465 = vpop.f32.mrf.mxu0
        %v7466 = vpop.f32.mrf.mxu0
        %v7467 = vadd.f32 %v7306, %v7466
        %v7468 = vpop.f32.mrf.mxu0
        %7469 = vmatprep.mubr.bf16.mxu0 %v6107
        %7470 = vmatmul.mubr.bf16.gmra.mxu0 %v6106
        %v7471 = vpop.f32.mrf.mxu0
        %v7472 = vadd.f32 %v7311, %v7471
        %v7473 = vpop.f32.mrf.mxu0
        %v7474 = vpop.f32.mrf.mxu0
        %v7475 = vadd.f32 %v7314, %v7474
        %v7476 = vpop.f32.mrf.mxu0
        %7477 = vmatprep.mubr.bf16.mxu0 %v6118
        %7478 = vmatmul.mubr.bf16.gmra.mxu0 %v6117
        %v7479 = vpop.f32.mrf.mxu0
        %v7480 = vadd.f32 %v7319, %v7479
        %v7481 = vpop.f32.mrf.mxu0
        %v7482 = vpop.f32.mrf.mxu0
        %v7483 = vadd.f32 %v7322, %v7482
        %v7484 = vpop.f32.mrf.mxu0
        %7485 = vmatprep.mubr.bf16.mxu0 %v6129
        %7486 = vmatmul.mubr.bf16.gmra.mxu0 %v6128
        %v7487 = vpop.f32.mrf.mxu0
        %v7488 = vadd.f32 %v7327, %v7487
        %v7489 = vpop.f32.mrf.mxu0
        %v7490 = vpop.f32.mrf.mxu0
        %v7491 = vadd.f32 %v7330, %v7490
        %v7492 = vpop.f32.mrf.mxu0
        %7493 = vmatprep.mubr.bf16.mxu0 %v6140
        %7494 = vmatmul.mubr.bf16.gmra.mxu0 %v6139
        %v7495 = vpop.f32.mrf.mxu0
        %v7496 = vadd.f32 %v7335, %v7495
        %v7497 = vpop.f32.mrf.mxu0
        %v7498 = vpop.f32.mrf.mxu0
        %v7499 = vadd.f32 %v7338, %v7498
        %v7500 = vpop.f32.mrf.mxu0
        %7501 = vmatprep.mubr.bf16.mxu0 %v6151
        %7502 = vmatmul.mubr.bf16.gmra.mxu0 %v6150
        %v7503 = vpop.f32.mrf.mxu0
        %v7504 = vadd.f32 %v7343, %v7503
        %v7505 = vpop.f32.mrf.mxu0
        %v7506 = vpop.f32.mrf.mxu0
        %v7507 = vadd.f32 %v7346, %v7506
        %v7508 = vpop.f32.mrf.mxu0
        %7509 = vdwg.mxu0
        %7510 = vmatprep.subr.bf16.mxu0 0
        %7511 = vmatpush1.bf16.msra.mxu0 %v6761
        %7512 = vmatprep.subr.bf16.mxu0 0
        %7513 = vmatpush1.bf16.msra.mxu0 %v6760
        %7514 = vmatprep.subr.bf16.mxu0 0
        %7515 = vmatpush1.bf16.msra.mxu0 %v6759
        %7516 = vmatprep.subr.bf16.mxu0 0
        %7517 = vmatpush1.bf16.msra.mxu0 %v6758
        %7518 = vmatprep.subr.bf16.mxu0 0
        %7519 = vmatpush1.bf16.msra.mxu0 %v6757
        %7520 = vmatprep.subr.bf16.mxu0 0
        %7521 = vmatpush1.bf16.msra.mxu0 %v6756
        %7522 = vmatprep.subr.bf16.mxu0 0
        %7523 = vmatpush1.bf16.msra.mxu0 %v6755
        %7524 = vmatprep.subr.bf16.mxu0 0
        %7525 = vmatpush1.bf16.msra.mxu0 %v6754
        %7526 = vmatprep.subr.bf16.mxu0 0
        %7527 = vmatpush2.bf16.msra.mxu0 %v6769
        %7528 = vmatprep.subr.bf16.mxu0 0
        %7529 = vmatpush2.bf16.msra.mxu0 %v6768
        %7530 = vmatprep.subr.bf16.mxu0 0
        %7531 = vmatpush2.bf16.msra.mxu0 %v6767
        %7532 = vmatprep.subr.bf16.mxu0 0
        %7533 = vmatpush2.bf16.msra.mxu0 %v6766
        %7534 = vmatprep.subr.bf16.mxu0 0
        %7535 = vmatpush2.bf16.msra.mxu0 %v6765
        %7536 = vmatprep.subr.bf16.mxu0 0
        %7537 = vmatpush2.bf16.msra.mxu0 %v6764
        %7538 = vmatprep.subr.bf16.mxu0 0
        %7539 = vmatpush2.bf16.msra.mxu0 %v6763
        %7540 = vmatprep.subr.bf16.mxu0 0
        %7541 = vmatpush2.bf16.msra.mxu0 %v6762
        %7542 = vmatprep.mubr.bf16.mxu0 %v5988
        %7543 = vmatmul.mubr.bf16.gmra.mxu0 %v5987
        %v7544 = vpop.f32.mrf.mxu0
        %v7545 = vadd.f32 %v7384, %v7544
        %v7546 = vpop.f32.mrf.mxu0
        %v7547 = vpop.f32.mrf.mxu0
        %v7548 = vadd.f32 %v7387, %v7547
        %v7549 = vpop.f32.mrf.mxu0
        %7550 = vmatprep.mubr.bf16.mxu0 %v5999
        %7551 = vmatmul.mubr.bf16.gmra.mxu0 %v5998
        %v7552 = vpop.f32.mrf.mxu0
        %v7553 = vadd.f32 %v7392, %v7552
        %v7554 = vpop.f32.mrf.mxu0
        %v7555 = vpop.f32.mrf.mxu0
        %v7556 = vadd.f32 %v7395, %v7555
        %v7557 = vpop.f32.mrf.mxu0
        %7558 = vmatprep.mubr.bf16.mxu0 %v6010
        %7559 = vmatmul.mubr.bf16.gmra.mxu0 %v6009
        %v7560 = vpop.f32.mrf.mxu0
        %v7561 = vadd.f32 %v7400, %v7560
        %v7562 = vpop.f32.mrf.mxu0
        %v7563 = vpop.f32.mrf.mxu0
        %v7564 = vadd.f32 %v7403, %v7563
        %v7565 = vpop.f32.mrf.mxu0
        %7566 = vmatprep.mubr.bf16.mxu0 %v6021
        %7567 = vmatmul.mubr.bf16.gmra.mxu0 %v6020
        %v7568 = vpop.f32.mrf.mxu0
        %v7569 = vadd.f32 %v7408, %v7568
        %v7570 = vpop.f32.mrf.mxu0
        %v7571 = vpop.f32.mrf.mxu0
        %v7572 = vadd.f32 %v7411, %v7571
        %v7573 = vpop.f32.mrf.mxu0
        %7574 = vmatprep.mubr.bf16.mxu0 %v6032
        %7575 = vmatmul.mubr.bf16.gmra.mxu0 %v6031
        %v7576 = vpop.f32.mrf.mxu0
        %v7577 = vadd.f32 %v7416, %v7576
        %v7578 = vpop.f32.mrf.mxu0
        %v7579 = vpop.f32.mrf.mxu0
        %v7580 = vadd.f32 %v7419, %v7579
        %v7581 = vpop.f32.mrf.mxu0
        %7582 = vmatprep.mubr.bf16.mxu0 %v6043
        %7583 = vmatmul.mubr.bf16.gmra.mxu0 %v6042
        %v7584 = vpop.f32.mrf.mxu0
        %v7585 = vadd.f32 %v7424, %v7584
        %v7586 = vpop.f32.mrf.mxu0
        %v7587 = vpop.f32.mrf.mxu0
        %v7588 = vadd.f32 %v7427, %v7587
        %v7589 = vpop.f32.mrf.mxu0
        %7590 = vmatprep.mubr.bf16.mxu0 %v6054
        %7591 = vmatmul.mubr.bf16.gmra.mxu0 %v6053
        %v7592 = vpop.f32.mrf.mxu0
        %v7593 = vadd.f32 %v7432, %v7592
        %v7594 = vpop.f32.mrf.mxu0
        %v7595 = vpop.f32.mrf.mxu0
        %v7596 = vadd.f32 %v7435, %v7595
        %v7597 = vpop.f32.mrf.mxu0
        %7598 = vmatprep.mubr.bf16.mxu0 %v6065
        %7599 = vmatmul.mubr.bf16.gmra.mxu0 %v6064
        %v7600 = vpop.f32.mrf.mxu0
        %v7601 = vadd.f32 %v7440, %v7600
        %v7602 = vpop.f32.mrf.mxu0
        %v7603 = vpop.f32.mrf.mxu0
        %v7604 = vadd.f32 %v7443, %v7603
        %v7605 = vpop.f32.mrf.mxu0
        %7606 = vmatprep.mubr.bf16.mxu0 %v6076
        %7607 = vmatmul.mubr.bf16.gmra.mxu0 %v6075
        %v7608 = vpop.f32.mrf.mxu0
        %v7609 = vadd.f32 %v7448, %v7608
        %v7610 = vpop.f32.mrf.mxu0
        %v7611 = vpop.f32.mrf.mxu0
        %v7612 = vadd.f32 %v7451, %v7611
        %v7613 = vpop.f32.mrf.mxu0
        %7614 = vmatprep.mubr.bf16.mxu0 %v6087
        %7615 = vmatmul.mubr.bf16.gmra.mxu0 %v6086
        %v7616 = vpop.f32.mrf.mxu0
        %v7617 = vadd.f32 %v7456, %v7616
        %v7618 = vpop.f32.mrf.mxu0
        %v7619 = vpop.f32.mrf.mxu0
        %v7620 = vadd.f32 %v7459, %v7619
        %v7621 = vpop.f32.mrf.mxu0
        %7622 = vmatprep.mubr.bf16.mxu0 %v6098
        %7623 = vmatmul.mubr.bf16.gmra.mxu0 %v6097
        %v7624 = vpop.f32.mrf.mxu0
        %v7625 = vadd.f32 %v7464, %v7624
        %v7626 = vpop.f32.mrf.mxu0
        %v7627 = vpop.f32.mrf.mxu0
        %v7628 = vadd.f32 %v7467, %v7627
        %v7629 = vpop.f32.mrf.mxu0
        %7630 = vmatprep.mubr.bf16.mxu0 %v6109
        %7631 = vmatmul.mubr.bf16.gmra.mxu0 %v6108
        %v7632 = vpop.f32.mrf.mxu0
        %v7633 = vadd.f32 %v7472, %v7632
        %v7634 = vpop.f32.mrf.mxu0
        %v7635 = vpop.f32.mrf.mxu0
        %v7636 = vadd.f32 %v7475, %v7635
        %v7637 = vpop.f32.mrf.mxu0
        %7638 = vmatprep.mubr.bf16.mxu0 %v6120
        %7639 = vmatmul.mubr.bf16.gmra.mxu0 %v6119
        %v7640 = vpop.f32.mrf.mxu0
        %v7641 = vadd.f32 %v7480, %v7640
        %v7642 = vpop.f32.mrf.mxu0
        %v7643 = vpop.f32.mrf.mxu0
        %v7644 = vadd.f32 %v7483, %v7643
        %v7645 = vpop.f32.mrf.mxu0
        %7646 = vmatprep.mubr.bf16.mxu0 %v6131
        %7647 = vmatmul.mubr.bf16.gmra.mxu0 %v6130
        %v7648 = vpop.f32.mrf.mxu0
        %v7649 = vadd.f32 %v7488, %v7648
        %v7650 = vpop.f32.mrf.mxu0
        %v7651 = vpop.f32.mrf.mxu0
        %v7652 = vadd.f32 %v7491, %v7651
        %v7653 = vpop.f32.mrf.mxu0
        %7654 = vmatprep.mubr.bf16.mxu0 %v6142
        %7655 = vmatmul.mubr.bf16.gmra.mxu0 %v6141
        %v7656 = vpop.f32.mrf.mxu0
        %v7657 = vadd.f32 %v7496, %v7656
        %v7658 = vpop.f32.mrf.mxu0
        %v7659 = vpop.f32.mrf.mxu0
        %v7660 = vadd.f32 %v7499, %v7659
        %v7661 = vpop.f32.mrf.mxu0
        %7662 = vmatprep.mubr.bf16.mxu0 %v6153
        %7663 = vmatmul.mubr.bf16.gmra.mxu0 %v6152
        %v7664 = vpop.f32.mrf.mxu0
        %v7665 = vadd.f32 %v7504, %v7664
        %v7666 = vpop.f32.mrf.mxu0
        %v7667 = vpop.f32.mrf.mxu0
        %v7668 = vadd.f32 %v7507, %v7667
        %v7669 = vpop.f32.mrf.mxu0
        %7670 = vdwg.mxu0
        %7671 = vmatprep.subr.bf16.mxu0 0
        %7672 = vmatpush1.bf16.msra.mxu0 %v6777
        %7673 = vmatprep.subr.bf16.mxu0 0
        %7674 = vmatpush1.bf16.msra.mxu0 %v6776
        %7675 = vmatprep.subr.bf16.mxu0 0
        %7676 = vmatpush1.bf16.msra.mxu0 %v6775
        %7677 = vmatprep.subr.bf16.mxu0 0
        %7678 = vmatpush1.bf16.msra.mxu0 %v6774
        %7679 = vmatprep.subr.bf16.mxu0 0
        %7680 = vmatpush1.bf16.msra.mxu0 %v6773
        %7681 = vmatprep.subr.bf16.mxu0 0
        %7682 = vmatpush1.bf16.msra.mxu0 %v6772
        %7683 = vmatprep.subr.bf16.mxu0 0
        %7684 = vmatpush1.bf16.msra.mxu0 %v6771
        %7685 = vmatprep.subr.bf16.mxu0 0
        %7686 = vmatpush1.bf16.msra.mxu0 %v6770
        %7687 = vmatprep.subr.bf16.mxu0 0
        %7688 = vmatpush2.bf16.msra.mxu0 0
        %7689 = vmatprep.subr.bf16.mxu0 0
        %7690 = vmatpush2.bf16.msra.mxu0 0
        %7691 = vmatprep.subr.bf16.mxu0 0
        %7692 = vmatpush2.bf16.msra.mxu0 0
        %7693 = vmatprep.subr.bf16.mxu0 0
        %7694 = vmatpush2.bf16.msra.mxu0 0
        %7695 = vmatprep.subr.bf16.mxu0 0
        %7696 = vmatpush2.bf16.msra.mxu0 0
        %7697 = vmatprep.subr.bf16.mxu0 0
        %7698 = vmatpush2.bf16.msra.mxu0 0
        %7699 = vmatprep.subr.bf16.mxu0 0
        %7700 = vmatpush2.bf16.msra.mxu0 0
        %7701 = vmatprep.subr.bf16.mxu0 0
        %7702 = vmatpush2.bf16.msra.mxu0 0
        %7703 = vmatprep.mubr.bf16.mxu0 0
        %7704 = vmatmul.mubr.bf16.gmra.mxu0 %v5989
        %v7705 = vpop.f32.mrf.mxu0
        %v7706 = vadd.f32 %v7545, %v7705
        %v7707 = vpop.f32.mrf.mxu0
        %v7708 = vpop.f32.mrf.mxu0
        %v7709 = vadd.f32 %v7548, %v7708
        %v7710 = vpop.f32.mrf.mxu0
        %7711 = vmatprep.mubr.bf16.mxu0 0
        %7712 = vmatmul.mubr.bf16.gmra.mxu0 %v6000
        %v7713 = vpop.f32.mrf.mxu0
        %v7714 = vadd.f32 %v7553, %v7713
        %v7715 = vpop.f32.mrf.mxu0
        %v7716 = vpop.f32.mrf.mxu0
        %v7717 = vadd.f32 %v7556, %v7716
        %v7718 = vpop.f32.mrf.mxu0
        %7719 = vmatprep.mubr.bf16.mxu0 0
        %7720 = vmatmul.mubr.bf16.gmra.mxu0 %v6011
        %v7721 = vpop.f32.mrf.mxu0
        %v7722 = vadd.f32 %v7561, %v7721
        %v7723 = vpop.f32.mrf.mxu0
        %v7724 = vpop.f32.mrf.mxu0
        %v7725 = vadd.f32 %v7564, %v7724
        %v7726 = vpop.f32.mrf.mxu0
        %7727 = vmatprep.mubr.bf16.mxu0 0
        %7728 = vmatmul.mubr.bf16.gmra.mxu0 %v6022
        %v7729 = vpop.f32.mrf.mxu0
        %v7730 = vadd.f32 %v7569, %v7729
        %v7731 = vpop.f32.mrf.mxu0
        %v7732 = vpop.f32.mrf.mxu0
        %v7733 = vadd.f32 %v7572, %v7732
        %v7734 = vpop.f32.mrf.mxu0
        %7735 = vmatprep.mubr.bf16.mxu0 0
        %7736 = vmatmul.mubr.bf16.gmra.mxu0 %v6033
        %v7737 = vpop.f32.mrf.mxu0
        %v7738 = vadd.f32 %v7577, %v7737
        %v7739 = vpop.f32.mrf.mxu0
        %v7740 = vpop.f32.mrf.mxu0
        %v7741 = vadd.f32 %v7580, %v7740
        %v7742 = vpop.f32.mrf.mxu0
        %7743 = vmatprep.mubr.bf16.mxu0 0
        %7744 = vmatmul.mubr.bf16.gmra.mxu0 %v6044
        %v7745 = vpop.f32.mrf.mxu0
        %v7746 = vadd.f32 %v7585, %v7745
        %v7747 = vpop.f32.mrf.mxu0
        %v7748 = vpop.f32.mrf.mxu0
        %v7749 = vadd.f32 %v7588, %v7748
        %v7750 = vpop.f32.mrf.mxu0
        %7751 = vmatprep.mubr.bf16.mxu0 0
        %7752 = vmatmul.mubr.bf16.gmra.mxu0 %v6055
        %v7753 = vpop.f32.mrf.mxu0
        %v7754 = vadd.f32 %v7593, %v7753
        %v7755 = vpop.f32.mrf.mxu0
        %v7756 = vpop.f32.mrf.mxu0
        %v7757 = vadd.f32 %v7596, %v7756
        %v7758 = vpop.f32.mrf.mxu0
        %7759 = vmatprep.mubr.bf16.mxu0 0
        %7760 = vmatmul.mubr.bf16.gmra.mxu0 %v6066
        %v7761 = vpop.f32.mrf.mxu0
        %v7762 = vadd.f32 %v7601, %v7761
        %v7763 = vpop.f32.mrf.mxu0
        %v7764 = vpop.f32.mrf.mxu0
        %v7765 = vadd.f32 %v7604, %v7764
        %v7766 = vpop.f32.mrf.mxu0
        %7767 = vmatprep.mubr.bf16.mxu0 0
        %7768 = vmatmul.mubr.bf16.gmra.mxu0 %v6077
        %v7769 = vpop.f32.mrf.mxu0
        %v7770 = vadd.f32 %v7609, %v7769
        %v7771 = vpop.f32.mrf.mxu0
        %v7772 = vpop.f32.mrf.mxu0
        %v7773 = vadd.f32 %v7612, %v7772
        %v7774 = vpop.f32.mrf.mxu0
        %7775 = vmatprep.mubr.bf16.mxu0 0
        %7776 = vmatmul.mubr.bf16.gmra.mxu0 %v6088
        %v7777 = vpop.f32.mrf.mxu0
        %v7778 = vadd.f32 %v7617, %v7777
        %v7779 = vpop.f32.mrf.mxu0
        %v7780 = vpop.f32.mrf.mxu0
        %v7781 = vadd.f32 %v7620, %v7780
        %v7782 = vpop.f32.mrf.mxu0
        %7783 = vmatprep.mubr.bf16.mxu0 0
        %7784 = vmatmul.mubr.bf16.gmra.mxu0 %v6099
        %v7785 = vpop.f32.mrf.mxu0
        %v7786 = vadd.f32 %v7625, %v7785
        %v7787 = vpop.f32.mrf.mxu0
        %v7788 = vpop.f32.mrf.mxu0
        %v7789 = vadd.f32 %v7628, %v7788
        %v7790 = vpop.f32.mrf.mxu0
        %7791 = vmatprep.mubr.bf16.mxu0 0
        %7792 = vmatmul.mubr.bf16.gmra.mxu0 %v6110
        %v7793 = vpop.f32.mrf.mxu0
        %v7794 = vadd.f32 %v7633, %v7793
        %v7795 = vpop.f32.mrf.mxu0
        %v7796 = vpop.f32.mrf.mxu0
        %v7797 = vadd.f32 %v7636, %v7796
        %v7798 = vpop.f32.mrf.mxu0
        %7799 = vmatprep.mubr.bf16.mxu0 0
        %7800 = vmatmul.mubr.bf16.gmra.mxu0 %v6121
        %v7801 = vpop.f32.mrf.mxu0
        %v7802 = vadd.f32 %v7641, %v7801
        %v7803 = vpop.f32.mrf.mxu0
        %v7804 = vpop.f32.mrf.mxu0
        %v7805 = vadd.f32 %v7644, %v7804
        %v7806 = vpop.f32.mrf.mxu0
        %7807 = vmatprep.mubr.bf16.mxu0 0
        %7808 = vmatmul.mubr.bf16.gmra.mxu0 %v6132
        %v7809 = vpop.f32.mrf.mxu0
        %v7810 = vadd.f32 %v7649, %v7809
        %v7811 = vpop.f32.mrf.mxu0
        %v7812 = vpop.f32.mrf.mxu0
        %v7813 = vadd.f32 %v7652, %v7812
        %v7814 = vpop.f32.mrf.mxu0
        %7815 = vmatprep.mubr.bf16.mxu0 0
        %7816 = vmatmul.mubr.bf16.gmra.mxu0 %v6143
        %v7817 = vpop.f32.mrf.mxu0
        %v7818 = vadd.f32 %v7657, %v7817
        %v7819 = vpop.f32.mrf.mxu0
        %v7820 = vpop.f32.mrf.mxu0
        %v7821 = vadd.f32 %v7660, %v7820
        %v7822 = vpop.f32.mrf.mxu0
        %7823 = vmatprep.mubr.bf16.mxu0 0
        %7824 = vmatmul.mubr.bf16.gmra.mxu0 %v6154
        %v7825 = vpop.f32.mrf.mxu0
        %v7826 = vadd.f32 %v7665, %v7825
        %v7827 = vpop.f32.mrf.mxu0
        %v7828 = vpop.f32.mrf.mxu0
        %v7829 = vadd.f32 %v7668, %v7828
        %v7830 = vpop.f32.mrf.mxu0
        %7831 = vdwg.mxu0
        %v7832 = vmul.f32 %v7706, 1.442695
        %v7833 = vpow.pop %v7832
        %v7834 = vmul.f32 %v7709, 1.442695
        %v7835 = vpow.pop %v7834
        %v7836 = vmul.f32 %v7714, 1.442695
        %v7837 = vpow.pop %v7836
        %v7838 = vmul.f32 %v7717, 1.442695
        %v7839 = vpow.pop %v7838
        %v7840 = vmul.f32 %v7722, 1.442695
        %v7841 = vpow.pop %v7840
        %v7842 = vmul.f32 %v7725, 1.442695
        %v7843 = vpow.pop %v7842
        %v7844 = vmul.f32 %v7730, 1.442695
        %v7845 = vpow.pop %v7844
        %v7846 = vmul.f32 %v7733, 1.442695
        %v7847 = vpow.pop %v7846
        %v7848 = vmul.f32 %v7738, 1.442695
        %v7849 = vpow.pop %v7848
        %v7850 = vmul.f32 %v7741, 1.442695
        %v7851 = vpow.pop %v7850
        %v7852 = vmul.f32 %v7746, 1.442695
        %v7853 = vpow.pop %v7852
        %v7854 = vmul.f32 %v7749, 1.442695
        %v7855 = vpow.pop %v7854
        %v7856 = vmul.f32 %v7754, 1.442695
        %v7857 = vpow.pop %v7856
        %v7858 = vmul.f32 %v7757, 1.442695
        %v7859 = vpow.pop %v7858
        %v7860 = vmul.f32 %v7762, 1.442695
        %v7861 = vpow.pop %v7860
        %v7862 = vmul.f32 %v7765, 1.442695
        %v7863 = vpow.pop %v7862
        %v7864 = vmul.f32 %v7770, 1.442695
        %v7865 = vpow.pop %v7864
        %v7866 = vmul.f32 %v7773, 1.442695
        %v7867 = vpow.pop %v7866
        %v7868 = vmul.f32 %v7778, 1.442695
        %v7869 = vpow.pop %v7868
        %v7870 = vmul.f32 %v7781, 1.442695
        %v7871 = vpow.pop %v7870
        %v7872 = vmul.f32 %v7786, 1.442695
        %v7873 = vpow.pop %v7872
        %v7874 = vmul.f32 %v7789, 1.442695
        %v7875 = vpow.pop %v7874
        %v7876 = vmul.f32 %v7794, 1.442695
        %v7877 = vpow.pop %v7876
        %v7878 = vmul.f32 %v7797, 1.442695
        %v7879 = vpow.pop %v7878
        %v7880 = vmul.f32 %v7802, 1.442695
        %v7881 = vpow.pop %v7880
        %v7882 = vmul.f32 %v7805, 1.442695
        %v7883 = vpow.pop %v7882
        %v7884 = vmul.f32 %v7810, 1.442695
        %v7885 = vpow.pop %v7884
        %v7886 = vmul.f32 %v7813, 1.442695
        %v7887 = vpow.pop %v7886
        %v7888 = vmul.f32 %v7818, 1.442695
        %v7889 = vpow.pop %v7888
        %v7890 = vmul.f32 %v7821, 1.442695
        %v7891 = vpow.pop %v7890
        %v7892 = vmul.f32 %v7826, 1.442695
        %v7893 = vpow.pop %v7892
        %v7894 = vmul.f32 %v7829, 1.442695
        %v7895 = vpow.pop %v7894
        %7928 = vrot.lane.b32.xlu0 %v7706, 117
        %v7929 = vpop.permute.xlu0 %7928
        %7930 = vrot.lane.b32.xlu0 %v7709, 117
        %v7931 = vpop.permute.xlu0 %7930
        %7932 = vrot.lane.b32.xlu0 %v7714, 117
        %v7933 = vpop.permute.xlu0 %7932
        %7934 = vrot.lane.b32.xlu0 %v7717, 117
        %v7935 = vpop.permute.xlu0 %7934
        %7936 = vrot.lane.b32.xlu0 %v7722, 117
        %v7937 = vpop.permute.xlu0 %7936
        %7938 = vrot.lane.b32.xlu0 %v7725, 117
        %v7939 = vpop.permute.xlu0 %7938
        %7940 = vrot.lane.b32.xlu0 %v7730, 117
        %v7941 = vpop.permute.xlu0 %7940
        %7942 = vrot.lane.b32.xlu0 %v7733, 117
        %v7943 = vpop.permute.xlu0 %7942
        %7944 = vrot.lane.b32.xlu0 %v7738, 117
        %v7945 = vpop.permute.xlu0 %7944
        %7946 = vrot.lane.b32.xlu0 %v7741, 117
        %v7947 = vpop.permute.xlu0 %7946
        %7948 = vrot.lane.b32.xlu0 %v7746, 117
        %v7949 = vpop.permute.xlu0 %7948
        %7950 = vrot.lane.b32.xlu0 %v7749, 117
        %v7951 = vpop.permute.xlu0 %7950
        %7952 = vrot.lane.b32.xlu0 %v7754, 117
        %v7953 = vpop.permute.xlu0 %7952
        %7954 = vrot.lane.b32.xlu0 %v7757, 117
        %v7955 = vpop.permute.xlu0 %7954
        %7956 = vrot.lane.b32.xlu0 %v7762, 117
        %v7957 = vpop.permute.xlu0 %7956
        %7958 = vrot.lane.b32.xlu0 %v7765, 117
        %v7959 = vpop.permute.xlu0 %7958
        %7960 = vrot.lane.b32.xlu0 %v7770, 117
        %v7961 = vpop.permute.xlu0 %7960
        %7962 = vrot.lane.b32.xlu0 %v7773, 117
        %v7963 = vpop.permute.xlu0 %7962
        %7964 = vrot.lane.b32.xlu0 %v7778, 117
        %v7965 = vpop.permute.xlu0 %7964
        %7966 = vrot.lane.b32.xlu0 %v7781, 117
        %v7967 = vpop.permute.xlu0 %7966
        %7968 = vrot.lane.b32.xlu0 %v7786, 117
        %v7969 = vpop.permute.xlu0 %7968
        %7970 = vrot.lane.b32.xlu0 %v7789, 117
        %v7971 = vpop.permute.xlu0 %7970
        %7972 = vrot.lane.b32.xlu0 %v7794, 117
        %v7973 = vpop.permute.xlu0 %7972
        %7974 = vrot.lane.b32.xlu0 %v7797, 117
        %v7975 = vpop.permute.xlu0 %7974
        %7976 = vrot.lane.b32.xlu0 %v7802, 117
        %v7977 = vpop.permute.xlu0 %7976
        %7978 = vrot.lane.b32.xlu0 %v7805, 117
        %v7979 = vpop.permute.xlu0 %7978
        %7980 = vrot.lane.b32.xlu0 %v7810, 117
        %v7981 = vpop.permute.xlu0 %7980
        %7982 = vrot.lane.b32.xlu0 %v7813, 117
        %v7983 = vpop.permute.xlu0 %7982
        %7984 = vrot.lane.b32.xlu0 %v7818, 117
        %v7985 = vpop.permute.xlu0 %7984
        %7986 = vrot.lane.b32.xlu0 %v7821, 117
        %v7987 = vpop.permute.xlu0 %7986
        %7988 = vrot.lane.b32.xlu0 %v7826, 117
        %v7989 = vpop.permute.xlu0 %7988
        %7990 = vrot.lane.b32.xlu0 %v7829, 117
        %v7991 = vpop.permute.xlu0 %7990
        %v8024 = vsub.f32 %v494, %v7929
        %v8025 = vsub.f32 %v495, %v7931
        %v8026 = vsub.f32 %v496, %v7933
        %v8027 = vsub.f32 %v497, %v7935
        %v8028 = vsub.f32 %v498, %v7937
        %v8029 = vsub.f32 %v499, %v7939
        %v8030 = vsub.f32 %v500, %v7941
        %v8031 = vsub.f32 %v501, %v7943
        %v8032 = vsub.f32 %v502, %v7945
        %v8033 = vsub.f32 %v503, %v7947
        %v8034 = vsub.f32 %v504, %v7949
        %v8035 = vsub.f32 %v505, %v7951
        %v8036 = vsub.f32 %v506, %v7953
        %v8037 = vsub.f32 %v507, %v7955
        %v8038 = vsub.f32 %v508, %v7957
        %v8039 = vsub.f32 %v509, %v7959
        %v8040 = vsub.f32 %v510, %v7961
        %v8041 = vsub.f32 %v511, %v7963
        %v8042 = vsub.f32 %v512, %v7965
        %v8043 = vsub.f32 %v513, %v7967
        %v8044 = vsub.f32 %v514, %v7969
        %v8045 = vsub.f32 %v515, %v7971
        %v8046 = vsub.f32 %v516, %v7973
        %v8047 = vsub.f32 %v517, %v7975
        %v8048 = vsub.f32 %v518, %v7977
        %v8049 = vsub.f32 %v519, %v7979
        %v8050 = vsub.f32 %v520, %v7981
        %v8051 = vsub.f32 %v521, %v7983
        %v8052 = vsub.f32 %v522, %v7985
        %v8053 = vsub.f32 %v523, %v7987
        %v8054 = vsub.f32 %v524, %v7989
        %v8055 = vsub.f32 %v525, %v7991
        %v8056 = vmul.f32 %v8024, %v8024
        %v8057 = vmul.f32 %v8025, %v8025
        %v8058 = vmul.f32 %v8026, %v8026
        %v8059 = vmul.f32 %v8027, %v8027
        %v8060 = vmul.f32 %v8028, %v8028
        %v8061 = vmul.f32 %v8029, %v8029
        %v8062 = vmul.f32 %v8030, %v8030
        %v8063 = vmul.f32 %v8031, %v8031
        %v8064 = vmul.f32 %v8032, %v8032
        %v8065 = vmul.f32 %v8033, %v8033
        %v8066 = vmul.f32 %v8034, %v8034
        %v8067 = vmul.f32 %v8035, %v8035
        %v8068 = vmul.f32 %v8036, %v8036
        %v8069 = vmul.f32 %v8037, %v8037
        %v8070 = vmul.f32 %v8038, %v8038
        %v8071 = vmul.f32 %v8039, %v8039
        %v8072 = vmul.f32 %v8040, %v8040
        %v8073 = vmul.f32 %v8041, %v8041
        %v8074 = vmul.f32 %v8042, %v8042
        %v8075 = vmul.f32 %v8043, %v8043
        %v8076 = vmul.f32 %v8044, %v8044
        %v8077 = vmul.f32 %v8045, %v8045
        %v8078 = vmul.f32 %v8046, %v8046
        %v8079 = vmul.f32 %v8047, %v8047
        %v8080 = vmul.f32 %v8048, %v8048
        %v8081 = vmul.f32 %v8049, %v8049
        %v8082 = vmul.f32 %v8050, %v8050
        %v8083 = vmul.f32 %v8051, %v8051
        %v8084 = vmul.f32 %v8052, %v8052
        %v8085 = vmul.f32 %v8053, %v8053
        %v8086 = vmul.f32 %v8054, %v8054
        %v8087 = vmul.f32 %v8055, %v8055
        %v8088 = vsub.f32 0.0, %v8056
        %v8089 = vsub.f32 0.0, %v8057
        %v8090 = vsub.f32 0.0, %v8058
        %v8091 = vsub.f32 0.0, %v8059
        %v8092 = vsub.f32 0.0, %v8060
        %v8093 = vsub.f32 0.0, %v8061
        %v8094 = vsub.f32 0.0, %v8062
        %v8095 = vsub.f32 0.0, %v8063
        %v8096 = vsub.f32 0.0, %v8064
        %v8097 = vsub.f32 0.0, %v8065
        %v8098 = vsub.f32 0.0, %v8066
        %v8099 = vsub.f32 0.0, %v8067
        %v8100 = vsub.f32 0.0, %v8068
        %v8101 = vsub.f32 0.0, %v8069
        %v8102 = vsub.f32 0.0, %v8070
        %v8103 = vsub.f32 0.0, %v8071
        %v8104 = vsub.f32 0.0, %v8072
        %v8105 = vsub.f32 0.0, %v8073
        %v8106 = vsub.f32 0.0, %v8074
        %v8107 = vsub.f32 0.0, %v8075
        %v8108 = vsub.f32 0.0, %v8076
        %v8109 = vsub.f32 0.0, %v8077
        %v8110 = vsub.f32 0.0, %v8078
        %v8111 = vsub.f32 0.0, %v8079
        %v8112 = vsub.f32 0.0, %v8080
        %v8113 = vsub.f32 0.0, %v8081
        %v8114 = vsub.f32 0.0, %v8082
        %v8115 = vsub.f32 0.0, %v8083
        %v8116 = vsub.f32 0.0, %v8084
        %v8117 = vsub.f32 0.0, %v8085
        %v8118 = vsub.f32 0.0, %v8086
        %v8119 = vsub.f32 0.0, %v8087
        %v8120 = vmul.f32 %v7833, 2.0
        %v8121 = vmul.f32 %v7835, 2.0
        %v8122 = vmul.f32 %v7837, 2.0
        %v8123 = vmul.f32 %v7839, 2.0
        %v8124 = vmul.f32 %v7841, 2.0
        %v8125 = vmul.f32 %v7843, 2.0
        %v8126 = vmul.f32 %v7845, 2.0
        %v8127 = vmul.f32 %v7847, 2.0
        %v8128 = vmul.f32 %v7849, 2.0
        %v8129 = vmul.f32 %v7851, 2.0
        %v8130 = vmul.f32 %v7853, 2.0
        %v8131 = vmul.f32 %v7855, 2.0
        %v8132 = vmul.f32 %v7857, 2.0
        %v8133 = vmul.f32 %v7859, 2.0
        %v8134 = vmul.f32 %v7861, 2.0
        %v8135 = vmul.f32 %v7863, 2.0
        %v8136 = vmul.f32 %v7865, 2.0
        %v8137 = vmul.f32 %v7867, 2.0
        %v8138 = vmul.f32 %v7869, 2.0
        %v8139 = vmul.f32 %v7871, 2.0
        %v8140 = vmul.f32 %v7873, 2.0
        %v8141 = vmul.f32 %v7875, 2.0
        %v8142 = vmul.f32 %v7877, 2.0
        %v8143 = vmul.f32 %v7879, 2.0
        %v8144 = vmul.f32 %v7881, 2.0
        %v8145 = vmul.f32 %v7883, 2.0
        %v8146 = vmul.f32 %v7885, 2.0
        %v8147 = vmul.f32 %v7887, 2.0
        %v8148 = vmul.f32 %v7889, 2.0
        %v8149 = vmul.f32 %v7891, 2.0
        %v8150 = vmul.f32 %v7893, 2.0
        %v8151 = vmul.f32 %v7895, 2.0
        %v8152 = vmul.f32 %v8120, %v7833
        %v8153 = vmul.f32 %v8121, %v7835
        %v8154 = vmul.f32 %v8122, %v7837
        %v8155 = vmul.f32 %v8123, %v7839
        %v8156 = vmul.f32 %v8124, %v7841
        %v8157 = vmul.f32 %v8125, %v7843
        %v8158 = vmul.f32 %v8126, %v7845
        %v8159 = vmul.f32 %v8127, %v7847
        %v8160 = vmul.f32 %v8128, %v7849
        %v8161 = vmul.f32 %v8129, %v7851
        %v8162 = vmul.f32 %v8130, %v7853
        %v8163 = vmul.f32 %v8131, %v7855
        %v8164 = vmul.f32 %v8132, %v7857
        %v8165 = vmul.f32 %v8133, %v7859
        %v8166 = vmul.f32 %v8134, %v7861
        %v8167 = vmul.f32 %v8135, %v7863
        %v8168 = vmul.f32 %v8136, %v7865
        %v8169 = vmul.f32 %v8137, %v7867
        %v8170 = vmul.f32 %v8138, %v7869
        %v8171 = vmul.f32 %v8139, %v7871
        %v8172 = vmul.f32 %v8140, %v7873
        %v8173 = vmul.f32 %v8141, %v7875
        %v8174 = vmul.f32 %v8142, %v7877
        %v8175 = vmul.f32 %v8143, %v7879
        %v8176 = vmul.f32 %v8144, %v7881
        %v8177 = vmul.f32 %v8145, %v7883
        %v8178 = vmul.f32 %v8146, %v7885
        %v8179 = vmul.f32 %v8147, %v7887
        %v8180 = vmul.f32 %v8148, %v7889
        %v8181 = vmul.f32 %v8149, %v7891
        %v8182 = vmul.f32 %v8150, %v7893
        %v8183 = vmul.f32 %v8151, %v7895
        %8216 = vrot.lane.b32.xlu0 %v8152, 116
        %v8217 = vpop.permute.xlu0 %8216
        %8218 = vrot.lane.b32.xlu0 %v8153, 116
        %v8219 = vpop.permute.xlu0 %8218
        %8220 = vrot.lane.b32.xlu0 %v8154, 116
        %v8221 = vpop.permute.xlu0 %8220
        %8222 = vrot.lane.b32.xlu0 %v8155, 116
        %v8223 = vpop.permute.xlu0 %8222
        %8224 = vrot.lane.b32.xlu0 %v8156, 116
        %v8225 = vpop.permute.xlu0 %8224
        %8226 = vrot.lane.b32.xlu0 %v8157, 116
        %v8227 = vpop.permute.xlu0 %8226
        %8228 = vrot.lane.b32.xlu0 %v8158, 116
        %v8229 = vpop.permute.xlu0 %8228
        %8230 = vrot.lane.b32.xlu0 %v8159, 116
        %v8231 = vpop.permute.xlu0 %8230
        %8232 = vrot.lane.b32.xlu0 %v8160, 116
        %v8233 = vpop.permute.xlu0 %8232
        %8234 = vrot.lane.b32.xlu0 %v8161, 116
        %v8235 = vpop.permute.xlu0 %8234
        %8236 = vrot.lane.b32.xlu0 %v8162, 116
        %v8237 = vpop.permute.xlu0 %8236
        %8238 = vrot.lane.b32.xlu0 %v8163, 116
        %v8239 = vpop.permute.xlu0 %8238
        %8240 = vrot.lane.b32.xlu0 %v8164, 116
        %v8241 = vpop.permute.xlu0 %8240
        %8242 = vrot.lane.b32.xlu0 %v8165, 116
        %v8243 = vpop.permute.xlu0 %8242
        %8244 = vrot.lane.b32.xlu0 %v8166, 116
        %v8245 = vpop.permute.xlu0 %8244
        %8246 = vrot.lane.b32.xlu0 %v8167, 116
        %v8247 = vpop.permute.xlu0 %8246
        %8248 = vrot.lane.b32.xlu0 %v8168, 116
        %v8249 = vpop.permute.xlu0 %8248
        %8250 = vrot.lane.b32.xlu0 %v8169, 116
        %v8251 = vpop.permute.xlu0 %8250
        %8252 = vrot.lane.b32.xlu0 %v8170, 116
        %v8253 = vpop.permute.xlu0 %8252
        %8254 = vrot.lane.b32.xlu0 %v8171, 116
        %v8255 = vpop.permute.xlu0 %8254
        %8256 = vrot.lane.b32.xlu0 %v8172, 116
        %v8257 = vpop.permute.xlu0 %8256
        %8258 = vrot.lane.b32.xlu0 %v8173, 116
        %v8259 = vpop.permute.xlu0 %8258
        %8260 = vrot.lane.b32.xlu0 %v8174, 116
        %v8261 = vpop.permute.xlu0 %8260
        %8262 = vrot.lane.b32.xlu0 %v8175, 116
        %v8263 = vpop.permute.xlu0 %8262
        %8264 = vrot.lane.b32.xlu0 %v8176, 116
        %v8265 = vpop.permute.xlu0 %8264
        %8266 = vrot.lane.b32.xlu0 %v8177, 116
        %v8267 = vpop.permute.xlu0 %8266
        %8268 = vrot.lane.b32.xlu0 %v8178, 116
        %v8269 = vpop.permute.xlu0 %8268
        %8270 = vrot.lane.b32.xlu0 %v8179, 116
        %v8271 = vpop.permute.xlu0 %8270
        %8272 = vrot.lane.b32.xlu0 %v8180, 116
        %v8273 = vpop.permute.xlu0 %8272
        %8274 = vrot.lane.b32.xlu0 %v8181, 116
        %v8275 = vpop.permute.xlu0 %8274
        %8276 = vrot.lane.b32.xlu0 %v8182, 116
        %v8277 = vpop.permute.xlu0 %8276
        %8278 = vrot.lane.b32.xlu0 %v8183, 116
        %v8279 = vpop.permute.xlu0 %8278
        %v8312 = vrcp.pop %v8217
        %v8313 = vmul.f32 %v8088, %v8312
        %v8314 = vrcp.pop %v8219
        %v8315 = vmul.f32 %v8089, %v8314
        %v8316 = vrcp.pop %v8221
        %v8317 = vmul.f32 %v8090, %v8316
        %v8318 = vrcp.pop %v8223
        %v8319 = vmul.f32 %v8091, %v8318
        %v8320 = vrcp.pop %v8225
        %v8321 = vmul.f32 %v8092, %v8320
        %v8322 = vrcp.pop %v8227
        %v8323 = vmul.f32 %v8093, %v8322
        %v8324 = vrcp.pop %v8229
        %v8325 = vmul.f32 %v8094, %v8324
        %v8326 = vrcp.pop %v8231
        %v8327 = vmul.f32 %v8095, %v8326
        %v8328 = vrcp.pop %v8233
        %v8329 = vmul.f32 %v8096, %v8328
        %v8330 = vrcp.pop %v8235
        %v8331 = vmul.f32 %v8097, %v8330
        %v8332 = vrcp.pop %v8237
        %v8333 = vmul.f32 %v8098, %v8332
        %v8334 = vrcp.pop %v8239
        %v8335 = vmul.f32 %v8099, %v8334
        %v8336 = vrcp.pop %v8241
        %v8337 = vmul.f32 %v8100, %v8336
        %v8338 = vrcp.pop %v8243
        %v8339 = vmul.f32 %v8101, %v8338
        %v8340 = vrcp.pop %v8245
        %v8341 = vmul.f32 %v8102, %v8340
        %v8342 = vrcp.pop %v8247
        %v8343 = vmul.f32 %v8103, %v8342
        %v8344 = vrcp.pop %v8249
        %v8345 = vmul.f32 %v8104, %v8344
        %v8346 = vrcp.pop %v8251
        %v8347 = vmul.f32 %v8105, %v8346
        %v8348 = vrcp.pop %v8253
        %v8349 = vmul.f32 %v8106, %v8348
        %v8350 = vrcp.pop %v8255
        %v8351 = vmul.f32 %v8107, %v8350
        %v8352 = vrcp.pop %v8257
        %v8353 = vmul.f32 %v8108, %v8352
        %v8354 = vrcp.pop %v8259
        %v8355 = vmul.f32 %v8109, %v8354
        %v8356 = vrcp.pop %v8261
        %v8357 = vmul.f32 %v8110, %v8356
        %v8358 = vrcp.pop %v8263
        %v8359 = vmul.f32 %v8111, %v8358
        %v8360 = vrcp.pop %v8265
        %v8361 = vmul.f32 %v8112, %v8360
        %v8362 = vrcp.pop %v8267
        %v8363 = vmul.f32 %v8113, %v8362
        %v8364 = vrcp.pop %v8269
        %v8365 = vmul.f32 %v8114, %v8364
        %v8366 = vrcp.pop %v8271
        %v8367 = vmul.f32 %v8115, %v8366
        %v8368 = vrcp.pop %v8273
        %v8369 = vmul.f32 %v8116, %v8368
        %v8370 = vrcp.pop %v8275
        %v8371 = vmul.f32 %v8117, %v8370
        %v8372 = vrcp.pop %v8277
        %v8373 = vmul.f32 %v8118, %v8372
        %v8374 = vrcp.pop %v8279
        %v8375 = vmul.f32 %v8119, %v8374
        %v8376 = vmul.f32 %v8313, 1.442695
        %v8377 = vpow.pop %v8376
        %v8378 = vmul.f32 %v8315, 1.442695
        %v8379 = vpow.pop %v8378
        %v8380 = vmul.f32 %v8317, 1.442695
        %v8381 = vpow.pop %v8380
        %v8382 = vmul.f32 %v8319, 1.442695
        %v8383 = vpow.pop %v8382
        %v8384 = vmul.f32 %v8321, 1.442695
        %v8385 = vpow.pop %v8384
        %v8386 = vmul.f32 %v8323, 1.442695
        %v8387 = vpow.pop %v8386
        %v8388 = vmul.f32 %v8325, 1.442695
        %v8389 = vpow.pop %v8388
        %v8390 = vmul.f32 %v8327, 1.442695
        %v8391 = vpow.pop %v8390
        %v8392 = vmul.f32 %v8329, 1.442695
        %v8393 = vpow.pop %v8392
        %v8394 = vmul.f32 %v8331, 1.442695
        %v8395 = vpow.pop %v8394
        %v8396 = vmul.f32 %v8333, 1.442695
        %v8397 = vpow.pop %v8396
        %v8398 = vmul.f32 %v8335, 1.442695
        %v8399 = vpow.pop %v8398
        %v8400 = vmul.f32 %v8337, 1.442695
        %v8401 = vpow.pop %v8400
        %v8402 = vmul.f32 %v8339, 1.442695
        %v8403 = vpow.pop %v8402
        %v8404 = vmul.f32 %v8341, 1.442695
        %v8405 = vpow.pop %v8404
        %v8406 = vmul.f32 %v8343, 1.442695
        %v8407 = vpow.pop %v8406
        %v8408 = vmul.f32 %v8345, 1.442695
        %v8409 = vpow.pop %v8408
        %v8410 = vmul.f32 %v8347, 1.442695
        %v8411 = vpow.pop %v8410
        %v8412 = vmul.f32 %v8349, 1.442695
        %v8413 = vpow.pop %v8412
        %v8414 = vmul.f32 %v8351, 1.442695
        %v8415 = vpow.pop %v8414
        %v8416 = vmul.f32 %v8353, 1.442695
        %v8417 = vpow.pop %v8416
        %v8418 = vmul.f32 %v8355, 1.442695
        %v8419 = vpow.pop %v8418
        %v8420 = vmul.f32 %v8357, 1.442695
        %v8421 = vpow.pop %v8420
        %v8422 = vmul.f32 %v8359, 1.442695
        %v8423 = vpow.pop %v8422
        %v8424 = vmul.f32 %v8361, 1.442695
        %v8425 = vpow.pop %v8424
        %v8426 = vmul.f32 %v8363, 1.442695
        %v8427 = vpow.pop %v8426
        %v8428 = vmul.f32 %v8365, 1.442695
        %v8429 = vpow.pop %v8428
        %v8430 = vmul.f32 %v8367, 1.442695
        %v8431 = vpow.pop %v8430
        %v8432 = vmul.f32 %v8369, 1.442695
        %v8433 = vpow.pop %v8432
        %v8434 = vmul.f32 %v8371, 1.442695
        %v8435 = vpow.pop %v8434
        %v8436 = vmul.f32 %v8373, 1.442695
        %v8437 = vpow.pop %v8436
        %v8438 = vmul.f32 %v8375, 1.442695
        %v8439 = vpow.pop %v8438
        %v8440 = vlaneseq
        %v8441 = vand.u32 %v8440, 127
        %vm8442 = vcmp.lt.s32.totalorder %v8441, 23
        %v8443 = vsel %vm8442, 1, 0
        %vm8444 = vcmp.eq.s32.totalorder %v8443, 1
        %v8445 = vsel %vm8444, %v494, 0.0
        %v8446 = vsel %vm8444, %v495, 0.0
        %v8447 = vsel %vm8444, %v496, 0.0
        %v8448 = vsel %vm8444, %v497, 0.0
        %v8449 = vsel %vm8444, %v498, 0.0
        %v8450 = vsel %vm8444, %v499, 0.0
        %v8451 = vsel %vm8444, %v500, 0.0
        %v8452 = vsel %vm8444, %v501, 0.0
        %v8453 = vsel %vm8444, %v502, 0.0
        %v8454 = vsel %vm8444, %v503, 0.0
        %v8455 = vsel %vm8444, %v504, 0.0
        %v8456 = vsel %vm8444, %v505, 0.0
        %v8457 = vsel %vm8444, %v506, 0.0
        %v8458 = vsel %vm8444, %v507, 0.0
        %v8459 = vsel %vm8444, %v508, 0.0
        %v8460 = vsel %vm8444, %v509, 0.0
        %v8461 = vsel %vm8444, %v510, 0.0
        %v8462 = vsel %vm8444, %v511, 0.0
        %v8463 = vsel %vm8444, %v512, 0.0
        %v8464 = vsel %vm8444, %v513, 0.0
        %v8465 = vsel %vm8444, %v514, 0.0
        %v8466 = vsel %vm8444, %v515, 0.0
        %v8467 = vsel %vm8444, %v516, 0.0
        %v8468 = vsel %vm8444, %v517, 0.0
        %v8469 = vsel %vm8444, %v518, 0.0
        %v8470 = vsel %vm8444, %v519, 0.0
        %v8471 = vsel %vm8444, %v520, 0.0
        %v8472 = vsel %vm8444, %v521, 0.0
        %v8473 = vsel %vm8444, %v522, 0.0
        %v8474 = vsel %vm8444, %v523, 0.0
        %v8475 = vsel %vm8444, %v524, 0.0
        %v8476 = vsel %vm8444, %v525, 0.0
        %v8477 = vadd.f32 %v7706, %v8445
        %v8478 = vadd.f32 %v7709, %v8446
        %v8479 = vadd.f32 %v7714, %v8447
        %v8480 = vadd.f32 %v7717, %v8448
        %v8481 = vadd.f32 %v7722, %v8449
        %v8482 = vadd.f32 %v7725, %v8450
        %v8483 = vadd.f32 %v7730, %v8451
        %v8484 = vadd.f32 %v7733, %v8452
        %v8485 = vadd.f32 %v7738, %v8453
        %v8486 = vadd.f32 %v7741, %v8454
        %v8487 = vadd.f32 %v7746, %v8455
        %v8488 = vadd.f32 %v7749, %v8456
        %v8489 = vadd.f32 %v7754, %v8457
        %v8490 = vadd.f32 %v7757, %v8458
        %v8491 = vadd.f32 %v7762, %v8459
        %v8492 = vadd.f32 %v7765, %v8460
        %v8493 = vadd.f32 %v7770, %v8461
        %v8494 = vadd.f32 %v7773, %v8462
        %v8495 = vadd.f32 %v7778, %v8463
        %v8496 = vadd.f32 %v7781, %v8464
        %v8497 = vadd.f32 %v7786, %v8465
        %v8498 = vadd.f32 %v7789, %v8466
        %v8499 = vadd.f32 %v7794, %v8467
        %v8500 = vadd.f32 %v7797, %v8468
        %v8501 = vadd.f32 %v7802, %v8469
        %v8502 = vadd.f32 %v7805, %v8470
        %v8503 = vadd.f32 %v7810, %v8471
        %v8504 = vadd.f32 %v7813, %v8472
        %v8505 = vadd.f32 %v7818, %v8473
        %v8506 = vadd.f32 %v7821, %v8474
        %v8507 = vadd.f32 %v7826, %v8475
        %v8508 = vadd.f32 %v7829, %v8476
        %vm8509 = vcmp.eq.s32.totalorder %v8441, 10
        %v8510 = vsel %vm8509, 1, 0
        %vm8511 = vcmp.eq.s32.totalorder %v8510, 1
        %8513 = vset.pattern.permute.xlu0 31
        %8514 = vperm.xlu0 %8513, %v8377
        %v8515 = vpop.permute.xlu0 %8514
        %8518 = vset.pattern.permute.xlu0 31
        %8519 = vperm.xlu0 %8518, %v8379
        %v8520 = vpop.permute.xlu0 %8519
        %8523 = vset.pattern.permute.xlu0 31
        %8524 = vperm.xlu0 %8523, %v8381
        %v8525 = vpop.permute.xlu0 %8524
        %8528 = vset.pattern.permute.xlu0 31
        %8529 = vperm.xlu0 %8528, %v8383
        %v8530 = vpop.permute.xlu0 %8529
        %8533 = vset.pattern.permute.xlu0 31
        %8534 = vperm.xlu0 %8533, %v8385
        %v8535 = vpop.permute.xlu0 %8534
        %8538 = vset.pattern.permute.xlu0 31
        %8539 = vperm.xlu0 %8538, %v8387
        %v8540 = vpop.permute.xlu0 %8539
        %8543 = vset.pattern.permute.xlu0 31
        %8544 = vperm.xlu0 %8543, %v8389
        %v8545 = vpop.permute.xlu0 %8544
        %8548 = vset.pattern.permute.xlu0 31
        %8549 = vperm.xlu0 %8548, %v8391
        %v8550 = vpop.permute.xlu0 %8549
        %8553 = vset.pattern.permute.xlu0 31
        %8554 = vperm.xlu0 %8553, %v8393
        %v8555 = vpop.permute.xlu0 %8554
        %8558 = vset.pattern.permute.xlu0 31
        %8559 = vperm.xlu0 %8558, %v8395
        %v8560 = vpop.permute.xlu0 %8559
        %8563 = vset.pattern.permute.xlu0 31
        %8564 = vperm.xlu0 %8563, %v8397
        %v8565 = vpop.permute.xlu0 %8564
        %8568 = vset.pattern.permute.xlu0 31
        %8569 = vperm.xlu0 %8568, %v8399
        %v8570 = vpop.permute.xlu0 %8569
        %8573 = vset.pattern.permute.xlu0 31
        %8574 = vperm.xlu0 %8573, %v8401
        %v8575 = vpop.permute.xlu0 %8574
        %8578 = vset.pattern.permute.xlu0 31
        %8579 = vperm.xlu0 %8578, %v8403
        %v8580 = vpop.permute.xlu0 %8579
        %8583 = vset.pattern.permute.xlu0 31
        %8584 = vperm.xlu0 %8583, %v8405
        %v8585 = vpop.permute.xlu0 %8584
        %8588 = vset.pattern.permute.xlu0 31
        %8589 = vperm.xlu0 %8588, %v8407
        %v8590 = vpop.permute.xlu0 %8589
        %8593 = vset.pattern.permute.xlu0 31
        %8594 = vperm.xlu0 %8593, %v8409
        %v8595 = vpop.permute.xlu0 %8594
        %8598 = vset.pattern.permute.xlu0 31
        %8599 = vperm.xlu0 %8598, %v8411
        %v8600 = vpop.permute.xlu0 %8599
        %8603 = vset.pattern.permute.xlu0 31
        %8604 = vperm.xlu0 %8603, %v8413
        %v8605 = vpop.permute.xlu0 %8604
        %8608 = vset.pattern.permute.xlu0 31
        %8609 = vperm.xlu0 %8608, %v8415
        %v8610 = vpop.permute.xlu0 %8609
        %8613 = vset.pattern.permute.xlu0 31
        %8614 = vperm.xlu0 %8613, %v8417
        %v8615 = vpop.permute.xlu0 %8614
        %8618 = vset.pattern.permute.xlu0 31
        %8619 = vperm.xlu0 %8618, %v8419
        %v8620 = vpop.permute.xlu0 %8619
        %8623 = vset.pattern.permute.xlu0 31
        %8624 = vperm.xlu0 %8623, %v8421
        %v8625 = vpop.permute.xlu0 %8624
        %8628 = vset.pattern.permute.xlu0 31
        %8629 = vperm.xlu0 %8628, %v8423
        %v8630 = vpop.permute.xlu0 %8629
        %8633 = vset.pattern.permute.xlu0 31
        %8634 = vperm.xlu0 %8633, %v8425
        %v8635 = vpop.permute.xlu0 %8634
        %8638 = vset.pattern.permute.xlu0 31
        %8639 = vperm.xlu0 %8638, %v8427
        %v8640 = vpop.permute.xlu0 %8639
        %8643 = vset.pattern.permute.xlu0 31
        %8644 = vperm.xlu0 %8643, %v8429
        %v8645 = vpop.permute.xlu0 %8644
        %8648 = vset.pattern.permute.xlu0 31
        %8649 = vperm.xlu0 %8648, %v8431
        %v8650 = vpop.permute.xlu0 %8649
        %8653 = vset.pattern.permute.xlu0 31
        %8654 = vperm.xlu0 %8653, %v8433
        %v8655 = vpop.permute.xlu0 %8654
        %8658 = vset.pattern.permute.xlu0 31
        %8659 = vperm.xlu0 %8658, %v8435
        %v8660 = vpop.permute.xlu0 %8659
        %8663 = vset.pattern.permute.xlu0 31
        %8664 = vperm.xlu0 %8663, %v8437
        %v8665 = vpop.permute.xlu0 %8664
        %8668 = vset.pattern.permute.xlu0 31
        %8669 = vperm.xlu0 %8668, %v8439
        %v8670 = vpop.permute.xlu0 %8669
        %v8672 = vsel %vm8511, %v8515, 1.0
        %v8673 = vsel %vm8511, %v8520, 1.0
        %v8674 = vsel %vm8511, %v8525, 1.0
        %v8675 = vsel %vm8511, %v8530, 1.0
        %v8676 = vsel %vm8511, %v8535, 1.0
        %v8677 = vsel %vm8511, %v8540, 1.0
        %v8678 = vsel %vm8511, %v8545, 1.0
        %v8679 = vsel %vm8511, %v8550, 1.0
        %v8680 = vsel %vm8511, %v8555, 1.0
        %v8681 = vsel %vm8511, %v8560, 1.0
        %v8682 = vsel %vm8511, %v8565, 1.0
        %v8683 = vsel %vm8511, %v8570, 1.0
        %v8684 = vsel %vm8511, %v8575, 1.0
        %v8685 = vsel %vm8511, %v8580, 1.0
        %v8686 = vsel %vm8511, %v8585, 1.0
        %v8687 = vsel %vm8511, %v8590, 1.0
        %v8688 = vsel %vm8511, %v8595, 1.0
        %v8689 = vsel %vm8511, %v8600, 1.0
        %v8690 = vsel %vm8511, %v8605, 1.0
        %v8691 = vsel %vm8511, %v8610, 1.0
        %v8692 = vsel %vm8511, %v8615, 1.0
        %v8693 = vsel %vm8511, %v8620, 1.0
        %v8694 = vsel %vm8511, %v8625, 1.0
        %v8695 = vsel %vm8511, %v8630, 1.0
        %v8696 = vsel %vm8511, %v8635, 1.0
        %v8697 = vsel %vm8511, %v8640, 1.0
        %v8698 = vsel %vm8511, %v8645, 1.0
        %v8699 = vsel %vm8511, %v8650, 1.0
        %v8700 = vsel %vm8511, %v8655, 1.0
        %v8701 = vsel %vm8511, %v8660, 1.0
        %v8702 = vsel %vm8511, %v8665, 1.0
        %v8703 = vsel %vm8511, %v8670, 1.0
        %v8704 = vmul.f32 %v8477, %v8672
        %v8705 = vmul.f32 %v8478, %v8673
        %v8706 = vmul.f32 %v8479, %v8674
        %v8707 = vmul.f32 %v8480, %v8675
        %v8708 = vmul.f32 %v8481, %v8676
        %v8709 = vmul.f32 %v8482, %v8677
        %v8710 = vmul.f32 %v8483, %v8678
        %v8711 = vmul.f32 %v8484, %v8679
        %v8712 = vmul.f32 %v8485, %v8680
        %v8713 = vmul.f32 %v8486, %v8681
        %v8714 = vmul.f32 %v8487, %v8682
        %v8715 = vmul.f32 %v8488, %v8683
        %v8716 = vmul.f32 %v8489, %v8684
        %v8717 = vmul.f32 %v8490, %v8685
        %v8718 = vmul.f32 %v8491, %v8686
        %v8719 = vmul.f32 %v8492, %v8687
        %v8720 = vmul.f32 %v8493, %v8688
        %v8721 = vmul.f32 %v8494, %v8689
        %v8722 = vmul.f32 %v8495, %v8690
        %v8723 = vmul.f32 %v8496, %v8691
        %v8724 = vmul.f32 %v8497, %v8692
        %v8725 = vmul.f32 %v8498, %v8693
        %v8726 = vmul.f32 %v8499, %v8694
        %v8727 = vmul.f32 %v8500, %v8695
        %v8728 = vmul.f32 %v8501, %v8696
        %v8729 = vmul.f32 %v8502, %v8697
        %v8730 = vmul.f32 %v8503, %v8698
        %v8731 = vmul.f32 %v8504, %v8699
        %v8732 = vmul.f32 %v8505, %v8700
        %v8733 = vmul.f32 %v8506, %v8701
        %v8734 = vmul.f32 %v8507, %v8702
        %v8735 = vmul.f32 %v8508, %v8703
        %vm8736 = vcmp.eq.s32.totalorder %v8441, 43
        %v8737 = vsel %vm8736, 1, 0
        %vm8738 = vcmp.eq.s32.totalorder %v8737, 1
        %8740 = vset.pattern.permute.xlu0 43
        %8741 = vperm.xlu0 %8740, %v7833
        %v8742 = vpop.permute.xlu0 %8741
        %8745 = vset.pattern.permute.xlu0 43
        %8746 = vperm.xlu0 %8745, %v7835
        %v8747 = vpop.permute.xlu0 %8746
        %8750 = vset.pattern.permute.xlu0 43
        %8751 = vperm.xlu0 %8750, %v7837
        %v8752 = vpop.permute.xlu0 %8751
        %8755 = vset.pattern.permute.xlu0 43
        %8756 = vperm.xlu0 %8755, %v7839
        %v8757 = vpop.permute.xlu0 %8756
        %8760 = vset.pattern.permute.xlu0 43
        %8761 = vperm.xlu0 %8760, %v7841
        %v8762 = vpop.permute.xlu0 %8761
        %8765 = vset.pattern.permute.xlu0 43
        %8766 = vperm.xlu0 %8765, %v7843
        %v8767 = vpop.permute.xlu0 %8766
        %8770 = vset.pattern.permute.xlu0 43
        %8771 = vperm.xlu0 %8770, %v7845
        %v8772 = vpop.permute.xlu0 %8771
        %8775 = vset.pattern.permute.xlu0 43
        %8776 = vperm.xlu0 %8775, %v7847
        %v8777 = vpop.permute.xlu0 %8776
        %8780 = vset.pattern.permute.xlu0 43
        %8781 = vperm.xlu0 %8780, %v7849
        %v8782 = vpop.permute.xlu0 %8781
        %8785 = vset.pattern.permute.xlu0 43
        %8786 = vperm.xlu0 %8785, %v7851
        %v8787 = vpop.permute.xlu0 %8786
        %8790 = vset.pattern.permute.xlu0 43
        %8791 = vperm.xlu0 %8790, %v7853
        %v8792 = vpop.permute.xlu0 %8791
        %8795 = vset.pattern.permute.xlu0 43
        %8796 = vperm.xlu0 %8795, %v7855
        %v8797 = vpop.permute.xlu0 %8796
        %8800 = vset.pattern.permute.xlu0 43
        %8801 = vperm.xlu0 %8800, %v7857
        %v8802 = vpop.permute.xlu0 %8801
        %8805 = vset.pattern.permute.xlu0 43
        %8806 = vperm.xlu0 %8805, %v7859
        %v8807 = vpop.permute.xlu0 %8806
        %8810 = vset.pattern.permute.xlu0 43
        %8811 = vperm.xlu0 %8810, %v7861
        %v8812 = vpop.permute.xlu0 %8811
        %8815 = vset.pattern.permute.xlu0 43
        %8816 = vperm.xlu0 %8815, %v7863
        %v8817 = vpop.permute.xlu0 %8816
        %8820 = vset.pattern.permute.xlu0 43
        %8821 = vperm.xlu0 %8820, %v7865
        %v8822 = vpop.permute.xlu0 %8821
        %8825 = vset.pattern.permute.xlu0 43
        %8826 = vperm.xlu0 %8825, %v7867
        %v8827 = vpop.permute.xlu0 %8826
        %8830 = vset.pattern.permute.xlu0 43
        %8831 = vperm.xlu0 %8830, %v7869
        %v8832 = vpop.permute.xlu0 %8831
        %8835 = vset.pattern.permute.xlu0 43
        %8836 = vperm.xlu0 %8835, %v7871
        %v8837 = vpop.permute.xlu0 %8836
        %8840 = vset.pattern.permute.xlu0 43
        %8841 = vperm.xlu0 %8840, %v7873
        %v8842 = vpop.permute.xlu0 %8841
        %8845 = vset.pattern.permute.xlu0 43
        %8846 = vperm.xlu0 %8845, %v7875
        %v8847 = vpop.permute.xlu0 %8846
        %8850 = vset.pattern.permute.xlu0 43
        %8851 = vperm.xlu0 %8850, %v7877
        %v8852 = vpop.permute.xlu0 %8851
        %8855 = vset.pattern.permute.xlu0 43
        %8856 = vperm.xlu0 %8855, %v7879
        %v8857 = vpop.permute.xlu0 %8856
        %8860 = vset.pattern.permute.xlu0 43
        %8861 = vperm.xlu0 %8860, %v7881
        %v8862 = vpop.permute.xlu0 %8861
        %8865 = vset.pattern.permute.xlu0 43
        %8866 = vperm.xlu0 %8865, %v7883
        %v8867 = vpop.permute.xlu0 %8866
        %8870 = vset.pattern.permute.xlu0 43
        %8871 = vperm.xlu0 %8870, %v7885
        %v8872 = vpop.permute.xlu0 %8871
        %8875 = vset.pattern.permute.xlu0 43
        %8876 = vperm.xlu0 %8875, %v7887
        %v8877 = vpop.permute.xlu0 %8876
        %8880 = vset.pattern.permute.xlu0 43
        %8881 = vperm.xlu0 %8880, %v7889
        %v8882 = vpop.permute.xlu0 %8881
        %8885 = vset.pattern.permute.xlu0 43
        %8886 = vperm.xlu0 %8885, %v7891
        %v8887 = vpop.permute.xlu0 %8886
        %8890 = vset.pattern.permute.xlu0 43
        %8891 = vperm.xlu0 %8890, %v7893
        %v8892 = vpop.permute.xlu0 %8891
        %8895 = vset.pattern.permute.xlu0 43
        %8896 = vperm.xlu0 %8895, %v7895
        %v8897 = vpop.permute.xlu0 %8896
        %v8899 = vsel %vm8738, %v8742, %v8704
        %v8900 = vsel %vm8738, %v8747, %v8705
        %v8901 = vsel %vm8738, %v8752, %v8706
        %v8902 = vsel %vm8738, %v8757, %v8707
        %v8903 = vsel %vm8738, %v8762, %v8708
        %v8904 = vsel %vm8738, %v8767, %v8709
        %v8905 = vsel %vm8738, %v8772, %v8710
        %v8906 = vsel %vm8738, %v8777, %v8711
        %v8907 = vsel %vm8738, %v8782, %v8712
        %v8908 = vsel %vm8738, %v8787, %v8713
        %v8909 = vsel %vm8738, %v8792, %v8714
        %v8910 = vsel %vm8738, %v8797, %v8715
        %v8911 = vsel %vm8738, %v8802, %v8716
        %v8912 = vsel %vm8738, %v8807, %v8717
        %v8913 = vsel %vm8738, %v8812, %v8718
        %v8914 = vsel %vm8738, %v8817, %v8719
        %v8915 = vsel %vm8738, %v8822, %v8720
        %v8916 = vsel %vm8738, %v8827, %v8721
        %v8917 = vsel %vm8738, %v8832, %v8722
        %v8918 = vsel %vm8738, %v8837, %v8723
        %v8919 = vsel %vm8738, %v8842, %v8724
        %v8920 = vsel %vm8738, %v8847, %v8725
        %v8921 = vsel %vm8738, %v8852, %v8726
        %v8922 = vsel %vm8738, %v8857, %v8727
        %v8923 = vsel %vm8738, %v8862, %v8728
        %v8924 = vsel %vm8738, %v8867, %v8729
        %v8925 = vsel %vm8738, %v8872, %v8730
        %v8926 = vsel %vm8738, %v8877, %v8731
        %v8927 = vsel %vm8738, %v8882, %v8732
        %v8928 = vsel %vm8738, %v8887, %v8733
        %v8929 = vsel %vm8738, %v8892, %v8734
        %v8930 = vsel %vm8738, %v8897, %v8735
        %8931 = vst [vmem:[%s489] sm:$0xff] %v8899
        %8932 = vst [vmem:[%s489 + $0x8] sm:$0xff] %v8900
        %8933 = vst [vmem:[%s489 + $0x10] sm:$0xff] %v8901
        %8934 = vst [vmem:[%s489 + $0x18] sm:$0xff] %v8902
        %8935 = vst [vmem:[%s489 + $0x20] sm:$0xff] %v8903
        %8936 = vst [vmem:[%s489 + $0x28] sm:$0xff] %v8904
        %8937 = vst [vmem:[%s489 + $0x30] sm:$0xff] %v8905
        %8938 = vst [vmem:[%s489 + $0x38] sm:$0xff] %v8906
        %8939 = vst [vmem:[%s489 + $0x40] sm:$0xff] %v8907
        %8940 = vst [vmem:[%s489 + $0x48] sm:$0xff] %v8908
        %8941 = vst [vmem:[%s489 + $0x50] sm:$0xff] %v8909
        %8942 = vst [vmem:[%s489 + $0x58] sm:$0xff] %v8910
        %8943 = vst [vmem:[%s489 + $0x60] sm:$0xff] %v8911
        %8944 = vst [vmem:[%s489 + $0x68] sm:$0xff] %v8912
        %8945 = vst [vmem:[%s489 + $0x70] sm:$0xff] %v8913
        %8946 = vst [vmem:[%s489 + $0x78] sm:$0xff] %v8914
        %8947 = vst [vmem:[%s489 + $0x80] sm:$0xff] %v8915
        %8948 = vst [vmem:[%s489 + $0x88] sm:$0xff] %v8916
        %8949 = vst [vmem:[%s489 + $0x90] sm:$0xff] %v8917
        %8950 = vst [vmem:[%s489 + $0x98] sm:$0xff] %v8918
        %8951 = vst [vmem:[%s489 + $0xa0] sm:$0xff] %v8919
        %8952 = vst [vmem:[%s489 + $0xa8] sm:$0xff] %v8920
        %8953 = vst [vmem:[%s489 + $0xb0] sm:$0xff] %v8921
        %8954 = vst [vmem:[%s489 + $0xb8] sm:$0xff] %v8922
        %8955 = vst [vmem:[%s489 + $0xc0] sm:$0xff] %v8923
        %8956 = vst [vmem:[%s489 + $0xc8] sm:$0xff] %v8924
        %8957 = vst [vmem:[%s489 + $0xd0] sm:$0xff] %v8925
        %8958 = vst [vmem:[%s489 + $0xd8] sm:$0xff] %v8926
        %8959 = vst [vmem:[%s489 + $0xe0] sm:$0xff] %v8927
        %8960 = vst [vmem:[%s489 + $0xe8] sm:$0xff] %v8928
        %8961 = vst [vmem:[%s489 + $0xf0] sm:$0xff] %v8929
        %8962 = vst [vmem:[%s489 + $0xf8] sm:$0xff] %v8930
        %s8963 = sand.u32 %s260, 1
        %s8964 = scalar_lea.sflag [#allocation5], %s8963
        %s8965 = sand.u32 %s260, 1
        %s8966 = smul.addr %s8965, 256
        %s8967 = scalar_lea.vmem [#allocation15], %s8966
        // Predicated region
        $region89: #{tpu_custom_call.1} parent=59 // pred_check
          %p8968 = pneg %p270
        $region90: #{tpu_custom_call.1} parent=59 // pred_check_branch
          %8970 = sbr.rel (%p8968) target = $region92
        $region91: #{tpu_custom_call.1} parent=59 // pred_region
          %s8971 = smul.u32 32, %s32
          %s8973 = ssub.s32 4096, 4096
          %8974 = vsyncadd %s8964, %s8973
          %s8975 = smul.addr %s8971, 128
          %s8976 = scalar_lea.hbm %s10, %s8975
          %s8977 = sshll.u32 %s8967, 4
          %s8978 = int_to_ptr.vmem [resolvable:$true] %s8977
          %8983 = dma.vmem_to_hbm [thread:$0]  %s8978, 4096, %s8976, %s8964, 128, 128, 8
        $region92: #{tpu_custom_call.1} parent=59 // pred_fallthru
          _
      $region60: #{tpu_custom_call.1} parent=5 // pred_fallthru
        _
      %p8984 = scmp.le.s32.totalorder 2, %s27
      // Predicated region
      $region93: #{tpu_custom_call.1} parent=5 // pred_check
        %p8985 = pneg %p8984
      $region94: #{tpu_custom_call.1} parent=5 // pred_check_branch
        %8987 = sbr.rel (%p8985) target = $region96
      $region95: #{tpu_custom_call.1} parent=5 // pred_region
        %s8988 = ssub.s32 %s27, 2
        // Predicated region
        $region97: #{tpu_custom_call.1} parent=95 // pred_check
          %p8989 = pneg %p276
        $region98: #{tpu_custom_call.1} parent=95 // pred_check_branch
          %8991 = sbr.rel (%p8989) target = $region100
        $region99: #{tpu_custom_call.1} parent=95 // pred_region
          %s8992 = sand.u32 %s261, 1
          %s8993 = scalar_lea.sflag [#allocation5], %s8992
          %s8994 = sand.u32 %s261, 1
          %s8995 = smul.addr %s8994, 256
          %s8996 = scalar_lea.vmem [#allocation15], %s8995
          %8997 = dma.done %s8993, 4096
        $region100: #{tpu_custom_call.1} parent=95 // pred_fallthru
          _
      $region96: #{tpu_custom_call.1} parent=5 // pred_fallthru
        _
    $region6: #{tpu_custom_call.1} parent=1 // loop_footer
      %s31 = sadd.s32 1, %s27
    $region7: #{tpu_custom_call.1} parent=1 // loop_footer_branch
      %26 = sbr.rel target = $region3
    $region8: #{tpu_custom_call.1} parent=1 // loop_exit
      _
    %8998 = vsyncpa [#allocation4], 1
    %s8999 = scalar_lea.sflag [#allocation4], 1
    %9000 = vsyncpa %s8999, 1
    %9001 = vsyncpa [#allocation7], 1
    %s9002 = scalar_lea.sflag [#allocation7], 1
    %9003 = vsyncpa %s9002, 1
    %9004 = vsyncpa [#allocation10], 1
    %9005 = vsyncpa [#allocation13], 1
    %9006 = vsyncpa [#allocation5], 1
    %s9007 = scalar_lea.sflag [#allocation5], 1
    %9008 = vsyncpa %s9007, 1

</llo_original>
